<compile_context>
chip_gen: v6e
topology: v6e:2x2x1
jax: 0.10.0
libtpu: 0.0.40
codegen_flags: <defaults>
</compile_context>

<pallas_src>
import functools

import jax
import jax.numpy as jnp
from jax.experimental import pallas as pl
from jax.experimental.pallas import tpu as pltpu


# bf16 MXU fast path for the main matmuls (f32 accumulation).  Set to
# jnp.float32 to recover exact float32 forward semantics.
_BF16 = jnp.bfloat16


def _mm(a, b):
    """Main matmul path: bf16 operands, f32 accumulation on the MXU."""
    return jnp.dot(a.astype(_BF16), b.astype(_BF16),
                   preferred_element_type=jnp.float32)


def _mm_f32(a, b):
    """f32 matmul — used only for LayerNorm statistics (accuracy)."""
    return jnp.dot(a, b, preferred_element_type=jnp.float32)


# ----------------------------------------------------------------------------
# Fused whole-model kernel: one grid step = one batch element, all blocks.
# ----------------------------------------------------------------------------
def _ft1d_fused_kernel(
        # inputs (order must match in_specs / operand order below)
        xin_ref,                       # (1, S, 2)   stacked [a, x]
        pw_ref, pb_ref,                # (2, W), (1, W)
        avg_ref, msk_ref,              # (W, W) per-head constants (host-built)
        cw_ref, cb_ref,                # (nb, 3, W, W), (nb, 1, W)
        wqkv_ref, bqkv_ref,            # (nb, W, 3W), (nb, 1, 3W)
        gq_ref, bq_ref, gk_ref, bk_ref,   # (nb, 1, W) each (per-head LN, packed)
        wo_ref, bo_ref,                # (nb, W, W), (nb, 1, W)
        ln1g_ref, ln1b_ref,            # (nb, 1, W)
        fw1_ref, fb1_ref, fw2_ref, fb2_ref,   # (nb, W, W), (nb, 1, W) x2
        ln2g_ref, ln2b_ref,            # (nb, 1, W)
        qw1_ref, qb1_ref, qw2t_ref, qb2_ref,  # (W, 2W), (1, 2W), (1, 2W), (1, 1)
        # output
        out_ref,                       # (1, 1, S)   lane-dense output row
        *, seq_len, width, nblocks):
    S, W = seq_len, width

    # ---- p layer: Linear(2 -> W) as two VPU broadcast-FMAs (no K=2 matmul) ----
    xin = xin_ref[0]                                   # (S, 2)
    a_col = xin[:, 0:1]                                # (S, 1)
    x_col = xin[:, 1:2]
    h = a_col * pw_ref[0:1, :] + x_col * pw_ref[1:2, :] + pb_ref[...]   # (S, W)

    avg = avg_ref[...]                                 # per-head mean matrix
    msk = msk_ref[...]                                 # intra-head mask
    inv_s = 1.0 / S

    def per_head_ln(x, g, b):
        # LayerNorm over each head's dh features, heads packed in the lane dim.
        # Statistics kept in f32.
        mean = _mm_f32(x, avg)
        xc = x - mean
        var = _mm_f32(xc * xc, avg)
        return xc * jax.lax.rsqrt(var + 1e-5) * g + b

    def full_ln(x, g, b):
        m = jnp.mean(x, axis=-1, keepdims=True)
        xc = x - m
        v = jnp.mean(xc * xc, axis=-1, keepdims=True)
        return xc * jax.lax.rsqrt(v + 1e-5) * g + b

    zrow = jnp.zeros((1, W), jnp.float32)

    # ---- nblocks transformer blocks, unrolled in-kernel; weights resident ----
    for j in range(nblocks):
        # local correction: Conv1d(W, W, k=3, padding=1), channels-last.
        # Halo built with zero rows in VMEM; weight layout [tap, Cin, Cout].
        # TODO(synk): at larger S, replace the concatenate/shifted-slice halo
        # with pltpu.roll on the per-tap matmul results (XLU slot).
        cw = cw_ref[j]                                       # (3, W, W)
        xp = jnp.concatenate([zrow, h, zrow], axis=0)        # (S+2, W)
        x1 = (cb_ref[j]
              + _mm(xp[0:S], cw[0])                          # tap for x[t-1]
              + _mm(xp[1:S + 1], cw[1])                      # tap for x[t]
              + _mm(xp[2:S + 2], cw[2]))                     # tap for x[t+1]

        # Fourier attention (no softmax), exact linear-attention reorder:
        #   (qn kn^T / S) v  ==  qn (kn^T v) / S,  heads packed in lanes.
        qkv = _mm(h, wqkv_ref[j]) + bqkv_ref[j]              # fused Q/K/V proj
        q = qkv[:, 0:W]
        k = qkv[:, W:2 * W]
        v = qkv[:, 2 * W:3 * W]
        qn = per_head_ln(q, gq_ref[j], bq_ref[j])
        kn = per_head_ln(k, gk_ref[j], bk_ref[j])
        ktv = jax.lax.dot_general(                           # (W, W), contract S
            kn.astype(_BF16), v.astype(_BF16),
            dimension_numbers=(((0,), (0,)), ((), ())),
            preferred_element_type=jnp.float32) * msk        # keep intra-head only
        attn = _mm(qn, ktv) * inv_s                          # (S, W)
        x2 = _mm(attn, wo_ref[j]) + bo_ref[j]                # output projection

        # residual + LN1, FFN, residual + LN2 (all fused; no HBM traffic).
        h1 = full_ln(x1 + x2, ln1g_ref[j], ln1b_ref[j])
        f = jnp.maximum(_mm(h1, fw1_ref[j]) + fb1_ref[j], 0.0)
        f = _mm(f, fw2_ref[j]) + fb2_ref[j]
        h = full_ln(h1 + f, ln2g_ref[j], ln2b_ref[j])

    # ---- output head q: Linear(W, 2W) + ReLU + Linear(2W, 1), lane-dense store.
    hid = jnp.maximum(_mm(h, qw1_ref[...]) + qb1_ref[...], 0.0)      # (S, 2W)
    out_row = jax.lax.dot_general(                                   # (1, S)
        qw2t_ref[...].astype(_BF16), hid.astype(_BF16),
        dimension_numbers=(((1,), (1,)), ((), ())),
        preferred_element_type=jnp.float32) + qb2_ref[...]
    out_ref[0] = out_row


# ----------------------------------------------------------------------------
# Parameter init (deterministic, PyTorch-style uniform fan-in bounds), stacked
# per-block so the whole model runs in one pallas_call.
# ----------------------------------------------------------------------------
def _uniform(key, shape, bound):
    return jax.random.uniform(key, shape, jnp.float32, -bound, bound)


def _lin_init(key, din, dout):
    kw, kb = jax.random.split(key)
    s = 1.0 / float(din) ** 0.5
    return _uniform(kw, (din, dout), s), _uniform(kb, (dout,), s)


def init_params(key, width, nhead, nblocks):
    W = width
    keys = iter(jax.random.split(key, 3 + 7 * nblocks))

    params = {}
    params["p_w"], params["p_b"] = _lin_init(next(keys), 2, W)
    params["q_w1"], params["q_b1"] = _lin_init(next(keys), W, 2 * W)
    params["q_w2"], params["q_b2"] = _lin_init(next(keys), 2 * W, 1)

    conv_w, conv_b = [], []
    wqkv, bqkv = [], []
    wo, bo = [], []
    fw1, fb1, fw2, fb2 = [], [], [], []
    for _ in range(nblocks):
        kc = next(keys)
        s = 1.0 / float(W * 3) ** 0.5
        conv_w.append(_uniform(kc, (3, W, W), s))                 # [tap, Cin, Cout]
        conv_b.append(_uniform(jax.random.fold_in(kc, 1), (W,), s))
        wq, bq = _lin_init(next(keys), W, W)
        wk, bk = _lin_init(next(keys), W, W)
        wv, bv = _lin_init(next(keys), W, W)
        wqkv.append(jnp.concatenate([wq, wk, wv], axis=1))        # (W, 3W)
        bqkv.append(jnp.concatenate([bq, bk, bv], axis=0))        # (3W,)
        w_o, b_o = _lin_init(next(keys), W, W)
        wo.append(w_o)
        bo.append(b_o)
        w1, b1 = _lin_init(next(keys), W, W)
        w2, b2 = _lin_init(next(keys), W, W)
        fw1.append(w1); fb1.append(b1); fw2.append(w2); fb2.append(b2)

    params["blocks"] = {
        "conv_w": jnp.stack(conv_w), "conv_b": jnp.stack(conv_b),
        "wqkv": jnp.stack(wqkv), "bqkv": jnp.stack(bqkv),
        "ln_q_g": jnp.ones((nblocks, W), jnp.float32),
        "ln_q_b": jnp.zeros((nblocks, W), jnp.float32),
        "ln_k_g": jnp.ones((nblocks, W), jnp.float32),
        "ln_k_b": jnp.zeros((nblocks, W), jnp.float32),
        "wo": jnp.stack(wo), "bo": jnp.stack(bo),
        "ln1_g": jnp.ones((nblocks, W), jnp.float32),
        "ln1_b": jnp.zeros((nblocks, W), jnp.float32),
        "fnn_w1": jnp.stack(fw1), "fnn_b1": jnp.stack(fb1),
        "fnn_w2": jnp.stack(fw2), "fnn_b2": jnp.stack(fb2),
        "ln2_g": jnp.ones((nblocks, W), jnp.float32),
        "ln2_b": jnp.zeros((nblocks, W), jnp.float32),
    }
    return params


# ----------------------------------------------------------------------------
# FT1d forward (clevel=0, mlevel=0 defaults) — one pallas_call for everything.
# ----------------------------------------------------------------------------
# TODO(synk): clevel != 0 (strided subsample + F.interpolate linear upsample) and
#             mlevel > 0 (multi-resolution MultiLevelLayer1d hierarchy) paths are
#             not implemented; defaults clevel=0, mlevel=0 are used.
# TODO(synk): for very large width (>~10 MB/block f32 on v7x), switch the
#             per-block weights back to streamed BlockSpecs instead of resident.
def ft1d_forward(params, x, a, *, width, nhead, nblocks):
    B, S = x.shape
    W = width
    dh = W // nhead
    xin = jnp.stack([a, x], axis=-1)                     # (B, S, 2)

    # Host-built per-head constants (hoisted out of the kernel body).
    idx = jnp.arange(W)
    same_head = (idx[:, None] // dh) == (idx[None, :] // dh)
    avg_mat = jnp.where(same_head, 1.0 / dh, 0.0).astype(jnp.float32)
    head_mask = same_head.astype(jnp.float32)

    blk = params["blocks"]
    r3 = lambda t: t.reshape(nblocks, 1, -1)             # (nb, D) -> (nb, 1, D)
    nb = nblocks

    def const_spec(shape):
        zeros = (0,) * len(shape)
        return pl.BlockSpec(shape, lambda b, zeros=zeros: zeros)

    in_specs = [
        pl.BlockSpec((1, S, 2), lambda b: (b, 0, 0)),            # xin
        const_spec((2, W)), const_spec((1, W)),                  # p_w, p_b
        const_spec((W, W)), const_spec((W, W)),                  # avg_mat, head_mask
        const_spec((nb, 3, W, W)), const_spec((nb, 1, W)),       # conv_w, conv_b
        const_spec((nb, W, 3 * W)), const_spec((nb, 1, 3 * W)),  # wqkv, bqkv
        const_spec((nb, 1, W)), const_spec((nb, 1, W)),          # ln_q g, b
        const_spec((nb, 1, W)), const_spec((nb, 1, W)),          # ln_k g, b
        const_spec((nb, W, W)), const_spec((nb, 1, W)),          # wo, bo
        const_spec((nb, 1, W)), const_spec((nb, 1, W)),          # ln1 g, b
        const_spec((nb, W, W)), const_spec((nb, 1, W)),          # fnn w1, b1
        const_spec((nb, W, W)), const_spec((nb, 1, W)),          # fnn w2, b2
        const_spec((nb, 1, W)), const_spec((nb, 1, W)),          # ln2 g, b
        const_spec((W, 2 * W)), const_spec((1, 2 * W)),          # q_w1, q_b1
        const_spec((1, 2 * W)), const_spec((1, 1)),              # q_w2^T, q_b2
    ]

    operands = (
        xin,
        params["p_w"], params["p_b"].reshape(1, W),
        avg_mat, head_mask,
        blk["conv_w"], r3(blk["conv_b"]),
        blk["wqkv"], r3(blk["bqkv"]),
        r3(blk["ln_q_g"]), r3(blk["ln_q_b"]),
        r3(blk["ln_k_g"]), r3(blk["ln_k_b"]),
        blk["wo"], r3(blk["bo"]),
        r3(blk["ln1_g"]), r3(blk["ln1_b"]),
        blk["fnn_w1"], r3(blk["fnn_b1"]),
        blk["fnn_w2"], r3(blk["fnn_b2"]),
        r3(blk["ln2_g"]), r3(blk["ln2_b"]),
        params["q_w1"], params["q_b1"].reshape(1, 2 * W),
        params["q_w2"].T, params["q_b2"].reshape(1, 1),
    )

    kernel = functools.partial(_ft1d_fused_kernel, seq_len=S, width=W,
                               nblocks=nblocks)

    out = pl.pallas_call(
        kernel,
        out_shape=jax.ShapeDtypeStruct((B, 1, S), jnp.float32),
        grid=(B,),
        in_specs=in_specs,
        out_specs=pl.BlockSpec((1, 1, S), lambda b: (b, 0, 0)),
        compiler_params=pltpu.CompilerParams(
            dimension_semantics=("parallel",),
            vmem_limit_bytes=32 * 1024 * 1024),
    )(*operands)
    # (B, 1, S) and (B, S, 1) have identical row-major order -> pure reshape.
    return out.reshape(B, S, 1)


# ----------------------------------------------------------------------------
if __name__ == "__main__":
    WIDTH, NHEAD, NBLOCKS = 32, 4, 4
    B, S = 2, 16

    params = init_params(jax.random.PRNGKey(42), WIDTH, NHEAD, NBLOCKS)

    key = jax.random.PRNGKey(0)
    kx, ka = jax.random.split(key)
    x = jax.random.normal(kx, (B, S), jnp.float32)
    a = jax.random.normal(ka, (B, S), jnp.float32)

    fwd = jax.jit(functools.partial(ft1d_forward, width=WIDTH, nhead=NHEAD,
                                    nblocks=NBLOCKS))
    out = fwd(params, x, a)
    jax.block_until_ready(out)
    assert out.shape == (B, S, 1), out.shape
    assert bool(jnp.all(jnp.isfinite(out)))
    print("KERNEL_OK")
</pallas_src>

<mosaic_0001>
module attributes {stable_mosaic.version = 11 : i64} {
  func.func @_ft1d_fused_kernel(%arg0: i32, %arg1: memref<1x16x2xf32, #tpu.memory_space<vmem>>, %arg2: memref<2x32xf32, #tpu.memory_space<vmem>>, %arg3: memref<1x32xf32, #tpu.memory_space<vmem>>, %arg4: memref<32x32xf32, #tpu.memory_space<vmem>>, %arg5: memref<32x32xf32, #tpu.memory_space<vmem>>, %arg6: memref<4x3x32x32xf32, #tpu.memory_space<vmem>>, %arg7: memref<4x1x32xf32, #tpu.memory_space<vmem>>, %arg8: memref<4x32x96xf32, #tpu.memory_space<vmem>>, %arg9: memref<4x1x96xf32, #tpu.memory_space<vmem>>, %arg10: memref<4x1x32xf32, #tpu.memory_space<vmem>>, %arg11: memref<4x1x32xf32, #tpu.memory_space<vmem>>, %arg12: memref<4x1x32xf32, #tpu.memory_space<vmem>>, %arg13: memref<4x1x32xf32, #tpu.memory_space<vmem>>, %arg14: memref<4x32x32xf32, #tpu.memory_space<vmem>>, %arg15: memref<4x1x32xf32, #tpu.memory_space<vmem>>, %arg16: memref<4x1x32xf32, #tpu.memory_space<vmem>>, %arg17: memref<4x1x32xf32, #tpu.memory_space<vmem>>, %arg18: memref<4x32x32xf32, #tpu.memory_space<vmem>>, %arg19: memref<4x1x32xf32, #tpu.memory_space<vmem>>, %arg20: memref<4x32x32xf32, #tpu.memory_space<vmem>>, %arg21: memref<4x1x32xf32, #tpu.memory_space<vmem>>, %arg22: memref<4x1x32xf32, #tpu.memory_space<vmem>>, %arg23: memref<4x1x32xf32, #tpu.memory_space<vmem>>, %arg24: memref<32x64xf32, #tpu.memory_space<vmem>>, %arg25: memref<1x64xf32, #tpu.memory_space<vmem>>, %arg26: memref<1x64xf32, #tpu.memory_space<vmem>>, %arg27: memref<1x1xf32, #tpu.memory_space<vmem>>, %arg28: memref<1x1x16xf32, #tpu.memory_space<vmem>>) attributes {dimension_semantics = [#tpu.dimension_semantics<parallel>], iteration_bounds = array<i64: 2>, scalar_prefetch = 0 : i64, scratch_operands = 0 : i64, tpu.core_type = #tpu.core_type<tc>, window_params = [{transform_indices = @transform_0, window_bounds = array<i64: 1, 16, 2>}, {pipeline_mode = #tpu.pipeline_mode<synchronous>, transform_indices = @transform_1, window_bounds = array<i64: 2, 32>}, {pipeline_mode = #tpu.pipeline_mode<synchronous>, transform_indices = @transform_2, window_bounds = array<i64: 1, 32>}, {pipeline_mode = #tpu.pipeline_mode<synchronous>, transform_indices = @transform_3, window_bounds = array<i64: 32, 32>}, {pipeline_mode = #tpu.pipeline_mode<synchronous>, transform_indices = @transform_4, window_bounds = array<i64: 32, 32>}, {pipeline_mode = #tpu.pipeline_mode<synchronous>, transform_indices = @transform_5, window_bounds = array<i64: 4, 3, 32, 32>}, {pipeline_mode = #tpu.pipeline_mode<synchronous>, transform_indices = @transform_6, window_bounds = array<i64: 4, 1, 32>}, {pipeline_mode = #tpu.pipeline_mode<synchronous>, transform_indices = @transform_7, window_bounds = array<i64: 4, 32, 96>}, {pipeline_mode = #tpu.pipeline_mode<synchronous>, transform_indices = @transform_8, window_bounds = array<i64: 4, 1, 96>}, {pipeline_mode = #tpu.pipeline_mode<synchronous>, transform_indices = @transform_9, window_bounds = array<i64: 4, 1, 32>}, {pipeline_mode = #tpu.pipeline_mode<synchronous>, transform_indices = @transform_10, window_bounds = array<i64: 4, 1, 32>}, {pipeline_mode = #tpu.pipeline_mode<synchronous>, transform_indices = @transform_11, window_bounds = array<i64: 4, 1, 32>}, {pipeline_mode = #tpu.pipeline_mode<synchronous>, transform_indices = @transform_12, window_bounds = array<i64: 4, 1, 32>}, {pipeline_mode = #tpu.pipeline_mode<synchronous>, transform_indices = @transform_13, window_bounds = array<i64: 4, 32, 32>}, {pipeline_mode = #tpu.pipeline_mode<synchronous>, transform_indices = @transform_14, window_bounds = array<i64: 4, 1, 32>}, {pipeline_mode = #tpu.pipeline_mode<synchronous>, transform_indices = @transform_15, window_bounds = array<i64: 4, 1, 32>}, {pipeline_mode = #tpu.pipeline_mode<synchronous>, transform_indices = @transform_16, window_bounds = array<i64: 4, 1, 32>}, {pipeline_mode = #tpu.pipeline_mode<synchronous>, transform_indices = @transform_17, window_bounds = array<i64: 4, 32, 32>}, {pipeline_mode = #tpu.pipeline_mode<synchronous>, transform_indices = @transform_18, window_bounds = array<i64: 4, 1, 32>}, {pipeline_mode = #tpu.pipeline_mode<synchronous>, transform_indices = @transform_19, window_bounds = array<i64: 4, 32, 32>}, {pipeline_mode = #tpu.pipeline_mode<synchronous>, transform_indices = @transform_20, window_bounds = array<i64: 4, 1, 32>}, {pipeline_mode = #tpu.pipeline_mode<synchronous>, transform_indices = @transform_21, window_bounds = array<i64: 4, 1, 32>}, {pipeline_mode = #tpu.pipeline_mode<synchronous>, transform_indices = @transform_22, window_bounds = array<i64: 4, 1, 32>}, {pipeline_mode = #tpu.pipeline_mode<synchronous>, transform_indices = @transform_23, window_bounds = array<i64: 32, 64>}, {pipeline_mode = #tpu.pipeline_mode<synchronous>, transform_indices = @transform_24, window_bounds = array<i64: 1, 64>}, {pipeline_mode = #tpu.pipeline_mode<synchronous>, transform_indices = @transform_25, window_bounds = array<i64: 1, 64>}, {pipeline_mode = #tpu.pipeline_mode<synchronous>, transform_indices = @transform_26, window_bounds = array<i64: 1, 1>}, {transform_indices = @transform_27, window_bounds = array<i64: 1, 1, 16>}]} {
    %c0 = arith.constant 0 : index
    %c0_0 = arith.constant 0 : index
    %c0_1 = arith.constant 0 : index
    %0 = vector.load %arg1[%c0, %c0_0, %c0_1] : memref<1x16x2xf32, #tpu.memory_space<vmem>>, vector<1x16x2xf32>
    %1 = vector.shape_cast %0 : vector<1x16x2xf32> to vector<16x2xf32>
    %2 = vector.extract_strided_slice %1 {offsets = [0, 0], sizes = [16, 1], strides = [1, 1]} : vector<16x2xf32> to vector<16x1xf32>
    %3 = vector.extract_strided_slice %1 {offsets = [0, 1], sizes = [16, 1], strides = [1, 1]} : vector<16x2xf32> to vector<16x1xf32>
    %c0_2 = arith.constant 0 : index
    %c0_3 = arith.constant 0 : index
    %4 = vector.load %arg2[%c0_2, %c0_3] : memref<2x32xf32, #tpu.memory_space<vmem>>, vector<1x32xf32>
    %5 = vector.broadcast %2 : vector<16x1xf32> to vector<16x32xf32>
    %6 = vector.broadcast %4 : vector<1x32xf32> to vector<16x32xf32>
    %7 = arith.mulf %5, %6 : vector<16x32xf32>
    %c1 = arith.constant 1 : index
    %c0_4 = arith.constant 0 : index
    %8 = vector.load %arg2[%c1, %c0_4] : memref<2x32xf32, #tpu.memory_space<vmem>>, vector<1x32xf32>
    %9 = vector.broadcast %3 : vector<16x1xf32> to vector<16x32xf32>
    %10 = vector.broadcast %8 : vector<1x32xf32> to vector<16x32xf32>
    %11 = arith.mulf %9, %10 : vector<16x32xf32>
    %12 = arith.addf %7, %11 : vector<16x32xf32>
    %c0_5 = arith.constant 0 : index
    %c0_6 = arith.constant 0 : index
    %13 = vector.load %arg3[%c0_5, %c0_6] : memref<1x32xf32, #tpu.memory_space<vmem>>, vector<1x32xf32>
    %14 = vector.broadcast %13 : vector<1x32xf32> to vector<16x32xf32>
    %15 = arith.addf %12, %14 : vector<16x32xf32>
    %c0_7 = arith.constant 0 : index
    %c0_8 = arith.constant 0 : index
    %16 = vector.load %arg4[%c0_7, %c0_8] : memref<32x32xf32, #tpu.memory_space<vmem>>, vector<32x32xf32>
    %c0_9 = arith.constant 0 : index
    %c0_10 = arith.constant 0 : index
    %17 = vector.load %arg5[%c0_9, %c0_10] : memref<32x32xf32, #tpu.memory_space<vmem>>, vector<32x32xf32>
    %cst = arith.constant 0.000000e+00 : f32
    %18 = vector.broadcast %cst : f32 to vector<1x32xf32>
    %c0_11 = arith.constant 0 : index
    %c0_12 = arith.constant 0 : index
    %c0_13 = arith.constant 0 : index
    %c0_14 = arith.constant 0 : index
    %19 = vector.load %arg6[%c0_11, %c0_12, %c0_13, %c0_14] : memref<4x3x32x32xf32, #tpu.memory_space<vmem>>, vector<1x3x32x32xf32>
    %20 = vector.shape_cast %19 : vector<1x3x32x32xf32> to vector<3x32x32xf32>
    %21 = tpu.concatenate %18, %15, %18 in 0 : vector<1x32xf32>, vector<16x32xf32>, vector<1x32xf32> -> vector<18x32xf32>
    %c0_15 = arith.constant 0 : index
    %c0_16 = arith.constant 0 : index
    %c0_17 = arith.constant 0 : index
    %22 = vector.load %arg7[%c0_15, %c0_16, %c0_17] : memref<4x1x32xf32, #tpu.memory_space<vmem>>, vector<1x1x32xf32>
    %23 = vector.shape_cast %22 : vector<1x1x32xf32> to vector<1x32xf32>
    %24 = vector.extract_strided_slice %21 {offsets = [0, 0], sizes = [16, 32], strides = [1, 1]} : vector<18x32xf32> to vector<16x32xf32>
    %25 = vector.extract_strided_slice %20 {offsets = [0, 0, 0], sizes = [1, 32, 32], strides = [1, 1, 1]} : vector<3x32x32xf32> to vector<1x32x32xf32>
    %26 = vector.shape_cast %25 : vector<1x32x32xf32> to vector<32x32xf32>
    %27 = arith.truncf %24 : vector<16x32xf32> to vector<16x32xbf16>
    %28 = arith.truncf %26 : vector<32x32xf32> to vector<32x32xbf16>
    %cst_18 = arith.constant dense<0.000000e+00> : vector<16x32xf32>
    %29 = tpu.matmul %27, %28, %cst_18 {dimension_numbers = #tpu.dot_dimension_numbers<[1], [0], [0], [1], [0, 0, 1, 1], [], []>} : vector<16x32xbf16>, vector<32x32xbf16>, vector<16x32xf32> -> vector<16x32xf32>
    %30 = vector.broadcast %23 : vector<1x32xf32> to vector<16x32xf32>
    %31 = arith.addf %30, %29 : vector<16x32xf32>
    %32 = vector.extract_strided_slice %21 {offsets = [1, 0], sizes = [16, 32], strides = [1, 1]} : vector<18x32xf32> to vector<16x32xf32>
    %33 = vector.extract_strided_slice %20 {offsets = [1, 0, 0], sizes = [1, 32, 32], strides = [1, 1, 1]} : vector<3x32x32xf32> to vector<1x32x32xf32>
    %34 = vector.shape_cast %33 : vector<1x32x32xf32> to vector<32x32xf32>
    %35 = arith.truncf %32 : vector<16x32xf32> to vector<16x32xbf16>
    %36 = arith.truncf %34 : vector<32x32xf32> to vector<32x32xbf16>
    %cst_19 = arith.constant dense<0.000000e+00> : vector<16x32xf32>
    %37 = tpu.matmul %35, %36, %cst_19 {dimension_numbers = #tpu.dot_dimension_numbers<[1], [0], [0], [1], [0, 0, 1, 1], [], []>} : vector<16x32xbf16>, vector<32x32xbf16>, vector<16x32xf32> -> vector<16x32xf32>
    %38 = arith.addf %31, %37 : vector<16x32xf32>
    %39 = vector.extract_strided_slice %21 {offsets = [2, 0], sizes = [16, 32], strides = [1, 1]} : vector<18x32xf32> to vector<16x32xf32>
    %40 = vector.extract_strided_slice %20 {offsets = [2, 0, 0], sizes = [1, 32, 32], strides = [1, 1, 1]} : vector<3x32x32xf32> to vector<1x32x32xf32>
    %41 = vector.shape_cast %40 : vector<1x32x32xf32> to vector<32x32xf32>
    %42 = arith.truncf %39 : vector<16x32xf32> to vector<16x32xbf16>
    %43 = arith.truncf %41 : vector<32x32xf32> to vector<32x32xbf16>
    %cst_20 = arith.constant dense<0.000000e+00> : vector<16x32xf32>
    %44 = tpu.matmul %42, %43, %cst_20 {dimension_numbers = #tpu.dot_dimension_numbers<[1], [0], [0], [1], [0, 0, 1, 1], [], []>} : vector<16x32xbf16>, vector<32x32xbf16>, vector<16x32xf32> -> vector<16x32xf32>
    %45 = arith.addf %38, %44 : vector<16x32xf32>
    %c0_21 = arith.constant 0 : index
    %c0_22 = arith.constant 0 : index
    %c0_23 = arith.constant 0 : index
    %46 = vector.load %arg8[%c0_21, %c0_22, %c0_23] : memref<4x32x96xf32, #tpu.memory_space<vmem>>, vector<1x32x96xf32>
    %47 = vector.shape_cast %46 : vector<1x32x96xf32> to vector<32x96xf32>
    %48 = arith.truncf %15 : vector<16x32xf32> to vector<16x32xbf16>
    %49 = arith.truncf %47 : vector<32x96xf32> to vector<32x96xbf16>
    %cst_24 = arith.constant dense<0.000000e+00> : vector<16x96xf32>
    %50 = tpu.matmul %48, %49, %cst_24 {dimension_numbers = #tpu.dot_dimension_numbers<[1], [0], [0], [1], [0, 0, 1, 1], [], []>} : vector<16x32xbf16>, vector<32x96xbf16>, vector<16x96xf32> -> vector<16x96xf32>
    %c0_25 = arith.constant 0 : index
    %c0_26 = arith.constant 0 : index
    %c0_27 = arith.constant 0 : index
    %51 = vector.load %arg9[%c0_25, %c0_26, %c0_27] : memref<4x1x96xf32, #tpu.memory_space<vmem>>, vector<1x1x96xf32>
    %52 = vector.shape_cast %51 : vector<1x1x96xf32> to vector<1x96xf32>
    %53 = vector.broadcast %52 : vector<1x96xf32> to vector<16x96xf32>
    %54 = arith.addf %50, %53 : vector<16x96xf32>
    %55 = vector.extract_strided_slice %54 {offsets = [0, 0], sizes = [16, 32], strides = [1, 1]} : vector<16x96xf32> to vector<16x32xf32>
    %56 = vector.extract_strided_slice %54 {offsets = [0, 32], sizes = [16, 32], strides = [1, 1]} : vector<16x96xf32> to vector<16x32xf32>
    %57 = vector.extract_strided_slice %54 {offsets = [0, 64], sizes = [16, 32], strides = [1, 1]} : vector<16x96xf32> to vector<16x32xf32>
    %c0_28 = arith.constant 0 : index
    %c0_29 = arith.constant 0 : index
    %c0_30 = arith.constant 0 : index
    %58 = vector.load %arg10[%c0_28, %c0_29, %c0_30] : memref<4x1x32xf32, #tpu.memory_space<vmem>>, vector<1x1x32xf32>
    %59 = vector.shape_cast %58 : vector<1x1x32xf32> to vector<1x32xf32>
    %c0_31 = arith.constant 0 : index
    %c0_32 = arith.constant 0 : index
    %c0_33 = arith.constant 0 : index
    %60 = vector.load %arg11[%c0_31, %c0_32, %c0_33] : memref<4x1x32xf32, #tpu.memory_space<vmem>>, vector<1x1x32xf32>
    %61 = vector.shape_cast %60 : vector<1x1x32xf32> to vector<1x32xf32>
    %cst_34 = arith.constant dense<0.000000e+00> : vector<16x32xf32>
    %62 = tpu.matmul %55, %16, %cst_34 {dimension_numbers = #tpu.dot_dimension_numbers<[1], [0], [0], [1], [0, 0, 1, 1], [], []>} : vector<16x32xf32>, vector<32x32xf32>, vector<16x32xf32> -> vector<16x32xf32>
    %63 = arith.subf %55, %62 : vector<16x32xf32>
    %64 = arith.mulf %63, %63 : vector<16x32xf32>
    %cst_35 = arith.constant dense<0.000000e+00> : vector<16x32xf32>
    %65 = tpu.matmul %64, %16, %cst_35 {dimension_numbers = #tpu.dot_dimension_numbers<[1], [0], [0], [1], [0, 0, 1, 1], [], []>} : vector<16x32xf32>, vector<32x32xf32>, vector<16x32xf32> -> vector<16x32xf32>
    %cst_36 = arith.constant 9.99999974E-6 : f32
    %66 = vector.broadcast %cst_36 : f32 to vector<16x32xf32>
    %67 = arith.addf %65, %66 : vector<16x32xf32>
    %68 = math.rsqrt %67 : vector<16x32xf32>
    %69 = arith.mulf %63, %68 : vector<16x32xf32>
    %70 = vector.broadcast %59 : vector<1x32xf32> to vector<16x32xf32>
    %71 = arith.mulf %69, %70 : vector<16x32xf32>
    %72 = vector.broadcast %61 : vector<1x32xf32> to vector<16x32xf32>
    %73 = arith.addf %71, %72 : vector<16x32xf32>
    %c0_37 = arith.constant 0 : index
    %c0_38 = arith.constant 0 : index
    %c0_39 = arith.constant 0 : index
    %74 = vector.load %arg12[%c0_37, %c0_38, %c0_39] : memref<4x1x32xf32, #tpu.memory_space<vmem>>, vector<1x1x32xf32>
    %75 = vector.shape_cast %74 : vector<1x1x32xf32> to vector<1x32xf32>
    %c0_40 = arith.constant 0 : index
    %c0_41 = arith.constant 0 : index
    %c0_42 = arith.constant 0 : index
    %76 = vector.load %arg13[%c0_40, %c0_41, %c0_42] : memref<4x1x32xf32, #tpu.memory_space<vmem>>, vector<1x1x32xf32>
    %77 = vector.shape_cast %76 : vector<1x1x32xf32> to vector<1x32xf32>
    %cst_43 = arith.constant dense<0.000000e+00> : vector<16x32xf32>
    %78 = tpu.matmul %56, %16, %cst_43 {dimension_numbers = #tpu.dot_dimension_numbers<[1], [0], [0], [1], [0, 0, 1, 1], [], []>} : vector<16x32xf32>, vector<32x32xf32>, vector<16x32xf32> -> vector<16x32xf32>
    %79 = arith.subf %56, %78 : vector<16x32xf32>
    %80 = arith.mulf %79, %79 : vector<16x32xf32>
    %cst_44 = arith.constant dense<0.000000e+00> : vector<16x32xf32>
    %81 = tpu.matmul %80, %16, %cst_44 {dimension_numbers = #tpu.dot_dimension_numbers<[1], [0], [0], [1], [0, 0, 1, 1], [], []>} : vector<16x32xf32>, vector<32x32xf32>, vector<16x32xf32> -> vector<16x32xf32>
    %cst_45 = arith.constant 9.99999974E-6 : f32
    %82 = vector.broadcast %cst_45 : f32 to vector<16x32xf32>
    %83 = arith.addf %81, %82 : vector<16x32xf32>
    %84 = math.rsqrt %83 : vector<16x32xf32>
    %85 = arith.mulf %79, %84 : vector<16x32xf32>
    %86 = vector.broadcast %75 : vector<1x32xf32> to vector<16x32xf32>
    %87 = arith.mulf %85, %86 : vector<16x32xf32>
    %88 = vector.broadcast %77 : vector<1x32xf32> to vector<16x32xf32>
    %89 = arith.addf %87, %88 : vector<16x32xf32>
    %90 = arith.truncf %89 : vector<16x32xf32> to vector<16x32xbf16>
    %91 = arith.truncf %57 : vector<16x32xf32> to vector<16x32xbf16>
    %cst_46 = arith.constant dense<0.000000e+00> : vector<32x32xf32>
    %92 = tpu.matmul %90, %91, %cst_46 {dimension_numbers = #tpu.dot_dimension_numbers<[0], [0], [1], [1], [0, 1, 1, 1], [], []>} : vector<16x32xbf16>, vector<16x32xbf16>, vector<32x32xf32> -> vector<32x32xf32>
    %93 = arith.mulf %92, %17 : vector<32x32xf32>
    %94 = arith.truncf %73 : vector<16x32xf32> to vector<16x32xbf16>
    %95 = arith.truncf %93 : vector<32x32xf32> to vector<32x32xbf16>
    %cst_47 = arith.constant dense<0.000000e+00> : vector<16x32xf32>
    %96 = tpu.matmul %94, %95, %cst_47 {dimension_numbers = #tpu.dot_dimension_numbers<[1], [0], [0], [1], [0, 0, 1, 1], [], []>} : vector<16x32xbf16>, vector<32x32xbf16>, vector<16x32xf32> -> vector<16x32xf32>
    %cst_48 = arith.constant 6.250000e-02 : f32
    %97 = vector.broadcast %cst_48 : f32 to vector<16x32xf32>
    %98 = arith.mulf %96, %97 : vector<16x32xf32>
    %c0_49 = arith.constant 0 : index
    %c0_50 = arith.constant 0 : index
    %c0_51 = arith.constant 0 : index
    %99 = vector.load %arg14[%c0_49, %c0_50, %c0_51] : memref<4x32x32xf32, #tpu.memory_space<vmem>>, vector<1x32x32xf32>
    %100 = vector.shape_cast %99 : vector<1x32x32xf32> to vector<32x32xf32>
    %101 = arith.truncf %98 : vector<16x32xf32> to vector<16x32xbf16>
    %102 = arith.truncf %100 : vector<32x32xf32> to vector<32x32xbf16>
    %cst_52 = arith.constant dense<0.000000e+00> : vector<16x32xf32>
    %103 = tpu.matmul %101, %102, %cst_52 {dimension_numbers = #tpu.dot_dimension_numbers<[1], [0], [0], [1], [0, 0, 1, 1], [], []>} : vector<16x32xbf16>, vector<32x32xbf16>, vector<16x32xf32> -> vector<16x32xf32>
    %c0_53 = arith.constant 0 : index
    %c0_54 = arith.constant 0 : index
    %c0_55 = arith.constant 0 : index
    %104 = vector.load %arg15[%c0_53, %c0_54, %c0_55] : memref<4x1x32xf32, #tpu.memory_space<vmem>>, vector<1x1x32xf32>
    %105 = vector.shape_cast %104 : vector<1x1x32xf32> to vector<1x32xf32>
    %106 = vector.broadcast %105 : vector<1x32xf32> to vector<16x32xf32>
    %107 = arith.addf %103, %106 : vector<16x32xf32>
    %108 = arith.addf %45, %107 : vector<16x32xf32>
    %c0_56 = arith.constant 0 : index
    %c0_57 = arith.constant 0 : index
    %c0_58 = arith.constant 0 : index
    %109 = vector.load %arg16[%c0_56, %c0_57, %c0_58] : memref<4x1x32xf32, #tpu.memory_space<vmem>>, vector<1x1x32xf32>
    %110 = vector.shape_cast %109 : vector<1x1x32xf32> to vector<1x32xf32>
    %c0_59 = arith.constant 0 : index
    %c0_60 = arith.constant 0 : index
    %c0_61 = arith.constant 0 : index
    %111 = vector.load %arg17[%c0_59, %c0_60, %c0_61] : memref<4x1x32xf32, #tpu.memory_space<vmem>>, vector<1x1x32xf32>
    %112 = vector.shape_cast %111 : vector<1x1x32xf32> to vector<1x32xf32>
    %cst_62 = arith.constant dense<0.000000e+00> : vector<16xf32>
    %113 = vector.multi_reduction <add>, %108, %cst_62 [1] : vector<16x32xf32> to vector<16xf32>
    %114 = vector.shape_cast %113 : vector<16xf32> to vector<16x1xf32>
    %cst_63 = arith.constant 3.200000e+01 : f32
    %115 = vector.broadcast %cst_63 : f32 to vector<16x1xf32>
    %116 = arith.divf %114, %115 : vector<16x1xf32>
    %117 = vector.broadcast %116 : vector<16x1xf32> to vector<16x32xf32>
    %118 = arith.subf %108, %117 : vector<16x32xf32>
    %119 = arith.mulf %118, %118 : vector<16x32xf32>
    %cst_64 = arith.constant dense<0.000000e+00> : vector<16xf32>
    %120 = vector.multi_reduction <add>, %119, %cst_64 [1] : vector<16x32xf32> to vector<16xf32>
    %121 = vector.shape_cast %120 : vector<16xf32> to vector<16x1xf32>
    %cst_65 = arith.constant 3.200000e+01 : f32
    %122 = vector.broadcast %cst_65 : f32 to vector<16x1xf32>
    %123 = arith.divf %121, %122 : vector<16x1xf32>
    %cst_66 = arith.constant 9.99999974E-6 : f32
    %124 = vector.broadcast %cst_66 : f32 to vector<16x1xf32>
    %125 = arith.addf %123, %124 : vector<16x1xf32>
    %126 = math.rsqrt %125 : vector<16x1xf32>
    %127 = vector.broadcast %126 : vector<16x1xf32> to vector<16x32xf32>
    %128 = arith.mulf %118, %127 : vector<16x32xf32>
    %129 = vector.broadcast %110 : vector<1x32xf32> to vector<16x32xf32>
    %130 = arith.mulf %128, %129 : vector<16x32xf32>
    %131 = vector.broadcast %112 : vector<1x32xf32> to vector<16x32xf32>
    %132 = arith.addf %130, %131 : vector<16x32xf32>
    %c0_67 = arith.constant 0 : index
    %c0_68 = arith.constant 0 : index
    %c0_69 = arith.constant 0 : index
    %133 = vector.load %arg18[%c0_67, %c0_68, %c0_69] : memref<4x32x32xf32, #tpu.memory_space<vmem>>, vector<1x32x32xf32>
    %134 = vector.shape_cast %133 : vector<1x32x32xf32> to vector<32x32xf32>
    %135 = arith.truncf %132 : vector<16x32xf32> to vector<16x32xbf16>
    %136 = arith.truncf %134 : vector<32x32xf32> to vector<32x32xbf16>
    %cst_70 = arith.constant dense<0.000000e+00> : vector<16x32xf32>
    %137 = tpu.matmul %135, %136, %cst_70 {dimension_numbers = #tpu.dot_dimension_numbers<[1], [0], [0], [1], [0, 0, 1, 1], [], []>} : vector<16x32xbf16>, vector<32x32xbf16>, vector<16x32xf32> -> vector<16x32xf32>
    %c0_71 = arith.constant 0 : index
    %c0_72 = arith.constant 0 : index
    %c0_73 = arith.constant 0 : index
    %138 = vector.load %arg19[%c0_71, %c0_72, %c0_73] : memref<4x1x32xf32, #tpu.memory_space<vmem>>, vector<1x1x32xf32>
    %139 = vector.shape_cast %138 : vector<1x1x32xf32> to vector<1x32xf32>
    %140 = vector.broadcast %139 : vector<1x32xf32> to vector<16x32xf32>
    %141 = arith.addf %137, %140 : vector<16x32xf32>
    %cst_74 = arith.constant 0.000000e+00 : f32
    %142 = vector.broadcast %cst_74 : f32 to vector<16x32xf32>
    %143 = arith.maximumf %141, %142 : vector<16x32xf32>
    %c0_75 = arith.constant 0 : index
    %c0_76 = arith.constant 0 : index
    %c0_77 = arith.constant 0 : index
    %144 = vector.load %arg20[%c0_75, %c0_76, %c0_77] : memref<4x32x32xf32, #tpu.memory_space<vmem>>, vector<1x32x32xf32>
    %145 = vector.shape_cast %144 : vector<1x32x32xf32> to vector<32x32xf32>
    %146 = arith.truncf %143 : vector<16x32xf32> to vector<16x32xbf16>
    %147 = arith.truncf %145 : vector<32x32xf32> to vector<32x32xbf16>
    %cst_78 = arith.constant dense<0.000000e+00> : vector<16x32xf32>
    %148 = tpu.matmul %146, %147, %cst_78 {dimension_numbers = #tpu.dot_dimension_numbers<[1], [0], [0], [1], [0, 0, 1, 1], [], []>} : vector<16x32xbf16>, vector<32x32xbf16>, vector<16x32xf32> -> vector<16x32xf32>
    %c0_79 = arith.constant 0 : index
    %c0_80 = arith.constant 0 : index
    %c0_81 = arith.constant 0 : index
    %149 = vector.load %arg21[%c0_79, %c0_80, %c0_81] : memref<4x1x32xf32, #tpu.memory_space<vmem>>, vector<1x1x32xf32>
    %150 = vector.shape_cast %149 : vector<1x1x32xf32> to vector<1x32xf32>
    %151 = vector.broadcast %150 : vector<1x32xf32> to vector<16x32xf32>
    %152 = arith.addf %148, %151 : vector<16x32xf32>
    %153 = arith.addf %132, %152 : vector<16x32xf32>
    %c0_82 = arith.constant 0 : index
    %c0_83 = arith.constant 0 : index
    %c0_84 = arith.constant 0 : index
    %154 = vector.load %arg22[%c0_82, %c0_83, %c0_84] : memref<4x1x32xf32, #tpu.memory_space<vmem>>, vector<1x1x32xf32>
    %155 = vector.shape_cast %154 : vector<1x1x32xf32> to vector<1x32xf32>
    %c0_85 = arith.constant 0 : index
    %c0_86 = arith.constant 0 : index
    %c0_87 = arith.constant 0 : index
    %156 = vector.load %arg23[%c0_85, %c0_86, %c0_87] : memref<4x1x32xf32, #tpu.memory_space<vmem>>, vector<1x1x32xf32>
    %157 = vector.shape_cast %156 : vector<1x1x32xf32> to vector<1x32xf32>
    %cst_88 = arith.constant dense<0.000000e+00> : vector<16xf32>
    %158 = vector.multi_reduction <add>, %153, %cst_88 [1] : vector<16x32xf32> to vector<16xf32>
    %159 = vector.shape_cast %158 : vector<16xf32> to vector<16x1xf32>
    %cst_89 = arith.constant 3.200000e+01 : f32
    %160 = vector.broadcast %cst_89 : f32 to vector<16x1xf32>
    %161 = arith.divf %159, %160 : vector<16x1xf32>
    %162 = vector.broadcast %161 : vector<16x1xf32> to vector<16x32xf32>
    %163 = arith.subf %153, %162 : vector<16x32xf32>
    %164 = arith.mulf %163, %163 : vector<16x32xf32>
    %cst_90 = arith.constant dense<0.000000e+00> : vector<16xf32>
    %165 = vector.multi_reduction <add>, %164, %cst_90 [1] : vector<16x32xf32> to vector<16xf32>
    %166 = vector.shape_cast %165 : vector<16xf32> to vector<16x1xf32>
    %cst_91 = arith.constant 3.200000e+01 : f32
    %167 = vector.broadcast %cst_91 : f32 to vector<16x1xf32>
    %168 = arith.divf %166, %167 : vector<16x1xf32>
    %cst_92 = arith.constant 9.99999974E-6 : f32
    %169 = vector.broadcast %cst_92 : f32 to vector<16x1xf32>
    %170 = arith.addf %168, %169 : vector<16x1xf32>
    %171 = math.rsqrt %170 : vector<16x1xf32>
    %172 = vector.broadcast %171 : vector<16x1xf32> to vector<16x32xf32>
    %173 = arith.mulf %163, %172 : vector<16x32xf32>
    %174 = vector.broadcast %155 : vector<1x32xf32> to vector<16x32xf32>
    %175 = arith.mulf %173, %174 : vector<16x32xf32>
    %176 = vector.broadcast %157 : vector<1x32xf32> to vector<16x32xf32>
    %177 = arith.addf %175, %176 : vector<16x32xf32>
    %c1_93 = arith.constant 1 : index
    %c0_94 = arith.constant 0 : index
    %c0_95 = arith.constant 0 : index
    %c0_96 = arith.constant 0 : index
    %178 = vector.load %arg6[%c1_93, %c0_94, %c0_95, %c0_96] : memref<4x3x32x32xf32, #tpu.memory_space<vmem>>, vector<1x3x32x32xf32>
    %179 = vector.shape_cast %178 : vector<1x3x32x32xf32> to vector<3x32x32xf32>
    %180 = tpu.concatenate %18, %177, %18 in 0 : vector<1x32xf32>, vector<16x32xf32>, vector<1x32xf32> -> vector<18x32xf32>
    %c1_97 = arith.constant 1 : index
    %c0_98 = arith.constant 0 : index
    %c0_99 = arith.constant 0 : index
    %181 = vector.load %arg7[%c1_97, %c0_98, %c0_99] : memref<4x1x32xf32, #tpu.memory_space<vmem>>, vector<1x1x32xf32>
    %182 = vector.shape_cast %181 : vector<1x1x32xf32> to vector<1x32xf32>
    %183 = vector.extract_strided_slice %180 {offsets = [0, 0], sizes = [16, 32], strides = [1, 1]} : vector<18x32xf32> to vector<16x32xf32>
    %184 = vector.extract_strided_slice %179 {offsets = [0, 0, 0], sizes = [1, 32, 32], strides = [1, 1, 1]} : vector<3x32x32xf32> to vector<1x32x32xf32>
    %185 = vector.shape_cast %184 : vector<1x32x32xf32> to vector<32x32xf32>
    %186 = arith.truncf %183 : vector<16x32xf32> to vector<16x32xbf16>
    %187 = arith.truncf %185 : vector<32x32xf32> to vector<32x32xbf16>
    %cst_100 = arith.constant dense<0.000000e+00> : vector<16x32xf32>
    %188 = tpu.matmul %186, %187, %cst_100 {dimension_numbers = #tpu.dot_dimension_numbers<[1], [0], [0], [1], [0, 0, 1, 1], [], []>} : vector<16x32xbf16>, vector<32x32xbf16>, vector<16x32xf32> -> vector<16x32xf32>
    %189 = vector.broadcast %182 : vector<1x32xf32> to vector<16x32xf32>
    %190 = arith.addf %189, %188 : vector<16x32xf32>
    %191 = vector.extract_strided_slice %180 {offsets = [1, 0], sizes = [16, 32], strides = [1, 1]} : vector<18x32xf32> to vector<16x32xf32>
    %192 = vector.extract_strided_slice %179 {offsets = [1, 0, 0], sizes = [1, 32, 32], strides = [1, 1, 1]} : vector<3x32x32xf32> to vector<1x32x32xf32>
    %193 = vector.shape_cast %192 : vector<1x32x32xf32> to vector<32x32xf32>
    %194 = arith.truncf %191 : vector<16x32xf32> to vector<16x32xbf16>
    %195 = arith.truncf %193 : vector<32x32xf32> to vector<32x32xbf16>
    %cst_101 = arith.constant dense<0.000000e+00> : vector<16x32xf32>
    %196 = tpu.matmul %194, %195, %cst_101 {dimension_numbers = #tpu.dot_dimension_numbers<[1], [0], [0], [1], [0, 0, 1, 1], [], []>} : vector<16x32xbf16>, vector<32x32xbf16>, vector<16x32xf32> -> vector<16x32xf32>
    %197 = arith.addf %190, %196 : vector<16x32xf32>
    %198 = vector.extract_strided_slice %180 {offsets = [2, 0], sizes = [16, 32], strides = [1, 1]} : vector<18x32xf32> to vector<16x32xf32>
    %199 = vector.extract_strided_slice %179 {offsets = [2, 0, 0], sizes = [1, 32, 32], strides = [1, 1, 1]} : vector<3x32x32xf32> to vector<1x32x32xf32>
    %200 = vector.shape_cast %199 : vector<1x32x32xf32> to vector<32x32xf32>
    %201 = arith.truncf %198 : vector<16x32xf32> to vector<16x32xbf16>
    %202 = arith.truncf %200 : vector<32x32xf32> to vector<32x32xbf16>
    %cst_102 = arith.constant dense<0.000000e+00> : vector<16x32xf32>
    %203 = tpu.matmul %201, %202, %cst_102 {dimension_numbers = #tpu.dot_dimension_numbers<[1], [0], [0], [1], [0, 0, 1, 1], [], []>} : vector<16x32xbf16>, vector<32x32xbf16>, vector<16x32xf32> -> vector<16x32xf32>
    %204 = arith.addf %197, %203 : vector<16x32xf32>
    %c1_103 = arith.constant 1 : index
    %c0_104 = arith.constant 0 : index
    %c0_105 = arith.constant 0 : index
    %205 = vector.load %arg8[%c1_103, %c0_104, %c0_105] : memref<4x32x96xf32, #tpu.memory_space<vmem>>, vector<1x32x96xf32>
    %206 = vector.shape_cast %205 : vector<1x32x96xf32> to vector<32x96xf32>
    %207 = arith.truncf %177 : vector<16x32xf32> to vector<16x32xbf16>
    %208 = arith.truncf %206 : vector<32x96xf32> to vector<32x96xbf16>
    %cst_106 = arith.constant dense<0.000000e+00> : vector<16x96xf32>
    %209 = tpu.matmul %207, %208, %cst_106 {dimension_numbers = #tpu.dot_dimension_numbers<[1], [0], [0], [1], [0, 0, 1, 1], [], []>} : vector<16x32xbf16>, vector<32x96xbf16>, vector<16x96xf32> -> vector<16x96xf32>
    %c1_107 = arith.constant 1 : index
    %c0_108 = arith.constant 0 : index
    %c0_109 = arith.constant 0 : index
    %210 = vector.load %arg9[%c1_107, %c0_108, %c0_109] : memref<4x1x96xf32, #tpu.memory_space<vmem>>, vector<1x1x96xf32>
    %211 = vector.shape_cast %210 : vector<1x1x96xf32> to vector<1x96xf32>
    %212 = vector.broadcast %211 : vector<1x96xf32> to vector<16x96xf32>
    %213 = arith.addf %209, %212 : vector<16x96xf32>
    %214 = vector.extract_strided_slice %213 {offsets = [0, 0], sizes = [16, 32], strides = [1, 1]} : vector<16x96xf32> to vector<16x32xf32>
    %215 = vector.extract_strided_slice %213 {offsets = [0, 32], sizes = [16, 32], strides = [1, 1]} : vector<16x96xf32> to vector<16x32xf32>
    %216 = vector.extract_strided_slice %213 {offsets = [0, 64], sizes = [16, 32], strides = [1, 1]} : vector<16x96xf32> to vector<16x32xf32>
    %c1_110 = arith.constant 1 : index
    %c0_111 = arith.constant 0 : index
    %c0_112 = arith.constant 0 : index
    %217 = vector.load %arg10[%c1_110, %c0_111, %c0_112] : memref<4x1x32xf32, #tpu.memory_space<vmem>>, vector<1x1x32xf32>
    %218 = vector.shape_cast %217 : vector<1x1x32xf32> to vector<1x32xf32>
    %c1_113 = arith.constant 1 : index
    %c0_114 = arith.constant 0 : index
    %c0_115 = arith.constant 0 : index
    %219 = vector.load %arg11[%c1_113, %c0_114, %c0_115] : memref<4x1x32xf32, #tpu.memory_space<vmem>>, vector<1x1x32xf32>
    %220 = vector.shape_cast %219 : vector<1x1x32xf32> to vector<1x32xf32>
    %cst_116 = arith.constant dense<0.000000e+00> : vector<16x32xf32>
    %221 = tpu.matmul %214, %16, %cst_116 {dimension_numbers = #tpu.dot_dimension_numbers<[1], [0], [0], [1], [0, 0, 1, 1], [], []>} : vector<16x32xf32>, vector<32x32xf32>, vector<16x32xf32> -> vector<16x32xf32>
    %222 = arith.subf %214, %221 : vector<16x32xf32>
    %223 = arith.mulf %222, %222 : vector<16x32xf32>
    %cst_117 = arith.constant dense<0.000000e+00> : vector<16x32xf32>
    %224 = tpu.matmul %223, %16, %cst_117 {dimension_numbers = #tpu.dot_dimension_numbers<[1], [0], [0], [1], [0, 0, 1, 1], [], []>} : vector<16x32xf32>, vector<32x32xf32>, vector<16x32xf32> -> vector<16x32xf32>
    %cst_118 = arith.constant 9.99999974E-6 : f32
    %225 = vector.broadcast %cst_118 : f32 to vector<16x32xf32>
    %226 = arith.addf %224, %225 : vector<16x32xf32>
    %227 = math.rsqrt %226 : vector<16x32xf32>
    %228 = arith.mulf %222, %227 : vector<16x32xf32>
    %229 = vector.broadcast %218 : vector<1x32xf32> to vector<16x32xf32>
    %230 = arith.mulf %228, %229 : vector<16x32xf32>
    %231 = vector.broadcast %220 : vector<1x32xf32> to vector<16x32xf32>
    %232 = arith.addf %230, %231 : vector<16x32xf32>
    %c1_119 = arith.constant 1 : index
    %c0_120 = arith.constant 0 : index
    %c0_121 = arith.constant 0 : index
    %233 = vector.load %arg12[%c1_119, %c0_120, %c0_121] : memref<4x1x32xf32, #tpu.memory_space<vmem>>, vector<1x1x32xf32>
    %234 = vector.shape_cast %233 : vector<1x1x32xf32> to vector<1x32xf32>
    %c1_122 = arith.constant 1 : index
    %c0_123 = arith.constant 0 : index
    %c0_124 = arith.constant 0 : index
    %235 = vector.load %arg13[%c1_122, %c0_123, %c0_124] : memref<4x1x32xf32, #tpu.memory_space<vmem>>, vector<1x1x32xf32>
    %236 = vector.shape_cast %235 : vector<1x1x32xf32> to vector<1x32xf32>
    %cst_125 = arith.constant dense<0.000000e+00> : vector<16x32xf32>
    %237 = tpu.matmul %215, %16, %cst_125 {dimension_numbers = #tpu.dot_dimension_numbers<[1], [0], [0], [1], [0, 0, 1, 1], [], []>} : vector<16x32xf32>, vector<32x32xf32>, vector<16x32xf32> -> vector<16x32xf32>
    %238 = arith.subf %215, %237 : vector<16x32xf32>
    %239 = arith.mulf %238, %238 : vector<16x32xf32>
    %cst_126 = arith.constant dense<0.000000e+00> : vector<16x32xf32>
    %240 = tpu.matmul %239, %16, %cst_126 {dimension_numbers = #tpu.dot_dimension_numbers<[1], [0], [0], [1], [0, 0, 1, 1], [], []>} : vector<16x32xf32>, vector<32x32xf32>, vector<16x32xf32> -> vector<16x32xf32>
    %cst_127 = arith.constant 9.99999974E-6 : f32
    %241 = vector.broadcast %cst_127 : f32 to vector<16x32xf32>
    %242 = arith.addf %240, %241 : vector<16x32xf32>
    %243 = math.rsqrt %242 : vector<16x32xf32>
    %244 = arith.mulf %238, %243 : vector<16x32xf32>
    %245 = vector.broadcast %234 : vector<1x32xf32> to vector<16x32xf32>
    %246 = arith.mulf %244, %245 : vector<16x32xf32>
    %247 = vector.broadcast %236 : vector<1x32xf32> to vector<16x32xf32>
    %248 = arith.addf %246, %247 : vector<16x32xf32>
    %249 = arith.truncf %248 : vector<16x32xf32> to vector<16x32xbf16>
    %250 = arith.truncf %216 : vector<16x32xf32> to vector<16x32xbf16>
    %cst_128 = arith.constant dense<0.000000e+00> : vector<32x32xf32>
    %251 = tpu.matmul %249, %250, %cst_128 {dimension_numbers = #tpu.dot_dimension_numbers<[0], [0], [1], [1], [0, 1, 1, 1], [], []>} : vector<16x32xbf16>, vector<16x32xbf16>, vector<32x32xf32> -> vector<32x32xf32>
    %252 = arith.mulf %251, %17 : vector<32x32xf32>
    %253 = arith.truncf %232 : vector<16x32xf32> to vector<16x32xbf16>
    %254 = arith.truncf %252 : vector<32x32xf32> to vector<32x32xbf16>
    %cst_129 = arith.constant dense<0.000000e+00> : vector<16x32xf32>
    %255 = tpu.matmul %253, %254, %cst_129 {dimension_numbers = #tpu.dot_dimension_numbers<[1], [0], [0], [1], [0, 0, 1, 1], [], []>} : vector<16x32xbf16>, vector<32x32xbf16>, vector<16x32xf32> -> vector<16x32xf32>
    %cst_130 = arith.constant 6.250000e-02 : f32
    %256 = vector.broadcast %cst_130 : f32 to vector<16x32xf32>
    %257 = arith.mulf %255, %256 : vector<16x32xf32>
    %c1_131 = arith.constant 1 : index
    %c0_132 = arith.constant 0 : index
    %c0_133 = arith.constant 0 : index
    %258 = vector.load %arg14[%c1_131, %c0_132, %c0_133] : memref<4x32x32xf32, #tpu.memory_space<vmem>>, vector<1x32x32xf32>
    %259 = vector.shape_cast %258 : vector<1x32x32xf32> to vector<32x32xf32>
    %260 = arith.truncf %257 : vector<16x32xf32> to vector<16x32xbf16>
    %261 = arith.truncf %259 : vector<32x32xf32> to vector<32x32xbf16>
    %cst_134 = arith.constant dense<0.000000e+00> : vector<16x32xf32>
    %262 = tpu.matmul %260, %261, %cst_134 {dimension_numbers = #tpu.dot_dimension_numbers<[1], [0], [0], [1], [0, 0, 1, 1], [], []>} : vector<16x32xbf16>, vector<32x32xbf16>, vector<16x32xf32> -> vector<16x32xf32>
    %c1_135 = arith.constant 1 : index
    %c0_136 = arith.constant 0 : index
    %c0_137 = arith.constant 0 : index
    %263 = vector.load %arg15[%c1_135, %c0_136, %c0_137] : memref<4x1x32xf32, #tpu.memory_space<vmem>>, vector<1x1x32xf32>
    %264 = vector.shape_cast %263 : vector<1x1x32xf32> to vector<1x32xf32>
    %265 = vector.broadcast %264 : vector<1x32xf32> to vector<16x32xf32>
    %266 = arith.addf %262, %265 : vector<16x32xf32>
    %267 = arith.addf %204, %266 : vector<16x32xf32>
    %c1_138 = arith.constant 1 : index
    %c0_139 = arith.constant 0 : index
    %c0_140 = arith.constant 0 : index
    %268 = vector.load %arg16[%c1_138, %c0_139, %c0_140] : memref<4x1x32xf32, #tpu.memory_space<vmem>>, vector<1x1x32xf32>
    %269 = vector.shape_cast %268 : vector<1x1x32xf32> to vector<1x32xf32>
    %c1_141 = arith.constant 1 : index
    %c0_142 = arith.constant 0 : index
    %c0_143 = arith.constant 0 : index
    %270 = vector.load %arg17[%c1_141, %c0_142, %c0_143] : memref<4x1x32xf32, #tpu.memory_space<vmem>>, vector<1x1x32xf32>
    %271 = vector.shape_cast %270 : vector<1x1x32xf32> to vector<1x32xf32>
    %cst_144 = arith.constant dense<0.000000e+00> : vector<16xf32>
    %272 = vector.multi_reduction <add>, %267, %cst_144 [1] : vector<16x32xf32> to vector<16xf32>
    %273 = vector.shape_cast %272 : vector<16xf32> to vector<16x1xf32>
    %cst_145 = arith.constant 3.200000e+01 : f32
    %274 = vector.broadcast %cst_145 : f32 to vector<16x1xf32>
    %275 = arith.divf %273, %274 : vector<16x1xf32>
    %276 = vector.broadcast %275 : vector<16x1xf32> to vector<16x32xf32>
    %277 = arith.subf %267, %276 : vector<16x32xf32>
    %278 = arith.mulf %277, %277 : vector<16x32xf32>
    %cst_146 = arith.constant dense<0.000000e+00> : vector<16xf32>
    %279 = vector.multi_reduction <add>, %278, %cst_146 [1] : vector<16x32xf32> to vector<16xf32>
    %280 = vector.shape_cast %279 : vector<16xf32> to vector<16x1xf32>
    %cst_147 = arith.constant 3.200000e+01 : f32
    %281 = vector.broadcast %cst_147 : f32 to vector<16x1xf32>
    %282 = arith.divf %280, %281 : vector<16x1xf32>
    %cst_148 = arith.constant 9.99999974E-6 : f32
    %283 = vector.broadcast %cst_148 : f32 to vector<16x1xf32>
    %284 = arith.addf %282, %283 : vector<16x1xf32>
    %285 = math.rsqrt %284 : vector<16x1xf32>
    %286 = vector.broadcast %285 : vector<16x1xf32> to vector<16x32xf32>
    %287 = arith.mulf %277, %286 : vector<16x32xf32>
    %288 = vector.broadcast %269 : vector<1x32xf32> to vector<16x32xf32>
    %289 = arith.mulf %287, %288 : vector<16x32xf32>
    %290 = vector.broadcast %271 : vector<1x32xf32> to vector<16x32xf32>
    %291 = arith.addf %289, %290 : vector<16x32xf32>
    %c1_149 = arith.constant 1 : index
    %c0_150 = arith.constant 0 : index
    %c0_151 = arith.constant 0 : index
    %292 = vector.load %arg18[%c1_149, %c0_150, %c0_151] : memref<4x32x32xf32, #tpu.memory_space<vmem>>, vector<1x32x32xf32>
    %293 = vector.shape_cast %292 : vector<1x32x32xf32> to vector<32x32xf32>
    %294 = arith.truncf %291 : vector<16x32xf32> to vector<16x32xbf16>
    %295 = arith.truncf %293 : vector<32x32xf32> to vector<32x32xbf16>
    %cst_152 = arith.constant dense<0.000000e+00> : vector<16x32xf32>
    %296 = tpu.matmul %294, %295, %cst_152 {dimension_numbers = #tpu.dot_dimension_numbers<[1], [0], [0], [1], [0, 0, 1, 1], [], []>} : vector<16x32xbf16>, vector<32x32xbf16>, vector<16x32xf32> -> vector<16x32xf32>
    %c1_153 = arith.constant 1 : index
    %c0_154 = arith.constant 0 : index
    %c0_155 = arith.constant 0 : index
    %297 = vector.load %arg19[%c1_153, %c0_154, %c0_155] : memref<4x1x32xf32, #tpu.memory_space<vmem>>, vector<1x1x32xf32>
    %298 = vector.shape_cast %297 : vector<1x1x32xf32> to vector<1x32xf32>
    %299 = vector.broadcast %298 : vector<1x32xf32> to vector<16x32xf32>
    %300 = arith.addf %296, %299 : vector<16x32xf32>
    %cst_156 = arith.constant 0.000000e+00 : f32
    %301 = vector.broadcast %cst_156 : f32 to vector<16x32xf32>
    %302 = arith.maximumf %300, %301 : vector<16x32xf32>
    %c1_157 = arith.constant 1 : index
    %c0_158 = arith.constant 0 : index
    %c0_159 = arith.constant 0 : index
    %303 = vector.load %arg20[%c1_157, %c0_158, %c0_159] : memref<4x32x32xf32, #tpu.memory_space<vmem>>, vector<1x32x32xf32>
    %304 = vector.shape_cast %303 : vector<1x32x32xf32> to vector<32x32xf32>
    %305 = arith.truncf %302 : vector<16x32xf32> to vector<16x32xbf16>
    %306 = arith.truncf %304 : vector<32x32xf32> to vector<32x32xbf16>
    %cst_160 = arith.constant dense<0.000000e+00> : vector<16x32xf32>
    %307 = tpu.matmul %305, %306, %cst_160 {dimension_numbers = #tpu.dot_dimension_numbers<[1], [0], [0], [1], [0, 0, 1, 1], [], []>} : vector<16x32xbf16>, vector<32x32xbf16>, vector<16x32xf32> -> vector<16x32xf32>
    %c1_161 = arith.constant 1 : index
    %c0_162 = arith.constant 0 : index
    %c0_163 = arith.constant 0 : index
    %308 = vector.load %arg21[%c1_161, %c0_162, %c0_163] : memref<4x1x32xf32, #tpu.memory_space<vmem>>, vector<1x1x32xf32>
    %309 = vector.shape_cast %308 : vector<1x1x32xf32> to vector<1x32xf32>
    %310 = vector.broadcast %309 : vector<1x32xf32> to vector<16x32xf32>
    %311 = arith.addf %307, %310 : vector<16x32xf32>
    %312 = arith.addf %291, %311 : vector<16x32xf32>
    %c1_164 = arith.constant 1 : index
    %c0_165 = arith.constant 0 : index
    %c0_166 = arith.constant 0 : index
    %313 = vector.load %arg22[%c1_164, %c0_165, %c0_166] : memref<4x1x32xf32, #tpu.memory_space<vmem>>, vector<1x1x32xf32>
    %314 = vector.shape_cast %313 : vector<1x1x32xf32> to vector<1x32xf32>
    %c1_167 = arith.constant 1 : index
    %c0_168 = arith.constant 0 : index
    %c0_169 = arith.constant 0 : index
    %315 = vector.load %arg23[%c1_167, %c0_168, %c0_169] : memref<4x1x32xf32, #tpu.memory_space<vmem>>, vector<1x1x32xf32>
    %316 = vector.shape_cast %315 : vector<1x1x32xf32> to vector<1x32xf32>
    %cst_170 = arith.constant dense<0.000000e+00> : vector<16xf32>
    %317 = vector.multi_reduction <add>, %312, %cst_170 [1] : vector<16x32xf32> to vector<16xf32>
    %318 = vector.shape_cast %317 : vector<16xf32> to vector<16x1xf32>
    %cst_171 = arith.constant 3.200000e+01 : f32
    %319 = vector.broadcast %cst_171 : f32 to vector<16x1xf32>
    %320 = arith.divf %318, %319 : vector<16x1xf32>
    %321 = vector.broadcast %320 : vector<16x1xf32> to vector<16x32xf32>
    %322 = arith.subf %312, %321 : vector<16x32xf32>
    %323 = arith.mulf %322, %322 : vector<16x32xf32>
    %cst_172 = arith.constant dense<0.000000e+00> : vector<16xf32>
    %324 = vector.multi_reduction <add>, %323, %cst_172 [1] : vector<16x32xf32> to vector<16xf32>
    %325 = vector.shape_cast %324 : vector<16xf32> to vector<16x1xf32>
    %cst_173 = arith.constant 3.200000e+01 : f32
    %326 = vector.broadcast %cst_173 : f32 to vector<16x1xf32>
    %327 = arith.divf %325, %326 : vector<16x1xf32>
    %cst_174 = arith.constant 9.99999974E-6 : f32
    %328 = vector.broadcast %cst_174 : f32 to vector<16x1xf32>
    %329 = arith.addf %327, %328 : vector<16x1xf32>
    %330 = math.rsqrt %329 : vector<16x1xf32>
    %331 = vector.broadcast %330 : vector<16x1xf32> to vector<16x32xf32>
    %332 = arith.mulf %322, %331 : vector<16x32xf32>
    %333 = vector.broadcast %314 : vector<1x32xf32> to vector<16x32xf32>
    %334 = arith.mulf %332, %333 : vector<16x32xf32>
    %335 = vector.broadcast %316 : vector<1x32xf32> to vector<16x32xf32>
    %336 = arith.addf %334, %335 : vector<16x32xf32>
    %c2 = arith.constant 2 : index
    %c0_175 = arith.constant 0 : index
    %c0_176 = arith.constant 0 : index
    %c0_177 = arith.constant 0 : index
    %337 = vector.load %arg6[%c2, %c0_175, %c0_176, %c0_177] : memref<4x3x32x32xf32, #tpu.memory_space<vmem>>, vector<1x3x32x32xf32>
    %338 = vector.shape_cast %337 : vector<1x3x32x32xf32> to vector<3x32x32xf32>
    %339 = tpu.concatenate %18, %336, %18 in 0 : vector<1x32xf32>, vector<16x32xf32>, vector<1x32xf32> -> vector<18x32xf32>
    %c2_178 = arith.constant 2 : index
    %c0_179 = arith.constant 0 : index
    %c0_180 = arith.constant 0 : index
    %340 = vector.load %arg7[%c2_178, %c0_179, %c0_180] : memref<4x1x32xf32, #tpu.memory_space<vmem>>, vector<1x1x32xf32>
    %341 = vector.shape_cast %340 : vector<1x1x32xf32> to vector<1x32xf32>
    %342 = vector.extract_strided_slice %339 {offsets = [0, 0], sizes = [16, 32], strides = [1, 1]} : vector<18x32xf32> to vector<16x32xf32>
    %343 = vector.extract_strided_slice %338 {offsets = [0, 0, 0], sizes = [1, 32, 32], strides = [1, 1, 1]} : vector<3x32x32xf32> to vector<1x32x32xf32>
    %344 = vector.shape_cast %343 : vector<1x32x32xf32> to vector<32x32xf32>
    %345 = arith.truncf %342 : vector<16x32xf32> to vector<16x32xbf16>
    %346 = arith.truncf %344 : vector<32x32xf32> to vector<32x32xbf16>
    %cst_181 = arith.constant dense<0.000000e+00> : vector<16x32xf32>
    %347 = tpu.matmul %345, %346, %cst_181 {dimension_numbers = #tpu.dot_dimension_numbers<[1], [0], [0], [1], [0, 0, 1, 1], [], []>} : vector<16x32xbf16>, vector<32x32xbf16>, vector<16x32xf32> -> vector<16x32xf32>
    %348 = vector.broadcast %341 : vector<1x32xf32> to vector<16x32xf32>
    %349 = arith.addf %348, %347 : vector<16x32xf32>
    %350 = vector.extract_strided_slice %339 {offsets = [1, 0], sizes = [16, 32], strides = [1, 1]} : vector<18x32xf32> to vector<16x32xf32>
    %351 = vector.extract_strided_slice %338 {offsets = [1, 0, 0], sizes = [1, 32, 32], strides = [1, 1, 1]} : vector<3x32x32xf32> to vector<1x32x32xf32>
    %352 = vector.shape_cast %351 : vector<1x32x32xf32> to vector<32x32xf32>
    %353 = arith.truncf %350 : vector<16x32xf32> to vector<16x32xbf16>
    %354 = arith.truncf %352 : vector<32x32xf32> to vector<32x32xbf16>
    %cst_182 = arith.constant dense<0.000000e+00> : vector<16x32xf32>
    %355 = tpu.matmul %353, %354, %cst_182 {dimension_numbers = #tpu.dot_dimension_numbers<[1], [0], [0], [1], [0, 0, 1, 1], [], []>} : vector<16x32xbf16>, vector<32x32xbf16>, vector<16x32xf32> -> vector<16x32xf32>
    %356 = arith.addf %349, %355 : vector<16x32xf32>
    %357 = vector.extract_strided_slice %339 {offsets = [2, 0], sizes = [16, 32], strides = [1, 1]} : vector<18x32xf32> to vector<16x32xf32>
    %358 = vector.extract_strided_slice %338 {offsets = [2, 0, 0], sizes = [1, 32, 32], strides = [1, 1, 1]} : vector<3x32x32xf32> to vector<1x32x32xf32>
    %359 = vector.shape_cast %358 : vector<1x32x32xf32> to vector<32x32xf32>
    %360 = arith.truncf %357 : vector<16x32xf32> to vector<16x32xbf16>
    %361 = arith.truncf %359 : vector<32x32xf32> to vector<32x32xbf16>
    %cst_183 = arith.constant dense<0.000000e+00> : vector<16x32xf32>
    %362 = tpu.matmul %360, %361, %cst_183 {dimension_numbers = #tpu.dot_dimension_numbers<[1], [0], [0], [1], [0, 0, 1, 1], [], []>} : vector<16x32xbf16>, vector<32x32xbf16>, vector<16x32xf32> -> vector<16x32xf32>
    %363 = arith.addf %356, %362 : vector<16x32xf32>
    %c2_184 = arith.constant 2 : index
    %c0_185 = arith.constant 0 : index
    %c0_186 = arith.constant 0 : index
    %364 = vector.load %arg8[%c2_184, %c0_185, %c0_186] : memref<4x32x96xf32, #tpu.memory_space<vmem>>, vector<1x32x96xf32>
    %365 = vector.shape_cast %364 : vector<1x32x96xf32> to vector<32x96xf32>
    %366 = arith.truncf %336 : vector<16x32xf32> to vector<16x32xbf16>
    %367 = arith.truncf %365 : vector<32x96xf32> to vector<32x96xbf16>
    %cst_187 = arith.constant dense<0.000000e+00> : vector<16x96xf32>
    %368 = tpu.matmul %366, %367, %cst_187 {dimension_numbers = #tpu.dot_dimension_numbers<[1], [0], [0], [1], [0, 0, 1, 1], [], []>} : vector<16x32xbf16>, vector<32x96xbf16>, vector<16x96xf32> -> vector<16x96xf32>
    %c2_188 = arith.constant 2 : index
    %c0_189 = arith.constant 0 : index
    %c0_190 = arith.constant 0 : index
    %369 = vector.load %arg9[%c2_188, %c0_189, %c0_190] : memref<4x1x96xf32, #tpu.memory_space<vmem>>, vector<1x1x96xf32>
    %370 = vector.shape_cast %369 : vector<1x1x96xf32> to vector<1x96xf32>
    %371 = vector.broadcast %370 : vector<1x96xf32> to vector<16x96xf32>
    %372 = arith.addf %368, %371 : vector<16x96xf32>
    %373 = vector.extract_strided_slice %372 {offsets = [0, 0], sizes = [16, 32], strides = [1, 1]} : vector<16x96xf32> to vector<16x32xf32>
    %374 = vector.extract_strided_slice %372 {offsets = [0, 32], sizes = [16, 32], strides = [1, 1]} : vector<16x96xf32> to vector<16x32xf32>
    %375 = vector.extract_strided_slice %372 {offsets = [0, 64], sizes = [16, 32], strides = [1, 1]} : vector<16x96xf32> to vector<16x32xf32>
    %c2_191 = arith.constant 2 : index
    %c0_192 = arith.constant 0 : index
    %c0_193 = arith.constant 0 : index
    %376 = vector.load %arg10[%c2_191, %c0_192, %c0_193] : memref<4x1x32xf32, #tpu.memory_space<vmem>>, vector<1x1x32xf32>
    %377 = vector.shape_cast %376 : vector<1x1x32xf32> to vector<1x32xf32>
    %c2_194 = arith.constant 2 : index
    %c0_195 = arith.constant 0 : index
    %c0_196 = arith.constant 0 : index
    %378 = vector.load %arg11[%c2_194, %c0_195, %c0_196] : memref<4x1x32xf32, #tpu.memory_space<vmem>>, vector<1x1x32xf32>
    %379 = vector.shape_cast %378 : vector<1x1x32xf32> to vector<1x32xf32>
    %cst_197 = arith.constant dense<0.000000e+00> : vector<16x32xf32>
    %380 = tpu.matmul %373, %16, %cst_197 {dimension_numbers = #tpu.dot_dimension_numbers<[1], [0], [0], [1], [0, 0, 1, 1], [], []>} : vector<16x32xf32>, vector<32x32xf32>, vector<16x32xf32> -> vector<16x32xf32>
    %381 = arith.subf %373, %380 : vector<16x32xf32>
    %382 = arith.mulf %381, %381 : vector<16x32xf32>
    %cst_198 = arith.constant dense<0.000000e+00> : vector<16x32xf32>
    %383 = tpu.matmul %382, %16, %cst_198 {dimension_numbers = #tpu.dot_dimension_numbers<[1], [0], [0], [1], [0, 0, 1, 1], [], []>} : vector<16x32xf32>, vector<32x32xf32>, vector<16x32xf32> -> vector<16x32xf32>
    %cst_199 = arith.constant 9.99999974E-6 : f32
    %384 = vector.broadcast %cst_199 : f32 to vector<16x32xf32>
    %385 = arith.addf %383, %384 : vector<16x32xf32>
    %386 = math.rsqrt %385 : vector<16x32xf32>
    %387 = arith.mulf %381, %386 : vector<16x32xf32>
    %388 = vector.broadcast %377 : vector<1x32xf32> to vector<16x32xf32>
    %389 = arith.mulf %387, %388 : vector<16x32xf32>
    %390 = vector.broadcast %379 : vector<1x32xf32> to vector<16x32xf32>
    %391 = arith.addf %389, %390 : vector<16x32xf32>
    %c2_200 = arith.constant 2 : index
    %c0_201 = arith.constant 0 : index
    %c0_202 = arith.constant 0 : index
    %392 = vector.load %arg12[%c2_200, %c0_201, %c0_202] : memref<4x1x32xf32, #tpu.memory_space<vmem>>, vector<1x1x32xf32>
    %393 = vector.shape_cast %392 : vector<1x1x32xf32> to vector<1x32xf32>
    %c2_203 = arith.constant 2 : index
    %c0_204 = arith.constant 0 : index
    %c0_205 = arith.constant 0 : index
    %394 = vector.load %arg13[%c2_203, %c0_204, %c0_205] : memref<4x1x32xf32, #tpu.memory_space<vmem>>, vector<1x1x32xf32>
    %395 = vector.shape_cast %394 : vector<1x1x32xf32> to vector<1x32xf32>
    %cst_206 = arith.constant dense<0.000000e+00> : vector<16x32xf32>
    %396 = tpu.matmul %374, %16, %cst_206 {dimension_numbers = #tpu.dot_dimension_numbers<[1], [0], [0], [1], [0, 0, 1, 1], [], []>} : vector<16x32xf32>, vector<32x32xf32>, vector<16x32xf32> -> vector<16x32xf32>
    %397 = arith.subf %374, %396 : vector<16x32xf32>
    %398 = arith.mulf %397, %397 : vector<16x32xf32>
    %cst_207 = arith.constant dense<0.000000e+00> : vector<16x32xf32>
    %399 = tpu.matmul %398, %16, %cst_207 {dimension_numbers = #tpu.dot_dimension_numbers<[1], [0], [0], [1], [0, 0, 1, 1], [], []>} : vector<16x32xf32>, vector<32x32xf32>, vector<16x32xf32> -> vector<16x32xf32>
    %cst_208 = arith.constant 9.99999974E-6 : f32
    %400 = vector.broadcast %cst_208 : f32 to vector<16x32xf32>
    %401 = arith.addf %399, %400 : vector<16x32xf32>
    %402 = math.rsqrt %401 : vector<16x32xf32>
    %403 = arith.mulf %397, %402 : vector<16x32xf32>
    %404 = vector.broadcast %393 : vector<1x32xf32> to vector<16x32xf32>
    %405 = arith.mulf %403, %404 : vector<16x32xf32>
    %406 = vector.broadcast %395 : vector<1x32xf32> to vector<16x32xf32>
    %407 = arith.addf %405, %406 : vector<16x32xf32>
    %408 = arith.truncf %407 : vector<16x32xf32> to vector<16x32xbf16>
    %409 = arith.truncf %375 : vector<16x32xf32> to vector<16x32xbf16>
    %cst_209 = arith.constant dense<0.000000e+00> : vector<32x32xf32>
    %410 = tpu.matmul %408, %409, %cst_209 {dimension_numbers = #tpu.dot_dimension_numbers<[0], [0], [1], [1], [0, 1, 1, 1], [], []>} : vector<16x32xbf16>, vector<16x32xbf16>, vector<32x32xf32> -> vector<32x32xf32>
    %411 = arith.mulf %410, %17 : vector<32x32xf32>
    %412 = arith.truncf %391 : vector<16x32xf32> to vector<16x32xbf16>
    %413 = arith.truncf %411 : vector<32x32xf32> to vector<32x32xbf16>
    %cst_210 = arith.constant dense<0.000000e+00> : vector<16x32xf32>
    %414 = tpu.matmul %412, %413, %cst_210 {dimension_numbers = #tpu.dot_dimension_numbers<[1], [0], [0], [1], [0, 0, 1, 1], [], []>} : vector<16x32xbf16>, vector<32x32xbf16>, vector<16x32xf32> -> vector<16x32xf32>
    %cst_211 = arith.constant 6.250000e-02 : f32
    %415 = vector.broadcast %cst_211 : f32 to vector<16x32xf32>
    %416 = arith.mulf %414, %415 : vector<16x32xf32>
    %c2_212 = arith.constant 2 : index
    %c0_213 = arith.constant 0 : index
    %c0_214 = arith.constant 0 : index
    %417 = vector.load %arg14[%c2_212, %c0_213, %c0_214] : memref<4x32x32xf32, #tpu.memory_space<vmem>>, vector<1x32x32xf32>
    %418 = vector.shape_cast %417 : vector<1x32x32xf32> to vector<32x32xf32>
    %419 = arith.truncf %416 : vector<16x32xf32> to vector<16x32xbf16>
    %420 = arith.truncf %418 : vector<32x32xf32> to vector<32x32xbf16>
    %cst_215 = arith.constant dense<0.000000e+00> : vector<16x32xf32>
    %421 = tpu.matmul %419, %420, %cst_215 {dimension_numbers = #tpu.dot_dimension_numbers<[1], [0], [0], [1], [0, 0, 1, 1], [], []>} : vector<16x32xbf16>, vector<32x32xbf16>, vector<16x32xf32> -> vector<16x32xf32>
    %c2_216 = arith.constant 2 : index
    %c0_217 = arith.constant 0 : index
    %c0_218 = arith.constant 0 : index
    %422 = vector.load %arg15[%c2_216, %c0_217, %c0_218] : memref<4x1x32xf32, #tpu.memory_space<vmem>>, vector<1x1x32xf32>
    %423 = vector.shape_cast %422 : vector<1x1x32xf32> to vector<1x32xf32>
    %424 = vector.broadcast %423 : vector<1x32xf32> to vector<16x32xf32>
    %425 = arith.addf %421, %424 : vector<16x32xf32>
    %426 = arith.addf %363, %425 : vector<16x32xf32>
    %c2_219 = arith.constant 2 : index
    %c0_220 = arith.constant 0 : index
    %c0_221 = arith.constant 0 : index
    %427 = vector.load %arg16[%c2_219, %c0_220, %c0_221] : memref<4x1x32xf32, #tpu.memory_space<vmem>>, vector<1x1x32xf32>
    %428 = vector.shape_cast %427 : vector<1x1x32xf32> to vector<1x32xf32>
    %c2_222 = arith.constant 2 : index
    %c0_223 = arith.constant 0 : index
    %c0_224 = arith.constant 0 : index
    %429 = vector.load %arg17[%c2_222, %c0_223, %c0_224] : memref<4x1x32xf32, #tpu.memory_space<vmem>>, vector<1x1x32xf32>
    %430 = vector.shape_cast %429 : vector<1x1x32xf32> to vector<1x32xf32>
    %cst_225 = arith.constant dense<0.000000e+00> : vector<16xf32>
    %431 = vector.multi_reduction <add>, %426, %cst_225 [1] : vector<16x32xf32> to vector<16xf32>
    %432 = vector.shape_cast %431 : vector<16xf32> to vector<16x1xf32>
    %cst_226 = arith.constant 3.200000e+01 : f32
    %433 = vector.broadcast %cst_226 : f32 to vector<16x1xf32>
    %434 = arith.divf %432, %433 : vector<16x1xf32>
    %435 = vector.broadcast %434 : vector<16x1xf32> to vector<16x32xf32>
    %436 = arith.subf %426, %435 : vector<16x32xf32>
    %437 = arith.mulf %436, %436 : vector<16x32xf32>
    %cst_227 = arith.constant dense<0.000000e+00> : vector<16xf32>
    %438 = vector.multi_reduction <add>, %437, %cst_227 [1] : vector<16x32xf32> to vector<16xf32>
    %439 = vector.shape_cast %438 : vector<16xf32> to vector<16x1xf32>
    %cst_228 = arith.constant 3.200000e+01 : f32
    %440 = vector.broadcast %cst_228 : f32 to vector<16x1xf32>
    %441 = arith.divf %439, %440 : vector<16x1xf32>
    %cst_229 = arith.constant 9.99999974E-6 : f32
    %442 = vector.broadcast %cst_229 : f32 to vector<16x1xf32>
    %443 = arith.addf %441, %442 : vector<16x1xf32>
    %444 = math.rsqrt %443 : vector<16x1xf32>
    %445 = vector.broadcast %444 : vector<16x1xf32> to vector<16x32xf32>
    %446 = arith.mulf %436, %445 : vector<16x32xf32>
    %447 = vector.broadcast %428 : vector<1x32xf32> to vector<16x32xf32>
    %448 = arith.mulf %446, %447 : vector<16x32xf32>
    %449 = vector.broadcast %430 : vector<1x32xf32> to vector<16x32xf32>
    %450 = arith.addf %448, %449 : vector<16x32xf32>
    %c2_230 = arith.constant 2 : index
    %c0_231 = arith.constant 0 : index
    %c0_232 = arith.constant 0 : index
    %451 = vector.load %arg18[%c2_230, %c0_231, %c0_232] : memref<4x32x32xf32, #tpu.memory_space<vmem>>, vector<1x32x32xf32>
    %452 = vector.shape_cast %451 : vector<1x32x32xf32> to vector<32x32xf32>
    %453 = arith.truncf %450 : vector<16x32xf32> to vector<16x32xbf16>
    %454 = arith.truncf %452 : vector<32x32xf32> to vector<32x32xbf16>
    %cst_233 = arith.constant dense<0.000000e+00> : vector<16x32xf32>
    %455 = tpu.matmul %453, %454, %cst_233 {dimension_numbers = #tpu.dot_dimension_numbers<[1], [0], [0], [1], [0, 0, 1, 1], [], []>} : vector<16x32xbf16>, vector<32x32xbf16>, vector<16x32xf32> -> vector<16x32xf32>
    %c2_234 = arith.constant 2 : index
    %c0_235 = arith.constant 0 : index
    %c0_236 = arith.constant 0 : index
    %456 = vector.load %arg19[%c2_234, %c0_235, %c0_236] : memref<4x1x32xf32, #tpu.memory_space<vmem>>, vector<1x1x32xf32>
    %457 = vector.shape_cast %456 : vector<1x1x32xf32> to vector<1x32xf32>
    %458 = vector.broadcast %457 : vector<1x32xf32> to vector<16x32xf32>
    %459 = arith.addf %455, %458 : vector<16x32xf32>
    %cst_237 = arith.constant 0.000000e+00 : f32
    %460 = vector.broadcast %cst_237 : f32 to vector<16x32xf32>
    %461 = arith.maximumf %459, %460 : vector<16x32xf32>
    %c2_238 = arith.constant 2 : index
    %c0_239 = arith.constant 0 : index
    %c0_240 = arith.constant 0 : index
    %462 = vector.load %arg20[%c2_238, %c0_239, %c0_240] : memref<4x32x32xf32, #tpu.memory_space<vmem>>, vector<1x32x32xf32>
    %463 = vector.shape_cast %462 : vector<1x32x32xf32> to vector<32x32xf32>
    %464 = arith.truncf %461 : vector<16x32xf32> to vector<16x32xbf16>
    %465 = arith.truncf %463 : vector<32x32xf32> to vector<32x32xbf16>
    %cst_241 = arith.constant dense<0.000000e+00> : vector<16x32xf32>
    %466 = tpu.matmul %464, %465, %cst_241 {dimension_numbers = #tpu.dot_dimension_numbers<[1], [0], [0], [1], [0, 0, 1, 1], [], []>} : vector<16x32xbf16>, vector<32x32xbf16>, vector<16x32xf32> -> vector<16x32xf32>
    %c2_242 = arith.constant 2 : index
    %c0_243 = arith.constant 0 : index
    %c0_244 = arith.constant 0 : index
    %467 = vector.load %arg21[%c2_242, %c0_243, %c0_244] : memref<4x1x32xf32, #tpu.memory_space<vmem>>, vector<1x1x32xf32>
    %468 = vector.shape_cast %467 : vector<1x1x32xf32> to vector<1x32xf32>
    %469 = vector.broadcast %468 : vector<1x32xf32> to vector<16x32xf32>
    %470 = arith.addf %466, %469 : vector<16x32xf32>
    %471 = arith.addf %450, %470 : vector<16x32xf32>
    %c2_245 = arith.constant 2 : index
    %c0_246 = arith.constant 0 : index
    %c0_247 = arith.constant 0 : index
    %472 = vector.load %arg22[%c2_245, %c0_246, %c0_247] : memref<4x1x32xf32, #tpu.memory_space<vmem>>, vector<1x1x32xf32>
    %473 = vector.shape_cast %472 : vector<1x1x32xf32> to vector<1x32xf32>
    %c2_248 = arith.constant 2 : index
    %c0_249 = arith.constant 0 : index
    %c0_250 = arith.constant 0 : index
    %474 = vector.load %arg23[%c2_248, %c0_249, %c0_250] : memref<4x1x32xf32, #tpu.memory_space<vmem>>, vector<1x1x32xf32>
    %475 = vector.shape_cast %474 : vector<1x1x32xf32> to vector<1x32xf32>
    %cst_251 = arith.constant dense<0.000000e+00> : vector<16xf32>
    %476 = vector.multi_reduction <add>, %471, %cst_251 [1] : vector<16x32xf32> to vector<16xf32>
    %477 = vector.shape_cast %476 : vector<16xf32> to vector<16x1xf32>
    %cst_252 = arith.constant 3.200000e+01 : f32
    %478 = vector.broadcast %cst_252 : f32 to vector<16x1xf32>
    %479 = arith.divf %477, %478 : vector<16x1xf32>
    %480 = vector.broadcast %479 : vector<16x1xf32> to vector<16x32xf32>
    %481 = arith.subf %471, %480 : vector<16x32xf32>
    %482 = arith.mulf %481, %481 : vector<16x32xf32>
    %cst_253 = arith.constant dense<0.000000e+00> : vector<16xf32>
    %483 = vector.multi_reduction <add>, %482, %cst_253 [1] : vector<16x32xf32> to vector<16xf32>
    %484 = vector.shape_cast %483 : vector<16xf32> to vector<16x1xf32>
    %cst_254 = arith.constant 3.200000e+01 : f32
    %485 = vector.broadcast %cst_254 : f32 to vector<16x1xf32>
    %486 = arith.divf %484, %485 : vector<16x1xf32>
    %cst_255 = arith.constant 9.99999974E-6 : f32
    %487 = vector.broadcast %cst_255 : f32 to vector<16x1xf32>
    %488 = arith.addf %486, %487 : vector<16x1xf32>
    %489 = math.rsqrt %488 : vector<16x1xf32>
    %490 = vector.broadcast %489 : vector<16x1xf32> to vector<16x32xf32>
    %491 = arith.mulf %481, %490 : vector<16x32xf32>
    %492 = vector.broadcast %473 : vector<1x32xf32> to vector<16x32xf32>
    %493 = arith.mulf %491, %492 : vector<16x32xf32>
    %494 = vector.broadcast %475 : vector<1x32xf32> to vector<16x32xf32>
    %495 = arith.addf %493, %494 : vector<16x32xf32>
    %c3 = arith.constant 3 : index
    %c0_256 = arith.constant 0 : index
    %c0_257 = arith.constant 0 : index
    %c0_258 = arith.constant 0 : index
    %496 = vector.load %arg6[%c3, %c0_256, %c0_257, %c0_258] : memref<4x3x32x32xf32, #tpu.memory_space<vmem>>, vector<1x3x32x32xf32>
    %497 = vector.shape_cast %496 : vector<1x3x32x32xf32> to vector<3x32x32xf32>
    %498 = tpu.concatenate %18, %495, %18 in 0 : vector<1x32xf32>, vector<16x32xf32>, vector<1x32xf32> -> vector<18x32xf32>
    %c3_259 = arith.constant 3 : index
    %c0_260 = arith.constant 0 : index
    %c0_261 = arith.constant 0 : index
    %499 = vector.load %arg7[%c3_259, %c0_260, %c0_261] : memref<4x1x32xf32, #tpu.memory_space<vmem>>, vector<1x1x32xf32>
    %500 = vector.shape_cast %499 : vector<1x1x32xf32> to vector<1x32xf32>
    %501 = vector.extract_strided_slice %498 {offsets = [0, 0], sizes = [16, 32], strides = [1, 1]} : vector<18x32xf32> to vector<16x32xf32>
    %502 = vector.extract_strided_slice %497 {offsets = [0, 0, 0], sizes = [1, 32, 32], strides = [1, 1, 1]} : vector<3x32x32xf32> to vector<1x32x32xf32>
    %503 = vector.shape_cast %502 : vector<1x32x32xf32> to vector<32x32xf32>
    %504 = arith.truncf %501 : vector<16x32xf32> to vector<16x32xbf16>
    %505 = arith.truncf %503 : vector<32x32xf32> to vector<32x32xbf16>
    %cst_262 = arith.constant dense<0.000000e+00> : vector<16x32xf32>
    %506 = tpu.matmul %504, %505, %cst_262 {dimension_numbers = #tpu.dot_dimension_numbers<[1], [0], [0], [1], [0, 0, 1, 1], [], []>} : vector<16x32xbf16>, vector<32x32xbf16>, vector<16x32xf32> -> vector<16x32xf32>
    %507 = vector.broadcast %500 : vector<1x32xf32> to vector<16x32xf32>
    %508 = arith.addf %507, %506 : vector<16x32xf32>
    %509 = vector.extract_strided_slice %498 {offsets = [1, 0], sizes = [16, 32], strides = [1, 1]} : vector<18x32xf32> to vector<16x32xf32>
    %510 = vector.extract_strided_slice %497 {offsets = [1, 0, 0], sizes = [1, 32, 32], strides = [1, 1, 1]} : vector<3x32x32xf32> to vector<1x32x32xf32>
    %511 = vector.shape_cast %510 : vector<1x32x32xf32> to vector<32x32xf32>
    %512 = arith.truncf %509 : vector<16x32xf32> to vector<16x32xbf16>
    %513 = arith.truncf %511 : vector<32x32xf32> to vector<32x32xbf16>
    %cst_263 = arith.constant dense<0.000000e+00> : vector<16x32xf32>
    %514 = tpu.matmul %512, %513, %cst_263 {dimension_numbers = #tpu.dot_dimension_numbers<[1], [0], [0], [1], [0, 0, 1, 1], [], []>} : vector<16x32xbf16>, vector<32x32xbf16>, vector<16x32xf32> -> vector<16x32xf32>
    %515 = arith.addf %508, %514 : vector<16x32xf32>
    %516 = vector.extract_strided_slice %498 {offsets = [2, 0], sizes = [16, 32], strides = [1, 1]} : vector<18x32xf32> to vector<16x32xf32>
    %517 = vector.extract_strided_slice %497 {offsets = [2, 0, 0], sizes = [1, 32, 32], strides = [1, 1, 1]} : vector<3x32x32xf32> to vector<1x32x32xf32>
    %518 = vector.shape_cast %517 : vector<1x32x32xf32> to vector<32x32xf32>
    %519 = arith.truncf %516 : vector<16x32xf32> to vector<16x32xbf16>
    %520 = arith.truncf %518 : vector<32x32xf32> to vector<32x32xbf16>
    %cst_264 = arith.constant dense<0.000000e+00> : vector<16x32xf32>
    %521 = tpu.matmul %519, %520, %cst_264 {dimension_numbers = #tpu.dot_dimension_numbers<[1], [0], [0], [1], [0, 0, 1, 1], [], []>} : vector<16x32xbf16>, vector<32x32xbf16>, vector<16x32xf32> -> vector<16x32xf32>
    %522 = arith.addf %515, %521 : vector<16x32xf32>
    %c3_265 = arith.constant 3 : index
    %c0_266 = arith.constant 0 : index
    %c0_267 = arith.constant 0 : index
    %523 = vector.load %arg8[%c3_265, %c0_266, %c0_267] : memref<4x32x96xf32, #tpu.memory_space<vmem>>, vector<1x32x96xf32>
    %524 = vector.shape_cast %523 : vector<1x32x96xf32> to vector<32x96xf32>
    %525 = arith.truncf %495 : vector<16x32xf32> to vector<16x32xbf16>
    %526 = arith.truncf %524 : vector<32x96xf32> to vector<32x96xbf16>
    %cst_268 = arith.constant dense<0.000000e+00> : vector<16x96xf32>
    %527 = tpu.matmul %525, %526, %cst_268 {dimension_numbers = #tpu.dot_dimension_numbers<[1], [0], [0], [1], [0, 0, 1, 1], [], []>} : vector<16x32xbf16>, vector<32x96xbf16>, vector<16x96xf32> -> vector<16x96xf32>
    %c3_269 = arith.constant 3 : index
    %c0_270 = arith.constant 0 : index
    %c0_271 = arith.constant 0 : index
    %528 = vector.load %arg9[%c3_269, %c0_270, %c0_271] : memref<4x1x96xf32, #tpu.memory_space<vmem>>, vector<1x1x96xf32>
    %529 = vector.shape_cast %528 : vector<1x1x96xf32> to vector<1x96xf32>
    %530 = vector.broadcast %529 : vector<1x96xf32> to vector<16x96xf32>
    %531 = arith.addf %527, %530 : vector<16x96xf32>
    %532 = vector.extract_strided_slice %531 {offsets = [0, 0], sizes = [16, 32], strides = [1, 1]} : vector<16x96xf32> to vector<16x32xf32>
    %533 = vector.extract_strided_slice %531 {offsets = [0, 32], sizes = [16, 32], strides = [1, 1]} : vector<16x96xf32> to vector<16x32xf32>
    %534 = vector.extract_strided_slice %531 {offsets = [0, 64], sizes = [16, 32], strides = [1, 1]} : vector<16x96xf32> to vector<16x32xf32>
    %c3_272 = arith.constant 3 : index
    %c0_273 = arith.constant 0 : index
    %c0_274 = arith.constant 0 : index
    %535 = vector.load %arg10[%c3_272, %c0_273, %c0_274] : memref<4x1x32xf32, #tpu.memory_space<vmem>>, vector<1x1x32xf32>
    %536 = vector.shape_cast %535 : vector<1x1x32xf32> to vector<1x32xf32>
    %c3_275 = arith.constant 3 : index
    %c0_276 = arith.constant 0 : index
    %c0_277 = arith.constant 0 : index
    %537 = vector.load %arg11[%c3_275, %c0_276, %c0_277] : memref<4x1x32xf32, #tpu.memory_space<vmem>>, vector<1x1x32xf32>
    %538 = vector.shape_cast %537 : vector<1x1x32xf32> to vector<1x32xf32>
    %cst_278 = arith.constant dense<0.000000e+00> : vector<16x32xf32>
    %539 = tpu.matmul %532, %16, %cst_278 {dimension_numbers = #tpu.dot_dimension_numbers<[1], [0], [0], [1], [0, 0, 1, 1], [], []>} : vector<16x32xf32>, vector<32x32xf32>, vector<16x32xf32> -> vector<16x32xf32>
    %540 = arith.subf %532, %539 : vector<16x32xf32>
    %541 = arith.mulf %540, %540 : vector<16x32xf32>
    %cst_279 = arith.constant dense<0.000000e+00> : vector<16x32xf32>
    %542 = tpu.matmul %541, %16, %cst_279 {dimension_numbers = #tpu.dot_dimension_numbers<[1], [0], [0], [1], [0, 0, 1, 1], [], []>} : vector<16x32xf32>, vector<32x32xf32>, vector<16x32xf32> -> vector<16x32xf32>
    %cst_280 = arith.constant 9.99999974E-6 : f32
    %543 = vector.broadcast %cst_280 : f32 to vector<16x32xf32>
    %544 = arith.addf %542, %543 : vector<16x32xf32>
    %545 = math.rsqrt %544 : vector<16x32xf32>
    %546 = arith.mulf %540, %545 : vector<16x32xf32>
    %547 = vector.broadcast %536 : vector<1x32xf32> to vector<16x32xf32>
    %548 = arith.mulf %546, %547 : vector<16x32xf32>
    %549 = vector.broadcast %538 : vector<1x32xf32> to vector<16x32xf32>
    %550 = arith.addf %548, %549 : vector<16x32xf32>
    %c3_281 = arith.constant 3 : index
    %c0_282 = arith.constant 0 : index
    %c0_283 = arith.constant 0 : index
    %551 = vector.load %arg12[%c3_281, %c0_282, %c0_283] : memref<4x1x32xf32, #tpu.memory_space<vmem>>, vector<1x1x32xf32>
    %552 = vector.shape_cast %551 : vector<1x1x32xf32> to vector<1x32xf32>
    %c3_284 = arith.constant 3 : index
    %c0_285 = arith.constant 0 : index
    %c0_286 = arith.constant 0 : index
    %553 = vector.load %arg13[%c3_284, %c0_285, %c0_286] : memref<4x1x32xf32, #tpu.memory_space<vmem>>, vector<1x1x32xf32>
    %554 = vector.shape_cast %553 : vector<1x1x32xf32> to vector<1x32xf32>
    %cst_287 = arith.constant dense<0.000000e+00> : vector<16x32xf32>
    %555 = tpu.matmul %533, %16, %cst_287 {dimension_numbers = #tpu.dot_dimension_numbers<[1], [0], [0], [1], [0, 0, 1, 1], [], []>} : vector<16x32xf32>, vector<32x32xf32>, vector<16x32xf32> -> vector<16x32xf32>
    %556 = arith.subf %533, %555 : vector<16x32xf32>
    %557 = arith.mulf %556, %556 : vector<16x32xf32>
    %cst_288 = arith.constant dense<0.000000e+00> : vector<16x32xf32>
    %558 = tpu.matmul %557, %16, %cst_288 {dimension_numbers = #tpu.dot_dimension_numbers<[1], [0], [0], [1], [0, 0, 1, 1], [], []>} : vector<16x32xf32>, vector<32x32xf32>, vector<16x32xf32> -> vector<16x32xf32>
    %cst_289 = arith.constant 9.99999974E-6 : f32
    %559 = vector.broadcast %cst_289 : f32 to vector<16x32xf32>
    %560 = arith.addf %558, %559 : vector<16x32xf32>
    %561 = math.rsqrt %560 : vector<16x32xf32>
    %562 = arith.mulf %556, %561 : vector<16x32xf32>
    %563 = vector.broadcast %552 : vector<1x32xf32> to vector<16x32xf32>
    %564 = arith.mulf %562, %563 : vector<16x32xf32>
    %565 = vector.broadcast %554 : vector<1x32xf32> to vector<16x32xf32>
    %566 = arith.addf %564, %565 : vector<16x32xf32>
    %567 = arith.truncf %566 : vector<16x32xf32> to vector<16x32xbf16>
    %568 = arith.truncf %534 : vector<16x32xf32> to vector<16x32xbf16>
    %cst_290 = arith.constant dense<0.000000e+00> : vector<32x32xf32>
    %569 = tpu.matmul %567, %568, %cst_290 {dimension_numbers = #tpu.dot_dimension_numbers<[0], [0], [1], [1], [0, 1, 1, 1], [], []>} : vector<16x32xbf16>, vector<16x32xbf16>, vector<32x32xf32> -> vector<32x32xf32>
    %570 = arith.mulf %569, %17 : vector<32x32xf32>
    %571 = arith.truncf %550 : vector<16x32xf32> to vector<16x32xbf16>
    %572 = arith.truncf %570 : vector<32x32xf32> to vector<32x32xbf16>
    %cst_291 = arith.constant dense<0.000000e+00> : vector<16x32xf32>
    %573 = tpu.matmul %571, %572, %cst_291 {dimension_numbers = #tpu.dot_dimension_numbers<[1], [0], [0], [1], [0, 0, 1, 1], [], []>} : vector<16x32xbf16>, vector<32x32xbf16>, vector<16x32xf32> -> vector<16x32xf32>
    %cst_292 = arith.constant 6.250000e-02 : f32
    %574 = vector.broadcast %cst_292 : f32 to vector<16x32xf32>
    %575 = arith.mulf %573, %574 : vector<16x32xf32>
    %c3_293 = arith.constant 3 : index
    %c0_294 = arith.constant 0 : index
    %c0_295 = arith.constant 0 : index
    %576 = vector.load %arg14[%c3_293, %c0_294, %c0_295] : memref<4x32x32xf32, #tpu.memory_space<vmem>>, vector<1x32x32xf32>
    %577 = vector.shape_cast %576 : vector<1x32x32xf32> to vector<32x32xf32>
    %578 = arith.truncf %575 : vector<16x32xf32> to vector<16x32xbf16>
    %579 = arith.truncf %577 : vector<32x32xf32> to vector<32x32xbf16>
    %cst_296 = arith.constant dense<0.000000e+00> : vector<16x32xf32>
    %580 = tpu.matmul %578, %579, %cst_296 {dimension_numbers = #tpu.dot_dimension_numbers<[1], [0], [0], [1], [0, 0, 1, 1], [], []>} : vector<16x32xbf16>, vector<32x32xbf16>, vector<16x32xf32> -> vector<16x32xf32>
    %c3_297 = arith.constant 3 : index
    %c0_298 = arith.constant 0 : index
    %c0_299 = arith.constant 0 : index
    %581 = vector.load %arg15[%c3_297, %c0_298, %c0_299] : memref<4x1x32xf32, #tpu.memory_space<vmem>>, vector<1x1x32xf32>
    %582 = vector.shape_cast %581 : vector<1x1x32xf32> to vector<1x32xf32>
    %583 = vector.broadcast %582 : vector<1x32xf32> to vector<16x32xf32>
    %584 = arith.addf %580, %583 : vector<16x32xf32>
    %585 = arith.addf %522, %584 : vector<16x32xf32>
    %c3_300 = arith.constant 3 : index
    %c0_301 = arith.constant 0 : index
    %c0_302 = arith.constant 0 : index
    %586 = vector.load %arg16[%c3_300, %c0_301, %c0_302] : memref<4x1x32xf32, #tpu.memory_space<vmem>>, vector<1x1x32xf32>
    %587 = vector.shape_cast %586 : vector<1x1x32xf32> to vector<1x32xf32>
    %c3_303 = arith.constant 3 : index
    %c0_304 = arith.constant 0 : index
    %c0_305 = arith.constant 0 : index
    %588 = vector.load %arg17[%c3_303, %c0_304, %c0_305] : memref<4x1x32xf32, #tpu.memory_space<vmem>>, vector<1x1x32xf32>
    %589 = vector.shape_cast %588 : vector<1x1x32xf32> to vector<1x32xf32>
    %cst_306 = arith.constant dense<0.000000e+00> : vector<16xf32>
    %590 = vector.multi_reduction <add>, %585, %cst_306 [1] : vector<16x32xf32> to vector<16xf32>
    %591 = vector.shape_cast %590 : vector<16xf32> to vector<16x1xf32>
    %cst_307 = arith.constant 3.200000e+01 : f32
    %592 = vector.broadcast %cst_307 : f32 to vector<16x1xf32>
    %593 = arith.divf %591, %592 : vector<16x1xf32>
    %594 = vector.broadcast %593 : vector<16x1xf32> to vector<16x32xf32>
    %595 = arith.subf %585, %594 : vector<16x32xf32>
    %596 = arith.mulf %595, %595 : vector<16x32xf32>
    %cst_308 = arith.constant dense<0.000000e+00> : vector<16xf32>
    %597 = vector.multi_reduction <add>, %596, %cst_308 [1] : vector<16x32xf32> to vector<16xf32>
    %598 = vector.shape_cast %597 : vector<16xf32> to vector<16x1xf32>
    %cst_309 = arith.constant 3.200000e+01 : f32
    %599 = vector.broadcast %cst_309 : f32 to vector<16x1xf32>
    %600 = arith.divf %598, %599 : vector<16x1xf32>
    %cst_310 = arith.constant 9.99999974E-6 : f32
    %601 = vector.broadcast %cst_310 : f32 to vector<16x1xf32>
    %602 = arith.addf %600, %601 : vector<16x1xf32>
    %603 = math.rsqrt %602 : vector<16x1xf32>
    %604 = vector.broadcast %603 : vector<16x1xf32> to vector<16x32xf32>
    %605 = arith.mulf %595, %604 : vector<16x32xf32>
    %606 = vector.broadcast %587 : vector<1x32xf32> to vector<16x32xf32>
    %607 = arith.mulf %605, %606 : vector<16x32xf32>
    %608 = vector.broadcast %589 : vector<1x32xf32> to vector<16x32xf32>
    %609 = arith.addf %607, %608 : vector<16x32xf32>
    %c3_311 = arith.constant 3 : index
    %c0_312 = arith.constant 0 : index
    %c0_313 = arith.constant 0 : index
    %610 = vector.load %arg18[%c3_311, %c0_312, %c0_313] : memref<4x32x32xf32, #tpu.memory_space<vmem>>, vector<1x32x32xf32>
    %611 = vector.shape_cast %610 : vector<1x32x32xf32> to vector<32x32xf32>
    %612 = arith.truncf %609 : vector<16x32xf32> to vector<16x32xbf16>
    %613 = arith.truncf %611 : vector<32x32xf32> to vector<32x32xbf16>
    %cst_314 = arith.constant dense<0.000000e+00> : vector<16x32xf32>
    %614 = tpu.matmul %612, %613, %cst_314 {dimension_numbers = #tpu.dot_dimension_numbers<[1], [0], [0], [1], [0, 0, 1, 1], [], []>} : vector<16x32xbf16>, vector<32x32xbf16>, vector<16x32xf32> -> vector<16x32xf32>
    %c3_315 = arith.constant 3 : index
    %c0_316 = arith.constant 0 : index
    %c0_317 = arith.constant 0 : index
    %615 = vector.load %arg19[%c3_315, %c0_316, %c0_317] : memref<4x1x32xf32, #tpu.memory_space<vmem>>, vector<1x1x32xf32>
    %616 = vector.shape_cast %615 : vector<1x1x32xf32> to vector<1x32xf32>
    %617 = vector.broadcast %616 : vector<1x32xf32> to vector<16x32xf32>
    %618 = arith.addf %614, %617 : vector<16x32xf32>
    %cst_318 = arith.constant 0.000000e+00 : f32
    %619 = vector.broadcast %cst_318 : f32 to vector<16x32xf32>
    %620 = arith.maximumf %618, %619 : vector<16x32xf32>
    %c3_319 = arith.constant 3 : index
    %c0_320 = arith.constant 0 : index
    %c0_321 = arith.constant 0 : index
    %621 = vector.load %arg20[%c3_319, %c0_320, %c0_321] : memref<4x32x32xf32, #tpu.memory_space<vmem>>, vector<1x32x32xf32>
    %622 = vector.shape_cast %621 : vector<1x32x32xf32> to vector<32x32xf32>
    %623 = arith.truncf %620 : vector<16x32xf32> to vector<16x32xbf16>
    %624 = arith.truncf %622 : vector<32x32xf32> to vector<32x32xbf16>
    %cst_322 = arith.constant dense<0.000000e+00> : vector<16x32xf32>
    %625 = tpu.matmul %623, %624, %cst_322 {dimension_numbers = #tpu.dot_dimension_numbers<[1], [0], [0], [1], [0, 0, 1, 1], [], []>} : vector<16x32xbf16>, vector<32x32xbf16>, vector<16x32xf32> -> vector<16x32xf32>
    %c3_323 = arith.constant 3 : index
    %c0_324 = arith.constant 0 : index
    %c0_325 = arith.constant 0 : index
    %626 = vector.load %arg21[%c3_323, %c0_324, %c0_325] : memref<4x1x32xf32, #tpu.memory_space<vmem>>, vector<1x1x32xf32>
    %627 = vector.shape_cast %626 : vector<1x1x32xf32> to vector<1x32xf32>
    %628 = vector.broadcast %627 : vector<1x32xf32> to vector<16x32xf32>
    %629 = arith.addf %625, %628 : vector<16x32xf32>
    %630 = arith.addf %609, %629 : vector<16x32xf32>
    %c3_326 = arith.constant 3 : index
    %c0_327 = arith.constant 0 : index
    %c0_328 = arith.constant 0 : index
    %631 = vector.load %arg22[%c3_326, %c0_327, %c0_328] : memref<4x1x32xf32, #tpu.memory_space<vmem>>, vector<1x1x32xf32>
    %632 = vector.shape_cast %631 : vector<1x1x32xf32> to vector<1x32xf32>
    %c3_329 = arith.constant 3 : index
    %c0_330 = arith.constant 0 : index
    %c0_331 = arith.constant 0 : index
    %633 = vector.load %arg23[%c3_329, %c0_330, %c0_331] : memref<4x1x32xf32, #tpu.memory_space<vmem>>, vector<1x1x32xf32>
    %634 = vector.shape_cast %633 : vector<1x1x32xf32> to vector<1x32xf32>
    %cst_332 = arith.constant dense<0.000000e+00> : vector<16xf32>
    %635 = vector.multi_reduction <add>, %630, %cst_332 [1] : vector<16x32xf32> to vector<16xf32>
    %636 = vector.shape_cast %635 : vector<16xf32> to vector<16x1xf32>
    %cst_333 = arith.constant 3.200000e+01 : f32
    %637 = vector.broadcast %cst_333 : f32 to vector<16x1xf32>
    %638 = arith.divf %636, %637 : vector<16x1xf32>
    %639 = vector.broadcast %638 : vector<16x1xf32> to vector<16x32xf32>
    %640 = arith.subf %630, %639 : vector<16x32xf32>
    %641 = arith.mulf %640, %640 : vector<16x32xf32>
    %cst_334 = arith.constant dense<0.000000e+00> : vector<16xf32>
    %642 = vector.multi_reduction <add>, %641, %cst_334 [1] : vector<16x32xf32> to vector<16xf32>
    %643 = vector.shape_cast %642 : vector<16xf32> to vector<16x1xf32>
    %cst_335 = arith.constant 3.200000e+01 : f32
    %644 = vector.broadcast %cst_335 : f32 to vector<16x1xf32>
    %645 = arith.divf %643, %644 : vector<16x1xf32>
    %cst_336 = arith.constant 9.99999974E-6 : f32
    %646 = vector.broadcast %cst_336 : f32 to vector<16x1xf32>
    %647 = arith.addf %645, %646 : vector<16x1xf32>
    %648 = math.rsqrt %647 : vector<16x1xf32>
    %649 = vector.broadcast %648 : vector<16x1xf32> to vector<16x32xf32>
    %650 = arith.mulf %640, %649 : vector<16x32xf32>
    %651 = vector.broadcast %632 : vector<1x32xf32> to vector<16x32xf32>
    %652 = arith.mulf %650, %651 : vector<16x32xf32>
    %653 = vector.broadcast %634 : vector<1x32xf32> to vector<16x32xf32>
    %654 = arith.addf %652, %653 : vector<16x32xf32>
    %c0_337 = arith.constant 0 : index
    %c0_338 = arith.constant 0 : index
    %655 = vector.load %arg24[%c0_337, %c0_338] : memref<32x64xf32, #tpu.memory_space<vmem>>, vector<32x64xf32>
    %656 = arith.truncf %654 : vector<16x32xf32> to vector<16x32xbf16>
    %657 = arith.truncf %655 : vector<32x64xf32> to vector<32x64xbf16>
    %cst_339 = arith.constant dense<0.000000e+00> : vector<16x64xf32>
    %658 = tpu.matmul %656, %657, %cst_339 {dimension_numbers = #tpu.dot_dimension_numbers<[1], [0], [0], [1], [0, 0, 1, 1], [], []>} : vector<16x32xbf16>, vector<32x64xbf16>, vector<16x64xf32> -> vector<16x64xf32>
    %c0_340 = arith.constant 0 : index
    %c0_341 = arith.constant 0 : index
    %659 = vector.load %arg25[%c0_340, %c0_341] : memref<1x64xf32, #tpu.memory_space<vmem>>, vector<1x64xf32>
    %660 = vector.broadcast %659 : vector<1x64xf32> to vector<16x64xf32>
    %661 = arith.addf %658, %660 : vector<16x64xf32>
    %cst_342 = arith.constant 0.000000e+00 : f32
    %662 = vector.broadcast %cst_342 : f32 to vector<16x64xf32>
    %663 = arith.maximumf %661, %662 : vector<16x64xf32>
    %c0_343 = arith.constant 0 : index
    %c0_344 = arith.constant 0 : index
    %664 = vector.load %arg26[%c0_343, %c0_344] : memref<1x64xf32, #tpu.memory_space<vmem>>, vector<1x64xf32>
    %665 = arith.truncf %664 : vector<1x64xf32> to vector<1x64xbf16>
    %666 = arith.truncf %663 : vector<16x64xf32> to vector<16x64xbf16>
    %cst_345 = arith.constant dense<0.000000e+00> : vector<1x16xf32>
    %667 = tpu.matmul %665, %666, %cst_345 {dimension_numbers = #tpu.dot_dimension_numbers<[1], [1], [0], [0], [0, 0, 1, 0], [], []>} : vector<1x64xbf16>, vector<16x64xbf16>, vector<1x16xf32> -> vector<1x16xf32>
    %c0_346 = arith.constant 0 : index
    %c0_347 = arith.constant 0 : index
    %668 = vector.load %arg27[%c0_346, %c0_347] : memref<1x1xf32, #tpu.memory_space<vmem>>, vector<1x1xf32>
    %669 = vector.broadcast %668 : vector<1x1xf32> to vector<1x16xf32>
    %670 = arith.addf %667, %669 : vector<1x16xf32>
    %c0_348 = arith.constant 0 : index
    %c0_349 = arith.constant 0 : index
    %c0_350 = arith.constant 0 : index
    %671 = vector.load %arg28[%c0_348, %c0_349, %c0_350] : memref<1x1x16xf32, #tpu.memory_space<vmem>>, vector<1x1x16xf32>
    %672 = vector.shape_cast %671 : vector<1x1x16xf32> to vector<1x16xf32>
    %673 = vector.shape_cast %670 : vector<1x16xf32> to vector<1x1x16xf32>
    tpu.vector_store %arg28[%c0_348, %c0_349, %c0_350], %673 {strides = array<i32>} : memref<1x1x16xf32, #tpu.memory_space<vmem>>, vector<1x1x16xf32>,
    return
  }
  func.func @transform_0(%arg0: i32) -> (i32, i32, i32) {
    %c0_i32 = arith.constant 0 : i32
    %c0_i32_0 = arith.constant 0 : i32
    %c0_i32_1 = arith.constant 0 : i32
    return %arg0, %c0_i32, %c0_i32_0 : i32, i32, i32
  }
  func.func @transform_1(%arg0: i32) -> (i32, i32) {
    %c0_i32 = arith.constant 0 : i32
    %c0_i32_0 = arith.constant 0 : i32
    %c0_i32_1 = arith.constant 0 : i32
    return %c0_i32, %c0_i32_0 : i32, i32
  }
  func.func @transform_2(%arg0: i32) -> (i32, i32) {
    %c0_i32 = arith.constant 0 : i32
    %c0_i32_0 = arith.constant 0 : i32
    %c0_i32_1 = arith.constant 0 : i32
    return %c0_i32, %c0_i32_0 : i32, i32
  }
  func.func @transform_3(%arg0: i32) -> (i32, i32) {
    %c0_i32 = arith.constant 0 : i32
    %c0_i32_0 = arith.constant 0 : i32
    %c0_i32_1 = arith.constant 0 : i32
    return %c0_i32, %c0_i32_0 : i32, i32
  }
  func.func @transform_4(%arg0: i32) -> (i32, i32) {
    %c0_i32 = arith.constant 0 : i32
    %c0_i32_0 = arith.constant 0 : i32
    %c0_i32_1 = arith.constant 0 : i32
    return %c0_i32, %c0_i32_0 : i32, i32
  }
  func.func @transform_5(%arg0: i32) -> (i32, i32, i32, i32) {
    %c0_i32 = arith.constant 0 : i32
    %c0_i32_0 = arith.constant 0 : i32
    %c0_i32_1 = arith.constant 0 : i32
    %c0_i32_2 = arith.constant 0 : i32
    %c0_i32_3 = arith.constant 0 : i32
    return %c0_i32, %c0_i32_0, %c0_i32_1, %c0_i32_2 : i32, i32, i32, i32
  }
  func.func @transform_6(%arg0: i32) -> (i32, i32, i32) {
    %c0_i32 = arith.constant 0 : i32
    %c0_i32_0 = arith.constant 0 : i32
    %c0_i32_1 = arith.constant 0 : i32
    %c0_i32_2 = arith.constant 0 : i32
    return %c0_i32, %c0_i32_0, %c0_i32_1 : i32, i32, i32
  }
  func.func @transform_7(%arg0: i32) -> (i32, i32, i32) {
    %c0_i32 = arith.constant 0 : i32
    %c0_i32_0 = arith.constant 0 : i32
    %c0_i32_1 = arith.constant 0 : i32
    %c0_i32_2 = arith.constant 0 : i32
    return %c0_i32, %c0_i32_0, %c0_i32_1 : i32, i32, i32
  }
  func.func @transform_8(%arg0: i32) -> (i32, i32, i32) {
    %c0_i32 = arith.constant 0 : i32
    %c0_i32_0 = arith.constant 0 : i32
    %c0_i32_1 = arith.constant 0 : i32
    %c0_i32_2 = arith.constant 0 : i32
    return %c0_i32, %c0_i32_0, %c0_i32_1 : i32, i32, i32
  }
  func.func @transform_9(%arg0: i32) -> (i32, i32, i32) {
    %c0_i32 = arith.constant 0 : i32
    %c0_i32_0 = arith.constant 0 : i32
    %c0_i32_1 = arith.constant 0 : i32
    %c0_i32_2 = arith.constant 0 : i32
    return %c0_i32, %c0_i32_0, %c0_i32_1 : i32, i32, i32
  }
  func.func @transform_10(%arg0: i32) -> (i32, i32, i32) {
    %c0_i32 = arith.constant 0 : i32
    %c0_i32_0 = arith.constant 0 : i32
    %c0_i32_1 = arith.constant 0 : i32
    %c0_i32_2 = arith.constant 0 : i32
    return %c0_i32, %c0_i32_0, %c0_i32_1 : i32, i32, i32
  }
  func.func @transform_11(%arg0: i32) -> (i32, i32, i32) {
    %c0_i32 = arith.constant 0 : i32
    %c0_i32_0 = arith.constant 0 : i32
    %c0_i32_1 = arith.constant 0 : i32
    %c0_i32_2 = arith.constant 0 : i32
    return %c0_i32, %c0_i32_0, %c0_i32_1 : i32, i32, i32
  }
  func.func @transform_12(%arg0: i32) -> (i32, i32, i32) {
    %c0_i32 = arith.constant 0 : i32
    %c0_i32_0 = arith.constant 0 : i32
    %c0_i32_1 = arith.constant 0 : i32
    %c0_i32_2 = arith.constant 0 : i32
    return %c0_i32, %c0_i32_0, %c0_i32_1 : i32, i32, i32
  }
  func.func @transform_13(%arg0: i32) -> (i32, i32, i32) {
    %c0_i32 = arith.constant 0 : i32
    %c0_i32_0 = arith.constant 0 : i32
    %c0_i32_1 = arith.constant 0 : i32
    %c0_i32_2 = arith.constant 0 : i32
    return %c0_i32, %c0_i32_0, %c0_i32_1 : i32, i32, i32
  }
  func.func @transform_14(%arg0: i32) -> (i32, i32, i32) {
    %c0_i32 = arith.constant 0 : i32
    %c0_i32_0 = arith.constant 0 : i32
    %c0_i32_1 = arith.constant 0 : i32
    %c0_i32_2 = arith.constant 0 : i32
    return %c0_i32, %c0_i32_0, %c0_i32_1 : i32, i32, i32
  }
  func.func @transform_15(%arg0: i32) -> (i32, i32, i32) {
    %c0_i32 = arith.constant 0 : i32
    %c0_i32_0 = arith.constant 0 : i32
    %c0_i32_1 = arith.constant 0 : i32
    %c0_i32_2 = arith.constant 0 : i32
    return %c0_i32, %c0_i32_0, %c0_i32_1 : i32, i32, i32
  }
  func.func @transform_16(%arg0: i32) -> (i32, i32, i32) {
    %c0_i32 = arith.constant 0 : i32
    %c0_i32_0 = arith.constant 0 : i32
    %c0_i32_1 = arith.constant 0 : i32
    %c0_i32_2 = arith.constant 0 : i32
    return %c0_i32, %c0_i32_0, %c0_i32_1 : i32, i32, i32
  }
  func.func @transform_17(%arg0: i32) -> (i32, i32, i32) {
    %c0_i32 = arith.constant 0 : i32
    %c0_i32_0 = arith.constant 0 : i32
    %c0_i32_1 = arith.constant 0 : i32
    %c0_i32_2 = arith.constant 0 : i32
    return %c0_i32, %c0_i32_0, %c0_i32_1 : i32, i32, i32
  }
  func.func @transform_18(%arg0: i32) -> (i32, i32, i32) {
    %c0_i32 = arith.constant 0 : i32
    %c0_i32_0 = arith.constant 0 : i32
    %c0_i32_1 = arith.constant 0 : i32
    %c0_i32_2 = arith.constant 0 : i32
    return %c0_i32, %c0_i32_0, %c0_i32_1 : i32, i32, i32
  }
  func.func @transform_19(%arg0: i32) -> (i32, i32, i32) {
    %c0_i32 = arith.constant 0 : i32
    %c0_i32_0 = arith.constant 0 : i32
    %c0_i32_1 = arith.constant 0 : i32
    %c0_i32_2 = arith.constant 0 : i32
    return %c0_i32, %c0_i32_0, %c0_i32_1 : i32, i32, i32
  }
  func.func @transform_20(%arg0: i32) -> (i32, i32, i32) {
    %c0_i32 = arith.constant 0 : i32
    %c0_i32_0 = arith.constant 0 : i32
    %c0_i32_1 = arith.constant 0 : i32
    %c0_i32_2 = arith.constant 0 : i32
    return %c0_i32, %c0_i32_0, %c0_i32_1 : i32, i32, i32
  }
  func.func @transform_21(%arg0: i32) -> (i32, i32, i32) {
    %c0_i32 = arith.constant 0 : i32
    %c0_i32_0 = arith.constant 0 : i32
    %c0_i32_1 = arith.constant 0 : i32
    %c0_i32_2 = arith.constant 0 : i32
    return %c0_i32, %c0_i32_0, %c0_i32_1 : i32, i32, i32
  }
  func.func @transform_22(%arg0: i32) -> (i32, i32, i32) {
    %c0_i32 = arith.constant 0 : i32
    %c0_i32_0 = arith.constant 0 : i32
    %c0_i32_1 = arith.constant 0 : i32
    %c0_i32_2 = arith.constant 0 : i32
    return %c0_i32, %c0_i32_0, %c0_i32_1 : i32, i32, i32
  }
  func.func @transform_23(%arg0: i32) -> (i32, i32) {
    %c0_i32 = arith.constant 0 : i32
    %c0_i32_0 = arith.constant 0 : i32
    %c0_i32_1 = arith.constant 0 : i32
    return %c0_i32, %c0_i32_0 : i32, i32
  }
  func.func @transform_24(%arg0: i32) -> (i32, i32) {
    %c0_i32 = arith.constant 0 : i32
    %c0_i32_0 = arith.constant 0 : i32
    %c0_i32_1 = arith.constant 0 : i32
    return %c0_i32, %c0_i32_0 : i32, i32
  }
  func.func @transform_25(%arg0: i32) -> (i32, i32) {
    %c0_i32 = arith.constant 0 : i32
    %c0_i32_0 = arith.constant 0 : i32
    %c0_i32_1 = arith.constant 0 : i32
    return %c0_i32, %c0_i32_0 : i32, i32
  }
  func.func @transform_26(%arg0: i32) -> (i32, i32) {
    %c0_i32 = arith.constant 0 : i32
    %c0_i32_0 = arith.constant 0 : i32
    %c0_i32_1 = arith.constant 0 : i32
    return %c0_i32, %c0_i32_0 : i32, i32
  }
  func.func @transform_27(%arg0: i32) -> (i32, i32, i32) {
    %c0_i32 = arith.constant 0 : i32
    %c0_i32_0 = arith.constant 0 : i32
    %c0_i32_1 = arith.constant 0 : i32
    return %arg0, %c0_i32, %c0_i32_0 : i32, i32, i32
  }
}

</mosaic_0001>

<llo_original>
// kernel: ft1d_forward.1
$region0: #{ft1d_forward.1}
  #allocation0 [shape = 'u32[]', space=smem, size = 0x4, offset = 0x4, fixed_abs, tag = 'smem constant byte address 0x4 - core index']
  #allocation1 [shape = 'u32[144,128]{1,0:T(1,128)}', space=vmem, size = 0x12000, scoped, tag = 'internal scratch']
  #allocation2 [shape = 'f32[1,1]{1,0:T(1,128)S(1)}', space=vmem, size = 0x200, scoped, tag = 'scoped memory for ft1d_forward.1']
  %s0 = inlined_call_operand.vmem [shape: f32[2,16,2], index: 0, kind: input, shape index: {}]
  %s1 = inlined_call_operand.vmem [shape: f32[2,32], index: 1, kind: input, shape index: {}]
  %s2 = inlined_call_operand.vmem [shape: f32[1,32], index: 2, kind: input, shape index: {}]
  %s3 = inlined_call_operand.vmem [shape: f32[32,32], index: 3, kind: input, shape index: {}]
  %s4 = inlined_call_operand.vmem [shape: f32[32,32], index: 4, kind: input, shape index: {}]
  %s5 = inlined_call_operand.hbm [shape: f32[4,3,32,32], index: 5, kind: input, shape index: {}]
  %s6 = inlined_call_operand.vmem [shape: f32[4,1,32], index: 6, kind: input, shape index: {}]
  %s7 = inlined_call_operand.vmem [shape: f32[4,32,96], index: 7, kind: input, shape index: {}]
  %s8 = inlined_call_operand.vmem [shape: f32[4,1,96], index: 8, kind: input, shape index: {}]
  %s9 = inlined_call_operand.vmem [shape: f32[4,1,32], index: 9, kind: input, shape index: {}]
  %s10 = inlined_call_operand.vmem [shape: f32[4,1,32], index: 10, kind: input, shape index: {}]
  %s11 = inlined_call_operand.vmem [shape: f32[4,1,32], index: 11, kind: input, shape index: {}]
  %s12 = inlined_call_operand.vmem [shape: f32[4,1,32], index: 12, kind: input, shape index: {}]
  %s13 = inlined_call_operand.vmem [shape: f32[4,32,32], index: 13, kind: input, shape index: {}]
  %s14 = inlined_call_operand.vmem [shape: f32[4,1,32], index: 14, kind: input, shape index: {}]
  %s15 = inlined_call_operand.hbm [shape: f32[4,1,32], index: 15, kind: input, shape index: {}]
  %s16 = inlined_call_operand.hbm [shape: f32[4,1,32], index: 16, kind: input, shape index: {}]
  %s17 = inlined_call_operand.hbm [shape: f32[4,32,32], index: 17, kind: input, shape index: {}]
  %s18 = inlined_call_operand.hbm [shape: f32[4,1,32], index: 18, kind: input, shape index: {}]
  %s19 = inlined_call_operand.hbm [shape: f32[4,32,32], index: 19, kind: input, shape index: {}]
  %s20 = inlined_call_operand.hbm [shape: f32[4,1,32], index: 20, kind: input, shape index: {}]
  %s21 = inlined_call_operand.hbm [shape: f32[4,1,32], index: 21, kind: input, shape index: {}]
  %s22 = inlined_call_operand.hbm [shape: f32[4,1,32], index: 22, kind: input, shape index: {}]
  %s23 = inlined_call_operand.hbm [shape: f32[32,64], index: 23, kind: input, shape index: {}]
  %s24 = inlined_call_operand.hbm [shape: f32[1,64], index: 24, kind: input, shape index: {}]
  %s25 = inlined_call_operand.hbm [shape: f32[1,64], index: 25, kind: input, shape index: {}]
  %s26 = inlined_call_operand.<no memory space> [shape: f32[1,1], index: 26, kind: input, shape index: {}]
  %s27 = inlined_call_operand.hbm [shape: f32[2,1,16], index: 27, kind: output, shape index: {}]
  %s28 = sld [smem:[#allocation0]]
  $region189: #{ft1d_forward.1} parent=0
    _
  %s30 = ssub.s32 1, %s28
  %s31 = scalar_select 0, %s30, %s28
  %v32 = vstv %s26
  %33 = vst [vmem:[#allocation2] sm:$0x1] %v32
  $region1: #{ft1d_forward.1} parent=0
    #allocation3 [shape = 'u8[196608]{0}', space=vmem, size = 0x30000, scoped, tag = 'input window, operand 5, single buffered']
    #allocation4 [shape = 's32[2]{0}', space=sflag, size = 0x8, scoped, tag = 'scoped memory for ft1d_forward.1']
    #allocation5 [shape = 's32[2]{0}', space=sflag, size = 0x8, scoped, tag = 'scoped memory for ft1d_forward.1']
    #allocation6 [shape = 'u8[2048]{0}', space=vmem, size = 0x800, scoped, tag = 'input window, operand 15, single buffered']
    #allocation7 [shape = 's32[1]{0}', space=sflag, size = 0x4, scoped, tag = 'scoped memory for ft1d_forward.1']
    #allocation8 [shape = 'u8[2048]{0}', space=vmem, size = 0x800, scoped, tag = 'input window, operand 16, single buffered']
    #allocation9 [shape = 'u8[65536]{0}', space=vmem, size = 0x10000, scoped, tag = 'input window, operand 17, single buffered']
    #allocation10 [shape = 's32[1]{0}', space=sflag, size = 0x4, scoped, tag = 'scoped memory for ft1d_forward.1']
    #allocation11 [shape = 'u8[2048]{0}', space=vmem, size = 0x800, scoped, tag = 'input window, operand 18, single buffered']
    #allocation12 [shape = 'u8[65536]{0}', space=vmem, size = 0x10000, scoped, tag = 'input window, operand 19, single buffered']
    #allocation13 [shape = 's32[1]{0}', space=sflag, size = 0x4, scoped, tag = 'scoped memory for ft1d_forward.1']
    #allocation14 [shape = 'u8[2048]{0}', space=vmem, size = 0x800, scoped, tag = 'input window, operand 20, single buffered']
    #allocation15 [shape = 'u8[2048]{0}', space=vmem, size = 0x800, scoped, tag = 'input window, operand 21, single buffered']
    #allocation16 [shape = 's32[1]{0}', space=sflag, size = 0x4, scoped, tag = 'scoped memory for ft1d_forward.1']
    #allocation17 [shape = 'u8[2048]{0}', space=vmem, size = 0x800, scoped, tag = 'input window, operand 22, single buffered']
    #allocation18 [shape = 'u8[16384]{0}', space=vmem, size = 0x4000, scoped, tag = 'input window, operand 23, single buffered']
    #allocation19 [shape = 's32[1]{0}', space=sflag, size = 0x4, scoped, tag = 'scoped memory for ft1d_forward.1']
    #allocation20 [shape = 'u8[512]{0}', space=vmem, size = 0x400, scoped, tag = 'input window, operand 24, single buffered']
    #allocation21 [shape = 'u8[512]{0}', space=vmem, size = 0x400, scoped, tag = 'input window, operand 25, single buffered']
    #allocation22 [shape = 's32[1]{0}', space=sflag, size = 0x4, scoped, tag = 'scoped memory for ft1d_forward.1']
    #allocation23 [shape = 'u8[1024]{0}', space=vmem, size = 0x400, scoped, tag = 'output window, operand 0']
    %34 = vsyncpa [#allocation4], 0
    %35 = vsyncpa [#allocation7], 0
    %36 = vsyncpa [#allocation10], 0
    %37 = vsyncpa [#allocation13], 0
    %38 = vsyncpa [#allocation16], 0
    %39 = vsyncpa [#allocation19], 0
    %40 = vsyncpa [#allocation22], 0
    %41 = vsyncpa [#allocation5], 0
    %s42 = scalar_lea.sflag [#allocation5], 1
    %43 = vsyncpa %s42, 0
    loop: start=0, step=1, limit=4
    $region2: #{ft1d_forward.1} parent=1 // loop_pre_header
      _
    $region3: #{ft1d_forward.1} parent=1 // loop_header
      %s45 = sphi 0, %s49
      %p46 = scmp.ge.s32.totalorder %s45, 4
      %s55 = sphi 0, %s57
      %s58 = sphi 0, %s55
      %s59 = sphi 0, %s58
      %s75 = sphi 0, %s59
      %s79 = sphi 0, %s79
      %s81 = sphi 0, %s79
      %s82 = sphi 0, %s81
      %s96 = sphi 0, %s82
      %s100 = sphi 0, %s100
      %s102 = sphi 0, %s100
      %s103 = sphi 0, %s102
      %s117 = sphi 0, %s103
      %s121 = sphi 0, %s121
      %s123 = sphi 0, %s121
      %s124 = sphi 0, %s123
      %s138 = sphi 0, %s124
      %s142 = sphi 0, %s142
      %s144 = sphi 0, %s142
      %s145 = sphi 0, %s144
      %s159 = sphi 0, %s145
      %s163 = sphi 0, %s163
      %s165 = sphi 0, %s163
      %s166 = sphi 0, %s165
      %s180 = sphi 0, %s166
      %s184 = sphi 0, %s184
      %s186 = sphi 0, %s184
      %s187 = sphi 0, %s186
      %s201 = sphi 0, %s187
      %s205 = sphi 0, %s205
      %s207 = sphi 0, %s205
      %s208 = sphi 0, %s207
      %s222 = sphi 0, %s208
      %s226 = sphi 0, %s226
      %s228 = sphi 0, %s226
      %s229 = sphi 0, %s228
      %s243 = sphi 0, %s229
      %s247 = sphi 0, %s247
      %s249 = sphi 0, %s247
      %s250 = sphi 0, %s249
      %s264 = sphi 0, %s250
      %s268 = sphi 0, %s268
      %s270 = sphi 0, %s268
      %s271 = sphi 0, %s270
      %s285 = sphi 0, %s271
      %s289 = sphi 0, %s289
      %s291 = sphi 0, %s289
      %s292 = sphi 0, %s291
      %s306 = sphi 0, %s292
      %s310 = sphi 0, %s310
      %s312 = sphi 0, %s310
      %s313 = sphi 0, %s312
      %s327 = sphi 0, %s313
      %s331 = sphi 0, %s331
      %s333 = sphi 0, %s331
      %s334 = sphi 0, %s333
      %s348 = sphi 0, %s334
      %s352 = sphi 0, %s352
      %s354 = sphi 0, %s352
      %s355 = sphi 0, %s354
      %s369 = sphi 0, %s355
      %s373 = sphi 0, %s373
      %s375 = sphi 0, %s373
      %s376 = sphi 0, %s375
      %s390 = sphi 0, %s376
      %s394 = sphi 0, %s394
      %s396 = sphi 0, %s394
      %s397 = sphi 0, %s396
      %s411 = sphi 0, %s397
      %s415 = sphi 0, %s415
      %s417 = sphi 0, %s415
      %s418 = sphi 0, %s417
      %s432 = sphi 0, %s418
      %s436 = sphi 0, %s436
      %s438 = sphi 0, %s436
      %s439 = sphi 0, %s438
      %s453 = sphi 0, %s439
      %s457 = sphi 0, %s457
      %s459 = sphi 0, %s457
      %s460 = sphi 0, %s459
      %s474 = sphi 0, %s460
      %s478 = sphi 0, %s478
      %s480 = sphi 0, %s478
      %s481 = sphi 0, %s480
      %s495 = sphi 0, %s481
      %s499 = sphi 0, %s499
      %s501 = sphi 0, %s499
      %s502 = sphi 0, %s501
      %s516 = sphi 0, %s502
      %s520 = sphi 0, %s520
      %s522 = sphi 0, %s520
      %s523 = sphi 0, %s522
      %s537 = sphi 0, %s523
      %s541 = sphi 0, %s541
      %s543 = sphi 0, %s541
      %s544 = sphi 0, %s543
      %s558 = sphi 0, %s544
      %s562 = sphi 0, %s562
      %s564 = sphi 0, %s562
      %s565 = sphi 0, %s564
      %s579 = sphi 0, %s565
      %s583 = sphi 0, %s583
      %s585 = sphi 0, %s583
      %s586 = sphi 0, %s585
      %s600 = sphi 0, %s586
      %s604 = sphi 0, %s604
      %s606 = sphi 0, %s604
      %s607 = sphi 0, %s606
      %s621 = sphi 0, %s607
      %s627 = sphi 0, %s629
      %s630 = sphi 0, %s627
      %s631 = sphi 0, %s630
      %s647 = sphi 0, %s631
    $region4: #{ft1d_forward.1} parent=1 // loop_header_branch
      %48 = sbr.rel (%p46) target = $region8
    $region5: #{ft1d_forward.1} parent=1 // loop_body
      %s50 = ssub.s32 %s45, 1
      %s51 = ssub.s32 %s45, 2
      %s52 = sadd.s32 %s45, 1
      %s53 = ssub.s32 %s45, %s52
      %p54 = scmp.eq.s32.totalorder %s53, 0
      %s56 = sadd.s32 %s55, 1
      %s57 = scalar_select %p54, %s55, %s56
      %p60 = pneg %p54
      %p61 = scmp.eq.s32.totalorder %s45, 1
      %p62 = por %p60, %p61
      %p63 = scmp.ne.s32.totalorder %s55, %s58
      %p64 = scmp.eq.s32.totalorder %s45, 0
      %p65 = por %p63, %p64
      %p66 = scmp.ne.s32.totalorder %s55, %s58
      %p67 = scmp.eq.s32.totalorder %s50, 1
      %p68 = por %p66, %p67
      %p69 = scmp.ne.s32.totalorder %s58, %s59
      %p70 = scmp.eq.s32.totalorder %s50, 0
      %p71 = por %p69, %p70
      %p72 = scmp.ne.s32.totalorder %s58, %s59
      %p73 = scmp.eq.s32.totalorder %s51, 1
      %p74 = por %p72, %p73
      %p76 = scmp.ne.s32.totalorder %s59, %s75
      %p77 = scmp.eq.s32.totalorder %s51, 0
      %p78 = por %p76, %p77
      %s80 = sadd.s32 %s79, 1
      %p83 = scmp.eq.s32.totalorder %s45, 1
      %p84 = scmp.ne.s32.totalorder %s79, %s81
      %p85 = scmp.eq.s32.totalorder %s45, 0
      %p86 = por %p84, %p85
      %p87 = scmp.ne.s32.totalorder %s79, %s81
      %p88 = scmp.eq.s32.totalorder %s50, 1
      %p89 = por %p87, %p88
      %p90 = scmp.ne.s32.totalorder %s81, %s82
      %p91 = scmp.eq.s32.totalorder %s50, 0
      %p92 = por %p90, %p91
      %p93 = scmp.ne.s32.totalorder %s81, %s82
      %p94 = scmp.eq.s32.totalorder %s51, 1
      %p95 = por %p93, %p94
      %p97 = scmp.ne.s32.totalorder %s82, %s96
      %p98 = scmp.eq.s32.totalorder %s51, 0
      %p99 = por %p97, %p98
      %s101 = sadd.s32 %s100, 1
      %p104 = scmp.eq.s32.totalorder %s45, 1
      %p105 = scmp.ne.s32.totalorder %s100, %s102
      %p106 = scmp.eq.s32.totalorder %s45, 0
      %p107 = por %p105, %p106
      %p108 = scmp.ne.s32.totalorder %s100, %s102
      %p109 = scmp.eq.s32.totalorder %s50, 1
      %p110 = por %p108, %p109
      %p111 = scmp.ne.s32.totalorder %s102, %s103
      %p112 = scmp.eq.s32.totalorder %s50, 0
      %p113 = por %p111, %p112
      %p114 = scmp.ne.s32.totalorder %s102, %s103
      %p115 = scmp.eq.s32.totalorder %s51, 1
      %p116 = por %p114, %p115
      %p118 = scmp.ne.s32.totalorder %s103, %s117
      %p119 = scmp.eq.s32.totalorder %s51, 0
      %p120 = por %p118, %p119
      %s122 = sadd.s32 %s121, 1
      %p125 = scmp.eq.s32.totalorder %s45, 1
      %p126 = scmp.ne.s32.totalorder %s121, %s123
      %p127 = scmp.eq.s32.totalorder %s45, 0
      %p128 = por %p126, %p127
      %p129 = scmp.ne.s32.totalorder %s121, %s123
      %p130 = scmp.eq.s32.totalorder %s50, 1
      %p131 = por %p129, %p130
      %p132 = scmp.ne.s32.totalorder %s123, %s124
      %p133 = scmp.eq.s32.totalorder %s50, 0
      %p134 = por %p132, %p133
      %p135 = scmp.ne.s32.totalorder %s123, %s124
      %p136 = scmp.eq.s32.totalorder %s51, 1
      %p137 = por %p135, %p136
      %p139 = scmp.ne.s32.totalorder %s124, %s138
      %p140 = scmp.eq.s32.totalorder %s51, 0
      %p141 = por %p139, %p140
      %s143 = sadd.s32 %s142, 1
      %p146 = scmp.eq.s32.totalorder %s45, 1
      %p147 = scmp.ne.s32.totalorder %s142, %s144
      %p148 = scmp.eq.s32.totalorder %s45, 0
      %p149 = por %p147, %p148
      %p150 = scmp.ne.s32.totalorder %s142, %s144
      %p151 = scmp.eq.s32.totalorder %s50, 1
      %p152 = por %p150, %p151
      %p153 = scmp.ne.s32.totalorder %s144, %s145
      %p154 = scmp.eq.s32.totalorder %s50, 0
      %p155 = por %p153, %p154
      %p156 = scmp.ne.s32.totalorder %s144, %s145
      %p157 = scmp.eq.s32.totalorder %s51, 1
      %p158 = por %p156, %p157
      %p160 = scmp.ne.s32.totalorder %s145, %s159
      %p161 = scmp.eq.s32.totalorder %s51, 0
      %p162 = por %p160, %p161
      %s164 = sadd.s32 %s163, 1
      %p167 = scmp.eq.s32.totalorder %s45, 1
      %p168 = scmp.ne.s32.totalorder %s163, %s165
      %p169 = scmp.eq.s32.totalorder %s45, 0
      %p170 = por %p168, %p169
      %p171 = scmp.ne.s32.totalorder %s163, %s165
      %p172 = scmp.eq.s32.totalorder %s50, 1
      %p173 = por %p171, %p172
      %p174 = scmp.ne.s32.totalorder %s165, %s166
      %p175 = scmp.eq.s32.totalorder %s50, 0
      %p176 = por %p174, %p175
      %p177 = scmp.ne.s32.totalorder %s165, %s166
      %p178 = scmp.eq.s32.totalorder %s51, 1
      %p179 = por %p177, %p178
      %p181 = scmp.ne.s32.totalorder %s166, %s180
      %p182 = scmp.eq.s32.totalorder %s51, 0
      %p183 = por %p181, %p182
      %s185 = sadd.s32 %s184, 1
      %p188 = scmp.eq.s32.totalorder %s45, 1
      %p189 = scmp.ne.s32.totalorder %s184, %s186
      %p190 = scmp.eq.s32.totalorder %s45, 0
      %p191 = por %p189, %p190
      %p192 = scmp.ne.s32.totalorder %s184, %s186
      %p193 = scmp.eq.s32.totalorder %s50, 1
      %p194 = por %p192, %p193
      %p195 = scmp.ne.s32.totalorder %s186, %s187
      %p196 = scmp.eq.s32.totalorder %s50, 0
      %p197 = por %p195, %p196
      %p198 = scmp.ne.s32.totalorder %s186, %s187
      %p199 = scmp.eq.s32.totalorder %s51, 1
      %p200 = por %p198, %p199
      %p202 = scmp.ne.s32.totalorder %s187, %s201
      %p203 = scmp.eq.s32.totalorder %s51, 0
      %p204 = por %p202, %p203
      %s206 = sadd.s32 %s205, 1
      %p209 = scmp.eq.s32.totalorder %s45, 1
      %p210 = scmp.ne.s32.totalorder %s205, %s207
      %p211 = scmp.eq.s32.totalorder %s45, 0
      %p212 = por %p210, %p211
      %p213 = scmp.ne.s32.totalorder %s205, %s207
      %p214 = scmp.eq.s32.totalorder %s50, 1
      %p215 = por %p213, %p214
      %p216 = scmp.ne.s32.totalorder %s207, %s208
      %p217 = scmp.eq.s32.totalorder %s50, 0
      %p218 = por %p216, %p217
      %p219 = scmp.ne.s32.totalorder %s207, %s208
      %p220 = scmp.eq.s32.totalorder %s51, 1
      %p221 = por %p219, %p220
      %p223 = scmp.ne.s32.totalorder %s208, %s222
      %p224 = scmp.eq.s32.totalorder %s51, 0
      %p225 = por %p223, %p224
      %s227 = sadd.s32 %s226, 1
      %p230 = scmp.eq.s32.totalorder %s45, 1
      %p231 = scmp.ne.s32.totalorder %s226, %s228
      %p232 = scmp.eq.s32.totalorder %s45, 0
      %p233 = por %p231, %p232
      %p234 = scmp.ne.s32.totalorder %s226, %s228
      %p235 = scmp.eq.s32.totalorder %s50, 1
      %p236 = por %p234, %p235
      %p237 = scmp.ne.s32.totalorder %s228, %s229
      %p238 = scmp.eq.s32.totalorder %s50, 0
      %p239 = por %p237, %p238
      %p240 = scmp.ne.s32.totalorder %s228, %s229
      %p241 = scmp.eq.s32.totalorder %s51, 1
      %p242 = por %p240, %p241
      %p244 = scmp.ne.s32.totalorder %s229, %s243
      %p245 = scmp.eq.s32.totalorder %s51, 0
      %p246 = por %p244, %p245
      %s248 = sadd.s32 %s247, 1
      %p251 = scmp.eq.s32.totalorder %s45, 1
      %p252 = scmp.ne.s32.totalorder %s247, %s249
      %p253 = scmp.eq.s32.totalorder %s45, 0
      %p254 = por %p252, %p253
      %p255 = scmp.ne.s32.totalorder %s247, %s249
      %p256 = scmp.eq.s32.totalorder %s50, 1
      %p257 = por %p255, %p256
      %p258 = scmp.ne.s32.totalorder %s249, %s250
      %p259 = scmp.eq.s32.totalorder %s50, 0
      %p260 = por %p258, %p259
      %p261 = scmp.ne.s32.totalorder %s249, %s250
      %p262 = scmp.eq.s32.totalorder %s51, 1
      %p263 = por %p261, %p262
      %p265 = scmp.ne.s32.totalorder %s250, %s264
      %p266 = scmp.eq.s32.totalorder %s51, 0
      %p267 = por %p265, %p266
      %s269 = sadd.s32 %s268, 1
      %p272 = scmp.eq.s32.totalorder %s45, 1
      %p273 = scmp.ne.s32.totalorder %s268, %s270
      %p274 = scmp.eq.s32.totalorder %s45, 0
      %p275 = por %p273, %p274
      %p276 = scmp.ne.s32.totalorder %s268, %s270
      %p277 = scmp.eq.s32.totalorder %s50, 1
      %p278 = por %p276, %p277
      %p279 = scmp.ne.s32.totalorder %s270, %s271
      %p280 = scmp.eq.s32.totalorder %s50, 0
      %p281 = por %p279, %p280
      %p282 = scmp.ne.s32.totalorder %s270, %s271
      %p283 = scmp.eq.s32.totalorder %s51, 1
      %p284 = por %p282, %p283
      %p286 = scmp.ne.s32.totalorder %s271, %s285
      %p287 = scmp.eq.s32.totalorder %s51, 0
      %p288 = por %p286, %p287
      %s290 = sadd.s32 %s289, 1
      %p293 = scmp.eq.s32.totalorder %s45, 1
      %p294 = scmp.ne.s32.totalorder %s289, %s291
      %p295 = scmp.eq.s32.totalorder %s45, 0
      %p296 = por %p294, %p295
      %p297 = scmp.ne.s32.totalorder %s289, %s291
      %p298 = scmp.eq.s32.totalorder %s50, 1
      %p299 = por %p297, %p298
      %p300 = scmp.ne.s32.totalorder %s291, %s292
      %p301 = scmp.eq.s32.totalorder %s50, 0
      %p302 = por %p300, %p301
      %p303 = scmp.ne.s32.totalorder %s291, %s292
      %p304 = scmp.eq.s32.totalorder %s51, 1
      %p305 = por %p303, %p304
      %p307 = scmp.ne.s32.totalorder %s292, %s306
      %p308 = scmp.eq.s32.totalorder %s51, 0
      %p309 = por %p307, %p308
      %s311 = sadd.s32 %s310, 1
      %p314 = scmp.eq.s32.totalorder %s45, 1
      %p315 = scmp.ne.s32.totalorder %s310, %s312
      %p316 = scmp.eq.s32.totalorder %s45, 0
      %p317 = por %p315, %p316
      %p318 = scmp.ne.s32.totalorder %s310, %s312
      %p319 = scmp.eq.s32.totalorder %s50, 1
      %p320 = por %p318, %p319
      %p321 = scmp.ne.s32.totalorder %s312, %s313
      %p322 = scmp.eq.s32.totalorder %s50, 0
      %p323 = por %p321, %p322
      %p324 = scmp.ne.s32.totalorder %s312, %s313
      %p325 = scmp.eq.s32.totalorder %s51, 1
      %p326 = por %p324, %p325
      %p328 = scmp.ne.s32.totalorder %s313, %s327
      %p329 = scmp.eq.s32.totalorder %s51, 0
      %p330 = por %p328, %p329
      %s332 = sadd.s32 %s331, 1
      %p335 = scmp.eq.s32.totalorder %s45, 1
      %p336 = scmp.ne.s32.totalorder %s331, %s333
      %p337 = scmp.eq.s32.totalorder %s45, 0
      %p338 = por %p336, %p337
      %p339 = scmp.ne.s32.totalorder %s331, %s333
      %p340 = scmp.eq.s32.totalorder %s50, 1
      %p341 = por %p339, %p340
      %p342 = scmp.ne.s32.totalorder %s333, %s334
      %p343 = scmp.eq.s32.totalorder %s50, 0
      %p344 = por %p342, %p343
      %p345 = scmp.ne.s32.totalorder %s333, %s334
      %p346 = scmp.eq.s32.totalorder %s51, 1
      %p347 = por %p345, %p346
      %p349 = scmp.ne.s32.totalorder %s334, %s348
      %p350 = scmp.eq.s32.totalorder %s51, 0
      %p351 = por %p349, %p350
      %s353 = sadd.s32 %s352, 1
      %p356 = scmp.eq.s32.totalorder %s45, 1
      %p357 = scmp.ne.s32.totalorder %s352, %s354
      %p358 = scmp.eq.s32.totalorder %s45, 0
      %p359 = por %p357, %p358
      %p360 = scmp.ne.s32.totalorder %s352, %s354
      %p361 = scmp.eq.s32.totalorder %s50, 1
      %p362 = por %p360, %p361
      %p363 = scmp.ne.s32.totalorder %s354, %s355
      %p364 = scmp.eq.s32.totalorder %s50, 0
      %p365 = por %p363, %p364
      %p366 = scmp.ne.s32.totalorder %s354, %s355
      %p367 = scmp.eq.s32.totalorder %s51, 1
      %p368 = por %p366, %p367
      %p370 = scmp.ne.s32.totalorder %s355, %s369
      %p371 = scmp.eq.s32.totalorder %s51, 0
      %p372 = por %p370, %p371
      %s374 = sadd.s32 %s373, 1
      %p377 = scmp.eq.s32.totalorder %s45, 1
      %p378 = scmp.ne.s32.totalorder %s373, %s375
      %p379 = scmp.eq.s32.totalorder %s45, 0
      %p380 = por %p378, %p379
      %p381 = scmp.ne.s32.totalorder %s373, %s375
      %p382 = scmp.eq.s32.totalorder %s50, 1
      %p383 = por %p381, %p382
      %p384 = scmp.ne.s32.totalorder %s375, %s376
      %p385 = scmp.eq.s32.totalorder %s50, 0
      %p386 = por %p384, %p385
      %p387 = scmp.ne.s32.totalorder %s375, %s376
      %p388 = scmp.eq.s32.totalorder %s51, 1
      %p389 = por %p387, %p388
      %p391 = scmp.ne.s32.totalorder %s376, %s390
      %p392 = scmp.eq.s32.totalorder %s51, 0
      %p393 = por %p391, %p392
      %s395 = sadd.s32 %s394, 1
      %p398 = scmp.eq.s32.totalorder %s45, 1
      %p399 = scmp.ne.s32.totalorder %s394, %s396
      %p400 = scmp.eq.s32.totalorder %s45, 0
      %p401 = por %p399, %p400
      %p402 = scmp.ne.s32.totalorder %s394, %s396
      %p403 = scmp.eq.s32.totalorder %s50, 1
      %p404 = por %p402, %p403
      %p405 = scmp.ne.s32.totalorder %s396, %s397
      %p406 = scmp.eq.s32.totalorder %s50, 0
      %p407 = por %p405, %p406
      %p408 = scmp.ne.s32.totalorder %s396, %s397
      %p409 = scmp.eq.s32.totalorder %s51, 1
      %p410 = por %p408, %p409
      %p412 = scmp.ne.s32.totalorder %s397, %s411
      %p413 = scmp.eq.s32.totalorder %s51, 0
      %p414 = por %p412, %p413
      %s416 = sadd.s32 %s415, 1
      %p419 = scmp.eq.s32.totalorder %s45, 1
      %p420 = scmp.ne.s32.totalorder %s415, %s417
      %p421 = scmp.eq.s32.totalorder %s45, 0
      %p422 = por %p420, %p421
      %p423 = scmp.ne.s32.totalorder %s415, %s417
      %p424 = scmp.eq.s32.totalorder %s50, 1
      %p425 = por %p423, %p424
      %p426 = scmp.ne.s32.totalorder %s417, %s418
      %p427 = scmp.eq.s32.totalorder %s50, 0
      %p428 = por %p426, %p427
      %p429 = scmp.ne.s32.totalorder %s417, %s418
      %p430 = scmp.eq.s32.totalorder %s51, 1
      %p431 = por %p429, %p430
      %p433 = scmp.ne.s32.totalorder %s418, %s432
      %p434 = scmp.eq.s32.totalorder %s51, 0
      %p435 = por %p433, %p434
      %s437 = sadd.s32 %s436, 1
      %p440 = scmp.eq.s32.totalorder %s45, 1
      %p441 = scmp.ne.s32.totalorder %s436, %s438
      %p442 = scmp.eq.s32.totalorder %s45, 0
      %p443 = por %p441, %p442
      %p444 = scmp.ne.s32.totalorder %s436, %s438
      %p445 = scmp.eq.s32.totalorder %s50, 1
      %p446 = por %p444, %p445
      %p447 = scmp.ne.s32.totalorder %s438, %s439
      %p448 = scmp.eq.s32.totalorder %s50, 0
      %p449 = por %p447, %p448
      %p450 = scmp.ne.s32.totalorder %s438, %s439
      %p451 = scmp.eq.s32.totalorder %s51, 1
      %p452 = por %p450, %p451
      %p454 = scmp.ne.s32.totalorder %s439, %s453
      %p455 = scmp.eq.s32.totalorder %s51, 0
      %p456 = por %p454, %p455
      %s458 = sadd.s32 %s457, 1
      %p461 = scmp.eq.s32.totalorder %s45, 1
      %p462 = scmp.ne.s32.totalorder %s457, %s459
      %p463 = scmp.eq.s32.totalorder %s45, 0
      %p464 = por %p462, %p463
      %p465 = scmp.ne.s32.totalorder %s457, %s459
      %p466 = scmp.eq.s32.totalorder %s50, 1
      %p467 = por %p465, %p466
      %p468 = scmp.ne.s32.totalorder %s459, %s460
      %p469 = scmp.eq.s32.totalorder %s50, 0
      %p470 = por %p468, %p469
      %p471 = scmp.ne.s32.totalorder %s459, %s460
      %p472 = scmp.eq.s32.totalorder %s51, 1
      %p473 = por %p471, %p472
      %p475 = scmp.ne.s32.totalorder %s460, %s474
      %p476 = scmp.eq.s32.totalorder %s51, 0
      %p477 = por %p475, %p476
      %s479 = sadd.s32 %s478, 1
      %p482 = scmp.eq.s32.totalorder %s45, 1
      %p483 = scmp.ne.s32.totalorder %s478, %s480
      %p484 = scmp.eq.s32.totalorder %s45, 0
      %p485 = por %p483, %p484
      %p486 = scmp.ne.s32.totalorder %s478, %s480
      %p487 = scmp.eq.s32.totalorder %s50, 1
      %p488 = por %p486, %p487
      %p489 = scmp.ne.s32.totalorder %s480, %s481
      %p490 = scmp.eq.s32.totalorder %s50, 0
      %p491 = por %p489, %p490
      %p492 = scmp.ne.s32.totalorder %s480, %s481
      %p493 = scmp.eq.s32.totalorder %s51, 1
      %p494 = por %p492, %p493
      %p496 = scmp.ne.s32.totalorder %s481, %s495
      %p497 = scmp.eq.s32.totalorder %s51, 0
      %p498 = por %p496, %p497
      %s500 = sadd.s32 %s499, 1
      %p503 = scmp.eq.s32.totalorder %s45, 1
      %p504 = scmp.ne.s32.totalorder %s499, %s501
      %p505 = scmp.eq.s32.totalorder %s45, 0
      %p506 = por %p504, %p505
      %p507 = scmp.ne.s32.totalorder %s499, %s501
      %p508 = scmp.eq.s32.totalorder %s50, 1
      %p509 = por %p507, %p508
      %p510 = scmp.ne.s32.totalorder %s501, %s502
      %p511 = scmp.eq.s32.totalorder %s50, 0
      %p512 = por %p510, %p511
      %p513 = scmp.ne.s32.totalorder %s501, %s502
      %p514 = scmp.eq.s32.totalorder %s51, 1
      %p515 = por %p513, %p514
      %p517 = scmp.ne.s32.totalorder %s502, %s516
      %p518 = scmp.eq.s32.totalorder %s51, 0
      %p519 = por %p517, %p518
      %s521 = sadd.s32 %s520, 1
      %p524 = scmp.eq.s32.totalorder %s45, 1
      %p525 = scmp.ne.s32.totalorder %s520, %s522
      %p526 = scmp.eq.s32.totalorder %s45, 0
      %p527 = por %p525, %p526
      %p528 = scmp.ne.s32.totalorder %s520, %s522
      %p529 = scmp.eq.s32.totalorder %s50, 1
      %p530 = por %p528, %p529
      %p531 = scmp.ne.s32.totalorder %s522, %s523
      %p532 = scmp.eq.s32.totalorder %s50, 0
      %p533 = por %p531, %p532
      %p534 = scmp.ne.s32.totalorder %s522, %s523
      %p535 = scmp.eq.s32.totalorder %s51, 1
      %p536 = por %p534, %p535
      %p538 = scmp.ne.s32.totalorder %s523, %s537
      %p539 = scmp.eq.s32.totalorder %s51, 0
      %p540 = por %p538, %p539
      %s542 = sadd.s32 %s541, 1
      %p545 = scmp.eq.s32.totalorder %s45, 1
      %p546 = scmp.ne.s32.totalorder %s541, %s543
      %p547 = scmp.eq.s32.totalorder %s45, 0
      %p548 = por %p546, %p547
      %p549 = scmp.ne.s32.totalorder %s541, %s543
      %p550 = scmp.eq.s32.totalorder %s50, 1
      %p551 = por %p549, %p550
      %p552 = scmp.ne.s32.totalorder %s543, %s544
      %p553 = scmp.eq.s32.totalorder %s50, 0
      %p554 = por %p552, %p553
      %p555 = scmp.ne.s32.totalorder %s543, %s544
      %p556 = scmp.eq.s32.totalorder %s51, 1
      %p557 = por %p555, %p556
      %p559 = scmp.ne.s32.totalorder %s544, %s558
      %p560 = scmp.eq.s32.totalorder %s51, 0
      %p561 = por %p559, %p560
      %s563 = sadd.s32 %s562, 1
      %p566 = scmp.eq.s32.totalorder %s45, 1
      %p567 = scmp.ne.s32.totalorder %s562, %s564
      %p568 = scmp.eq.s32.totalorder %s45, 0
      %p569 = por %p567, %p568
      %p570 = scmp.ne.s32.totalorder %s562, %s564
      %p571 = scmp.eq.s32.totalorder %s50, 1
      %p572 = por %p570, %p571
      %p573 = scmp.ne.s32.totalorder %s564, %s565
      %p574 = scmp.eq.s32.totalorder %s50, 0
      %p575 = por %p573, %p574
      %p576 = scmp.ne.s32.totalorder %s564, %s565
      %p577 = scmp.eq.s32.totalorder %s51, 1
      %p578 = por %p576, %p577
      %p580 = scmp.ne.s32.totalorder %s565, %s579
      %p581 = scmp.eq.s32.totalorder %s51, 0
      %p582 = por %p580, %p581
      %s584 = sadd.s32 %s583, 1
      %p587 = scmp.eq.s32.totalorder %s45, 1
      %p588 = scmp.ne.s32.totalorder %s583, %s585
      %p589 = scmp.eq.s32.totalorder %s45, 0
      %p590 = por %p588, %p589
      %p591 = scmp.ne.s32.totalorder %s583, %s585
      %p592 = scmp.eq.s32.totalorder %s50, 1
      %p593 = por %p591, %p592
      %p594 = scmp.ne.s32.totalorder %s585, %s586
      %p595 = scmp.eq.s32.totalorder %s50, 0
      %p596 = por %p594, %p595
      %p597 = scmp.ne.s32.totalorder %s585, %s586
      %p598 = scmp.eq.s32.totalorder %s51, 1
      %p599 = por %p597, %p598
      %p601 = scmp.ne.s32.totalorder %s586, %s600
      %p602 = scmp.eq.s32.totalorder %s51, 0
      %p603 = por %p601, %p602
      %s605 = sadd.s32 %s604, 1
      %p608 = scmp.eq.s32.totalorder %s45, 1
      %p609 = scmp.ne.s32.totalorder %s604, %s606
      %p610 = scmp.eq.s32.totalorder %s45, 0
      %p611 = por %p609, %p610
      %p612 = scmp.ne.s32.totalorder %s604, %s606
      %p613 = scmp.eq.s32.totalorder %s50, 1
      %p614 = por %p612, %p613
      %p615 = scmp.ne.s32.totalorder %s606, %s607
      %p616 = scmp.eq.s32.totalorder %s50, 0
      %p617 = por %p615, %p616
      %p618 = scmp.ne.s32.totalorder %s606, %s607
      %p619 = scmp.eq.s32.totalorder %s51, 1
      %p620 = por %p618, %p619
      %p622 = scmp.ne.s32.totalorder %s607, %s621
      %p623 = scmp.eq.s32.totalorder %s51, 0
      %p624 = por %p622, %p623
      %s625 = ssub.s32 %s45, %s52
      %p626 = scmp.eq.s32.totalorder %s625, 0
      %s628 = sadd.s32 %s627, 1
      %s629 = scalar_select %p626, %s627, %s628
      %p632 = pneg %p626
      %p633 = scmp.eq.s32.totalorder %s45, 1
      %p634 = por %p632, %p633
      %p635 = scmp.ne.s32.totalorder %s627, %s630
      %p636 = scmp.eq.s32.totalorder %s45, 0
      %p637 = por %p635, %p636
      %p638 = scmp.ne.s32.totalorder %s627, %s630
      %p639 = scmp.eq.s32.totalorder %s50, 1
      %p640 = por %p638, %p639
      %p641 = scmp.ne.s32.totalorder %s630, %s631
      %p642 = scmp.eq.s32.totalorder %s50, 0
      %p643 = por %p641, %p642
      %p644 = scmp.ne.s32.totalorder %s630, %s631
      %p645 = scmp.eq.s32.totalorder %s51, 1
      %p646 = por %p644, %p645
      %p648 = scmp.ne.s32.totalorder %s631, %s647
      %p649 = scmp.eq.s32.totalorder %s51, 0
      %p650 = por %p648, %p649
      %p651 = scmp.le.s32.totalorder 1, %s45
      %p652 = scmp.lt.s32.totalorder %s45, 3
      %p653 = pnand %p651, %p652
      %p654 = pneg %p653
      // Predicated region
      $region9: #{ft1d_forward.1} parent=5 // pred_check
        _
      $region10: #{ft1d_forward.1} parent=5 // pred_check_branch
        %656 = sbr.rel (%p653) target = $region12
      $region11: #{ft1d_forward.1} parent=5 // pred_region
        %s657 = ssub.s32 %s45, 1
        // Predicated region
        $region13: #{ft1d_forward.1} parent=11 // pred_check
          %p658 = pneg %p92
        $region14: #{ft1d_forward.1} parent=11 // pred_check_branch
          %660 = sbr.rel (%p658) target = $region16
        $region15: #{ft1d_forward.1} parent=11 // pred_region
          _
        $region16: #{ft1d_forward.1} parent=11 // pred_fallthru
          _
        // Predicated region
        $region17: #{ft1d_forward.1} parent=11 // pred_check
          %p661 = pneg %p113
        $region18: #{ft1d_forward.1} parent=11 // pred_check_branch
          %663 = sbr.rel (%p661) target = $region20
        $region19: #{ft1d_forward.1} parent=11 // pred_region
          _
        $region20: #{ft1d_forward.1} parent=11 // pred_fallthru
          _
        // Predicated region
        $region21: #{ft1d_forward.1} parent=11 // pred_check
          %p664 = pneg %p134
        $region22: #{ft1d_forward.1} parent=11 // pred_check_branch
          %666 = sbr.rel (%p664) target = $region24
        $region23: #{ft1d_forward.1} parent=11 // pred_region
          _
        $region24: #{ft1d_forward.1} parent=11 // pred_fallthru
          _
        // Predicated region
        $region25: #{ft1d_forward.1} parent=11 // pred_check
          %p667 = pneg %p155
        $region26: #{ft1d_forward.1} parent=11 // pred_check_branch
          %669 = sbr.rel (%p667) target = $region28
        $region27: #{ft1d_forward.1} parent=11 // pred_region
          _
        $region28: #{ft1d_forward.1} parent=11 // pred_fallthru
          _
        // Predicated region
        $region29: #{ft1d_forward.1} parent=11 // pred_check
          %p670 = pneg %p176
        $region30: #{ft1d_forward.1} parent=11 // pred_check_branch
          %672 = sbr.rel (%p670) target = $region32
        $region31: #{ft1d_forward.1} parent=11 // pred_region
          %s674 = ssub.s32 6144, 6144
          %675 = vsyncadd [#allocation4], %s674
          %s676 = sshll.u32 [#allocation3], 4
          %s677 = int_to_ptr.vmem [resolvable:$true] %s676
          %682 = dma.hbm_to_vmem [thread:$0]  %s5, 6144, %s677, [#allocation4], 128, 128, 8
        $region32: #{ft1d_forward.1} parent=11 // pred_fallthru
          _
        // Predicated region
        $region33: #{ft1d_forward.1} parent=11 // pred_check
          %p683 = pneg %p197
        $region34: #{ft1d_forward.1} parent=11 // pred_check_branch
          %685 = sbr.rel (%p683) target = $region36
        $region35: #{ft1d_forward.1} parent=11 // pred_region
          _
        $region36: #{ft1d_forward.1} parent=11 // pred_fallthru
          _
        // Predicated region
        $region37: #{ft1d_forward.1} parent=11 // pred_check
          %p686 = pneg %p218
        $region38: #{ft1d_forward.1} parent=11 // pred_check_branch
          %688 = sbr.rel (%p686) target = $region40
        $region39: #{ft1d_forward.1} parent=11 // pred_region
          _
        $region40: #{ft1d_forward.1} parent=11 // pred_fallthru
          _
        // Predicated region
        $region41: #{ft1d_forward.1} parent=11 // pred_check
          %p689 = pneg %p239
        $region42: #{ft1d_forward.1} parent=11 // pred_check_branch
          %691 = sbr.rel (%p689) target = $region44
        $region43: #{ft1d_forward.1} parent=11 // pred_region
          _
        $region44: #{ft1d_forward.1} parent=11 // pred_fallthru
          _
        // Predicated region
        $region45: #{ft1d_forward.1} parent=11 // pred_check
          %p692 = pneg %p260
        $region46: #{ft1d_forward.1} parent=11 // pred_check_branch
          %694 = sbr.rel (%p692) target = $region48
        $region47: #{ft1d_forward.1} parent=11 // pred_region
          _
        $region48: #{ft1d_forward.1} parent=11 // pred_fallthru
          _
        // Predicated region
        $region49: #{ft1d_forward.1} parent=11 // pred_check
          %p695 = pneg %p281
        $region50: #{ft1d_forward.1} parent=11 // pred_check_branch
          %697 = sbr.rel (%p695) target = $region52
        $region51: #{ft1d_forward.1} parent=11 // pred_region
          _
        $region52: #{ft1d_forward.1} parent=11 // pred_fallthru
          _
        // Predicated region
        $region53: #{ft1d_forward.1} parent=11 // pred_check
          %p698 = pneg %p302
        $region54: #{ft1d_forward.1} parent=11 // pred_check_branch
          %700 = sbr.rel (%p698) target = $region56
        $region55: #{ft1d_forward.1} parent=11 // pred_region
          _
        $region56: #{ft1d_forward.1} parent=11 // pred_fallthru
          _
        // Predicated region
        $region57: #{ft1d_forward.1} parent=11 // pred_check
          %p701 = pneg %p323
        $region58: #{ft1d_forward.1} parent=11 // pred_check_branch
          %703 = sbr.rel (%p701) target = $region60
        $region59: #{ft1d_forward.1} parent=11 // pred_region
          _
        $region60: #{ft1d_forward.1} parent=11 // pred_fallthru
          _
        // Predicated region
        $region61: #{ft1d_forward.1} parent=11 // pred_check
          %p704 = pneg %p344
        $region62: #{ft1d_forward.1} parent=11 // pred_check_branch
          %706 = sbr.rel (%p704) target = $region64
        $region63: #{ft1d_forward.1} parent=11 // pred_region
          _
        $region64: #{ft1d_forward.1} parent=11 // pred_fallthru
          _
        // Predicated region
        $region65: #{ft1d_forward.1} parent=11 // pred_check
          %p707 = pneg %p365
        $region66: #{ft1d_forward.1} parent=11 // pred_check_branch
          %709 = sbr.rel (%p707) target = $region68
        $region67: #{ft1d_forward.1} parent=11 // pred_region
          _
        $region68: #{ft1d_forward.1} parent=11 // pred_fallthru
          _
        // Predicated region
        $region69: #{ft1d_forward.1} parent=11 // pred_check
          %p710 = pneg %p386
        $region70: #{ft1d_forward.1} parent=11 // pred_check_branch
          %712 = sbr.rel (%p710) target = $region72
        $region71: #{ft1d_forward.1} parent=11 // pred_region
          %s714 = ssub.s32 64, 64
          %715 = vsyncadd [#allocation7], %s714
          %s716 = sshll.u32 [#allocation6], 4
          %s717 = int_to_ptr.vmem [resolvable:$true] %s716
          %722 = dma.hbm_to_vmem [thread:$0]  %s15, 64, %s717, [#allocation7], 16, 16, 1
        $region72: #{ft1d_forward.1} parent=11 // pred_fallthru
          _
        // Predicated region
        $region73: #{ft1d_forward.1} parent=11 // pred_check
          %p723 = pneg %p407
        $region74: #{ft1d_forward.1} parent=11 // pred_check_branch
          %725 = sbr.rel (%p723) target = $region76
        $region75: #{ft1d_forward.1} parent=11 // pred_region
          %s727 = ssub.s32 64, 64
          %728 = vsyncadd [#allocation7], %s727
          %s729 = sshll.u32 [#allocation8], 4
          %s730 = int_to_ptr.vmem [resolvable:$true] %s729
          %735 = dma.hbm_to_vmem [thread:$0]  %s16, 64, %s730, [#allocation7], 16, 16, 1
        $region76: #{ft1d_forward.1} parent=11 // pred_fallthru
          _
        // Predicated region
        $region77: #{ft1d_forward.1} parent=11 // pred_check
          %p736 = pneg %p428
        $region78: #{ft1d_forward.1} parent=11 // pred_check_branch
          %738 = sbr.rel (%p736) target = $region80
        $region79: #{ft1d_forward.1} parent=11 // pred_region
          %s740 = ssub.s32 2048, 2048
          %741 = vsyncadd [#allocation10], %s740
          %s742 = sshll.u32 [#allocation9], 4
          %s743 = int_to_ptr.vmem [resolvable:$true] %s742
          %748 = dma.hbm_to_vmem [thread:$0]  %s17, 2048, %s743, [#allocation10], 128, 128, 8
        $region80: #{ft1d_forward.1} parent=11 // pred_fallthru
          _
        // Predicated region
        $region81: #{ft1d_forward.1} parent=11 // pred_check
          %p749 = pneg %p449
        $region82: #{ft1d_forward.1} parent=11 // pred_check_branch
          %751 = sbr.rel (%p749) target = $region84
        $region83: #{ft1d_forward.1} parent=11 // pred_region
          %s753 = ssub.s32 64, 64
          %754 = vsyncadd [#allocation10], %s753
          %s755 = sshll.u32 [#allocation11], 4
          %s756 = int_to_ptr.vmem [resolvable:$true] %s755
          %761 = dma.hbm_to_vmem [thread:$0]  %s18, 64, %s756, [#allocation10], 16, 16, 1
        $region84: #{ft1d_forward.1} parent=11 // pred_fallthru
          _
        // Predicated region
        $region85: #{ft1d_forward.1} parent=11 // pred_check
          %p762 = pneg %p470
        $region86: #{ft1d_forward.1} parent=11 // pred_check_branch
          %764 = sbr.rel (%p762) target = $region88
        $region87: #{ft1d_forward.1} parent=11 // pred_region
          %s766 = ssub.s32 2048, 2048
          %767 = vsyncadd [#allocation13], %s766
          %s768 = sshll.u32 [#allocation12], 4
          %s769 = int_to_ptr.vmem [resolvable:$true] %s768
          %774 = dma.hbm_to_vmem [thread:$0]  %s19, 2048, %s769, [#allocation13], 128, 128, 8
        $region88: #{ft1d_forward.1} parent=11 // pred_fallthru
          _
        // Predicated region
        $region89: #{ft1d_forward.1} parent=11 // pred_check
          %p775 = pneg %p491
        $region90: #{ft1d_forward.1} parent=11 // pred_check_branch
          %777 = sbr.rel (%p775) target = $region92
        $region91: #{ft1d_forward.1} parent=11 // pred_region
          %s779 = ssub.s32 64, 64
          %780 = vsyncadd [#allocation13], %s779
          %s781 = sshll.u32 [#allocation14], 4
          %s782 = int_to_ptr.vmem [resolvable:$true] %s781
          %787 = dma.hbm_to_vmem [thread:$0]  %s20, 64, %s782, [#allocation13], 16, 16, 1
        $region92: #{ft1d_forward.1} parent=11 // pred_fallthru
          _
        // Predicated region
        $region93: #{ft1d_forward.1} parent=11 // pred_check
          %p788 = pneg %p512
        $region94: #{ft1d_forward.1} parent=11 // pred_check_branch
          %790 = sbr.rel (%p788) target = $region96
        $region95: #{ft1d_forward.1} parent=11 // pred_region
          %s792 = ssub.s32 64, 64
          %793 = vsyncadd [#allocation16], %s792
          %s794 = sshll.u32 [#allocation15], 4
          %s795 = int_to_ptr.vmem [resolvable:$true] %s794
          %800 = dma.hbm_to_vmem [thread:$0]  %s21, 64, %s795, [#allocation16], 16, 16, 1
        $region96: #{ft1d_forward.1} parent=11 // pred_fallthru
          _
        // Predicated region
        $region97: #{ft1d_forward.1} parent=11 // pred_check
          %p801 = pneg %p533
        $region98: #{ft1d_forward.1} parent=11 // pred_check_branch
          %803 = sbr.rel (%p801) target = $region100
        $region99: #{ft1d_forward.1} parent=11 // pred_region
          %s805 = ssub.s32 64, 64
          %806 = vsyncadd [#allocation16], %s805
          %s807 = sshll.u32 [#allocation17], 4
          %s808 = int_to_ptr.vmem [resolvable:$true] %s807
          %813 = dma.hbm_to_vmem [thread:$0]  %s22, 64, %s808, [#allocation16], 16, 16, 1
        $region100: #{ft1d_forward.1} parent=11 // pred_fallthru
          _
        // Predicated region
        $region101: #{ft1d_forward.1} parent=11 // pred_check
          %p814 = pneg %p554
        $region102: #{ft1d_forward.1} parent=11 // pred_check_branch
          %816 = sbr.rel (%p814) target = $region104
        $region103: #{ft1d_forward.1} parent=11 // pred_region
          %s818 = ssub.s32 512, 512
          %819 = vsyncadd [#allocation19], %s818
          %s820 = sshll.u32 [#allocation18], 4
          %s821 = int_to_ptr.vmem [resolvable:$true] %s820
          %826 = dma.hbm_to_vmem [thread:$0]  %s23, 512, %s821, [#allocation19], 128, 128, 8
        $region104: #{ft1d_forward.1} parent=11 // pred_fallthru
          _
        // Predicated region
        $region105: #{ft1d_forward.1} parent=11 // pred_check
          %p827 = pneg %p575
        $region106: #{ft1d_forward.1} parent=11 // pred_check_branch
          %829 = sbr.rel (%p827) target = $region108
        $region107: #{ft1d_forward.1} parent=11 // pred_region
          %s831 = ssub.s32 16, 16
          %832 = vsyncadd [#allocation19], %s831
          %s834 = sshll.u32 [#allocation20], 4
          %s835 = int_to_ptr.vmem [resolvable:$true] %s834
          %837 = dma.hbm_to_vmem [thread:$0]  %s24, 16, %s835, [#allocation19]
        $region108: #{ft1d_forward.1} parent=11 // pred_fallthru
          _
        // Predicated region
        $region109: #{ft1d_forward.1} parent=11 // pred_check
          %p838 = pneg %p596
        $region110: #{ft1d_forward.1} parent=11 // pred_check_branch
          %840 = sbr.rel (%p838) target = $region112
        $region111: #{ft1d_forward.1} parent=11 // pred_region
          %s842 = ssub.s32 16, 16
          %843 = vsyncadd [#allocation22], %s842
          %s845 = sshll.u32 [#allocation21], 4
          %s846 = int_to_ptr.vmem [resolvable:$true] %s845
          %848 = dma.hbm_to_vmem [thread:$0]  %s25, 16, %s846, [#allocation22]
        $region112: #{ft1d_forward.1} parent=11 // pred_fallthru
          _
        // Predicated region
        $region113: #{ft1d_forward.1} parent=11 // pred_check
          %p849 = pneg %p617
        $region114: #{ft1d_forward.1} parent=11 // pred_check_branch
          %851 = sbr.rel (%p849) target = $region116
        $region115: #{ft1d_forward.1} parent=11 // pred_region
          _
        $region116: #{ft1d_forward.1} parent=11 // pred_fallthru
          _
      $region12: #{ft1d_forward.1} parent=5 // pred_fallthru
        _
      %p852 = scmp.lt.s32.totalorder %s45, 2
      // Predicated region
      $region117: #{ft1d_forward.1} parent=5 // pred_check
        %p853 = pneg %p852
      $region118: #{ft1d_forward.1} parent=5 // pred_check_branch
        %855 = sbr.rel (%p853) target = $region120
      $region119: #{ft1d_forward.1} parent=5 // pred_region
        // Predicated region
        $region121: #{ft1d_forward.1} parent=119 // pred_check
          %p856 = pneg %p65
        $region122: #{ft1d_forward.1} parent=119 // pred_check_branch
          %858 = sbr.rel (%p856) target = $region124
        $region123: #{ft1d_forward.1} parent=119 // pred_region
          %p859 = scmp.lt.s32.totalorder %s45, 1
          %s860 = scalar_select %p859, %s45, 1
          %s861 = smul.addr %s860, 2
          %s862 = smul.addr %s861, 8
          %s863 = scalar_lea.vmem %s0, %s862
        $region124: #{ft1d_forward.1} parent=119 // pred_fallthru
          _
      $region120: #{ft1d_forward.1} parent=5 // pred_fallthru
        _
      %p864 = scmp.le.s32.totalorder 1, %s45
      %p865 = scmp.lt.s32.totalorder %s45, 3
      %p866 = pnand %p864, %p865
      %p867 = pneg %p866
      // Predicated region
      $region125: #{ft1d_forward.1} parent=5 // pred_check
        _
      $region126: #{ft1d_forward.1} parent=5 // pred_check_branch
        %869 = sbr.rel (%p866) target = $region128
      $region127: #{ft1d_forward.1} parent=5 // pred_region
        %s870 = ssub.s32 %s45, 1
        // Predicated region
        $region129: #{ft1d_forward.1} parent=127 // pred_check
          %p871 = pneg %p176
        $region130: #{ft1d_forward.1} parent=127 // pred_check_branch
          %873 = sbr.rel (%p871) target = $region132
        $region131: #{ft1d_forward.1} parent=127 // pred_region
          %874 = dma.done [#allocation4], 6144
        $region132: #{ft1d_forward.1} parent=127 // pred_fallthru
          _
        // Predicated region
        $region133: #{ft1d_forward.1} parent=127 // pred_check
          %p875 = pneg %p386
        $region134: #{ft1d_forward.1} parent=127 // pred_check_branch
          %877 = sbr.rel (%p875) target = $region136
        $region135: #{ft1d_forward.1} parent=127 // pred_region
          %878 = dma.done [#allocation7], 64
        $region136: #{ft1d_forward.1} parent=127 // pred_fallthru
          _
        // Predicated region
        $region137: #{ft1d_forward.1} parent=127 // pred_check
          %p879 = pneg %p407
        $region138: #{ft1d_forward.1} parent=127 // pred_check_branch
          %881 = sbr.rel (%p879) target = $region140
        $region139: #{ft1d_forward.1} parent=127 // pred_region
          %882 = dma.done [#allocation7], 64
        $region140: #{ft1d_forward.1} parent=127 // pred_fallthru
          _
        // Predicated region
        $region141: #{ft1d_forward.1} parent=127 // pred_check
          %p883 = pneg %p428
        $region142: #{ft1d_forward.1} parent=127 // pred_check_branch
          %885 = sbr.rel (%p883) target = $region144
        $region143: #{ft1d_forward.1} parent=127 // pred_region
          %886 = dma.done [#allocation10], 2048
        $region144: #{ft1d_forward.1} parent=127 // pred_fallthru
          _
        // Predicated region
        $region145: #{ft1d_forward.1} parent=127 // pred_check
          %p887 = pneg %p449
        $region146: #{ft1d_forward.1} parent=127 // pred_check_branch
          %889 = sbr.rel (%p887) target = $region148
        $region147: #{ft1d_forward.1} parent=127 // pred_region
          %890 = dma.done [#allocation10], 64
        $region148: #{ft1d_forward.1} parent=127 // pred_fallthru
          _
        // Predicated region
        $region149: #{ft1d_forward.1} parent=127 // pred_check
          %p891 = pneg %p470
        $region150: #{ft1d_forward.1} parent=127 // pred_check_branch
          %893 = sbr.rel (%p891) target = $region152
        $region151: #{ft1d_forward.1} parent=127 // pred_region
          %894 = dma.done [#allocation13], 2048
        $region152: #{ft1d_forward.1} parent=127 // pred_fallthru
          _
        // Predicated region
        $region153: #{ft1d_forward.1} parent=127 // pred_check
          %p895 = pneg %p491
        $region154: #{ft1d_forward.1} parent=127 // pred_check_branch
          %897 = sbr.rel (%p895) target = $region156
        $region155: #{ft1d_forward.1} parent=127 // pred_region
          %898 = dma.done [#allocation13], 64
        $region156: #{ft1d_forward.1} parent=127 // pred_fallthru
          _
        // Predicated region
        $region157: #{ft1d_forward.1} parent=127 // pred_check
          %p899 = pneg %p512
        $region158: #{ft1d_forward.1} parent=127 // pred_check_branch
          %901 = sbr.rel (%p899) target = $region160
        $region159: #{ft1d_forward.1} parent=127 // pred_region
          %902 = dma.done [#allocation16], 64
        $region160: #{ft1d_forward.1} parent=127 // pred_fallthru
          _
        // Predicated region
        $region161: #{ft1d_forward.1} parent=127 // pred_check
          %p903 = pneg %p533
        $region162: #{ft1d_forward.1} parent=127 // pred_check_branch
          %905 = sbr.rel (%p903) target = $region164
        $region163: #{ft1d_forward.1} parent=127 // pred_region
          %906 = dma.done [#allocation16], 64
        $region164: #{ft1d_forward.1} parent=127 // pred_fallthru
          _
        // Predicated region
        $region165: #{ft1d_forward.1} parent=127 // pred_check
          %p907 = pneg %p554
        $region166: #{ft1d_forward.1} parent=127 // pred_check_branch
          %909 = sbr.rel (%p907) target = $region168
        $region167: #{ft1d_forward.1} parent=127 // pred_region
          %910 = dma.done [#allocation19], 512
        $region168: #{ft1d_forward.1} parent=127 // pred_fallthru
          _
        // Predicated region
        $region169: #{ft1d_forward.1} parent=127 // pred_check
          %p911 = pneg %p575
        $region170: #{ft1d_forward.1} parent=127 // pred_check_branch
          %913 = sbr.rel (%p911) target = $region172
        $region171: #{ft1d_forward.1} parent=127 // pred_region
          %914 = dma.done [#allocation19], 16
        $region172: #{ft1d_forward.1} parent=127 // pred_fallthru
          _
        // Predicated region
        $region173: #{ft1d_forward.1} parent=127 // pred_check
          %p915 = pneg %p596
        $region174: #{ft1d_forward.1} parent=127 // pred_check_branch
          %917 = sbr.rel (%p915) target = $region176
        $region175: #{ft1d_forward.1} parent=127 // pred_region
          %918 = dma.done [#allocation22], 16
        $region176: #{ft1d_forward.1} parent=127 // pred_fallthru
          _
        %p919 = scmp.lt.s32.totalorder %s50, 1
        %s920 = scalar_select %p919, %s50, 1
        %s921 = smul.addr %s920, 2
        %s922 = smul.addr %s921, 8
        %s923 = scalar_lea.vmem %s0, %s922
        %p924 = pneg %p71
        %p925 = pneg %p68
        %p926 = pneg %p92
        %p927 = pneg %p89
        %p928 = pneg %p113
        %p929 = pneg %p110
        %p930 = pneg %p134
        %p931 = pneg %p131
        %p932 = pneg %p155
        %p933 = pneg %p152
        %p934 = pneg %p176
        %p935 = pneg %p173
        %p936 = pneg %p197
        %p937 = pneg %p194
        %p938 = pneg %p218
        %p939 = pneg %p215
        %p940 = pneg %p239
        %p941 = pneg %p236
        %p942 = pneg %p260
        %p943 = pneg %p257
        %p944 = pneg %p281
        %p945 = pneg %p278
        %p946 = pneg %p302
        %p947 = pneg %p299
        %p948 = pneg %p323
        %p949 = pneg %p320
        %p950 = pneg %p344
        %p951 = pneg %p341
        %p952 = pneg %p365
        %p953 = pneg %p362
        %p954 = pneg %p386
        %p955 = pneg %p383
        %p956 = pneg %p407
        %p957 = pneg %p404
        %p958 = pneg %p428
        %p959 = pneg %p425
        %p960 = pneg %p449
        %p961 = pneg %p446
        %p962 = pneg %p470
        %p963 = pneg %p467
        %p964 = pneg %p491
        %p965 = pneg %p488
        %p966 = pneg %p512
        %p967 = pneg %p509
        %p968 = pneg %p533
        %p969 = pneg %p530
        %p970 = pneg %p554
        %p971 = pneg %p551
        %p972 = pneg %p575
        %p973 = pneg %p572
        %p974 = pneg %p596
        %p975 = pneg %p593
        %p976 = pneg %p617
        %p977 = pneg %p614
        %p978 = pneg %p643
        %p979 = pneg %p640
        %s980 = sand.u32 %s630, 1
        %s981 = scalar_lea.sflag [#allocation5], %s980
        %s982 = sand.u32 %s630, 1
        %s983 = scalar_lea.vmem [#allocation23], %s982
        %p984 = scmp.lt.s32.totalorder %s50, 1
        %s985 = scalar_select %p984, %s50, 1
        %s986 = smul.addr %s985, 2
        %s987 = smul.addr %s986, 8
        %s988 = scalar_lea.vmem %s0, %s987
        %v990 = vld [vmem:[%s988] sm:$0xff]
        %v991 = vld [vmem:[%s988 + $0x8] sm:$0xff]
        %v992 = vld [vmem:[%s1] sm:$0x1]
        %994 = vset.pattern.permute.xlu0 0
        %995 = vperm.xlu0 %994, %v990
        %v996 = vpop.permute.xlu0 %995
        %999 = vset.pattern.permute.xlu0 0
        %1000 = vperm.xlu0 %999, %v991
        %v1001 = vpop.permute.xlu0 %1000
        %v1003 = vlaneseq
        %v1004 = vshrl.u32 %v1003, 7
        %v1005 = vsub.s32 0, %v1004
        %v1006 = vrot.slane %v992, %v1005
        %v1007 = vmul.f32 %v996, %v1006
        %v1008 = vmul.f32 %v1001, %v1006
        %v1009 = vld [vmem:[%s1 + $0x1] sm:$0x1]
        %1010 = vset.pattern.permute.xlu0 1
        %1011 = vperm.xlu0 %1010, %v990
        %v1012 = vpop.permute.xlu0 %1011
        %1014 = vset.pattern.permute.xlu0 1
        %1015 = vperm.xlu0 %1014, %v991
        %v1016 = vpop.permute.xlu0 %1015
        %v1018 = vlaneseq
        %v1019 = vshrl.u32 %v1018, 7
        %v1020 = vsub.s32 0, %v1019
        %v1021 = vrot.slane %v1009, %v1020
        %v1022 = vmul.f32 %v1012, %v1021
        %v1023 = vmul.f32 %v1016, %v1021
        %v1024 = vadd.f32 %v1007, %v1022
        %v1025 = vadd.f32 %v1008, %v1023
        %v1026 = vld [vmem:[%s2] sm:$0x1]
        %v1028 = vlaneseq
        %v1029 = vshrl.u32 %v1028, 7
        %v1030 = vsub.s32 0, %v1029
        %v1031 = vrot.slane %v1026, %v1030
        %v1033 = vadd.f32 %v1024, %v1031
        %v1034 = vadd.f32 %v1025, %v1031
        %v1035 = vld [vmem:[%s3] sm:$0xff]
        %v1036 = vld [vmem:[%s3 + $0x8] sm:$0xff]
        %v1037 = vld [vmem:[%s3 + $0x10] sm:$0xff]
        %v1038 = vld [vmem:[%s3 + $0x18] sm:$0xff]
        %v1039 = vld [vmem:[%s4] sm:$0xff]
        %v1040 = vld [vmem:[%s4 + $0x8] sm:$0xff]
        %v1041 = vld [vmem:[%s4 + $0x10] sm:$0xff]
        %v1042 = vld [vmem:[%s4 + $0x18] sm:$0xff]
        %v1043 = vld [vmem:[#allocation3] sm:$0xff]
        %v1044 = vld [vmem:[#allocation3 + $0x8] sm:$0xff]
        %v1045 = vld [vmem:[#allocation3 + $0x10] sm:$0xff]
        %v1046 = vld [vmem:[#allocation3 + $0x18] sm:$0xff]
        %v1047 = vld [vmem:[#allocation3 + $0x20] sm:$0xff]
        %v1048 = vld [vmem:[#allocation3 + $0x28] sm:$0xff]
        %v1049 = vld [vmem:[#allocation3 + $0x30] sm:$0xff]
        %v1050 = vld [vmem:[#allocation3 + $0x38] sm:$0xff]
        %v1051 = vld [vmem:[#allocation3 + $0x40] sm:$0xff]
        %v1052 = vld [vmem:[#allocation3 + $0x48] sm:$0xff]
        %v1053 = vld [vmem:[#allocation3 + $0x50] sm:$0xff]
        %v1054 = vld [vmem:[#allocation3 + $0x58] sm:$0xff]
        %vm1057 = vcmask 1040384
        %v1058 = vrot.slane %v1033, 7
        %v1059 = vrot.slane %v1034, 7
        %v1060 = vsel %vm1057, %v1058, %v1059
        %v1064 = vsel %vm1057, 0.0, %v1058
        %v1065 = vsel %vm1057, %v1059, 0.0
        %v1066 = vld [vmem:[%s6] sm:$0x1]
        %v1067 = vpack.c.bf16 %v1060, %v1064
        %v1068 = vpack.c.bf16 %v1044, %v1043
        %v1069 = vpack.c.bf16 %v1046, %v1045
        %vm1070 = vcmask 261120
        %v1072 = vsel %vm1070, %v1067, 0
        %1074 = vmatprep.subr.bf16.mxu0 0
        %1075 = vmatpush1.bf16.msra.mxu0 0
        %1076 = vmatprep.subr.bf16.mxu0 0
        %1077 = vmatpush1.bf16.msra.mxu0 0
        %1078 = vmatprep.subr.bf16.mxu0 0
        %1079 = vmatpush1.bf16.msra.mxu0 0
        %1080 = vmatprep.subr.bf16.mxu0 0
        %1081 = vmatpush1.bf16.msra.mxu0 0
        %1082 = vmatprep.subr.bf16.mxu0 0
        %1083 = vmatpush1.bf16.msra.mxu0 0
        %1084 = vmatprep.subr.bf16.mxu0 0
        %1085 = vmatpush1.bf16.msra.mxu0 0
        %1086 = vmatprep.subr.bf16.mxu0 0
        %1087 = vmatpush1.bf16.msra.mxu0 %v1069
        %1088 = vmatprep.subr.bf16.mxu0 0
        %1089 = vmatpush1.bf16.msra.mxu0 %v1068
        %1090 = vmatprep.subr.bf16.mxu0 0
        %1091 = vmatpush2.bf16.msra.mxu0 0
        %1092 = vmatprep.subr.bf16.mxu0 0
        %1093 = vmatpush2.bf16.msra.mxu0 0
        %1094 = vmatprep.subr.bf16.mxu0 0
        %1095 = vmatpush2.bf16.msra.mxu0 0
        %1096 = vmatprep.subr.bf16.mxu0 0
        %1097 = vmatpush2.bf16.msra.mxu0 0
        %1098 = vmatprep.subr.bf16.mxu0 0
        %1099 = vmatpush2.bf16.msra.mxu0 0
        %1100 = vmatprep.subr.bf16.mxu0 0
        %1101 = vmatpush2.bf16.msra.mxu0 0
        %1102 = vmatprep.subr.bf16.mxu0 0
        %1103 = vmatpush2.bf16.msra.mxu0 0
        %1104 = vmatprep.subr.bf16.mxu0 0
        %1105 = vmatpush2.bf16.msra.mxu0 0
        %1106 = vmatprep.mubr.bf16.mxu0 0
        %1107 = vmatmul.mubr.bf16.gmra.mxu0 %v1072
        %v1108 = vpop.f32.mrf.mxu0
        %v1109 = vadd.f32 0.0, %v1108
        %v1110 = vpop.f32.mrf.mxu0
        %v1111 = vpop.f32.mrf.mxu0
        %v1112 = vadd.f32 0.0, %v1111
        %v1113 = vpop.f32.mrf.mxu0
        %1114 = vdwg.mxu0
        %v1116 = vlaneseq
        %v1117 = vshrl.u32 %v1116, 7
        %v1118 = vsub.s32 0, %v1117
        %v1119 = vrot.slane %v1066, %v1118
        %v1121 = vadd.f32 %v1119, %v1109
        %v1122 = vadd.f32 %v1119, %v1112
        %v1123 = vpack.c.bf16 %v1065, %v1065
        %v1124 = vpack.c.bf16 %v1048, %v1047
        %v1125 = vpack.c.bf16 %v1050, %v1049
        %vm1126 = vsmask.f32 7424
        %v1127 = vshrl.u32 %v1067, 16
        %v1129 = vshll.u32 %v1067, 16
        %v1131 = vrot.slane %v1129, 1
        %v1132 = vor.u32 %v1127, %v1131
        %v1134 = vshll.u32 %v1123, 16
        %v1136 = vrot.slane %v1134, 1
        %v1137 = vsel %vm1126, %v1132, %v1136
        %v1139 = vsel %vm1070, %v1137, 0
        %1141 = vmatprep.subr.bf16.mxu0 0
        %1142 = vmatpush1.bf16.msra.mxu0 0
        %1143 = vmatprep.subr.bf16.mxu0 0
        %1144 = vmatpush1.bf16.msra.mxu0 0
        %1145 = vmatprep.subr.bf16.mxu0 0
        %1146 = vmatpush1.bf16.msra.mxu0 0
        %1147 = vmatprep.subr.bf16.mxu0 0
        %1148 = vmatpush1.bf16.msra.mxu0 0
        %1149 = vmatprep.subr.bf16.mxu0 0
        %1150 = vmatpush1.bf16.msra.mxu0 0
        %1151 = vmatprep.subr.bf16.mxu0 0
        %1152 = vmatpush1.bf16.msra.mxu0 0
        %1153 = vmatprep.subr.bf16.mxu0 0
        %1154 = vmatpush1.bf16.msra.mxu0 %v1125
        %1155 = vmatprep.subr.bf16.mxu0 0
        %1156 = vmatpush1.bf16.msra.mxu0 %v1124
        %1157 = vmatprep.subr.bf16.mxu0 0
        %1158 = vmatpush2.bf16.msra.mxu0 0
        %1159 = vmatprep.subr.bf16.mxu0 0
        %1160 = vmatpush2.bf16.msra.mxu0 0
        %1161 = vmatprep.subr.bf16.mxu0 0
        %1162 = vmatpush2.bf16.msra.mxu0 0
        %1163 = vmatprep.subr.bf16.mxu0 0
        %1164 = vmatpush2.bf16.msra.mxu0 0
        %1165 = vmatprep.subr.bf16.mxu0 0
        %1166 = vmatpush2.bf16.msra.mxu0 0
        %1167 = vmatprep.subr.bf16.mxu0 0
        %1168 = vmatpush2.bf16.msra.mxu0 0
        %1169 = vmatprep.subr.bf16.mxu0 0
        %1170 = vmatpush2.bf16.msra.mxu0 0
        %1171 = vmatprep.subr.bf16.mxu0 0
        %1172 = vmatpush2.bf16.msra.mxu0 0
        %1173 = vmatprep.mubr.bf16.mxu0 0
        %1174 = vmatmul.mubr.bf16.gmra.mxu0 %v1139
        %v1175 = vpop.f32.mrf.mxu0
        %v1176 = vadd.f32 0.0, %v1175
        %v1177 = vpop.f32.mrf.mxu0
        %v1178 = vpop.f32.mrf.mxu0
        %v1179 = vadd.f32 0.0, %v1178
        %v1180 = vpop.f32.mrf.mxu0
        %1181 = vdwg.mxu0
        %v1182 = vadd.f32 %v1121, %v1176
        %v1183 = vadd.f32 %v1122, %v1179
        %v1184 = vpack.c.bf16 %v1052, %v1051
        %v1185 = vpack.c.bf16 %v1054, %v1053
        %vm1188 = vcmask 1046528
        %v1189 = vrot.slane %v1067, 1
        %v1190 = vrot.slane %v1123, 1
        %v1191 = vsel %vm1188, %v1189, %v1190
        %v1193 = vsel %vm1070, %v1191, 0
        %1195 = vmatprep.subr.bf16.mxu0 0
        %1196 = vmatpush1.bf16.msra.mxu0 0
        %1197 = vmatprep.subr.bf16.mxu0 0
        %1198 = vmatpush1.bf16.msra.mxu0 0
        %1199 = vmatprep.subr.bf16.mxu0 0
        %1200 = vmatpush1.bf16.msra.mxu0 0
        %1201 = vmatprep.subr.bf16.mxu0 0
        %1202 = vmatpush1.bf16.msra.mxu0 0
        %1203 = vmatprep.subr.bf16.mxu0 0
        %1204 = vmatpush1.bf16.msra.mxu0 0
        %1205 = vmatprep.subr.bf16.mxu0 0
        %1206 = vmatpush1.bf16.msra.mxu0 0
        %1207 = vmatprep.subr.bf16.mxu0 0
        %1208 = vmatpush1.bf16.msra.mxu0 %v1185
        %1209 = vmatprep.subr.bf16.mxu0 0
        %1210 = vmatpush1.bf16.msra.mxu0 %v1184
        %1211 = vmatprep.subr.bf16.mxu0 0
        %1212 = vmatpush2.bf16.msra.mxu0 0
        %1213 = vmatprep.subr.bf16.mxu0 0
        %1214 = vmatpush2.bf16.msra.mxu0 0
        %1215 = vmatprep.subr.bf16.mxu0 0
        %1216 = vmatpush2.bf16.msra.mxu0 0
        %1217 = vmatprep.subr.bf16.mxu0 0
        %1218 = vmatpush2.bf16.msra.mxu0 0
        %1219 = vmatprep.subr.bf16.mxu0 0
        %1220 = vmatpush2.bf16.msra.mxu0 0
        %1221 = vmatprep.subr.bf16.mxu0 0
        %1222 = vmatpush2.bf16.msra.mxu0 0
        %1223 = vmatprep.subr.bf16.mxu0 0
        %1224 = vmatpush2.bf16.msra.mxu0 0
        %1225 = vmatprep.subr.bf16.mxu0 0
        %1226 = vmatpush2.bf16.msra.mxu0 0
        %1227 = vmatprep.mubr.bf16.mxu0 0
        %1228 = vmatmul.mubr.bf16.gmra.mxu0 %v1193
        %v1229 = vpop.f32.mrf.mxu0
        %v1230 = vadd.f32 0.0, %v1229
        %v1231 = vpop.f32.mrf.mxu0
        %v1232 = vpop.f32.mrf.mxu0
        %v1233 = vadd.f32 0.0, %v1232
        %v1234 = vpop.f32.mrf.mxu0
        %1235 = vdwg.mxu0
        %v1236 = vadd.f32 %v1182, %v1230
        %v1237 = vadd.f32 %v1183, %v1233
        %v1238 = vld [vmem:[%s7] sm:$0xff]
        %v1239 = vld [vmem:[%s7 + $0x8] sm:$0xff]
        %v1240 = vld [vmem:[%s7 + $0x10] sm:$0xff]
        %v1241 = vld [vmem:[%s7 + $0x18] sm:$0xff]
        %v1242 = vpack.c.bf16 %v1034, %v1033
        %v1243 = vpack.c.bf16 %v1239, %v1238
        %v1244 = vpack.c.bf16 %v1241, %v1240
        %v1245 = vld [vmem:[%s8] sm:$0x1]
        %v1247 = vlaneseq
        %v1248 = vshrl.u32 %v1247, 7
        %v1249 = vsub.s32 0, %v1248
        %v1250 = vrot.slane %v1245, %v1249
        %v1253 = vsel %vm1070, %v1242, 0
        %1255 = vmatprep.subr.bf16.mxu0 0
        %1256 = vmatpush1.bf16.msra.mxu0 0
        %1257 = vmatprep.subr.bf16.mxu0 0
        %1258 = vmatpush1.bf16.msra.mxu0 0
        %1259 = vmatprep.subr.bf16.mxu0 0
        %1260 = vmatpush1.bf16.msra.mxu0 0
        %1261 = vmatprep.subr.bf16.mxu0 0
        %1262 = vmatpush1.bf16.msra.mxu0 0
        %1263 = vmatprep.subr.bf16.mxu0 0
        %1264 = vmatpush1.bf16.msra.mxu0 0
        %1265 = vmatprep.subr.bf16.mxu0 0
        %1266 = vmatpush1.bf16.msra.mxu0 0
        %1267 = vmatprep.subr.bf16.mxu0 0
        %1268 = vmatpush1.bf16.msra.mxu0 %v1244
        %1269 = vmatprep.subr.bf16.mxu0 0
        %1270 = vmatpush1.bf16.msra.mxu0 %v1243
        %1271 = vmatprep.subr.bf16.mxu0 0
        %1272 = vmatpush2.bf16.msra.mxu0 0
        %1273 = vmatprep.subr.bf16.mxu0 0
        %1274 = vmatpush2.bf16.msra.mxu0 0
        %1275 = vmatprep.subr.bf16.mxu0 0
        %1276 = vmatpush2.bf16.msra.mxu0 0
        %1277 = vmatprep.subr.bf16.mxu0 0
        %1278 = vmatpush2.bf16.msra.mxu0 0
        %1279 = vmatprep.subr.bf16.mxu0 0
        %1280 = vmatpush2.bf16.msra.mxu0 0
        %1281 = vmatprep.subr.bf16.mxu0 0
        %1282 = vmatpush2.bf16.msra.mxu0 0
        %1283 = vmatprep.subr.bf16.mxu0 0
        %1284 = vmatpush2.bf16.msra.mxu0 0
        %1285 = vmatprep.subr.bf16.mxu0 0
        %1286 = vmatpush2.bf16.msra.mxu0 0
        %1287 = vmatprep.mubr.bf16.mxu0 0
        %1288 = vmatmul.mubr.bf16.gmra.mxu0 %v1253
        %v1289 = vpop.f32.mrf.mxu0
        %v1290 = vadd.f32 %v1250, %v1289
        %v1291 = vpop.f32.mrf.mxu0
        %v1292 = vpop.f32.mrf.mxu0
        %v1293 = vadd.f32 %v1250, %v1292
        %v1294 = vpop.f32.mrf.mxu0
        %1295 = vdwg.mxu0
        %v1296 = vld [vmem:[%s9] sm:$0x1]
        %v1297 = vld [vmem:[%s10] sm:$0x1]
        %v1299 = vsel %vm1070, %v1290, 0
        %v1302 = vsel %vm1070, %v1293, 0
        %1304 = vmatprep.subr.mxu0 0.0
        %1305 = vmatpush1.msra.mxu0 0.0
        %1306 = vmatprep.subr.mxu0 0.0
        %1307 = vmatpush1.msra.mxu0 0.0
        %1308 = vmatprep.subr.mxu0 0.0
        %1309 = vmatpush1.msra.mxu0 0.0
        %1310 = vmatprep.subr.mxu0 0.0
        %1311 = vmatpush1.msra.mxu0 0.0
        %1312 = vmatprep.subr.mxu0 0.0
        %1313 = vmatpush1.msra.mxu0 0.0
        %1314 = vmatprep.subr.mxu0 0.0
        %1315 = vmatpush1.msra.mxu0 0.0
        %1316 = vmatprep.subr.mxu0 0.0
        %1317 = vmatpush1.msra.mxu0 0.0
        %1318 = vmatprep.subr.mxu0 0.0
        %1319 = vmatpush1.msra.mxu0 0.0
        %1320 = vmatprep.subr.mxu0 0.0
        %1321 = vmatpush1.msra.mxu0 0.0
        %1322 = vmatprep.subr.mxu0 0.0
        %1323 = vmatpush1.msra.mxu0 0.0
        %1324 = vmatprep.subr.mxu0 0.0
        %1325 = vmatpush1.msra.mxu0 0.0
        %1326 = vmatprep.subr.mxu0 0.0
        %1327 = vmatpush1.msra.mxu0 0.0
        %1328 = vmatprep.subr.mxu0 0.0
        %1329 = vmatpush1.msra.mxu0 %v1038
        %1330 = vmatprep.subr.mxu0 0.0
        %1331 = vmatpush1.msra.mxu0 %v1037
        %1332 = vmatprep.subr.mxu0 0.0
        %1333 = vmatpush1.msra.mxu0 %v1036
        %1334 = vmatprep.subr.mxu0 0.0
        %1335 = vmatpush1.msra.mxu0 %v1035
        %1336 = vmatprep.subr.mxu0 0.0
        %1337 = vmatpush2.msra.mxu0 0.0
        %1338 = vmatprep.subr.mxu0 0.0
        %1339 = vmatpush2.msra.mxu0 0.0
        %1340 = vmatprep.subr.mxu0 0.0
        %1341 = vmatpush2.msra.mxu0 0.0
        %1342 = vmatprep.subr.mxu0 0.0
        %1343 = vmatpush2.msra.mxu0 0.0
        %1344 = vmatprep.subr.mxu0 0.0
        %1345 = vmatpush2.msra.mxu0 0.0
        %1346 = vmatprep.subr.mxu0 0.0
        %1347 = vmatpush2.msra.mxu0 0.0
        %1348 = vmatprep.subr.mxu0 0.0
        %1349 = vmatpush2.msra.mxu0 0.0
        %1350 = vmatprep.subr.mxu0 0.0
        %1351 = vmatpush2.msra.mxu0 0.0
        %1352 = vmatprep.subr.mxu0 0.0
        %1353 = vmatpush2.msra.mxu0 0.0
        %1354 = vmatprep.subr.mxu0 0.0
        %1355 = vmatpush2.msra.mxu0 0.0
        %1356 = vmatprep.subr.mxu0 0.0
        %1357 = vmatpush2.msra.mxu0 0.0
        %1358 = vmatprep.subr.mxu0 0.0
        %1359 = vmatpush2.msra.mxu0 0.0
        %1360 = vmatprep.subr.mxu0 0.0
        %1361 = vmatpush2.msra.mxu0 0.0
        %1362 = vmatprep.subr.mxu0 0.0
        %1363 = vmatpush2.msra.mxu0 0.0
        %1364 = vmatprep.subr.mxu0 0.0
        %1365 = vmatpush2.msra.mxu0 0.0
        %1366 = vmatprep.subr.mxu0 0.0
        %1367 = vmatpush2.msra.mxu0 0.0
        %1368 = vmatprep.mubr.f32.mxu0 0.0
        %1369 = vmatmul.mubr.f32.gmra.mxu0 %v1299
        %v1370 = vpop.f32.mrf.mxu0
        %v1371 = vadd.f32 0.0, %v1370
        %v1372 = vpop.f32.mrf.mxu0
        %1373 = vmatprep.mubr.f32.mxu0 0.0
        %1374 = vmatmul.mubr.f32.gmra.mxu0 %v1302
        %v1375 = vpop.f32.mrf.mxu0
        %v1376 = vadd.f32 0.0, %v1375
        %v1377 = vpop.f32.mrf.mxu0
        %1378 = vdwg.mxu0
        %v1379 = vsub.f32 %v1290, %v1371
        %v1380 = vsub.f32 %v1293, %v1376
        %v1381 = vmul.f32 %v1379, %v1379
        %v1382 = vmul.f32 %v1380, %v1380
        %v1384 = vsel %vm1070, %v1381, 0
        %v1387 = vsel %vm1070, %v1382, 0
        %1389 = vmatprep.subr.mxu0 0.0
        %1390 = vmatpush1.msra.mxu0 0.0
        %1391 = vmatprep.subr.mxu0 0.0
        %1392 = vmatpush1.msra.mxu0 0.0
        %1393 = vmatprep.subr.mxu0 0.0
        %1394 = vmatpush1.msra.mxu0 0.0
        %1395 = vmatprep.subr.mxu0 0.0
        %1396 = vmatpush1.msra.mxu0 0.0
        %1397 = vmatprep.subr.mxu0 0.0
        %1398 = vmatpush1.msra.mxu0 0.0
        %1399 = vmatprep.subr.mxu0 0.0
        %1400 = vmatpush1.msra.mxu0 0.0
        %1401 = vmatprep.subr.mxu0 0.0
        %1402 = vmatpush1.msra.mxu0 0.0
        %1403 = vmatprep.subr.mxu0 0.0
        %1404 = vmatpush1.msra.mxu0 0.0
        %1405 = vmatprep.subr.mxu0 0.0
        %1406 = vmatpush1.msra.mxu0 0.0
        %1407 = vmatprep.subr.mxu0 0.0
        %1408 = vmatpush1.msra.mxu0 0.0
        %1409 = vmatprep.subr.mxu0 0.0
        %1410 = vmatpush1.msra.mxu0 0.0
        %1411 = vmatprep.subr.mxu0 0.0
        %1412 = vmatpush1.msra.mxu0 0.0
        %1413 = vmatprep.subr.mxu0 0.0
        %1414 = vmatpush1.msra.mxu0 %v1038
        %1415 = vmatprep.subr.mxu0 0.0
        %1416 = vmatpush1.msra.mxu0 %v1037
        %1417 = vmatprep.subr.mxu0 0.0
        %1418 = vmatpush1.msra.mxu0 %v1036
        %1419 = vmatprep.subr.mxu0 0.0
        %1420 = vmatpush1.msra.mxu0 %v1035
        %1421 = vmatprep.subr.mxu0 0.0
        %1422 = vmatpush2.msra.mxu0 0.0
        %1423 = vmatprep.subr.mxu0 0.0
        %1424 = vmatpush2.msra.mxu0 0.0
        %1425 = vmatprep.subr.mxu0 0.0
        %1426 = vmatpush2.msra.mxu0 0.0
        %1427 = vmatprep.subr.mxu0 0.0
        %1428 = vmatpush2.msra.mxu0 0.0
        %1429 = vmatprep.subr.mxu0 0.0
        %1430 = vmatpush2.msra.mxu0 0.0
        %1431 = vmatprep.subr.mxu0 0.0
        %1432 = vmatpush2.msra.mxu0 0.0
        %1433 = vmatprep.subr.mxu0 0.0
        %1434 = vmatpush2.msra.mxu0 0.0
        %1435 = vmatprep.subr.mxu0 0.0
        %1436 = vmatpush2.msra.mxu0 0.0
        %1437 = vmatprep.subr.mxu0 0.0
        %1438 = vmatpush2.msra.mxu0 0.0
        %1439 = vmatprep.subr.mxu0 0.0
        %1440 = vmatpush2.msra.mxu0 0.0
        %1441 = vmatprep.subr.mxu0 0.0
        %1442 = vmatpush2.msra.mxu0 0.0
        %1443 = vmatprep.subr.mxu0 0.0
        %1444 = vmatpush2.msra.mxu0 0.0
        %1445 = vmatprep.subr.mxu0 0.0
        %1446 = vmatpush2.msra.mxu0 0.0
        %1447 = vmatprep.subr.mxu0 0.0
        %1448 = vmatpush2.msra.mxu0 0.0
        %1449 = vmatprep.subr.mxu0 0.0
        %1450 = vmatpush2.msra.mxu0 0.0
        %1451 = vmatprep.subr.mxu0 0.0
        %1452 = vmatpush2.msra.mxu0 0.0
        %1453 = vmatprep.mubr.f32.mxu0 0.0
        %1454 = vmatmul.mubr.f32.gmra.mxu0 %v1384
        %v1455 = vpop.f32.mrf.mxu0
        %v1456 = vadd.f32 1e-05, %v1455
        %v1457 = vpop.f32.mrf.mxu0
        %1458 = vmatprep.mubr.f32.mxu0 0.0
        %1459 = vmatmul.mubr.f32.gmra.mxu0 %v1387
        %v1460 = vpop.f32.mrf.mxu0
        %v1461 = vadd.f32 1e-05, %v1460
        %v1462 = vpop.f32.mrf.mxu0
        %1463 = vdwg.mxu0
        %v1464 = vrsqrt.pop %v1456
        %v1465 = vrsqrt.pop %v1461
        %v1466 = vmul.f32 %v1379, %v1464
        %v1467 = vmul.f32 %v1380, %v1465
        %v1469 = vlaneseq
        %v1470 = vshrl.u32 %v1469, 7
        %v1471 = vsub.s32 0, %v1470
        %v1472 = vrot.slane %v1296, %v1471
        %v1474 = vmul.f32 %v1466, %v1472
        %v1475 = vmul.f32 %v1467, %v1472
        %v1477 = vlaneseq
        %v1478 = vshrl.u32 %v1477, 7
        %v1479 = vsub.s32 0, %v1478
        %v1480 = vrot.slane %v1297, %v1479
        %v1482 = vadd.f32 %v1474, %v1480
        %v1483 = vadd.f32 %v1475, %v1480
        %v1484 = vld [vmem:[%s11] sm:$0x1]
        %v1485 = vld [vmem:[%s12] sm:$0x1]
        %1486 = vrot.lane.b32.xlu0 %v1290, 96
        %v1487 = vpop.permute.xlu0 %1486
        %1488 = vrot.lane.b32.xlu0 %v1293, 96
        %v1489 = vpop.permute.xlu0 %1488
        %v1490 = vsel %vm1070, %v1487, 0
        %v1492 = vsel %vm1070, %v1489, 0
        %1494 = vmatprep.subr.mxu0 0.0
        %1495 = vmatpush1.msra.mxu0 0.0
        %1496 = vmatprep.subr.mxu0 0.0
        %1497 = vmatpush1.msra.mxu0 0.0
        %1498 = vmatprep.subr.mxu0 0.0
        %1499 = vmatpush1.msra.mxu0 0.0
        %1500 = vmatprep.subr.mxu0 0.0
        %1501 = vmatpush1.msra.mxu0 0.0
        %1502 = vmatprep.subr.mxu0 0.0
        %1503 = vmatpush1.msra.mxu0 0.0
        %1504 = vmatprep.subr.mxu0 0.0
        %1505 = vmatpush1.msra.mxu0 0.0
        %1506 = vmatprep.subr.mxu0 0.0
        %1507 = vmatpush1.msra.mxu0 0.0
        %1508 = vmatprep.subr.mxu0 0.0
        %1509 = vmatpush1.msra.mxu0 0.0
        %1510 = vmatprep.subr.mxu0 0.0
        %1511 = vmatpush1.msra.mxu0 0.0
        %1512 = vmatprep.subr.mxu0 0.0
        %1513 = vmatpush1.msra.mxu0 0.0
        %1514 = vmatprep.subr.mxu0 0.0
        %1515 = vmatpush1.msra.mxu0 0.0
        %1516 = vmatprep.subr.mxu0 0.0
        %1517 = vmatpush1.msra.mxu0 0.0
        %1518 = vmatprep.subr.mxu0 0.0
        %1519 = vmatpush1.msra.mxu0 %v1038
        %1520 = vmatprep.subr.mxu0 0.0
        %1521 = vmatpush1.msra.mxu0 %v1037
        %1522 = vmatprep.subr.mxu0 0.0
        %1523 = vmatpush1.msra.mxu0 %v1036
        %1524 = vmatprep.subr.mxu0 0.0
        %1525 = vmatpush1.msra.mxu0 %v1035
        %1526 = vmatprep.subr.mxu0 0.0
        %1527 = vmatpush2.msra.mxu0 0.0
        %1528 = vmatprep.subr.mxu0 0.0
        %1529 = vmatpush2.msra.mxu0 0.0
        %1530 = vmatprep.subr.mxu0 0.0
        %1531 = vmatpush2.msra.mxu0 0.0
        %1532 = vmatprep.subr.mxu0 0.0
        %1533 = vmatpush2.msra.mxu0 0.0
        %1534 = vmatprep.subr.mxu0 0.0
        %1535 = vmatpush2.msra.mxu0 0.0
        %1536 = vmatprep.subr.mxu0 0.0
        %1537 = vmatpush2.msra.mxu0 0.0
        %1538 = vmatprep.subr.mxu0 0.0
        %1539 = vmatpush2.msra.mxu0 0.0
        %1540 = vmatprep.subr.mxu0 0.0
        %1541 = vmatpush2.msra.mxu0 0.0
        %1542 = vmatprep.subr.mxu0 0.0
        %1543 = vmatpush2.msra.mxu0 0.0
        %1544 = vmatprep.subr.mxu0 0.0
        %1545 = vmatpush2.msra.mxu0 0.0
        %1546 = vmatprep.subr.mxu0 0.0
        %1547 = vmatpush2.msra.mxu0 0.0
        %1548 = vmatprep.subr.mxu0 0.0
        %1549 = vmatpush2.msra.mxu0 0.0
        %1550 = vmatprep.subr.mxu0 0.0
        %1551 = vmatpush2.msra.mxu0 0.0
        %1552 = vmatprep.subr.mxu0 0.0
        %1553 = vmatpush2.msra.mxu0 0.0
        %1554 = vmatprep.subr.mxu0 0.0
        %1555 = vmatpush2.msra.mxu0 0.0
        %1556 = vmatprep.subr.mxu0 0.0
        %1557 = vmatpush2.msra.mxu0 0.0
        %1558 = vmatprep.mubr.f32.mxu0 0.0
        %1559 = vmatmul.mubr.f32.gmra.mxu0 %v1490
        %v1560 = vpop.f32.mrf.mxu0
        %v1561 = vadd.f32 0.0, %v1560
        %v1562 = vpop.f32.mrf.mxu0
        %1563 = vmatprep.mubr.f32.mxu0 0.0
        %1564 = vmatmul.mubr.f32.gmra.mxu0 %v1492
        %v1565 = vpop.f32.mrf.mxu0
        %v1566 = vadd.f32 0.0, %v1565
        %v1567 = vpop.f32.mrf.mxu0
        %1568 = vdwg.mxu0
        %1571 = vrot.lane.b32.xlu0 %v1561, 32
        %v1572 = vpop.permute.xlu0 %1571
        %1573 = vrot.lane.b32.xlu0 %v1566, 32
        %v1574 = vpop.permute.xlu0 %1573
        %v1577 = vsub.f32 %v1290, %v1572
        %v1578 = vsub.f32 %v1293, %v1574
        %v1579 = vmul.f32 %v1577, %v1577
        %v1580 = vmul.f32 %v1578, %v1578
        %1583 = vrot.lane.b32.xlu0 %v1579, 96
        %v1584 = vpop.permute.xlu0 %1583
        %1585 = vrot.lane.b32.xlu0 %v1580, 96
        %v1586 = vpop.permute.xlu0 %1585
        %v1587 = vsel %vm1070, %v1584, 0
        %v1589 = vsel %vm1070, %v1586, 0
        %1591 = vmatprep.subr.mxu0 0.0
        %1592 = vmatpush1.msra.mxu0 0.0
        %1593 = vmatprep.subr.mxu0 0.0
        %1594 = vmatpush1.msra.mxu0 0.0
        %1595 = vmatprep.subr.mxu0 0.0
        %1596 = vmatpush1.msra.mxu0 0.0
        %1597 = vmatprep.subr.mxu0 0.0
        %1598 = vmatpush1.msra.mxu0 0.0
        %1599 = vmatprep.subr.mxu0 0.0
        %1600 = vmatpush1.msra.mxu0 0.0
        %1601 = vmatprep.subr.mxu0 0.0
        %1602 = vmatpush1.msra.mxu0 0.0
        %1603 = vmatprep.subr.mxu0 0.0
        %1604 = vmatpush1.msra.mxu0 0.0
        %1605 = vmatprep.subr.mxu0 0.0
        %1606 = vmatpush1.msra.mxu0 0.0
        %1607 = vmatprep.subr.mxu0 0.0
        %1608 = vmatpush1.msra.mxu0 0.0
        %1609 = vmatprep.subr.mxu0 0.0
        %1610 = vmatpush1.msra.mxu0 0.0
        %1611 = vmatprep.subr.mxu0 0.0
        %1612 = vmatpush1.msra.mxu0 0.0
        %1613 = vmatprep.subr.mxu0 0.0
        %1614 = vmatpush1.msra.mxu0 0.0
        %1615 = vmatprep.subr.mxu0 0.0
        %1616 = vmatpush1.msra.mxu0 %v1038
        %1617 = vmatprep.subr.mxu0 0.0
        %1618 = vmatpush1.msra.mxu0 %v1037
        %1619 = vmatprep.subr.mxu0 0.0
        %1620 = vmatpush1.msra.mxu0 %v1036
        %1621 = vmatprep.subr.mxu0 0.0
        %1622 = vmatpush1.msra.mxu0 %v1035
        %1623 = vmatprep.subr.mxu0 0.0
        %1624 = vmatpush2.msra.mxu0 0.0
        %1625 = vmatprep.subr.mxu0 0.0
        %1626 = vmatpush2.msra.mxu0 0.0
        %1627 = vmatprep.subr.mxu0 0.0
        %1628 = vmatpush2.msra.mxu0 0.0
        %1629 = vmatprep.subr.mxu0 0.0
        %1630 = vmatpush2.msra.mxu0 0.0
        %1631 = vmatprep.subr.mxu0 0.0
        %1632 = vmatpush2.msra.mxu0 0.0
        %1633 = vmatprep.subr.mxu0 0.0
        %1634 = vmatpush2.msra.mxu0 0.0
        %1635 = vmatprep.subr.mxu0 0.0
        %1636 = vmatpush2.msra.mxu0 0.0
        %1637 = vmatprep.subr.mxu0 0.0
        %1638 = vmatpush2.msra.mxu0 0.0
        %1639 = vmatprep.subr.mxu0 0.0
        %1640 = vmatpush2.msra.mxu0 0.0
        %1641 = vmatprep.subr.mxu0 0.0
        %1642 = vmatpush2.msra.mxu0 0.0
        %1643 = vmatprep.subr.mxu0 0.0
        %1644 = vmatpush2.msra.mxu0 0.0
        %1645 = vmatprep.subr.mxu0 0.0
        %1646 = vmatpush2.msra.mxu0 0.0
        %1647 = vmatprep.subr.mxu0 0.0
        %1648 = vmatpush2.msra.mxu0 0.0
        %1649 = vmatprep.subr.mxu0 0.0
        %1650 = vmatpush2.msra.mxu0 0.0
        %1651 = vmatprep.subr.mxu0 0.0
        %1652 = vmatpush2.msra.mxu0 0.0
        %1653 = vmatprep.subr.mxu0 0.0
        %1654 = vmatpush2.msra.mxu0 0.0
        %1655 = vmatprep.mubr.f32.mxu0 0.0
        %1656 = vmatmul.mubr.f32.gmra.mxu0 %v1587
        %v1657 = vpop.f32.mrf.mxu0
        %v1658 = vadd.f32 1e-05, %v1657
        %v1659 = vpop.f32.mrf.mxu0
        %1660 = vmatprep.mubr.f32.mxu0 0.0
        %1661 = vmatmul.mubr.f32.gmra.mxu0 %v1589
        %v1662 = vpop.f32.mrf.mxu0
        %v1663 = vadd.f32 1e-05, %v1662
        %v1664 = vpop.f32.mrf.mxu0
        %1665 = vdwg.mxu0
        %v1666 = vrsqrt.pop %v1658
        %v1667 = vrsqrt.pop %v1663
        %1670 = vrot.lane.b32.xlu0 %v1666, 32
        %v1671 = vpop.permute.xlu0 %1670
        %1672 = vrot.lane.b32.xlu0 %v1667, 32
        %v1673 = vpop.permute.xlu0 %1672
        %v1676 = vmul.f32 %v1577, %v1671
        %v1677 = vmul.f32 %v1578, %v1673
        %v1679 = vlaneseq
        %v1680 = vshrl.u32 %v1679, 7
        %v1681 = vsub.s32 0, %v1680
        %v1682 = vrot.slane %v1484, %v1681
        %1683 = vrot.lane.b32.xlu0 %v1682, 32
        %v1684 = vpop.permute.xlu0 %1683
        %v1686 = vmul.f32 %v1676, %v1684
        %v1687 = vmul.f32 %v1677, %v1684
        %v1689 = vlaneseq
        %v1690 = vshrl.u32 %v1689, 7
        %v1691 = vsub.s32 0, %v1690
        %v1692 = vrot.slane %v1485, %v1691
        %1693 = vrot.lane.b32.xlu0 %v1692, 32
        %v1694 = vpop.permute.xlu0 %1693
        %v1696 = vadd.f32 %v1686, %v1694
        %v1697 = vadd.f32 %v1687, %v1694
        %v1698 = vpack.c.bf16 %v1697, %v1696
        %v1699 = vpack.c.bf16 %v1293, %v1290
        %1701 = vrot.lane.b32.xlu0 %v1698, 96
        %v1702 = vpop.permute.xlu0 %1701
        %1704 = vxpose.xlu0.c.b16.start [1/8] %v1702, 128
        %1705 = vxpose.xlu0.c.b16.cont [2/8] 0, 128
        %1706 = vxpose.xlu0.c.b16.cont [3/8] 0, 128
        %1707 = vxpose.xlu0.c.b16.cont [4/8] 0, 128
        %1708 = vxpose.xlu0.c.b16.cont [5/8] 0, 128
        %1709 = vxpose.xlu0.c.b16.cont [6/8] 0, 128
        %1710 = vxpose.xlu0.c.b16.cont [7/8] 0, 128
        %1711 = vxpose.xlu0.c.b16.end [8/8] 0, 128
        %v1712 = vpop.trf.xlu0
        %v1713 = vpop.trf.xlu0
        %v1714 = vpop.trf.xlu0
        %v1715 = vpop.trf.xlu0
        %v1716 = vpop.trf.xlu0
        %v1717 = vpop.trf.xlu0
        %v1718 = vpop.trf.xlu0
        %v1719 = vpop.trf.xlu0
        %1721 = vrot.lane.b32.xlu0 %v1699, 64
        %v1722 = vpop.permute.xlu0 %1721
        %vm1724 = vcmask 130048
        %v1726 = vsel %vm1724, %v1712, 0
        %v1729 = vsel %vm1724, %v1713, 0
        %1731 = vmatprep.subr.bf16.mxu0 0
        %1732 = vmatpush1.bf16.msra.mxu0 0
        %1733 = vmatprep.subr.bf16.mxu0 0
        %1734 = vmatpush1.bf16.msra.mxu0 0
        %1735 = vmatprep.subr.bf16.mxu0 0
        %1736 = vmatpush1.bf16.msra.mxu0 0
        %1737 = vmatprep.subr.bf16.mxu0 0
        %1738 = vmatpush1.bf16.msra.mxu0 0
        %1739 = vmatprep.subr.bf16.mxu0 0
        %1740 = vmatpush1.bf16.msra.mxu0 0
        %1741 = vmatprep.subr.bf16.mxu0 0
        %1742 = vmatpush1.bf16.msra.mxu0 0
        %1743 = vmatprep.subr.bf16.mxu0 0
        %1744 = vmatpush1.bf16.msra.mxu0 0
        %1745 = vmatprep.subr.bf16.mxu0 0
        %1746 = vmatpush1.bf16.msra.mxu0 %v1722
        %1747 = vmatprep.subr.bf16.mxu0 0
        %1748 = vmatpush2.bf16.msra.mxu0 0
        %1749 = vmatprep.subr.bf16.mxu0 0
        %1750 = vmatpush2.bf16.msra.mxu0 0
        %1751 = vmatprep.subr.bf16.mxu0 0
        %1752 = vmatpush2.bf16.msra.mxu0 0
        %1753 = vmatprep.subr.bf16.mxu0 0
        %1754 = vmatpush2.bf16.msra.mxu0 0
        %1755 = vmatprep.subr.bf16.mxu0 0
        %1756 = vmatpush2.bf16.msra.mxu0 0
        %1757 = vmatprep.subr.bf16.mxu0 0
        %1758 = vmatpush2.bf16.msra.mxu0 0
        %1759 = vmatprep.subr.bf16.mxu0 0
        %1760 = vmatpush2.bf16.msra.mxu0 0
        %1761 = vmatprep.subr.bf16.mxu0 0
        %1762 = vmatpush2.bf16.msra.mxu0 0
        %1763 = vmatprep.mubr.bf16.mxu0 0
        %1764 = vmatmul.mubr.bf16.gmra.mxu0 %v1726
        %v1765 = vpop.f32.mrf.mxu0
        %v1766 = vadd.f32 0.0, %v1765
        %v1767 = vpop.f32.mrf.mxu0
        %v1768 = vpop.f32.mrf.mxu0
        %v1769 = vadd.f32 0.0, %v1768
        %v1770 = vpop.f32.mrf.mxu0
        %1771 = vmatprep.mubr.bf16.mxu0 0
        %1772 = vmatmul.mubr.bf16.gmra.mxu0 %v1729
        %v1773 = vpop.f32.mrf.mxu0
        %v1774 = vadd.f32 0.0, %v1773
        %v1775 = vpop.f32.mrf.mxu0
        %v1776 = vpop.f32.mrf.mxu0
        %v1777 = vadd.f32 0.0, %v1776
        %v1778 = vpop.f32.mrf.mxu0
        %1779 = vdwg.mxu0
        %v1780 = vmul.f32 %v1766, %v1039
        %v1781 = vmul.f32 %v1769, %v1040
        %v1782 = vmul.f32 %v1774, %v1041
        %v1783 = vmul.f32 %v1777, %v1042
        %v1784 = vpack.c.bf16 %v1483, %v1482
        %v1785 = vpack.c.bf16 %v1781, %v1780
        %v1786 = vpack.c.bf16 %v1783, %v1782
        %v1788 = vsel %vm1070, %v1784, 0
        %1790 = vmatprep.subr.bf16.mxu0 0
        %1791 = vmatpush1.bf16.msra.mxu0 0
        %1792 = vmatprep.subr.bf16.mxu0 0
        %1793 = vmatpush1.bf16.msra.mxu0 0
        %1794 = vmatprep.subr.bf16.mxu0 0
        %1795 = vmatpush1.bf16.msra.mxu0 0
        %1796 = vmatprep.subr.bf16.mxu0 0
        %1797 = vmatpush1.bf16.msra.mxu0 0
        %1798 = vmatprep.subr.bf16.mxu0 0
        %1799 = vmatpush1.bf16.msra.mxu0 0
        %1800 = vmatprep.subr.bf16.mxu0 0
        %1801 = vmatpush1.bf16.msra.mxu0 0
        %1802 = vmatprep.subr.bf16.mxu0 0
        %1803 = vmatpush1.bf16.msra.mxu0 %v1786
        %1804 = vmatprep.subr.bf16.mxu0 0
        %1805 = vmatpush1.bf16.msra.mxu0 %v1785
        %1806 = vmatprep.subr.bf16.mxu0 0
        %1807 = vmatpush2.bf16.msra.mxu0 0
        %1808 = vmatprep.subr.bf16.mxu0 0
        %1809 = vmatpush2.bf16.msra.mxu0 0
        %1810 = vmatprep.subr.bf16.mxu0 0
        %1811 = vmatpush2.bf16.msra.mxu0 0
        %1812 = vmatprep.subr.bf16.mxu0 0
        %1813 = vmatpush2.bf16.msra.mxu0 0
        %1814 = vmatprep.subr.bf16.mxu0 0
        %1815 = vmatpush2.bf16.msra.mxu0 0
        %1816 = vmatprep.subr.bf16.mxu0 0
        %1817 = vmatpush2.bf16.msra.mxu0 0
        %1818 = vmatprep.subr.bf16.mxu0 0
        %1819 = vmatpush2.bf16.msra.mxu0 0
        %1820 = vmatprep.subr.bf16.mxu0 0
        %1821 = vmatpush2.bf16.msra.mxu0 0
        %1822 = vmatprep.mubr.bf16.mxu0 0
        %1823 = vmatmul.mubr.bf16.gmra.mxu0 %v1788
        %v1824 = vpop.f32.mrf.mxu0
        %v1825 = vadd.f32 0.0, %v1824
        %v1826 = vpop.f32.mrf.mxu0
        %v1827 = vpop.f32.mrf.mxu0
        %v1828 = vadd.f32 0.0, %v1827
        %v1829 = vpop.f32.mrf.mxu0
        %1830 = vdwg.mxu0
        %v1831 = vmul.f32 %v1825, 0.0625
        %v1832 = vmul.f32 %v1828, 0.0625
        %v1833 = vld [vmem:[%s13] sm:$0xff]
        %v1834 = vld [vmem:[%s13 + $0x8] sm:$0xff]
        %v1835 = vld [vmem:[%s13 + $0x10] sm:$0xff]
        %v1836 = vld [vmem:[%s13 + $0x18] sm:$0xff]
        %v1837 = vpack.c.bf16 %v1832, %v1831
        %v1838 = vpack.c.bf16 %v1834, %v1833
        %v1839 = vpack.c.bf16 %v1836, %v1835
        %v1840 = vld [vmem:[%s14] sm:$0x1]
        %v1842 = vlaneseq
        %v1843 = vshrl.u32 %v1842, 7
        %v1844 = vsub.s32 0, %v1843
        %v1845 = vrot.slane %v1840, %v1844
        %v1848 = vsel %vm1070, %v1837, 0
        %1850 = vmatprep.subr.bf16.mxu0 0
        %1851 = vmatpush1.bf16.msra.mxu0 0
        %1852 = vmatprep.subr.bf16.mxu0 0
        %1853 = vmatpush1.bf16.msra.mxu0 0
        %1854 = vmatprep.subr.bf16.mxu0 0
        %1855 = vmatpush1.bf16.msra.mxu0 0
        %1856 = vmatprep.subr.bf16.mxu0 0
        %1857 = vmatpush1.bf16.msra.mxu0 0
        %1858 = vmatprep.subr.bf16.mxu0 0
        %1859 = vmatpush1.bf16.msra.mxu0 0
        %1860 = vmatprep.subr.bf16.mxu0 0
        %1861 = vmatpush1.bf16.msra.mxu0 0
        %1862 = vmatprep.subr.bf16.mxu0 0
        %1863 = vmatpush1.bf16.msra.mxu0 %v1839
        %1864 = vmatprep.subr.bf16.mxu0 0
        %1865 = vmatpush1.bf16.msra.mxu0 %v1838
        %1866 = vmatprep.subr.bf16.mxu0 0
        %1867 = vmatpush2.bf16.msra.mxu0 0
        %1868 = vmatprep.subr.bf16.mxu0 0
        %1869 = vmatpush2.bf16.msra.mxu0 0
        %1870 = vmatprep.subr.bf16.mxu0 0
        %1871 = vmatpush2.bf16.msra.mxu0 0
        %1872 = vmatprep.subr.bf16.mxu0 0
        %1873 = vmatpush2.bf16.msra.mxu0 0
        %1874 = vmatprep.subr.bf16.mxu0 0
        %1875 = vmatpush2.bf16.msra.mxu0 0
        %1876 = vmatprep.subr.bf16.mxu0 0
        %1877 = vmatpush2.bf16.msra.mxu0 0
        %1878 = vmatprep.subr.bf16.mxu0 0
        %1879 = vmatpush2.bf16.msra.mxu0 0
        %1880 = vmatprep.subr.bf16.mxu0 0
        %1881 = vmatpush2.bf16.msra.mxu0 0
        %1882 = vmatprep.mubr.bf16.mxu0 0
        %1883 = vmatmul.mubr.bf16.gmra.mxu0 %v1848
        %v1884 = vpop.f32.mrf.mxu0
        %v1885 = vadd.f32 %v1845, %v1884
        %v1886 = vpop.f32.mrf.mxu0
        %v1887 = vpop.f32.mrf.mxu0
        %v1888 = vadd.f32 %v1845, %v1887
        %v1889 = vpop.f32.mrf.mxu0
        %1890 = vdwg.mxu0
        %v1891 = vadd.f32 %v1236, %v1885
        %v1892 = vadd.f32 %v1237, %v1888
        %v1893 = vld [vmem:[#allocation6] sm:$0x1]
        %v1894 = vld [vmem:[#allocation8] sm:$0x1]
        %v1895 = vsel %vm1070, %v1891, 0.0
        %1896 = vadd.xlane.f32.xlu0 %v1895
        %v1897 = vpop.xlane.xlu0 %1896
        %v1898 = vsel %vm1070, %v1892, 0.0
        %1899 = vadd.xlane.f32.xlu0 %v1898
        %v1900 = vpop.xlane.xlu0 %1899
        %v1901 = vrcp.pop 32.0
        %v1902 = vmul.f32 %v1897, %v1901
        %v1903 = vmul.f32 %v1900, %v1901
        %v1904 = vsub.f32 %v1891, %v1902
        %v1905 = vsub.f32 %v1892, %v1903
        %v1906 = vmul.f32 %v1904, %v1904
        %v1907 = vmul.f32 %v1905, %v1905
        %v1908 = vsel %vm1070, %v1906, 0.0
        %1909 = vadd.xlane.f32.xlu0 %v1908
        %v1910 = vpop.xlane.xlu0 %1909
        %v1911 = vsel %vm1070, %v1907, 0.0
        %1912 = vadd.xlane.f32.xlu0 %v1911
        %v1913 = vpop.xlane.xlu0 %1912
        %v1914 = vmul.f32 %v1910, %v1901
        %v1915 = vmul.f32 %v1913, %v1901
        %v1916 = vadd.f32 %v1914, 1e-05
        %v1917 = vadd.f32 %v1915, 1e-05
        %v1918 = vrsqrt.pop %v1916
        %v1919 = vrsqrt.pop %v1917
        %v1920 = vmul.f32 %v1904, %v1918
        %v1921 = vmul.f32 %v1905, %v1919
        %v1923 = vlaneseq
        %v1924 = vshrl.u32 %v1923, 7
        %v1925 = vsub.s32 0, %v1924
        %v1926 = vrot.slane %v1893, %v1925
        %v1928 = vmul.f32 %v1920, %v1926
        %v1929 = vmul.f32 %v1921, %v1926
        %v1931 = vlaneseq
        %v1932 = vshrl.u32 %v1931, 7
        %v1933 = vsub.s32 0, %v1932
        %v1934 = vrot.slane %v1894, %v1933
        %v1936 = vadd.f32 %v1928, %v1934
        %v1937 = vadd.f32 %v1929, %v1934
        %v1938 = vld [vmem:[#allocation9] sm:$0xff]
        %v1939 = vld [vmem:[#allocation9 + $0x8] sm:$0xff]
        %v1940 = vld [vmem:[#allocation9 + $0x10] sm:$0xff]
        %v1941 = vld [vmem:[#allocation9 + $0x18] sm:$0xff]
        %v1942 = vpack.c.bf16 %v1937, %v1936
        %v1943 = vpack.c.bf16 %v1939, %v1938
        %v1944 = vpack.c.bf16 %v1941, %v1940
        %v1945 = vld [vmem:[#allocation11] sm:$0x1]
        %v1947 = vlaneseq
        %v1948 = vshrl.u32 %v1947, 7
        %v1949 = vsub.s32 0, %v1948
        %v1950 = vrot.slane %v1945, %v1949
        %v1953 = vsel %vm1070, %v1942, 0
        %1955 = vmatprep.subr.bf16.mxu0 0
        %1956 = vmatpush1.bf16.msra.mxu0 0
        %1957 = vmatprep.subr.bf16.mxu0 0
        %1958 = vmatpush1.bf16.msra.mxu0 0
        %1959 = vmatprep.subr.bf16.mxu0 0
        %1960 = vmatpush1.bf16.msra.mxu0 0
        %1961 = vmatprep.subr.bf16.mxu0 0
        %1962 = vmatpush1.bf16.msra.mxu0 0
        %1963 = vmatprep.subr.bf16.mxu0 0
        %1964 = vmatpush1.bf16.msra.mxu0 0
        %1965 = vmatprep.subr.bf16.mxu0 0
        %1966 = vmatpush1.bf16.msra.mxu0 0
        %1967 = vmatprep.subr.bf16.mxu0 0
        %1968 = vmatpush1.bf16.msra.mxu0 %v1944
        %1969 = vmatprep.subr.bf16.mxu0 0
        %1970 = vmatpush1.bf16.msra.mxu0 %v1943
        %1971 = vmatprep.subr.bf16.mxu0 0
        %1972 = vmatpush2.bf16.msra.mxu0 0
        %1973 = vmatprep.subr.bf16.mxu0 0
        %1974 = vmatpush2.bf16.msra.mxu0 0
        %1975 = vmatprep.subr.bf16.mxu0 0
        %1976 = vmatpush2.bf16.msra.mxu0 0
        %1977 = vmatprep.subr.bf16.mxu0 0
        %1978 = vmatpush2.bf16.msra.mxu0 0
        %1979 = vmatprep.subr.bf16.mxu0 0
        %1980 = vmatpush2.bf16.msra.mxu0 0
        %1981 = vmatprep.subr.bf16.mxu0 0
        %1982 = vmatpush2.bf16.msra.mxu0 0
        %1983 = vmatprep.subr.bf16.mxu0 0
        %1984 = vmatpush2.bf16.msra.mxu0 0
        %1985 = vmatprep.subr.bf16.mxu0 0
        %1986 = vmatpush2.bf16.msra.mxu0 0
        %1987 = vmatprep.mubr.bf16.mxu0 0
        %1988 = vmatmul.mubr.bf16.gmra.mxu0 %v1953
        %v1989 = vpop.f32.mrf.mxu0
        %v1990 = vadd.f32 %v1950, %v1989
        %v1991 = vpop.f32.mrf.mxu0
        %v1992 = vpop.f32.mrf.mxu0
        %v1993 = vadd.f32 %v1950, %v1992
        %v1994 = vpop.f32.mrf.mxu0
        %1995 = vdwg.mxu0
        %v1996 = vmax.f32 %v1990, 0.0
        %v1997 = vmax.f32 %v1993, 0.0
        %v1998 = vld [vmem:[#allocation12] sm:$0xff]
        %v1999 = vld [vmem:[#allocation12 + $0x8] sm:$0xff]
        %v2000 = vld [vmem:[#allocation12 + $0x10] sm:$0xff]
        %v2001 = vld [vmem:[#allocation12 + $0x18] sm:$0xff]
        %v2002 = vpack.c.bf16 %v1997, %v1996
        %v2003 = vpack.c.bf16 %v1999, %v1998
        %v2004 = vpack.c.bf16 %v2001, %v2000
        %v2005 = vld [vmem:[#allocation14] sm:$0x1]
        %v2007 = vlaneseq
        %v2008 = vshrl.u32 %v2007, 7
        %v2009 = vsub.s32 0, %v2008
        %v2010 = vrot.slane %v2005, %v2009
        %v2013 = vsel %vm1070, %v2002, 0
        %2015 = vmatprep.subr.bf16.mxu0 0
        %2016 = vmatpush1.bf16.msra.mxu0 0
        %2017 = vmatprep.subr.bf16.mxu0 0
        %2018 = vmatpush1.bf16.msra.mxu0 0
        %2019 = vmatprep.subr.bf16.mxu0 0
        %2020 = vmatpush1.bf16.msra.mxu0 0
        %2021 = vmatprep.subr.bf16.mxu0 0
        %2022 = vmatpush1.bf16.msra.mxu0 0
        %2023 = vmatprep.subr.bf16.mxu0 0
        %2024 = vmatpush1.bf16.msra.mxu0 0
        %2025 = vmatprep.subr.bf16.mxu0 0
        %2026 = vmatpush1.bf16.msra.mxu0 0
        %2027 = vmatprep.subr.bf16.mxu0 0
        %2028 = vmatpush1.bf16.msra.mxu0 %v2004
        %2029 = vmatprep.subr.bf16.mxu0 0
        %2030 = vmatpush1.bf16.msra.mxu0 %v2003
        %2031 = vmatprep.subr.bf16.mxu0 0
        %2032 = vmatpush2.bf16.msra.mxu0 0
        %2033 = vmatprep.subr.bf16.mxu0 0
        %2034 = vmatpush2.bf16.msra.mxu0 0
        %2035 = vmatprep.subr.bf16.mxu0 0
        %2036 = vmatpush2.bf16.msra.mxu0 0
        %2037 = vmatprep.subr.bf16.mxu0 0
        %2038 = vmatpush2.bf16.msra.mxu0 0
        %2039 = vmatprep.subr.bf16.mxu0 0
        %2040 = vmatpush2.bf16.msra.mxu0 0
        %2041 = vmatprep.subr.bf16.mxu0 0
        %2042 = vmatpush2.bf16.msra.mxu0 0
        %2043 = vmatprep.subr.bf16.mxu0 0
        %2044 = vmatpush2.bf16.msra.mxu0 0
        %2045 = vmatprep.subr.bf16.mxu0 0
        %2046 = vmatpush2.bf16.msra.mxu0 0
        %2047 = vmatprep.mubr.bf16.mxu0 0
        %2048 = vmatmul.mubr.bf16.gmra.mxu0 %v2013
        %v2049 = vpop.f32.mrf.mxu0
        %v2050 = vadd.f32 %v2010, %v2049
        %v2051 = vpop.f32.mrf.mxu0
        %v2052 = vpop.f32.mrf.mxu0
        %v2053 = vadd.f32 %v2010, %v2052
        %v2054 = vpop.f32.mrf.mxu0
        %2055 = vdwg.mxu0
        %v2056 = vadd.f32 %v1936, %v2050
        %v2057 = vadd.f32 %v1937, %v2053
        %v2058 = vld [vmem:[#allocation15] sm:$0x1]
        %v2059 = vld [vmem:[#allocation17] sm:$0x1]
        %v2060 = vsel %vm1070, %v2056, 0.0
        %2061 = vadd.xlane.f32.xlu0 %v2060
        %v2062 = vpop.xlane.xlu0 %2061
        %v2063 = vsel %vm1070, %v2057, 0.0
        %2064 = vadd.xlane.f32.xlu0 %v2063
        %v2065 = vpop.xlane.xlu0 %2064
        %v2066 = vmul.f32 %v2062, %v1901
        %v2067 = vmul.f32 %v2065, %v1901
        %v2068 = vsub.f32 %v2056, %v2066
        %v2069 = vsub.f32 %v2057, %v2067
        %v2070 = vmul.f32 %v2068, %v2068
        %v2071 = vmul.f32 %v2069, %v2069
        %v2072 = vsel %vm1070, %v2070, 0.0
        %2073 = vadd.xlane.f32.xlu0 %v2072
        %v2074 = vpop.xlane.xlu0 %2073
        %v2075 = vsel %vm1070, %v2071, 0.0
        %2076 = vadd.xlane.f32.xlu0 %v2075
        %v2077 = vpop.xlane.xlu0 %2076
        %v2078 = vmul.f32 %v2074, %v1901
        %v2079 = vmul.f32 %v2077, %v1901
        %v2080 = vadd.f32 %v2078, 1e-05
        %v2081 = vadd.f32 %v2079, 1e-05
        %v2082 = vrsqrt.pop %v2080
        %v2083 = vrsqrt.pop %v2081
        %v2084 = vmul.f32 %v2068, %v2082
        %v2085 = vmul.f32 %v2069, %v2083
        %v2087 = vlaneseq
        %v2088 = vshrl.u32 %v2087, 7
        %v2089 = vsub.s32 0, %v2088
        %v2090 = vrot.slane %v2058, %v2089
        %v2092 = vmul.f32 %v2084, %v2090
        %v2093 = vmul.f32 %v2085, %v2090
        %v2095 = vlaneseq
        %v2096 = vshrl.u32 %v2095, 7
        %v2097 = vsub.s32 0, %v2096
        %v2098 = vrot.slane %v2059, %v2097
        %v2100 = vadd.f32 %v2092, %v2098
        %v2101 = vadd.f32 %v2093, %v2098
        %s2102 = scalar_lea.vmem [#allocation3], 96
        %v2103 = vld [vmem:[%s2102] sm:$0xff]
        %v2104 = vld [vmem:[%s2102 + $0x8] sm:$0xff]
        %v2105 = vld [vmem:[%s2102 + $0x10] sm:$0xff]
        %v2106 = vld [vmem:[%s2102 + $0x18] sm:$0xff]
        %v2107 = vld [vmem:[%s2102 + $0x20] sm:$0xff]
        %v2108 = vld [vmem:[%s2102 + $0x28] sm:$0xff]
        %v2109 = vld [vmem:[%s2102 + $0x30] sm:$0xff]
        %v2110 = vld [vmem:[%s2102 + $0x38] sm:$0xff]
        %v2111 = vld [vmem:[%s2102 + $0x40] sm:$0xff]
        %v2112 = vld [vmem:[%s2102 + $0x48] sm:$0xff]
        %v2113 = vld [vmem:[%s2102 + $0x50] sm:$0xff]
        %v2114 = vld [vmem:[%s2102 + $0x58] sm:$0xff]
        %v2117 = vrot.slane %v2100, 7
        %v2118 = vrot.slane %v2101, 7
        %v2119 = vsel %vm1057, %v2117, %v2118
        %v2123 = vsel %vm1057, 0.0, %v2117
        %v2124 = vsel %vm1057, %v2118, 0.0
        %s2125 = scalar_lea.vmem %s6, 1
        %v2126 = vld [vmem:[%s2125] sm:$0x1]
        %v2127 = vpack.c.bf16 %v2119, %v2123
        %v2128 = vpack.c.bf16 %v2104, %v2103
        %v2129 = vpack.c.bf16 %v2106, %v2105
        %v2131 = vsel %vm1070, %v2127, 0
        %2133 = vmatprep.subr.bf16.mxu0 0
        %2134 = vmatpush1.bf16.msra.mxu0 0
        %2135 = vmatprep.subr.bf16.mxu0 0
        %2136 = vmatpush1.bf16.msra.mxu0 0
        %2137 = vmatprep.subr.bf16.mxu0 0
        %2138 = vmatpush1.bf16.msra.mxu0 0
        %2139 = vmatprep.subr.bf16.mxu0 0
        %2140 = vmatpush1.bf16.msra.mxu0 0
        %2141 = vmatprep.subr.bf16.mxu0 0
        %2142 = vmatpush1.bf16.msra.mxu0 0
        %2143 = vmatprep.subr.bf16.mxu0 0
        %2144 = vmatpush1.bf16.msra.mxu0 0
        %2145 = vmatprep.subr.bf16.mxu0 0
        %2146 = vmatpush1.bf16.msra.mxu0 %v2129
        %2147 = vmatprep.subr.bf16.mxu0 0
        %2148 = vmatpush1.bf16.msra.mxu0 %v2128
        %2149 = vmatprep.subr.bf16.mxu0 0
        %2150 = vmatpush2.bf16.msra.mxu0 0
        %2151 = vmatprep.subr.bf16.mxu0 0
        %2152 = vmatpush2.bf16.msra.mxu0 0
        %2153 = vmatprep.subr.bf16.mxu0 0
        %2154 = vmatpush2.bf16.msra.mxu0 0
        %2155 = vmatprep.subr.bf16.mxu0 0
        %2156 = vmatpush2.bf16.msra.mxu0 0
        %2157 = vmatprep.subr.bf16.mxu0 0
        %2158 = vmatpush2.bf16.msra.mxu0 0
        %2159 = vmatprep.subr.bf16.mxu0 0
        %2160 = vmatpush2.bf16.msra.mxu0 0
        %2161 = vmatprep.subr.bf16.mxu0 0
        %2162 = vmatpush2.bf16.msra.mxu0 0
        %2163 = vmatprep.subr.bf16.mxu0 0
        %2164 = vmatpush2.bf16.msra.mxu0 0
        %2165 = vmatprep.mubr.bf16.mxu0 0
        %2166 = vmatmul.mubr.bf16.gmra.mxu0 %v2131
        %v2167 = vpop.f32.mrf.mxu0
        %v2168 = vadd.f32 0.0, %v2167
        %v2169 = vpop.f32.mrf.mxu0
        %v2170 = vpop.f32.mrf.mxu0
        %v2171 = vadd.f32 0.0, %v2170
        %v2172 = vpop.f32.mrf.mxu0
        %2173 = vdwg.mxu0
        %v2175 = vlaneseq
        %v2176 = vshrl.u32 %v2175, 7
        %v2177 = vsub.s32 0, %v2176
        %v2178 = vrot.slane %v2126, %v2177
        %v2180 = vadd.f32 %v2178, %v2168
        %v2181 = vadd.f32 %v2178, %v2171
        %v2182 = vpack.c.bf16 %v2124, %v2124
        %v2183 = vpack.c.bf16 %v2108, %v2107
        %v2184 = vpack.c.bf16 %v2110, %v2109
        %v2185 = vshrl.u32 %v2127, 16
        %v2187 = vshll.u32 %v2127, 16
        %v2189 = vrot.slane %v2187, 1
        %v2190 = vor.u32 %v2185, %v2189
        %v2192 = vshll.u32 %v2182, 16
        %v2194 = vrot.slane %v2192, 1
        %v2195 = vsel %vm1126, %v2190, %v2194
        %v2197 = vsel %vm1070, %v2195, 0
        %2199 = vmatprep.subr.bf16.mxu0 0
        %2200 = vmatpush1.bf16.msra.mxu0 0
        %2201 = vmatprep.subr.bf16.mxu0 0
        %2202 = vmatpush1.bf16.msra.mxu0 0
        %2203 = vmatprep.subr.bf16.mxu0 0
        %2204 = vmatpush1.bf16.msra.mxu0 0
        %2205 = vmatprep.subr.bf16.mxu0 0
        %2206 = vmatpush1.bf16.msra.mxu0 0
        %2207 = vmatprep.subr.bf16.mxu0 0
        %2208 = vmatpush1.bf16.msra.mxu0 0
        %2209 = vmatprep.subr.bf16.mxu0 0
        %2210 = vmatpush1.bf16.msra.mxu0 0
        %2211 = vmatprep.subr.bf16.mxu0 0
        %2212 = vmatpush1.bf16.msra.mxu0 %v2184
        %2213 = vmatprep.subr.bf16.mxu0 0
        %2214 = vmatpush1.bf16.msra.mxu0 %v2183
        %2215 = vmatprep.subr.bf16.mxu0 0
        %2216 = vmatpush2.bf16.msra.mxu0 0
        %2217 = vmatprep.subr.bf16.mxu0 0
        %2218 = vmatpush2.bf16.msra.mxu0 0
        %2219 = vmatprep.subr.bf16.mxu0 0
        %2220 = vmatpush2.bf16.msra.mxu0 0
        %2221 = vmatprep.subr.bf16.mxu0 0
        %2222 = vmatpush2.bf16.msra.mxu0 0
        %2223 = vmatprep.subr.bf16.mxu0 0
        %2224 = vmatpush2.bf16.msra.mxu0 0
        %2225 = vmatprep.subr.bf16.mxu0 0
        %2226 = vmatpush2.bf16.msra.mxu0 0
        %2227 = vmatprep.subr.bf16.mxu0 0
        %2228 = vmatpush2.bf16.msra.mxu0 0
        %2229 = vmatprep.subr.bf16.mxu0 0
        %2230 = vmatpush2.bf16.msra.mxu0 0
        %2231 = vmatprep.mubr.bf16.mxu0 0
        %2232 = vmatmul.mubr.bf16.gmra.mxu0 %v2197
        %v2233 = vpop.f32.mrf.mxu0
        %v2234 = vadd.f32 0.0, %v2233
        %v2235 = vpop.f32.mrf.mxu0
        %v2236 = vpop.f32.mrf.mxu0
        %v2237 = vadd.f32 0.0, %v2236
        %v2238 = vpop.f32.mrf.mxu0
        %2239 = vdwg.mxu0
        %v2240 = vadd.f32 %v2180, %v2234
        %v2241 = vadd.f32 %v2181, %v2237
        %v2242 = vpack.c.bf16 %v2112, %v2111
        %v2243 = vpack.c.bf16 %v2114, %v2113
        %v2246 = vrot.slane %v2127, 1
        %v2247 = vrot.slane %v2182, 1
        %v2248 = vsel %vm1188, %v2246, %v2247
        %v2250 = vsel %vm1070, %v2248, 0
        %2252 = vmatprep.subr.bf16.mxu0 0
        %2253 = vmatpush1.bf16.msra.mxu0 0
        %2254 = vmatprep.subr.bf16.mxu0 0
        %2255 = vmatpush1.bf16.msra.mxu0 0
        %2256 = vmatprep.subr.bf16.mxu0 0
        %2257 = vmatpush1.bf16.msra.mxu0 0
        %2258 = vmatprep.subr.bf16.mxu0 0
        %2259 = vmatpush1.bf16.msra.mxu0 0
        %2260 = vmatprep.subr.bf16.mxu0 0
        %2261 = vmatpush1.bf16.msra.mxu0 0
        %2262 = vmatprep.subr.bf16.mxu0 0
        %2263 = vmatpush1.bf16.msra.mxu0 0
        %2264 = vmatprep.subr.bf16.mxu0 0
        %2265 = vmatpush1.bf16.msra.mxu0 %v2243
        %2266 = vmatprep.subr.bf16.mxu0 0
        %2267 = vmatpush1.bf16.msra.mxu0 %v2242
        %2268 = vmatprep.subr.bf16.mxu0 0
        %2269 = vmatpush2.bf16.msra.mxu0 0
        %2270 = vmatprep.subr.bf16.mxu0 0
        %2271 = vmatpush2.bf16.msra.mxu0 0
        %2272 = vmatprep.subr.bf16.mxu0 0
        %2273 = vmatpush2.bf16.msra.mxu0 0
        %2274 = vmatprep.subr.bf16.mxu0 0
        %2275 = vmatpush2.bf16.msra.mxu0 0
        %2276 = vmatprep.subr.bf16.mxu0 0
        %2277 = vmatpush2.bf16.msra.mxu0 0
        %2278 = vmatprep.subr.bf16.mxu0 0
        %2279 = vmatpush2.bf16.msra.mxu0 0
        %2280 = vmatprep.subr.bf16.mxu0 0
        %2281 = vmatpush2.bf16.msra.mxu0 0
        %2282 = vmatprep.subr.bf16.mxu0 0
        %2283 = vmatpush2.bf16.msra.mxu0 0
        %2284 = vmatprep.mubr.bf16.mxu0 0
        %2285 = vmatmul.mubr.bf16.gmra.mxu0 %v2250
        %v2286 = vpop.f32.mrf.mxu0
        %v2287 = vadd.f32 0.0, %v2286
        %v2288 = vpop.f32.mrf.mxu0
        %v2289 = vpop.f32.mrf.mxu0
        %v2290 = vadd.f32 0.0, %v2289
        %v2291 = vpop.f32.mrf.mxu0
        %2292 = vdwg.mxu0
        %v2293 = vadd.f32 %v2240, %v2287
        %v2294 = vadd.f32 %v2241, %v2290
        %s2295 = scalar_lea.vmem %s7, 32
        %v2296 = vld [vmem:[%s2295] sm:$0xff]
        %v2297 = vld [vmem:[%s2295 + $0x8] sm:$0xff]
        %v2298 = vld [vmem:[%s2295 + $0x10] sm:$0xff]
        %v2299 = vld [vmem:[%s2295 + $0x18] sm:$0xff]
        %v2300 = vpack.c.bf16 %v2101, %v2100
        %v2301 = vpack.c.bf16 %v2297, %v2296
        %v2302 = vpack.c.bf16 %v2299, %v2298
        %s2303 = scalar_lea.vmem %s8, 1
        %v2304 = vld [vmem:[%s2303] sm:$0x1]
        %v2306 = vlaneseq
        %v2307 = vshrl.u32 %v2306, 7
        %v2308 = vsub.s32 0, %v2307
        %v2309 = vrot.slane %v2304, %v2308
        %v2312 = vsel %vm1070, %v2300, 0
        %2314 = vmatprep.subr.bf16.mxu0 0
        %2315 = vmatpush1.bf16.msra.mxu0 0
        %2316 = vmatprep.subr.bf16.mxu0 0
        %2317 = vmatpush1.bf16.msra.mxu0 0
        %2318 = vmatprep.subr.bf16.mxu0 0
        %2319 = vmatpush1.bf16.msra.mxu0 0
        %2320 = vmatprep.subr.bf16.mxu0 0
        %2321 = vmatpush1.bf16.msra.mxu0 0
        %2322 = vmatprep.subr.bf16.mxu0 0
        %2323 = vmatpush1.bf16.msra.mxu0 0
        %2324 = vmatprep.subr.bf16.mxu0 0
        %2325 = vmatpush1.bf16.msra.mxu0 0
        %2326 = vmatprep.subr.bf16.mxu0 0
        %2327 = vmatpush1.bf16.msra.mxu0 %v2302
        %2328 = vmatprep.subr.bf16.mxu0 0
        %2329 = vmatpush1.bf16.msra.mxu0 %v2301
        %2330 = vmatprep.subr.bf16.mxu0 0
        %2331 = vmatpush2.bf16.msra.mxu0 0
        %2332 = vmatprep.subr.bf16.mxu0 0
        %2333 = vmatpush2.bf16.msra.mxu0 0
        %2334 = vmatprep.subr.bf16.mxu0 0
        %2335 = vmatpush2.bf16.msra.mxu0 0
        %2336 = vmatprep.subr.bf16.mxu0 0
        %2337 = vmatpush2.bf16.msra.mxu0 0
        %2338 = vmatprep.subr.bf16.mxu0 0
        %2339 = vmatpush2.bf16.msra.mxu0 0
        %2340 = vmatprep.subr.bf16.mxu0 0
        %2341 = vmatpush2.bf16.msra.mxu0 0
        %2342 = vmatprep.subr.bf16.mxu0 0
        %2343 = vmatpush2.bf16.msra.mxu0 0
        %2344 = vmatprep.subr.bf16.mxu0 0
        %2345 = vmatpush2.bf16.msra.mxu0 0
        %2346 = vmatprep.mubr.bf16.mxu0 0
        %2347 = vmatmul.mubr.bf16.gmra.mxu0 %v2312
        %v2348 = vpop.f32.mrf.mxu0
        %v2349 = vadd.f32 %v2309, %v2348
        %v2350 = vpop.f32.mrf.mxu0
        %v2351 = vpop.f32.mrf.mxu0
        %v2352 = vadd.f32 %v2309, %v2351
        %v2353 = vpop.f32.mrf.mxu0
        %2354 = vdwg.mxu0
        %s2355 = scalar_lea.vmem %s9, 1
        %v2356 = vld [vmem:[%s2355] sm:$0x1]
        %s2357 = scalar_lea.vmem %s10, 1
        %v2358 = vld [vmem:[%s2357] sm:$0x1]
        %v2360 = vsel %vm1070, %v2349, 0
        %v2363 = vsel %vm1070, %v2352, 0
        %2365 = vmatprep.subr.mxu0 0.0
        %2366 = vmatpush1.msra.mxu0 0.0
        %2367 = vmatprep.subr.mxu0 0.0
        %2368 = vmatpush1.msra.mxu0 0.0
        %2369 = vmatprep.subr.mxu0 0.0
        %2370 = vmatpush1.msra.mxu0 0.0
        %2371 = vmatprep.subr.mxu0 0.0
        %2372 = vmatpush1.msra.mxu0 0.0
        %2373 = vmatprep.subr.mxu0 0.0
        %2374 = vmatpush1.msra.mxu0 0.0
        %2375 = vmatprep.subr.mxu0 0.0
        %2376 = vmatpush1.msra.mxu0 0.0
        %2377 = vmatprep.subr.mxu0 0.0
        %2378 = vmatpush1.msra.mxu0 0.0
        %2379 = vmatprep.subr.mxu0 0.0
        %2380 = vmatpush1.msra.mxu0 0.0
        %2381 = vmatprep.subr.mxu0 0.0
        %2382 = vmatpush1.msra.mxu0 0.0
        %2383 = vmatprep.subr.mxu0 0.0
        %2384 = vmatpush1.msra.mxu0 0.0
        %2385 = vmatprep.subr.mxu0 0.0
        %2386 = vmatpush1.msra.mxu0 0.0
        %2387 = vmatprep.subr.mxu0 0.0
        %2388 = vmatpush1.msra.mxu0 0.0
        %2389 = vmatprep.subr.mxu0 0.0
        %2390 = vmatpush1.msra.mxu0 %v1038
        %2391 = vmatprep.subr.mxu0 0.0
        %2392 = vmatpush1.msra.mxu0 %v1037
        %2393 = vmatprep.subr.mxu0 0.0
        %2394 = vmatpush1.msra.mxu0 %v1036
        %2395 = vmatprep.subr.mxu0 0.0
        %2396 = vmatpush1.msra.mxu0 %v1035
        %2397 = vmatprep.subr.mxu0 0.0
        %2398 = vmatpush2.msra.mxu0 0.0
        %2399 = vmatprep.subr.mxu0 0.0
        %2400 = vmatpush2.msra.mxu0 0.0
        %2401 = vmatprep.subr.mxu0 0.0
        %2402 = vmatpush2.msra.mxu0 0.0
        %2403 = vmatprep.subr.mxu0 0.0
        %2404 = vmatpush2.msra.mxu0 0.0
        %2405 = vmatprep.subr.mxu0 0.0
        %2406 = vmatpush2.msra.mxu0 0.0
        %2407 = vmatprep.subr.mxu0 0.0
        %2408 = vmatpush2.msra.mxu0 0.0
        %2409 = vmatprep.subr.mxu0 0.0
        %2410 = vmatpush2.msra.mxu0 0.0
        %2411 = vmatprep.subr.mxu0 0.0
        %2412 = vmatpush2.msra.mxu0 0.0
        %2413 = vmatprep.subr.mxu0 0.0
        %2414 = vmatpush2.msra.mxu0 0.0
        %2415 = vmatprep.subr.mxu0 0.0
        %2416 = vmatpush2.msra.mxu0 0.0
        %2417 = vmatprep.subr.mxu0 0.0
        %2418 = vmatpush2.msra.mxu0 0.0
        %2419 = vmatprep.subr.mxu0 0.0
        %2420 = vmatpush2.msra.mxu0 0.0
        %2421 = vmatprep.subr.mxu0 0.0
        %2422 = vmatpush2.msra.mxu0 0.0
        %2423 = vmatprep.subr.mxu0 0.0
        %2424 = vmatpush2.msra.mxu0 0.0
        %2425 = vmatprep.subr.mxu0 0.0
        %2426 = vmatpush2.msra.mxu0 0.0
        %2427 = vmatprep.subr.mxu0 0.0
        %2428 = vmatpush2.msra.mxu0 0.0
        %2429 = vmatprep.mubr.f32.mxu0 0.0
        %2430 = vmatmul.mubr.f32.gmra.mxu0 %v2360
        %v2431 = vpop.f32.mrf.mxu0
        %v2432 = vadd.f32 0.0, %v2431
        %v2433 = vpop.f32.mrf.mxu0
        %2434 = vmatprep.mubr.f32.mxu0 0.0
        %2435 = vmatmul.mubr.f32.gmra.mxu0 %v2363
        %v2436 = vpop.f32.mrf.mxu0
        %v2437 = vadd.f32 0.0, %v2436
        %v2438 = vpop.f32.mrf.mxu0
        %2439 = vdwg.mxu0
        %v2440 = vsub.f32 %v2349, %v2432
        %v2441 = vsub.f32 %v2352, %v2437
        %v2442 = vmul.f32 %v2440, %v2440
        %v2443 = vmul.f32 %v2441, %v2441
        %v2445 = vsel %vm1070, %v2442, 0
        %v2448 = vsel %vm1070, %v2443, 0
        %2450 = vmatprep.subr.mxu0 0.0
        %2451 = vmatpush1.msra.mxu0 0.0
        %2452 = vmatprep.subr.mxu0 0.0
        %2453 = vmatpush1.msra.mxu0 0.0
        %2454 = vmatprep.subr.mxu0 0.0
        %2455 = vmatpush1.msra.mxu0 0.0
        %2456 = vmatprep.subr.mxu0 0.0
        %2457 = vmatpush1.msra.mxu0 0.0
        %2458 = vmatprep.subr.mxu0 0.0
        %2459 = vmatpush1.msra.mxu0 0.0
        %2460 = vmatprep.subr.mxu0 0.0
        %2461 = vmatpush1.msra.mxu0 0.0
        %2462 = vmatprep.subr.mxu0 0.0
        %2463 = vmatpush1.msra.mxu0 0.0
        %2464 = vmatprep.subr.mxu0 0.0
        %2465 = vmatpush1.msra.mxu0 0.0
        %2466 = vmatprep.subr.mxu0 0.0
        %2467 = vmatpush1.msra.mxu0 0.0
        %2468 = vmatprep.subr.mxu0 0.0
        %2469 = vmatpush1.msra.mxu0 0.0
        %2470 = vmatprep.subr.mxu0 0.0
        %2471 = vmatpush1.msra.mxu0 0.0
        %2472 = vmatprep.subr.mxu0 0.0
        %2473 = vmatpush1.msra.mxu0 0.0
        %2474 = vmatprep.subr.mxu0 0.0
        %2475 = vmatpush1.msra.mxu0 %v1038
        %2476 = vmatprep.subr.mxu0 0.0
        %2477 = vmatpush1.msra.mxu0 %v1037
        %2478 = vmatprep.subr.mxu0 0.0
        %2479 = vmatpush1.msra.mxu0 %v1036
        %2480 = vmatprep.subr.mxu0 0.0
        %2481 = vmatpush1.msra.mxu0 %v1035
        %2482 = vmatprep.subr.mxu0 0.0
        %2483 = vmatpush2.msra.mxu0 0.0
        %2484 = vmatprep.subr.mxu0 0.0
        %2485 = vmatpush2.msra.mxu0 0.0
        %2486 = vmatprep.subr.mxu0 0.0
        %2487 = vmatpush2.msra.mxu0 0.0
        %2488 = vmatprep.subr.mxu0 0.0
        %2489 = vmatpush2.msra.mxu0 0.0
        %2490 = vmatprep.subr.mxu0 0.0
        %2491 = vmatpush2.msra.mxu0 0.0
        %2492 = vmatprep.subr.mxu0 0.0
        %2493 = vmatpush2.msra.mxu0 0.0
        %2494 = vmatprep.subr.mxu0 0.0
        %2495 = vmatpush2.msra.mxu0 0.0
        %2496 = vmatprep.subr.mxu0 0.0
        %2497 = vmatpush2.msra.mxu0 0.0
        %2498 = vmatprep.subr.mxu0 0.0
        %2499 = vmatpush2.msra.mxu0 0.0
        %2500 = vmatprep.subr.mxu0 0.0
        %2501 = vmatpush2.msra.mxu0 0.0
        %2502 = vmatprep.subr.mxu0 0.0
        %2503 = vmatpush2.msra.mxu0 0.0
        %2504 = vmatprep.subr.mxu0 0.0
        %2505 = vmatpush2.msra.mxu0 0.0
        %2506 = vmatprep.subr.mxu0 0.0
        %2507 = vmatpush2.msra.mxu0 0.0
        %2508 = vmatprep.subr.mxu0 0.0
        %2509 = vmatpush2.msra.mxu0 0.0
        %2510 = vmatprep.subr.mxu0 0.0
        %2511 = vmatpush2.msra.mxu0 0.0
        %2512 = vmatprep.subr.mxu0 0.0
        %2513 = vmatpush2.msra.mxu0 0.0
        %2514 = vmatprep.mubr.f32.mxu0 0.0
        %2515 = vmatmul.mubr.f32.gmra.mxu0 %v2445
        %v2516 = vpop.f32.mrf.mxu0
        %v2517 = vadd.f32 1e-05, %v2516
        %v2518 = vpop.f32.mrf.mxu0
        %2519 = vmatprep.mubr.f32.mxu0 0.0
        %2520 = vmatmul.mubr.f32.gmra.mxu0 %v2448
        %v2521 = vpop.f32.mrf.mxu0
        %v2522 = vadd.f32 1e-05, %v2521
        %v2523 = vpop.f32.mrf.mxu0
        %2524 = vdwg.mxu0
        %v2525 = vrsqrt.pop %v2517
        %v2526 = vrsqrt.pop %v2522
        %v2527 = vmul.f32 %v2440, %v2525
        %v2528 = vmul.f32 %v2441, %v2526
        %v2530 = vlaneseq
        %v2531 = vshrl.u32 %v2530, 7
        %v2532 = vsub.s32 0, %v2531
        %v2533 = vrot.slane %v2356, %v2532
        %v2535 = vmul.f32 %v2527, %v2533
        %v2536 = vmul.f32 %v2528, %v2533
        %v2538 = vlaneseq
        %v2539 = vshrl.u32 %v2538, 7
        %v2540 = vsub.s32 0, %v2539
        %v2541 = vrot.slane %v2358, %v2540
        %v2543 = vadd.f32 %v2535, %v2541
        %v2544 = vadd.f32 %v2536, %v2541
        %s2545 = scalar_lea.vmem %s11, 1
        %v2546 = vld [vmem:[%s2545] sm:$0x1]
        %s2547 = scalar_lea.vmem %s12, 1
        %v2548 = vld [vmem:[%s2547] sm:$0x1]
        %2549 = vrot.lane.b32.xlu0 %v2349, 96
        %v2550 = vpop.permute.xlu0 %2549
        %2551 = vrot.lane.b32.xlu0 %v2352, 96
        %v2552 = vpop.permute.xlu0 %2551
        %v2553 = vsel %vm1070, %v2550, 0
        %v2555 = vsel %vm1070, %v2552, 0
        %2557 = vmatprep.subr.mxu0 0.0
        %2558 = vmatpush1.msra.mxu0 0.0
        %2559 = vmatprep.subr.mxu0 0.0
        %2560 = vmatpush1.msra.mxu0 0.0
        %2561 = vmatprep.subr.mxu0 0.0
        %2562 = vmatpush1.msra.mxu0 0.0
        %2563 = vmatprep.subr.mxu0 0.0
        %2564 = vmatpush1.msra.mxu0 0.0
        %2565 = vmatprep.subr.mxu0 0.0
        %2566 = vmatpush1.msra.mxu0 0.0
        %2567 = vmatprep.subr.mxu0 0.0
        %2568 = vmatpush1.msra.mxu0 0.0
        %2569 = vmatprep.subr.mxu0 0.0
        %2570 = vmatpush1.msra.mxu0 0.0
        %2571 = vmatprep.subr.mxu0 0.0
        %2572 = vmatpush1.msra.mxu0 0.0
        %2573 = vmatprep.subr.mxu0 0.0
        %2574 = vmatpush1.msra.mxu0 0.0
        %2575 = vmatprep.subr.mxu0 0.0
        %2576 = vmatpush1.msra.mxu0 0.0
        %2577 = vmatprep.subr.mxu0 0.0
        %2578 = vmatpush1.msra.mxu0 0.0
        %2579 = vmatprep.subr.mxu0 0.0
        %2580 = vmatpush1.msra.mxu0 0.0
        %2581 = vmatprep.subr.mxu0 0.0
        %2582 = vmatpush1.msra.mxu0 %v1038
        %2583 = vmatprep.subr.mxu0 0.0
        %2584 = vmatpush1.msra.mxu0 %v1037
        %2585 = vmatprep.subr.mxu0 0.0
        %2586 = vmatpush1.msra.mxu0 %v1036
        %2587 = vmatprep.subr.mxu0 0.0
        %2588 = vmatpush1.msra.mxu0 %v1035
        %2589 = vmatprep.subr.mxu0 0.0
        %2590 = vmatpush2.msra.mxu0 0.0
        %2591 = vmatprep.subr.mxu0 0.0
        %2592 = vmatpush2.msra.mxu0 0.0
        %2593 = vmatprep.subr.mxu0 0.0
        %2594 = vmatpush2.msra.mxu0 0.0
        %2595 = vmatprep.subr.mxu0 0.0
        %2596 = vmatpush2.msra.mxu0 0.0
        %2597 = vmatprep.subr.mxu0 0.0
        %2598 = vmatpush2.msra.mxu0 0.0
        %2599 = vmatprep.subr.mxu0 0.0
        %2600 = vmatpush2.msra.mxu0 0.0
        %2601 = vmatprep.subr.mxu0 0.0
        %2602 = vmatpush2.msra.mxu0 0.0
        %2603 = vmatprep.subr.mxu0 0.0
        %2604 = vmatpush2.msra.mxu0 0.0
        %2605 = vmatprep.subr.mxu0 0.0
        %2606 = vmatpush2.msra.mxu0 0.0
        %2607 = vmatprep.subr.mxu0 0.0
        %2608 = vmatpush2.msra.mxu0 0.0
        %2609 = vmatprep.subr.mxu0 0.0
        %2610 = vmatpush2.msra.mxu0 0.0
        %2611 = vmatprep.subr.mxu0 0.0
        %2612 = vmatpush2.msra.mxu0 0.0
        %2613 = vmatprep.subr.mxu0 0.0
        %2614 = vmatpush2.msra.mxu0 0.0
        %2615 = vmatprep.subr.mxu0 0.0
        %2616 = vmatpush2.msra.mxu0 0.0
        %2617 = vmatprep.subr.mxu0 0.0
        %2618 = vmatpush2.msra.mxu0 0.0
        %2619 = vmatprep.subr.mxu0 0.0
        %2620 = vmatpush2.msra.mxu0 0.0
        %2621 = vmatprep.mubr.f32.mxu0 0.0
        %2622 = vmatmul.mubr.f32.gmra.mxu0 %v2553
        %v2623 = vpop.f32.mrf.mxu0
        %v2624 = vadd.f32 0.0, %v2623
        %v2625 = vpop.f32.mrf.mxu0
        %2626 = vmatprep.mubr.f32.mxu0 0.0
        %2627 = vmatmul.mubr.f32.gmra.mxu0 %v2555
        %v2628 = vpop.f32.mrf.mxu0
        %v2629 = vadd.f32 0.0, %v2628
        %v2630 = vpop.f32.mrf.mxu0
        %2631 = vdwg.mxu0
        %2634 = vrot.lane.b32.xlu0 %v2624, 32
        %v2635 = vpop.permute.xlu0 %2634
        %2636 = vrot.lane.b32.xlu0 %v2629, 32
        %v2637 = vpop.permute.xlu0 %2636
        %v2640 = vsub.f32 %v2349, %v2635
        %v2641 = vsub.f32 %v2352, %v2637
        %v2642 = vmul.f32 %v2640, %v2640
        %v2643 = vmul.f32 %v2641, %v2641
        %2646 = vrot.lane.b32.xlu0 %v2642, 96
        %v2647 = vpop.permute.xlu0 %2646
        %2648 = vrot.lane.b32.xlu0 %v2643, 96
        %v2649 = vpop.permute.xlu0 %2648
        %v2650 = vsel %vm1070, %v2647, 0
        %v2652 = vsel %vm1070, %v2649, 0
        %2654 = vmatprep.subr.mxu0 0.0
        %2655 = vmatpush1.msra.mxu0 0.0
        %2656 = vmatprep.subr.mxu0 0.0
        %2657 = vmatpush1.msra.mxu0 0.0
        %2658 = vmatprep.subr.mxu0 0.0
        %2659 = vmatpush1.msra.mxu0 0.0
        %2660 = vmatprep.subr.mxu0 0.0
        %2661 = vmatpush1.msra.mxu0 0.0
        %2662 = vmatprep.subr.mxu0 0.0
        %2663 = vmatpush1.msra.mxu0 0.0
        %2664 = vmatprep.subr.mxu0 0.0
        %2665 = vmatpush1.msra.mxu0 0.0
        %2666 = vmatprep.subr.mxu0 0.0
        %2667 = vmatpush1.msra.mxu0 0.0
        %2668 = vmatprep.subr.mxu0 0.0
        %2669 = vmatpush1.msra.mxu0 0.0
        %2670 = vmatprep.subr.mxu0 0.0
        %2671 = vmatpush1.msra.mxu0 0.0
        %2672 = vmatprep.subr.mxu0 0.0
        %2673 = vmatpush1.msra.mxu0 0.0
        %2674 = vmatprep.subr.mxu0 0.0
        %2675 = vmatpush1.msra.mxu0 0.0
        %2676 = vmatprep.subr.mxu0 0.0
        %2677 = vmatpush1.msra.mxu0 0.0
        %2678 = vmatprep.subr.mxu0 0.0
        %2679 = vmatpush1.msra.mxu0 %v1038
        %2680 = vmatprep.subr.mxu0 0.0
        %2681 = vmatpush1.msra.mxu0 %v1037
        %2682 = vmatprep.subr.mxu0 0.0
        %2683 = vmatpush1.msra.mxu0 %v1036
        %2684 = vmatprep.subr.mxu0 0.0
        %2685 = vmatpush1.msra.mxu0 %v1035
        %2686 = vmatprep.subr.mxu0 0.0
        %2687 = vmatpush2.msra.mxu0 0.0
        %2688 = vmatprep.subr.mxu0 0.0
        %2689 = vmatpush2.msra.mxu0 0.0
        %2690 = vmatprep.subr.mxu0 0.0
        %2691 = vmatpush2.msra.mxu0 0.0
        %2692 = vmatprep.subr.mxu0 0.0
        %2693 = vmatpush2.msra.mxu0 0.0
        %2694 = vmatprep.subr.mxu0 0.0
        %2695 = vmatpush2.msra.mxu0 0.0
        %2696 = vmatprep.subr.mxu0 0.0
        %2697 = vmatpush2.msra.mxu0 0.0
        %2698 = vmatprep.subr.mxu0 0.0
        %2699 = vmatpush2.msra.mxu0 0.0
        %2700 = vmatprep.subr.mxu0 0.0
        %2701 = vmatpush2.msra.mxu0 0.0
        %2702 = vmatprep.subr.mxu0 0.0
        %2703 = vmatpush2.msra.mxu0 0.0
        %2704 = vmatprep.subr.mxu0 0.0
        %2705 = vmatpush2.msra.mxu0 0.0
        %2706 = vmatprep.subr.mxu0 0.0
        %2707 = vmatpush2.msra.mxu0 0.0
        %2708 = vmatprep.subr.mxu0 0.0
        %2709 = vmatpush2.msra.mxu0 0.0
        %2710 = vmatprep.subr.mxu0 0.0
        %2711 = vmatpush2.msra.mxu0 0.0
        %2712 = vmatprep.subr.mxu0 0.0
        %2713 = vmatpush2.msra.mxu0 0.0
        %2714 = vmatprep.subr.mxu0 0.0
        %2715 = vmatpush2.msra.mxu0 0.0
        %2716 = vmatprep.subr.mxu0 0.0
        %2717 = vmatpush2.msra.mxu0 0.0
        %2718 = vmatprep.mubr.f32.mxu0 0.0
        %2719 = vmatmul.mubr.f32.gmra.mxu0 %v2650
        %v2720 = vpop.f32.mrf.mxu0
        %v2721 = vadd.f32 1e-05, %v2720
        %v2722 = vpop.f32.mrf.mxu0
        %2723 = vmatprep.mubr.f32.mxu0 0.0
        %2724 = vmatmul.mubr.f32.gmra.mxu0 %v2652
        %v2725 = vpop.f32.mrf.mxu0
        %v2726 = vadd.f32 1e-05, %v2725
        %v2727 = vpop.f32.mrf.mxu0
        %2728 = vdwg.mxu0
        %v2729 = vrsqrt.pop %v2721
        %v2730 = vrsqrt.pop %v2726
        %2733 = vrot.lane.b32.xlu0 %v2729, 32
        %v2734 = vpop.permute.xlu0 %2733
        %2735 = vrot.lane.b32.xlu0 %v2730, 32
        %v2736 = vpop.permute.xlu0 %2735
        %v2739 = vmul.f32 %v2640, %v2734
        %v2740 = vmul.f32 %v2641, %v2736
        %v2742 = vlaneseq
        %v2743 = vshrl.u32 %v2742, 7
        %v2744 = vsub.s32 0, %v2743
        %v2745 = vrot.slane %v2546, %v2744
        %2746 = vrot.lane.b32.xlu0 %v2745, 32
        %v2747 = vpop.permute.xlu0 %2746
        %v2749 = vmul.f32 %v2739, %v2747
        %v2750 = vmul.f32 %v2740, %v2747
        %v2752 = vlaneseq
        %v2753 = vshrl.u32 %v2752, 7
        %v2754 = vsub.s32 0, %v2753
        %v2755 = vrot.slane %v2548, %v2754
        %2756 = vrot.lane.b32.xlu0 %v2755, 32
        %v2757 = vpop.permute.xlu0 %2756
        %v2759 = vadd.f32 %v2749, %v2757
        %v2760 = vadd.f32 %v2750, %v2757
        %v2761 = vpack.c.bf16 %v2760, %v2759
        %v2762 = vpack.c.bf16 %v2352, %v2349
        %2764 = vrot.lane.b32.xlu0 %v2761, 96
        %v2765 = vpop.permute.xlu0 %2764
        %2767 = vxpose.xlu0.c.b16.start [1/8] %v2765, 128
        %2768 = vxpose.xlu0.c.b16.cont [2/8] 0, 128
        %2769 = vxpose.xlu0.c.b16.cont [3/8] 0, 128
        %2770 = vxpose.xlu0.c.b16.cont [4/8] 0, 128
        %2771 = vxpose.xlu0.c.b16.cont [5/8] 0, 128
        %2772 = vxpose.xlu0.c.b16.cont [6/8] 0, 128
        %2773 = vxpose.xlu0.c.b16.cont [7/8] 0, 128
        %2774 = vxpose.xlu0.c.b16.end [8/8] 0, 128
        %v2775 = vpop.trf.xlu0
        %v2776 = vpop.trf.xlu0
        %v2777 = vpop.trf.xlu0
        %v2778 = vpop.trf.xlu0
        %v2779 = vpop.trf.xlu0
        %v2780 = vpop.trf.xlu0
        %v2781 = vpop.trf.xlu0
        %v2782 = vpop.trf.xlu0
        %2784 = vrot.lane.b32.xlu0 %v2762, 64
        %v2785 = vpop.permute.xlu0 %2784
        %v2788 = vsel %vm1724, %v2775, 0
        %v2791 = vsel %vm1724, %v2776, 0
        %2793 = vmatprep.subr.bf16.mxu0 0
        %2794 = vmatpush1.bf16.msra.mxu0 0
        %2795 = vmatprep.subr.bf16.mxu0 0
        %2796 = vmatpush1.bf16.msra.mxu0 0
        %2797 = vmatprep.subr.bf16.mxu0 0
        %2798 = vmatpush1.bf16.msra.mxu0 0
        %2799 = vmatprep.subr.bf16.mxu0 0
        %2800 = vmatpush1.bf16.msra.mxu0 0
        %2801 = vmatprep.subr.bf16.mxu0 0
        %2802 = vmatpush1.bf16.msra.mxu0 0
        %2803 = vmatprep.subr.bf16.mxu0 0
        %2804 = vmatpush1.bf16.msra.mxu0 0
        %2805 = vmatprep.subr.bf16.mxu0 0
        %2806 = vmatpush1.bf16.msra.mxu0 0
        %2807 = vmatprep.subr.bf16.mxu0 0
        %2808 = vmatpush1.bf16.msra.mxu0 %v2785
        %2809 = vmatprep.subr.bf16.mxu0 0
        %2810 = vmatpush2.bf16.msra.mxu0 0
        %2811 = vmatprep.subr.bf16.mxu0 0
        %2812 = vmatpush2.bf16.msra.mxu0 0
        %2813 = vmatprep.subr.bf16.mxu0 0
        %2814 = vmatpush2.bf16.msra.mxu0 0
        %2815 = vmatprep.subr.bf16.mxu0 0
        %2816 = vmatpush2.bf16.msra.mxu0 0
        %2817 = vmatprep.subr.bf16.mxu0 0
        %2818 = vmatpush2.bf16.msra.mxu0 0
        %2819 = vmatprep.subr.bf16.mxu0 0
        %2820 = vmatpush2.bf16.msra.mxu0 0
        %2821 = vmatprep.subr.bf16.mxu0 0
        %2822 = vmatpush2.bf16.msra.mxu0 0
        %2823 = vmatprep.subr.bf16.mxu0 0
        %2824 = vmatpush2.bf16.msra.mxu0 0
        %2825 = vmatprep.mubr.bf16.mxu0 0
        %2826 = vmatmul.mubr.bf16.gmra.mxu0 %v2788
        %v2827 = vpop.f32.mrf.mxu0
        %v2828 = vadd.f32 0.0, %v2827
        %v2829 = vpop.f32.mrf.mxu0
        %v2830 = vpop.f32.mrf.mxu0
        %v2831 = vadd.f32 0.0, %v2830
        %v2832 = vpop.f32.mrf.mxu0
        %2833 = vmatprep.mubr.bf16.mxu0 0
        %2834 = vmatmul.mubr.bf16.gmra.mxu0 %v2791
        %v2835 = vpop.f32.mrf.mxu0
        %v2836 = vadd.f32 0.0, %v2835
        %v2837 = vpop.f32.mrf.mxu0
        %v2838 = vpop.f32.mrf.mxu0
        %v2839 = vadd.f32 0.0, %v2838
        %v2840 = vpop.f32.mrf.mxu0
        %2841 = vdwg.mxu0
        %v2842 = vmul.f32 %v2828, %v1039
        %v2843 = vmul.f32 %v2831, %v1040
        %v2844 = vmul.f32 %v2836, %v1041
        %v2845 = vmul.f32 %v2839, %v1042
        %v2846 = vpack.c.bf16 %v2544, %v2543
        %v2847 = vpack.c.bf16 %v2843, %v2842
        %v2848 = vpack.c.bf16 %v2845, %v2844
        %v2850 = vsel %vm1070, %v2846, 0
        %2852 = vmatprep.subr.bf16.mxu0 0
        %2853 = vmatpush1.bf16.msra.mxu0 0
        %2854 = vmatprep.subr.bf16.mxu0 0
        %2855 = vmatpush1.bf16.msra.mxu0 0
        %2856 = vmatprep.subr.bf16.mxu0 0
        %2857 = vmatpush1.bf16.msra.mxu0 0
        %2858 = vmatprep.subr.bf16.mxu0 0
        %2859 = vmatpush1.bf16.msra.mxu0 0
        %2860 = vmatprep.subr.bf16.mxu0 0
        %2861 = vmatpush1.bf16.msra.mxu0 0
        %2862 = vmatprep.subr.bf16.mxu0 0
        %2863 = vmatpush1.bf16.msra.mxu0 0
        %2864 = vmatprep.subr.bf16.mxu0 0
        %2865 = vmatpush1.bf16.msra.mxu0 %v2848
        %2866 = vmatprep.subr.bf16.mxu0 0
        %2867 = vmatpush1.bf16.msra.mxu0 %v2847
        %2868 = vmatprep.subr.bf16.mxu0 0
        %2869 = vmatpush2.bf16.msra.mxu0 0
        %2870 = vmatprep.subr.bf16.mxu0 0
        %2871 = vmatpush2.bf16.msra.mxu0 0
        %2872 = vmatprep.subr.bf16.mxu0 0
        %2873 = vmatpush2.bf16.msra.mxu0 0
        %2874 = vmatprep.subr.bf16.mxu0 0
        %2875 = vmatpush2.bf16.msra.mxu0 0
        %2876 = vmatprep.subr.bf16.mxu0 0
        %2877 = vmatpush2.bf16.msra.mxu0 0
        %2878 = vmatprep.subr.bf16.mxu0 0
        %2879 = vmatpush2.bf16.msra.mxu0 0
        %2880 = vmatprep.subr.bf16.mxu0 0
        %2881 = vmatpush2.bf16.msra.mxu0 0
        %2882 = vmatprep.subr.bf16.mxu0 0
        %2883 = vmatpush2.bf16.msra.mxu0 0
        %2884 = vmatprep.mubr.bf16.mxu0 0
        %2885 = vmatmul.mubr.bf16.gmra.mxu0 %v2850
        %v2886 = vpop.f32.mrf.mxu0
        %v2887 = vadd.f32 0.0, %v2886
        %v2888 = vpop.f32.mrf.mxu0
        %v2889 = vpop.f32.mrf.mxu0
        %v2890 = vadd.f32 0.0, %v2889
        %v2891 = vpop.f32.mrf.mxu0
        %2892 = vdwg.mxu0
        %v2893 = vmul.f32 %v2887, 0.0625
        %v2894 = vmul.f32 %v2890, 0.0625
        %s2895 = scalar_lea.vmem %s13, 32
        %v2896 = vld [vmem:[%s2895] sm:$0xff]
        %v2897 = vld [vmem:[%s2895 + $0x8] sm:$0xff]
        %v2898 = vld [vmem:[%s2895 + $0x10] sm:$0xff]
        %v2899 = vld [vmem:[%s2895 + $0x18] sm:$0xff]
        %v2900 = vpack.c.bf16 %v2894, %v2893
        %v2901 = vpack.c.bf16 %v2897, %v2896
        %v2902 = vpack.c.bf16 %v2899, %v2898
        %s2903 = scalar_lea.vmem %s14, 1
        %v2904 = vld [vmem:[%s2903] sm:$0x1]
        %v2906 = vlaneseq
        %v2907 = vshrl.u32 %v2906, 7
        %v2908 = vsub.s32 0, %v2907
        %v2909 = vrot.slane %v2904, %v2908
        %v2912 = vsel %vm1070, %v2900, 0
        %2914 = vmatprep.subr.bf16.mxu0 0
        %2915 = vmatpush1.bf16.msra.mxu0 0
        %2916 = vmatprep.subr.bf16.mxu0 0
        %2917 = vmatpush1.bf16.msra.mxu0 0
        %2918 = vmatprep.subr.bf16.mxu0 0
        %2919 = vmatpush1.bf16.msra.mxu0 0
        %2920 = vmatprep.subr.bf16.mxu0 0
        %2921 = vmatpush1.bf16.msra.mxu0 0
        %2922 = vmatprep.subr.bf16.mxu0 0
        %2923 = vmatpush1.bf16.msra.mxu0 0
        %2924 = vmatprep.subr.bf16.mxu0 0
        %2925 = vmatpush1.bf16.msra.mxu0 0
        %2926 = vmatprep.subr.bf16.mxu0 0
        %2927 = vmatpush1.bf16.msra.mxu0 %v2902
        %2928 = vmatprep.subr.bf16.mxu0 0
        %2929 = vmatpush1.bf16.msra.mxu0 %v2901
        %2930 = vmatprep.subr.bf16.mxu0 0
        %2931 = vmatpush2.bf16.msra.mxu0 0
        %2932 = vmatprep.subr.bf16.mxu0 0
        %2933 = vmatpush2.bf16.msra.mxu0 0
        %2934 = vmatprep.subr.bf16.mxu0 0
        %2935 = vmatpush2.bf16.msra.mxu0 0
        %2936 = vmatprep.subr.bf16.mxu0 0
        %2937 = vmatpush2.bf16.msra.mxu0 0
        %2938 = vmatprep.subr.bf16.mxu0 0
        %2939 = vmatpush2.bf16.msra.mxu0 0
        %2940 = vmatprep.subr.bf16.mxu0 0
        %2941 = vmatpush2.bf16.msra.mxu0 0
        %2942 = vmatprep.subr.bf16.mxu0 0
        %2943 = vmatpush2.bf16.msra.mxu0 0
        %2944 = vmatprep.subr.bf16.mxu0 0
        %2945 = vmatpush2.bf16.msra.mxu0 0
        %2946 = vmatprep.mubr.bf16.mxu0 0
        %2947 = vmatmul.mubr.bf16.gmra.mxu0 %v2912
        %v2948 = vpop.f32.mrf.mxu0
        %v2949 = vadd.f32 %v2909, %v2948
        %v2950 = vpop.f32.mrf.mxu0
        %v2951 = vpop.f32.mrf.mxu0
        %v2952 = vadd.f32 %v2909, %v2951
        %v2953 = vpop.f32.mrf.mxu0
        %2954 = vdwg.mxu0
        %v2955 = vadd.f32 %v2293, %v2949
        %v2956 = vadd.f32 %v2294, %v2952
        %s2957 = scalar_lea.vmem [#allocation6], 1
        %v2958 = vld [vmem:[%s2957] sm:$0x1]
        %s2959 = scalar_lea.vmem [#allocation8], 1
        %v2960 = vld [vmem:[%s2959] sm:$0x1]
        %v2961 = vsel %vm1070, %v2955, 0.0
        %2962 = vadd.xlane.f32.xlu0 %v2961
        %v2963 = vpop.xlane.xlu0 %2962
        %v2964 = vsel %vm1070, %v2956, 0.0
        %2965 = vadd.xlane.f32.xlu0 %v2964
        %v2966 = vpop.xlane.xlu0 %2965
        %v2967 = vmul.f32 %v2963, %v1901
        %v2968 = vmul.f32 %v2966, %v1901
        %v2969 = vsub.f32 %v2955, %v2967
        %v2970 = vsub.f32 %v2956, %v2968
        %v2971 = vmul.f32 %v2969, %v2969
        %v2972 = vmul.f32 %v2970, %v2970
        %v2973 = vsel %vm1070, %v2971, 0.0
        %2974 = vadd.xlane.f32.xlu0 %v2973
        %v2975 = vpop.xlane.xlu0 %2974
        %v2976 = vsel %vm1070, %v2972, 0.0
        %2977 = vadd.xlane.f32.xlu0 %v2976
        %v2978 = vpop.xlane.xlu0 %2977
        %v2979 = vmul.f32 %v2975, %v1901
        %v2980 = vmul.f32 %v2978, %v1901
        %v2981 = vadd.f32 %v2979, 1e-05
        %v2982 = vadd.f32 %v2980, 1e-05
        %v2983 = vrsqrt.pop %v2981
        %v2984 = vrsqrt.pop %v2982
        %v2985 = vmul.f32 %v2969, %v2983
        %v2986 = vmul.f32 %v2970, %v2984
        %v2988 = vlaneseq
        %v2989 = vshrl.u32 %v2988, 7
        %v2990 = vsub.s32 0, %v2989
        %v2991 = vrot.slane %v2958, %v2990
        %v2993 = vmul.f32 %v2985, %v2991
        %v2994 = vmul.f32 %v2986, %v2991
        %v2996 = vlaneseq
        %v2997 = vshrl.u32 %v2996, 7
        %v2998 = vsub.s32 0, %v2997
        %v2999 = vrot.slane %v2960, %v2998
        %v3001 = vadd.f32 %v2993, %v2999
        %v3002 = vadd.f32 %v2994, %v2999
        %s3003 = scalar_lea.vmem [#allocation9], 32
        %v3004 = vld [vmem:[%s3003] sm:$0xff]
        %v3005 = vld [vmem:[%s3003 + $0x8] sm:$0xff]
        %v3006 = vld [vmem:[%s3003 + $0x10] sm:$0xff]
        %v3007 = vld [vmem:[%s3003 + $0x18] sm:$0xff]
        %v3008 = vpack.c.bf16 %v3002, %v3001
        %v3009 = vpack.c.bf16 %v3005, %v3004
        %v3010 = vpack.c.bf16 %v3007, %v3006
        %s3011 = scalar_lea.vmem [#allocation11], 1
        %v3012 = vld [vmem:[%s3011] sm:$0x1]
        %v3014 = vlaneseq
        %v3015 = vshrl.u32 %v3014, 7
        %v3016 = vsub.s32 0, %v3015
        %v3017 = vrot.slane %v3012, %v3016
        %v3020 = vsel %vm1070, %v3008, 0
        %3022 = vmatprep.subr.bf16.mxu0 0
        %3023 = vmatpush1.bf16.msra.mxu0 0
        %3024 = vmatprep.subr.bf16.mxu0 0
        %3025 = vmatpush1.bf16.msra.mxu0 0
        %3026 = vmatprep.subr.bf16.mxu0 0
        %3027 = vmatpush1.bf16.msra.mxu0 0
        %3028 = vmatprep.subr.bf16.mxu0 0
        %3029 = vmatpush1.bf16.msra.mxu0 0
        %3030 = vmatprep.subr.bf16.mxu0 0
        %3031 = vmatpush1.bf16.msra.mxu0 0
        %3032 = vmatprep.subr.bf16.mxu0 0
        %3033 = vmatpush1.bf16.msra.mxu0 0
        %3034 = vmatprep.subr.bf16.mxu0 0
        %3035 = vmatpush1.bf16.msra.mxu0 %v3010
        %3036 = vmatprep.subr.bf16.mxu0 0
        %3037 = vmatpush1.bf16.msra.mxu0 %v3009
        %3038 = vmatprep.subr.bf16.mxu0 0
        %3039 = vmatpush2.bf16.msra.mxu0 0
        %3040 = vmatprep.subr.bf16.mxu0 0
        %3041 = vmatpush2.bf16.msra.mxu0 0
        %3042 = vmatprep.subr.bf16.mxu0 0
        %3043 = vmatpush2.bf16.msra.mxu0 0
        %3044 = vmatprep.subr.bf16.mxu0 0
        %3045 = vmatpush2.bf16.msra.mxu0 0
        %3046 = vmatprep.subr.bf16.mxu0 0
        %3047 = vmatpush2.bf16.msra.mxu0 0
        %3048 = vmatprep.subr.bf16.mxu0 0
        %3049 = vmatpush2.bf16.msra.mxu0 0
        %3050 = vmatprep.subr.bf16.mxu0 0
        %3051 = vmatpush2.bf16.msra.mxu0 0
        %3052 = vmatprep.subr.bf16.mxu0 0
        %3053 = vmatpush2.bf16.msra.mxu0 0
        %3054 = vmatprep.mubr.bf16.mxu0 0
        %3055 = vmatmul.mubr.bf16.gmra.mxu0 %v3020
        %v3056 = vpop.f32.mrf.mxu0
        %v3057 = vadd.f32 %v3017, %v3056
        %v3058 = vpop.f32.mrf.mxu0
        %v3059 = vpop.f32.mrf.mxu0
        %v3060 = vadd.f32 %v3017, %v3059
        %v3061 = vpop.f32.mrf.mxu0
        %3062 = vdwg.mxu0
        %v3063 = vmax.f32 %v3057, 0.0
        %v3064 = vmax.f32 %v3060, 0.0
        %s3065 = scalar_lea.vmem [#allocation12], 32
        %v3066 = vld [vmem:[%s3065] sm:$0xff]
        %v3067 = vld [vmem:[%s3065 + $0x8] sm:$0xff]
        %v3068 = vld [vmem:[%s3065 + $0x10] sm:$0xff]
        %v3069 = vld [vmem:[%s3065 + $0x18] sm:$0xff]
        %v3070 = vpack.c.bf16 %v3064, %v3063
        %v3071 = vpack.c.bf16 %v3067, %v3066
        %v3072 = vpack.c.bf16 %v3069, %v3068
        %s3073 = scalar_lea.vmem [#allocation14], 1
        %v3074 = vld [vmem:[%s3073] sm:$0x1]
        %v3076 = vlaneseq
        %v3077 = vshrl.u32 %v3076, 7
        %v3078 = vsub.s32 0, %v3077
        %v3079 = vrot.slane %v3074, %v3078
        %v3082 = vsel %vm1070, %v3070, 0
        %3084 = vmatprep.subr.bf16.mxu0 0
        %3085 = vmatpush1.bf16.msra.mxu0 0
        %3086 = vmatprep.subr.bf16.mxu0 0
        %3087 = vmatpush1.bf16.msra.mxu0 0
        %3088 = vmatprep.subr.bf16.mxu0 0
        %3089 = vmatpush1.bf16.msra.mxu0 0
        %3090 = vmatprep.subr.bf16.mxu0 0
        %3091 = vmatpush1.bf16.msra.mxu0 0
        %3092 = vmatprep.subr.bf16.mxu0 0
        %3093 = vmatpush1.bf16.msra.mxu0 0
        %3094 = vmatprep.subr.bf16.mxu0 0
        %3095 = vmatpush1.bf16.msra.mxu0 0
        %3096 = vmatprep.subr.bf16.mxu0 0
        %3097 = vmatpush1.bf16.msra.mxu0 %v3072
        %3098 = vmatprep.subr.bf16.mxu0 0
        %3099 = vmatpush1.bf16.msra.mxu0 %v3071
        %3100 = vmatprep.subr.bf16.mxu0 0
        %3101 = vmatpush2.bf16.msra.mxu0 0
        %3102 = vmatprep.subr.bf16.mxu0 0
        %3103 = vmatpush2.bf16.msra.mxu0 0
        %3104 = vmatprep.subr.bf16.mxu0 0
        %3105 = vmatpush2.bf16.msra.mxu0 0
        %3106 = vmatprep.subr.bf16.mxu0 0
        %3107 = vmatpush2.bf16.msra.mxu0 0
        %3108 = vmatprep.subr.bf16.mxu0 0
        %3109 = vmatpush2.bf16.msra.mxu0 0
        %3110 = vmatprep.subr.bf16.mxu0 0
        %3111 = vmatpush2.bf16.msra.mxu0 0
        %3112 = vmatprep.subr.bf16.mxu0 0
        %3113 = vmatpush2.bf16.msra.mxu0 0
        %3114 = vmatprep.subr.bf16.mxu0 0
        %3115 = vmatpush2.bf16.msra.mxu0 0
        %3116 = vmatprep.mubr.bf16.mxu0 0
        %3117 = vmatmul.mubr.bf16.gmra.mxu0 %v3082
        %v3118 = vpop.f32.mrf.mxu0
        %v3119 = vadd.f32 %v3079, %v3118
        %v3120 = vpop.f32.mrf.mxu0
        %v3121 = vpop.f32.mrf.mxu0
        %v3122 = vadd.f32 %v3079, %v3121
        %v3123 = vpop.f32.mrf.mxu0
        %3124 = vdwg.mxu0
        %v3125 = vadd.f32 %v3001, %v3119
        %v3126 = vadd.f32 %v3002, %v3122
        %s3127 = scalar_lea.vmem [#allocation15], 1
        %v3128 = vld [vmem:[%s3127] sm:$0x1]
        %s3129 = scalar_lea.vmem [#allocation17], 1
        %v3130 = vld [vmem:[%s3129] sm:$0x1]
        %v3131 = vsel %vm1070, %v3125, 0.0
        %3132 = vadd.xlane.f32.xlu0 %v3131
        %v3133 = vpop.xlane.xlu0 %3132
        %v3134 = vsel %vm1070, %v3126, 0.0
        %3135 = vadd.xlane.f32.xlu0 %v3134
        %v3136 = vpop.xlane.xlu0 %3135
        %v3137 = vmul.f32 %v3133, %v1901
        %v3138 = vmul.f32 %v3136, %v1901
        %v3139 = vsub.f32 %v3125, %v3137
        %v3140 = vsub.f32 %v3126, %v3138
        %v3141 = vmul.f32 %v3139, %v3139
        %v3142 = vmul.f32 %v3140, %v3140
        %v3143 = vsel %vm1070, %v3141, 0.0
        %3144 = vadd.xlane.f32.xlu0 %v3143
        %v3145 = vpop.xlane.xlu0 %3144
        %v3146 = vsel %vm1070, %v3142, 0.0
        %3147 = vadd.xlane.f32.xlu0 %v3146
        %v3148 = vpop.xlane.xlu0 %3147
        %v3149 = vmul.f32 %v3145, %v1901
        %v3150 = vmul.f32 %v3148, %v1901
        %v3151 = vadd.f32 %v3149, 1e-05
        %v3152 = vadd.f32 %v3150, 1e-05
        %v3153 = vrsqrt.pop %v3151
        %v3154 = vrsqrt.pop %v3152
        %v3155 = vmul.f32 %v3139, %v3153
        %v3156 = vmul.f32 %v3140, %v3154
        %v3158 = vlaneseq
        %v3159 = vshrl.u32 %v3158, 7
        %v3160 = vsub.s32 0, %v3159
        %v3161 = vrot.slane %v3128, %v3160
        %v3163 = vmul.f32 %v3155, %v3161
        %v3164 = vmul.f32 %v3156, %v3161
        %v3166 = vlaneseq
        %v3167 = vshrl.u32 %v3166, 7
        %v3168 = vsub.s32 0, %v3167
        %v3169 = vrot.slane %v3130, %v3168
        %v3171 = vadd.f32 %v3163, %v3169
        %v3172 = vadd.f32 %v3164, %v3169
        %s3173 = scalar_lea.vmem [#allocation3], 192
        %v3174 = vld [vmem:[%s3173] sm:$0xff]
        %v3175 = vld [vmem:[%s3173 + $0x8] sm:$0xff]
        %v3176 = vld [vmem:[%s3173 + $0x10] sm:$0xff]
        %v3177 = vld [vmem:[%s3173 + $0x18] sm:$0xff]
        %v3178 = vld [vmem:[%s3173 + $0x20] sm:$0xff]
        %v3179 = vld [vmem:[%s3173 + $0x28] sm:$0xff]
        %v3180 = vld [vmem:[%s3173 + $0x30] sm:$0xff]
        %v3181 = vld [vmem:[%s3173 + $0x38] sm:$0xff]
        %v3182 = vld [vmem:[%s3173 + $0x40] sm:$0xff]
        %v3183 = vld [vmem:[%s3173 + $0x48] sm:$0xff]
        %v3184 = vld [vmem:[%s3173 + $0x50] sm:$0xff]
        %v3185 = vld [vmem:[%s3173 + $0x58] sm:$0xff]
        %v3188 = vrot.slane %v3171, 7
        %v3189 = vrot.slane %v3172, 7
        %v3190 = vsel %vm1057, %v3188, %v3189
        %v3194 = vsel %vm1057, 0.0, %v3188
        %v3195 = vsel %vm1057, %v3189, 0.0
        %s3196 = scalar_lea.vmem %s6, 2
        %v3197 = vld [vmem:[%s3196] sm:$0x1]
        %v3198 = vpack.c.bf16 %v3190, %v3194
        %v3199 = vpack.c.bf16 %v3175, %v3174
        %v3200 = vpack.c.bf16 %v3177, %v3176
        %v3202 = vsel %vm1070, %v3198, 0
        %3204 = vmatprep.subr.bf16.mxu0 0
        %3205 = vmatpush1.bf16.msra.mxu0 0
        %3206 = vmatprep.subr.bf16.mxu0 0
        %3207 = vmatpush1.bf16.msra.mxu0 0
        %3208 = vmatprep.subr.bf16.mxu0 0
        %3209 = vmatpush1.bf16.msra.mxu0 0
        %3210 = vmatprep.subr.bf16.mxu0 0
        %3211 = vmatpush1.bf16.msra.mxu0 0
        %3212 = vmatprep.subr.bf16.mxu0 0
        %3213 = vmatpush1.bf16.msra.mxu0 0
        %3214 = vmatprep.subr.bf16.mxu0 0
        %3215 = vmatpush1.bf16.msra.mxu0 0
        %3216 = vmatprep.subr.bf16.mxu0 0
        %3217 = vmatpush1.bf16.msra.mxu0 %v3200
        %3218 = vmatprep.subr.bf16.mxu0 0
        %3219 = vmatpush1.bf16.msra.mxu0 %v3199
        %3220 = vmatprep.subr.bf16.mxu0 0
        %3221 = vmatpush2.bf16.msra.mxu0 0
        %3222 = vmatprep.subr.bf16.mxu0 0
        %3223 = vmatpush2.bf16.msra.mxu0 0
        %3224 = vmatprep.subr.bf16.mxu0 0
        %3225 = vmatpush2.bf16.msra.mxu0 0
        %3226 = vmatprep.subr.bf16.mxu0 0
        %3227 = vmatpush2.bf16.msra.mxu0 0
        %3228 = vmatprep.subr.bf16.mxu0 0
        %3229 = vmatpush2.bf16.msra.mxu0 0
        %3230 = vmatprep.subr.bf16.mxu0 0
        %3231 = vmatpush2.bf16.msra.mxu0 0
        %3232 = vmatprep.subr.bf16.mxu0 0
        %3233 = vmatpush2.bf16.msra.mxu0 0
        %3234 = vmatprep.subr.bf16.mxu0 0
        %3235 = vmatpush2.bf16.msra.mxu0 0
        %3236 = vmatprep.mubr.bf16.mxu0 0
        %3237 = vmatmul.mubr.bf16.gmra.mxu0 %v3202
        %v3238 = vpop.f32.mrf.mxu0
        %v3239 = vadd.f32 0.0, %v3238
        %v3240 = vpop.f32.mrf.mxu0
        %v3241 = vpop.f32.mrf.mxu0
        %v3242 = vadd.f32 0.0, %v3241
        %v3243 = vpop.f32.mrf.mxu0
        %3244 = vdwg.mxu0
        %v3246 = vlaneseq
        %v3247 = vshrl.u32 %v3246, 7
        %v3248 = vsub.s32 0, %v3247
        %v3249 = vrot.slane %v3197, %v3248
        %v3251 = vadd.f32 %v3249, %v3239
        %v3252 = vadd.f32 %v3249, %v3242
        %v3253 = vpack.c.bf16 %v3195, %v3195
        %v3254 = vpack.c.bf16 %v3179, %v3178
        %v3255 = vpack.c.bf16 %v3181, %v3180
        %v3256 = vshrl.u32 %v3198, 16
        %v3258 = vshll.u32 %v3198, 16
        %v3260 = vrot.slane %v3258, 1
        %v3261 = vor.u32 %v3256, %v3260
        %v3263 = vshll.u32 %v3253, 16
        %v3265 = vrot.slane %v3263, 1
        %v3266 = vsel %vm1126, %v3261, %v3265
        %v3268 = vsel %vm1070, %v3266, 0
        %3270 = vmatprep.subr.bf16.mxu0 0
        %3271 = vmatpush1.bf16.msra.mxu0 0
        %3272 = vmatprep.subr.bf16.mxu0 0
        %3273 = vmatpush1.bf16.msra.mxu0 0
        %3274 = vmatprep.subr.bf16.mxu0 0
        %3275 = vmatpush1.bf16.msra.mxu0 0
        %3276 = vmatprep.subr.bf16.mxu0 0
        %3277 = vmatpush1.bf16.msra.mxu0 0
        %3278 = vmatprep.subr.bf16.mxu0 0
        %3279 = vmatpush1.bf16.msra.mxu0 0
        %3280 = vmatprep.subr.bf16.mxu0 0
        %3281 = vmatpush1.bf16.msra.mxu0 0
        %3282 = vmatprep.subr.bf16.mxu0 0
        %3283 = vmatpush1.bf16.msra.mxu0 %v3255
        %3284 = vmatprep.subr.bf16.mxu0 0
        %3285 = vmatpush1.bf16.msra.mxu0 %v3254
        %3286 = vmatprep.subr.bf16.mxu0 0
        %3287 = vmatpush2.bf16.msra.mxu0 0
        %3288 = vmatprep.subr.bf16.mxu0 0
        %3289 = vmatpush2.bf16.msra.mxu0 0
        %3290 = vmatprep.subr.bf16.mxu0 0
        %3291 = vmatpush2.bf16.msra.mxu0 0
        %3292 = vmatprep.subr.bf16.mxu0 0
        %3293 = vmatpush2.bf16.msra.mxu0 0
        %3294 = vmatprep.subr.bf16.mxu0 0
        %3295 = vmatpush2.bf16.msra.mxu0 0
        %3296 = vmatprep.subr.bf16.mxu0 0
        %3297 = vmatpush2.bf16.msra.mxu0 0
        %3298 = vmatprep.subr.bf16.mxu0 0
        %3299 = vmatpush2.bf16.msra.mxu0 0
        %3300 = vmatprep.subr.bf16.mxu0 0
        %3301 = vmatpush2.bf16.msra.mxu0 0
        %3302 = vmatprep.mubr.bf16.mxu0 0
        %3303 = vmatmul.mubr.bf16.gmra.mxu0 %v3268
        %v3304 = vpop.f32.mrf.mxu0
        %v3305 = vadd.f32 0.0, %v3304
        %v3306 = vpop.f32.mrf.mxu0
        %v3307 = vpop.f32.mrf.mxu0
        %v3308 = vadd.f32 0.0, %v3307
        %v3309 = vpop.f32.mrf.mxu0
        %3310 = vdwg.mxu0
        %v3311 = vadd.f32 %v3251, %v3305
        %v3312 = vadd.f32 %v3252, %v3308
        %v3313 = vpack.c.bf16 %v3183, %v3182
        %v3314 = vpack.c.bf16 %v3185, %v3184
        %v3317 = vrot.slane %v3198, 1
        %v3318 = vrot.slane %v3253, 1
        %v3319 = vsel %vm1188, %v3317, %v3318
        %v3321 = vsel %vm1070, %v3319, 0
        %3323 = vmatprep.subr.bf16.mxu0 0
        %3324 = vmatpush1.bf16.msra.mxu0 0
        %3325 = vmatprep.subr.bf16.mxu0 0
        %3326 = vmatpush1.bf16.msra.mxu0 0
        %3327 = vmatprep.subr.bf16.mxu0 0
        %3328 = vmatpush1.bf16.msra.mxu0 0
        %3329 = vmatprep.subr.bf16.mxu0 0
        %3330 = vmatpush1.bf16.msra.mxu0 0
        %3331 = vmatprep.subr.bf16.mxu0 0
        %3332 = vmatpush1.bf16.msra.mxu0 0
        %3333 = vmatprep.subr.bf16.mxu0 0
        %3334 = vmatpush1.bf16.msra.mxu0 0
        %3335 = vmatprep.subr.bf16.mxu0 0
        %3336 = vmatpush1.bf16.msra.mxu0 %v3314
        %3337 = vmatprep.subr.bf16.mxu0 0
        %3338 = vmatpush1.bf16.msra.mxu0 %v3313
        %3339 = vmatprep.subr.bf16.mxu0 0
        %3340 = vmatpush2.bf16.msra.mxu0 0
        %3341 = vmatprep.subr.bf16.mxu0 0
        %3342 = vmatpush2.bf16.msra.mxu0 0
        %3343 = vmatprep.subr.bf16.mxu0 0
        %3344 = vmatpush2.bf16.msra.mxu0 0
        %3345 = vmatprep.subr.bf16.mxu0 0
        %3346 = vmatpush2.bf16.msra.mxu0 0
        %3347 = vmatprep.subr.bf16.mxu0 0
        %3348 = vmatpush2.bf16.msra.mxu0 0
        %3349 = vmatprep.subr.bf16.mxu0 0
        %3350 = vmatpush2.bf16.msra.mxu0 0
        %3351 = vmatprep.subr.bf16.mxu0 0
        %3352 = vmatpush2.bf16.msra.mxu0 0
        %3353 = vmatprep.subr.bf16.mxu0 0
        %3354 = vmatpush2.bf16.msra.mxu0 0
        %3355 = vmatprep.mubr.bf16.mxu0 0
        %3356 = vmatmul.mubr.bf16.gmra.mxu0 %v3321
        %v3357 = vpop.f32.mrf.mxu0
        %v3358 = vadd.f32 0.0, %v3357
        %v3359 = vpop.f32.mrf.mxu0
        %v3360 = vpop.f32.mrf.mxu0
        %v3361 = vadd.f32 0.0, %v3360
        %v3362 = vpop.f32.mrf.mxu0
        %3363 = vdwg.mxu0
        %v3364 = vadd.f32 %v3311, %v3358
        %v3365 = vadd.f32 %v3312, %v3361
        %s3366 = scalar_lea.vmem %s7, 64
        %v3367 = vld [vmem:[%s3366] sm:$0xff]
        %v3368 = vld [vmem:[%s3366 + $0x8] sm:$0xff]
        %v3369 = vld [vmem:[%s3366 + $0x10] sm:$0xff]
        %v3370 = vld [vmem:[%s3366 + $0x18] sm:$0xff]
        %v3371 = vpack.c.bf16 %v3172, %v3171
        %v3372 = vpack.c.bf16 %v3368, %v3367
        %v3373 = vpack.c.bf16 %v3370, %v3369
        %s3374 = scalar_lea.vmem %s8, 2
        %v3375 = vld [vmem:[%s3374] sm:$0x1]
        %v3377 = vlaneseq
        %v3378 = vshrl.u32 %v3377, 7
        %v3379 = vsub.s32 0, %v3378
        %v3380 = vrot.slane %v3375, %v3379
        %v3383 = vsel %vm1070, %v3371, 0
        %3385 = vmatprep.subr.bf16.mxu0 0
        %3386 = vmatpush1.bf16.msra.mxu0 0
        %3387 = vmatprep.subr.bf16.mxu0 0
        %3388 = vmatpush1.bf16.msra.mxu0 0
        %3389 = vmatprep.subr.bf16.mxu0 0
        %3390 = vmatpush1.bf16.msra.mxu0 0
        %3391 = vmatprep.subr.bf16.mxu0 0
        %3392 = vmatpush1.bf16.msra.mxu0 0
        %3393 = vmatprep.subr.bf16.mxu0 0
        %3394 = vmatpush1.bf16.msra.mxu0 0
        %3395 = vmatprep.subr.bf16.mxu0 0
        %3396 = vmatpush1.bf16.msra.mxu0 0
        %3397 = vmatprep.subr.bf16.mxu0 0
        %3398 = vmatpush1.bf16.msra.mxu0 %v3373
        %3399 = vmatprep.subr.bf16.mxu0 0
        %3400 = vmatpush1.bf16.msra.mxu0 %v3372
        %3401 = vmatprep.subr.bf16.mxu0 0
        %3402 = vmatpush2.bf16.msra.mxu0 0
        %3403 = vmatprep.subr.bf16.mxu0 0
        %3404 = vmatpush2.bf16.msra.mxu0 0
        %3405 = vmatprep.subr.bf16.mxu0 0
        %3406 = vmatpush2.bf16.msra.mxu0 0
        %3407 = vmatprep.subr.bf16.mxu0 0
        %3408 = vmatpush2.bf16.msra.mxu0 0
        %3409 = vmatprep.subr.bf16.mxu0 0
        %3410 = vmatpush2.bf16.msra.mxu0 0
        %3411 = vmatprep.subr.bf16.mxu0 0
        %3412 = vmatpush2.bf16.msra.mxu0 0
        %3413 = vmatprep.subr.bf16.mxu0 0
        %3414 = vmatpush2.bf16.msra.mxu0 0
        %3415 = vmatprep.subr.bf16.mxu0 0
        %3416 = vmatpush2.bf16.msra.mxu0 0
        %3417 = vmatprep.mubr.bf16.mxu0 0
        %3418 = vmatmul.mubr.bf16.gmra.mxu0 %v3383
        %v3419 = vpop.f32.mrf.mxu0
        %v3420 = vadd.f32 %v3380, %v3419
        %v3421 = vpop.f32.mrf.mxu0
        %v3422 = vpop.f32.mrf.mxu0
        %v3423 = vadd.f32 %v3380, %v3422
        %v3424 = vpop.f32.mrf.mxu0
        %3425 = vdwg.mxu0
        %s3426 = scalar_lea.vmem %s9, 2
        %v3427 = vld [vmem:[%s3426] sm:$0x1]
        %s3428 = scalar_lea.vmem %s10, 2
        %v3429 = vld [vmem:[%s3428] sm:$0x1]
        %v3431 = vsel %vm1070, %v3420, 0
        %v3434 = vsel %vm1070, %v3423, 0
        %3436 = vmatprep.subr.mxu0 0.0
        %3437 = vmatpush1.msra.mxu0 0.0
        %3438 = vmatprep.subr.mxu0 0.0
        %3439 = vmatpush1.msra.mxu0 0.0
        %3440 = vmatprep.subr.mxu0 0.0
        %3441 = vmatpush1.msra.mxu0 0.0
        %3442 = vmatprep.subr.mxu0 0.0
        %3443 = vmatpush1.msra.mxu0 0.0
        %3444 = vmatprep.subr.mxu0 0.0
        %3445 = vmatpush1.msra.mxu0 0.0
        %3446 = vmatprep.subr.mxu0 0.0
        %3447 = vmatpush1.msra.mxu0 0.0
        %3448 = vmatprep.subr.mxu0 0.0
        %3449 = vmatpush1.msra.mxu0 0.0
        %3450 = vmatprep.subr.mxu0 0.0
        %3451 = vmatpush1.msra.mxu0 0.0
        %3452 = vmatprep.subr.mxu0 0.0
        %3453 = vmatpush1.msra.mxu0 0.0
        %3454 = vmatprep.subr.mxu0 0.0
        %3455 = vmatpush1.msra.mxu0 0.0
        %3456 = vmatprep.subr.mxu0 0.0
        %3457 = vmatpush1.msra.mxu0 0.0
        %3458 = vmatprep.subr.mxu0 0.0
        %3459 = vmatpush1.msra.mxu0 0.0
        %3460 = vmatprep.subr.mxu0 0.0
        %3461 = vmatpush1.msra.mxu0 %v1038
        %3462 = vmatprep.subr.mxu0 0.0
        %3463 = vmatpush1.msra.mxu0 %v1037
        %3464 = vmatprep.subr.mxu0 0.0
        %3465 = vmatpush1.msra.mxu0 %v1036
        %3466 = vmatprep.subr.mxu0 0.0
        %3467 = vmatpush1.msra.mxu0 %v1035
        %3468 = vmatprep.subr.mxu0 0.0
        %3469 = vmatpush2.msra.mxu0 0.0
        %3470 = vmatprep.subr.mxu0 0.0
        %3471 = vmatpush2.msra.mxu0 0.0
        %3472 = vmatprep.subr.mxu0 0.0
        %3473 = vmatpush2.msra.mxu0 0.0
        %3474 = vmatprep.subr.mxu0 0.0
        %3475 = vmatpush2.msra.mxu0 0.0
        %3476 = vmatprep.subr.mxu0 0.0
        %3477 = vmatpush2.msra.mxu0 0.0
        %3478 = vmatprep.subr.mxu0 0.0
        %3479 = vmatpush2.msra.mxu0 0.0
        %3480 = vmatprep.subr.mxu0 0.0
        %3481 = vmatpush2.msra.mxu0 0.0
        %3482 = vmatprep.subr.mxu0 0.0
        %3483 = vmatpush2.msra.mxu0 0.0
        %3484 = vmatprep.subr.mxu0 0.0
        %3485 = vmatpush2.msra.mxu0 0.0
        %3486 = vmatprep.subr.mxu0 0.0
        %3487 = vmatpush2.msra.mxu0 0.0
        %3488 = vmatprep.subr.mxu0 0.0
        %3489 = vmatpush2.msra.mxu0 0.0
        %3490 = vmatprep.subr.mxu0 0.0
        %3491 = vmatpush2.msra.mxu0 0.0
        %3492 = vmatprep.subr.mxu0 0.0
        %3493 = vmatpush2.msra.mxu0 0.0
        %3494 = vmatprep.subr.mxu0 0.0
        %3495 = vmatpush2.msra.mxu0 0.0
        %3496 = vmatprep.subr.mxu0 0.0
        %3497 = vmatpush2.msra.mxu0 0.0
        %3498 = vmatprep.subr.mxu0 0.0
        %3499 = vmatpush2.msra.mxu0 0.0
        %3500 = vmatprep.mubr.f32.mxu0 0.0
        %3501 = vmatmul.mubr.f32.gmra.mxu0 %v3431
        %v3502 = vpop.f32.mrf.mxu0
        %v3503 = vadd.f32 0.0, %v3502
        %v3504 = vpop.f32.mrf.mxu0
        %3505 = vmatprep.mubr.f32.mxu0 0.0
        %3506 = vmatmul.mubr.f32.gmra.mxu0 %v3434
        %v3507 = vpop.f32.mrf.mxu0
        %v3508 = vadd.f32 0.0, %v3507
        %v3509 = vpop.f32.mrf.mxu0
        %3510 = vdwg.mxu0
        %v3511 = vsub.f32 %v3420, %v3503
        %v3512 = vsub.f32 %v3423, %v3508
        %v3513 = vmul.f32 %v3511, %v3511
        %v3514 = vmul.f32 %v3512, %v3512
        %v3516 = vsel %vm1070, %v3513, 0
        %v3519 = vsel %vm1070, %v3514, 0
        %3521 = vmatprep.subr.mxu0 0.0
        %3522 = vmatpush1.msra.mxu0 0.0
        %3523 = vmatprep.subr.mxu0 0.0
        %3524 = vmatpush1.msra.mxu0 0.0
        %3525 = vmatprep.subr.mxu0 0.0
        %3526 = vmatpush1.msra.mxu0 0.0
        %3527 = vmatprep.subr.mxu0 0.0
        %3528 = vmatpush1.msra.mxu0 0.0
        %3529 = vmatprep.subr.mxu0 0.0
        %3530 = vmatpush1.msra.mxu0 0.0
        %3531 = vmatprep.subr.mxu0 0.0
        %3532 = vmatpush1.msra.mxu0 0.0
        %3533 = vmatprep.subr.mxu0 0.0
        %3534 = vmatpush1.msra.mxu0 0.0
        %3535 = vmatprep.subr.mxu0 0.0
        %3536 = vmatpush1.msra.mxu0 0.0
        %3537 = vmatprep.subr.mxu0 0.0
        %3538 = vmatpush1.msra.mxu0 0.0
        %3539 = vmatprep.subr.mxu0 0.0
        %3540 = vmatpush1.msra.mxu0 0.0
        %3541 = vmatprep.subr.mxu0 0.0
        %3542 = vmatpush1.msra.mxu0 0.0
        %3543 = vmatprep.subr.mxu0 0.0
        %3544 = vmatpush1.msra.mxu0 0.0
        %3545 = vmatprep.subr.mxu0 0.0
        %3546 = vmatpush1.msra.mxu0 %v1038
        %3547 = vmatprep.subr.mxu0 0.0
        %3548 = vmatpush1.msra.mxu0 %v1037
        %3549 = vmatprep.subr.mxu0 0.0
        %3550 = vmatpush1.msra.mxu0 %v1036
        %3551 = vmatprep.subr.mxu0 0.0
        %3552 = vmatpush1.msra.mxu0 %v1035
        %3553 = vmatprep.subr.mxu0 0.0
        %3554 = vmatpush2.msra.mxu0 0.0
        %3555 = vmatprep.subr.mxu0 0.0
        %3556 = vmatpush2.msra.mxu0 0.0
        %3557 = vmatprep.subr.mxu0 0.0
        %3558 = vmatpush2.msra.mxu0 0.0
        %3559 = vmatprep.subr.mxu0 0.0
        %3560 = vmatpush2.msra.mxu0 0.0
        %3561 = vmatprep.subr.mxu0 0.0
        %3562 = vmatpush2.msra.mxu0 0.0
        %3563 = vmatprep.subr.mxu0 0.0
        %3564 = vmatpush2.msra.mxu0 0.0
        %3565 = vmatprep.subr.mxu0 0.0
        %3566 = vmatpush2.msra.mxu0 0.0
        %3567 = vmatprep.subr.mxu0 0.0
        %3568 = vmatpush2.msra.mxu0 0.0
        %3569 = vmatprep.subr.mxu0 0.0
        %3570 = vmatpush2.msra.mxu0 0.0
        %3571 = vmatprep.subr.mxu0 0.0
        %3572 = vmatpush2.msra.mxu0 0.0
        %3573 = vmatprep.subr.mxu0 0.0
        %3574 = vmatpush2.msra.mxu0 0.0
        %3575 = vmatprep.subr.mxu0 0.0
        %3576 = vmatpush2.msra.mxu0 0.0
        %3577 = vmatprep.subr.mxu0 0.0
        %3578 = vmatpush2.msra.mxu0 0.0
        %3579 = vmatprep.subr.mxu0 0.0
        %3580 = vmatpush2.msra.mxu0 0.0
        %3581 = vmatprep.subr.mxu0 0.0
        %3582 = vmatpush2.msra.mxu0 0.0
        %3583 = vmatprep.subr.mxu0 0.0
        %3584 = vmatpush2.msra.mxu0 0.0
        %3585 = vmatprep.mubr.f32.mxu0 0.0
        %3586 = vmatmul.mubr.f32.gmra.mxu0 %v3516
        %v3587 = vpop.f32.mrf.mxu0
        %v3588 = vadd.f32 1e-05, %v3587
        %v3589 = vpop.f32.mrf.mxu0
        %3590 = vmatprep.mubr.f32.mxu0 0.0
        %3591 = vmatmul.mubr.f32.gmra.mxu0 %v3519
        %v3592 = vpop.f32.mrf.mxu0
        %v3593 = vadd.f32 1e-05, %v3592
        %v3594 = vpop.f32.mrf.mxu0
        %3595 = vdwg.mxu0
        %v3596 = vrsqrt.pop %v3588
        %v3597 = vrsqrt.pop %v3593
        %v3598 = vmul.f32 %v3511, %v3596
        %v3599 = vmul.f32 %v3512, %v3597
        %v3601 = vlaneseq
        %v3602 = vshrl.u32 %v3601, 7
        %v3603 = vsub.s32 0, %v3602
        %v3604 = vrot.slane %v3427, %v3603
        %v3606 = vmul.f32 %v3598, %v3604
        %v3607 = vmul.f32 %v3599, %v3604
        %v3609 = vlaneseq
        %v3610 = vshrl.u32 %v3609, 7
        %v3611 = vsub.s32 0, %v3610
        %v3612 = vrot.slane %v3429, %v3611
        %v3614 = vadd.f32 %v3606, %v3612
        %v3615 = vadd.f32 %v3607, %v3612
        %s3616 = scalar_lea.vmem %s11, 2
        %v3617 = vld [vmem:[%s3616] sm:$0x1]
        %s3618 = scalar_lea.vmem %s12, 2
        %v3619 = vld [vmem:[%s3618] sm:$0x1]
        %3620 = vrot.lane.b32.xlu0 %v3420, 96
        %v3621 = vpop.permute.xlu0 %3620
        %3622 = vrot.lane.b32.xlu0 %v3423, 96
        %v3623 = vpop.permute.xlu0 %3622
        %v3624 = vsel %vm1070, %v3621, 0
        %v3626 = vsel %vm1070, %v3623, 0
        %3628 = vmatprep.subr.mxu0 0.0
        %3629 = vmatpush1.msra.mxu0 0.0
        %3630 = vmatprep.subr.mxu0 0.0
        %3631 = vmatpush1.msra.mxu0 0.0
        %3632 = vmatprep.subr.mxu0 0.0
        %3633 = vmatpush1.msra.mxu0 0.0
        %3634 = vmatprep.subr.mxu0 0.0
        %3635 = vmatpush1.msra.mxu0 0.0
        %3636 = vmatprep.subr.mxu0 0.0
        %3637 = vmatpush1.msra.mxu0 0.0
        %3638 = vmatprep.subr.mxu0 0.0
        %3639 = vmatpush1.msra.mxu0 0.0
        %3640 = vmatprep.subr.mxu0 0.0
        %3641 = vmatpush1.msra.mxu0 0.0
        %3642 = vmatprep.subr.mxu0 0.0
        %3643 = vmatpush1.msra.mxu0 0.0
        %3644 = vmatprep.subr.mxu0 0.0
        %3645 = vmatpush1.msra.mxu0 0.0
        %3646 = vmatprep.subr.mxu0 0.0
        %3647 = vmatpush1.msra.mxu0 0.0
        %3648 = vmatprep.subr.mxu0 0.0
        %3649 = vmatpush1.msra.mxu0 0.0
        %3650 = vmatprep.subr.mxu0 0.0
        %3651 = vmatpush1.msra.mxu0 0.0
        %3652 = vmatprep.subr.mxu0 0.0
        %3653 = vmatpush1.msra.mxu0 %v1038
        %3654 = vmatprep.subr.mxu0 0.0
        %3655 = vmatpush1.msra.mxu0 %v1037
        %3656 = vmatprep.subr.mxu0 0.0
        %3657 = vmatpush1.msra.mxu0 %v1036
        %3658 = vmatprep.subr.mxu0 0.0
        %3659 = vmatpush1.msra.mxu0 %v1035
        %3660 = vmatprep.subr.mxu0 0.0
        %3661 = vmatpush2.msra.mxu0 0.0
        %3662 = vmatprep.subr.mxu0 0.0
        %3663 = vmatpush2.msra.mxu0 0.0
        %3664 = vmatprep.subr.mxu0 0.0
        %3665 = vmatpush2.msra.mxu0 0.0
        %3666 = vmatprep.subr.mxu0 0.0
        %3667 = vmatpush2.msra.mxu0 0.0
        %3668 = vmatprep.subr.mxu0 0.0
        %3669 = vmatpush2.msra.mxu0 0.0
        %3670 = vmatprep.subr.mxu0 0.0
        %3671 = vmatpush2.msra.mxu0 0.0
        %3672 = vmatprep.subr.mxu0 0.0
        %3673 = vmatpush2.msra.mxu0 0.0
        %3674 = vmatprep.subr.mxu0 0.0
        %3675 = vmatpush2.msra.mxu0 0.0
        %3676 = vmatprep.subr.mxu0 0.0
        %3677 = vmatpush2.msra.mxu0 0.0
        %3678 = vmatprep.subr.mxu0 0.0
        %3679 = vmatpush2.msra.mxu0 0.0
        %3680 = vmatprep.subr.mxu0 0.0
        %3681 = vmatpush2.msra.mxu0 0.0
        %3682 = vmatprep.subr.mxu0 0.0
        %3683 = vmatpush2.msra.mxu0 0.0
        %3684 = vmatprep.subr.mxu0 0.0
        %3685 = vmatpush2.msra.mxu0 0.0
        %3686 = vmatprep.subr.mxu0 0.0
        %3687 = vmatpush2.msra.mxu0 0.0
        %3688 = vmatprep.subr.mxu0 0.0
        %3689 = vmatpush2.msra.mxu0 0.0
        %3690 = vmatprep.subr.mxu0 0.0
        %3691 = vmatpush2.msra.mxu0 0.0
        %3692 = vmatprep.mubr.f32.mxu0 0.0
        %3693 = vmatmul.mubr.f32.gmra.mxu0 %v3624
        %v3694 = vpop.f32.mrf.mxu0
        %v3695 = vadd.f32 0.0, %v3694
        %v3696 = vpop.f32.mrf.mxu0
        %3697 = vmatprep.mubr.f32.mxu0 0.0
        %3698 = vmatmul.mubr.f32.gmra.mxu0 %v3626
        %v3699 = vpop.f32.mrf.mxu0
        %v3700 = vadd.f32 0.0, %v3699
        %v3701 = vpop.f32.mrf.mxu0
        %3702 = vdwg.mxu0
        %3705 = vrot.lane.b32.xlu0 %v3695, 32
        %v3706 = vpop.permute.xlu0 %3705
        %3707 = vrot.lane.b32.xlu0 %v3700, 32
        %v3708 = vpop.permute.xlu0 %3707
        %v3711 = vsub.f32 %v3420, %v3706
        %v3712 = vsub.f32 %v3423, %v3708
        %v3713 = vmul.f32 %v3711, %v3711
        %v3714 = vmul.f32 %v3712, %v3712
        %3717 = vrot.lane.b32.xlu0 %v3713, 96
        %v3718 = vpop.permute.xlu0 %3717
        %3719 = vrot.lane.b32.xlu0 %v3714, 96
        %v3720 = vpop.permute.xlu0 %3719
        %v3721 = vsel %vm1070, %v3718, 0
        %v3723 = vsel %vm1070, %v3720, 0
        %3725 = vmatprep.subr.mxu0 0.0
        %3726 = vmatpush1.msra.mxu0 0.0
        %3727 = vmatprep.subr.mxu0 0.0
        %3728 = vmatpush1.msra.mxu0 0.0
        %3729 = vmatprep.subr.mxu0 0.0
        %3730 = vmatpush1.msra.mxu0 0.0
        %3731 = vmatprep.subr.mxu0 0.0
        %3732 = vmatpush1.msra.mxu0 0.0
        %3733 = vmatprep.subr.mxu0 0.0
        %3734 = vmatpush1.msra.mxu0 0.0
        %3735 = vmatprep.subr.mxu0 0.0
        %3736 = vmatpush1.msra.mxu0 0.0
        %3737 = vmatprep.subr.mxu0 0.0
        %3738 = vmatpush1.msra.mxu0 0.0
        %3739 = vmatprep.subr.mxu0 0.0
        %3740 = vmatpush1.msra.mxu0 0.0
        %3741 = vmatprep.subr.mxu0 0.0
        %3742 = vmatpush1.msra.mxu0 0.0
        %3743 = vmatprep.subr.mxu0 0.0
        %3744 = vmatpush1.msra.mxu0 0.0
        %3745 = vmatprep.subr.mxu0 0.0
        %3746 = vmatpush1.msra.mxu0 0.0
        %3747 = vmatprep.subr.mxu0 0.0
        %3748 = vmatpush1.msra.mxu0 0.0
        %3749 = vmatprep.subr.mxu0 0.0
        %3750 = vmatpush1.msra.mxu0 %v1038
        %3751 = vmatprep.subr.mxu0 0.0
        %3752 = vmatpush1.msra.mxu0 %v1037
        %3753 = vmatprep.subr.mxu0 0.0
        %3754 = vmatpush1.msra.mxu0 %v1036
        %3755 = vmatprep.subr.mxu0 0.0
        %3756 = vmatpush1.msra.mxu0 %v1035
        %3757 = vmatprep.subr.mxu0 0.0
        %3758 = vmatpush2.msra.mxu0 0.0
        %3759 = vmatprep.subr.mxu0 0.0
        %3760 = vmatpush2.msra.mxu0 0.0
        %3761 = vmatprep.subr.mxu0 0.0
        %3762 = vmatpush2.msra.mxu0 0.0
        %3763 = vmatprep.subr.mxu0 0.0
        %3764 = vmatpush2.msra.mxu0 0.0
        %3765 = vmatprep.subr.mxu0 0.0
        %3766 = vmatpush2.msra.mxu0 0.0
        %3767 = vmatprep.subr.mxu0 0.0
        %3768 = vmatpush2.msra.mxu0 0.0
        %3769 = vmatprep.subr.mxu0 0.0
        %3770 = vmatpush2.msra.mxu0 0.0
        %3771 = vmatprep.subr.mxu0 0.0
        %3772 = vmatpush2.msra.mxu0 0.0
        %3773 = vmatprep.subr.mxu0 0.0
        %3774 = vmatpush2.msra.mxu0 0.0
        %3775 = vmatprep.subr.mxu0 0.0
        %3776 = vmatpush2.msra.mxu0 0.0
        %3777 = vmatprep.subr.mxu0 0.0
        %3778 = vmatpush2.msra.mxu0 0.0
        %3779 = vmatprep.subr.mxu0 0.0
        %3780 = vmatpush2.msra.mxu0 0.0
        %3781 = vmatprep.subr.mxu0 0.0
        %3782 = vmatpush2.msra.mxu0 0.0
        %3783 = vmatprep.subr.mxu0 0.0
        %3784 = vmatpush2.msra.mxu0 0.0
        %3785 = vmatprep.subr.mxu0 0.0
        %3786 = vmatpush2.msra.mxu0 0.0
        %3787 = vmatprep.subr.mxu0 0.0
        %3788 = vmatpush2.msra.mxu0 0.0
        %3789 = vmatprep.mubr.f32.mxu0 0.0
        %3790 = vmatmul.mubr.f32.gmra.mxu0 %v3721
        %v3791 = vpop.f32.mrf.mxu0
        %v3792 = vadd.f32 1e-05, %v3791
        %v3793 = vpop.f32.mrf.mxu0
        %3794 = vmatprep.mubr.f32.mxu0 0.0
        %3795 = vmatmul.mubr.f32.gmra.mxu0 %v3723
        %v3796 = vpop.f32.mrf.mxu0
        %v3797 = vadd.f32 1e-05, %v3796
        %v3798 = vpop.f32.mrf.mxu0
        %3799 = vdwg.mxu0
        %v3800 = vrsqrt.pop %v3792
        %v3801 = vrsqrt.pop %v3797
        %3804 = vrot.lane.b32.xlu0 %v3800, 32
        %v3805 = vpop.permute.xlu0 %3804
        %3806 = vrot.lane.b32.xlu0 %v3801, 32
        %v3807 = vpop.permute.xlu0 %3806
        %v3810 = vmul.f32 %v3711, %v3805
        %v3811 = vmul.f32 %v3712, %v3807
        %v3813 = vlaneseq
        %v3814 = vshrl.u32 %v3813, 7
        %v3815 = vsub.s32 0, %v3814
        %v3816 = vrot.slane %v3617, %v3815
        %3817 = vrot.lane.b32.xlu0 %v3816, 32
        %v3818 = vpop.permute.xlu0 %3817
        %v3820 = vmul.f32 %v3810, %v3818
        %v3821 = vmul.f32 %v3811, %v3818
        %v3823 = vlaneseq
        %v3824 = vshrl.u32 %v3823, 7
        %v3825 = vsub.s32 0, %v3824
        %v3826 = vrot.slane %v3619, %v3825
        %3827 = vrot.lane.b32.xlu0 %v3826, 32
        %v3828 = vpop.permute.xlu0 %3827
        %v3830 = vadd.f32 %v3820, %v3828
        %v3831 = vadd.f32 %v3821, %v3828
        %v3832 = vpack.c.bf16 %v3831, %v3830
        %v3833 = vpack.c.bf16 %v3423, %v3420
        %3835 = vrot.lane.b32.xlu0 %v3832, 96
        %v3836 = vpop.permute.xlu0 %3835
        %3838 = vxpose.xlu0.c.b16.start [1/8] %v3836, 128
        %3839 = vxpose.xlu0.c.b16.cont [2/8] 0, 128
        %3840 = vxpose.xlu0.c.b16.cont [3/8] 0, 128
        %3841 = vxpose.xlu0.c.b16.cont [4/8] 0, 128
        %3842 = vxpose.xlu0.c.b16.cont [5/8] 0, 128
        %3843 = vxpose.xlu0.c.b16.cont [6/8] 0, 128
        %3844 = vxpose.xlu0.c.b16.cont [7/8] 0, 128
        %3845 = vxpose.xlu0.c.b16.end [8/8] 0, 128
        %v3846 = vpop.trf.xlu0
        %v3847 = vpop.trf.xlu0
        %v3848 = vpop.trf.xlu0
        %v3849 = vpop.trf.xlu0
        %v3850 = vpop.trf.xlu0
        %v3851 = vpop.trf.xlu0
        %v3852 = vpop.trf.xlu0
        %v3853 = vpop.trf.xlu0
        %3855 = vrot.lane.b32.xlu0 %v3833, 64
        %v3856 = vpop.permute.xlu0 %3855
        %v3859 = vsel %vm1724, %v3846, 0
        %v3862 = vsel %vm1724, %v3847, 0
        %3864 = vmatprep.subr.bf16.mxu0 0
        %3865 = vmatpush1.bf16.msra.mxu0 0
        %3866 = vmatprep.subr.bf16.mxu0 0
        %3867 = vmatpush1.bf16.msra.mxu0 0
        %3868 = vmatprep.subr.bf16.mxu0 0
        %3869 = vmatpush1.bf16.msra.mxu0 0
        %3870 = vmatprep.subr.bf16.mxu0 0
        %3871 = vmatpush1.bf16.msra.mxu0 0
        %3872 = vmatprep.subr.bf16.mxu0 0
        %3873 = vmatpush1.bf16.msra.mxu0 0
        %3874 = vmatprep.subr.bf16.mxu0 0
        %3875 = vmatpush1.bf16.msra.mxu0 0
        %3876 = vmatprep.subr.bf16.mxu0 0
        %3877 = vmatpush1.bf16.msra.mxu0 0
        %3878 = vmatprep.subr.bf16.mxu0 0
        %3879 = vmatpush1.bf16.msra.mxu0 %v3856
        %3880 = vmatprep.subr.bf16.mxu0 0
        %3881 = vmatpush2.bf16.msra.mxu0 0
        %3882 = vmatprep.subr.bf16.mxu0 0
        %3883 = vmatpush2.bf16.msra.mxu0 0
        %3884 = vmatprep.subr.bf16.mxu0 0
        %3885 = vmatpush2.bf16.msra.mxu0 0
        %3886 = vmatprep.subr.bf16.mxu0 0
        %3887 = vmatpush2.bf16.msra.mxu0 0
        %3888 = vmatprep.subr.bf16.mxu0 0
        %3889 = vmatpush2.bf16.msra.mxu0 0
        %3890 = vmatprep.subr.bf16.mxu0 0
        %3891 = vmatpush2.bf16.msra.mxu0 0
        %3892 = vmatprep.subr.bf16.mxu0 0
        %3893 = vmatpush2.bf16.msra.mxu0 0
        %3894 = vmatprep.subr.bf16.mxu0 0
        %3895 = vmatpush2.bf16.msra.mxu0 0
        %3896 = vmatprep.mubr.bf16.mxu0 0
        %3897 = vmatmul.mubr.bf16.gmra.mxu0 %v3859
        %v3898 = vpop.f32.mrf.mxu0
        %v3899 = vadd.f32 0.0, %v3898
        %v3900 = vpop.f32.mrf.mxu0
        %v3901 = vpop.f32.mrf.mxu0
        %v3902 = vadd.f32 0.0, %v3901
        %v3903 = vpop.f32.mrf.mxu0
        %3904 = vmatprep.mubr.bf16.mxu0 0
        %3905 = vmatmul.mubr.bf16.gmra.mxu0 %v3862
        %v3906 = vpop.f32.mrf.mxu0
        %v3907 = vadd.f32 0.0, %v3906
        %v3908 = vpop.f32.mrf.mxu0
        %v3909 = vpop.f32.mrf.mxu0
        %v3910 = vadd.f32 0.0, %v3909
        %v3911 = vpop.f32.mrf.mxu0
        %3912 = vdwg.mxu0
        %v3913 = vmul.f32 %v3899, %v1039
        %v3914 = vmul.f32 %v3902, %v1040
        %v3915 = vmul.f32 %v3907, %v1041
        %v3916 = vmul.f32 %v3910, %v1042
        %v3917 = vpack.c.bf16 %v3615, %v3614
        %v3918 = vpack.c.bf16 %v3914, %v3913
        %v3919 = vpack.c.bf16 %v3916, %v3915
        %v3921 = vsel %vm1070, %v3917, 0
        %3923 = vmatprep.subr.bf16.mxu0 0
        %3924 = vmatpush1.bf16.msra.mxu0 0
        %3925 = vmatprep.subr.bf16.mxu0 0
        %3926 = vmatpush1.bf16.msra.mxu0 0
        %3927 = vmatprep.subr.bf16.mxu0 0
        %3928 = vmatpush1.bf16.msra.mxu0 0
        %3929 = vmatprep.subr.bf16.mxu0 0
        %3930 = vmatpush1.bf16.msra.mxu0 0
        %3931 = vmatprep.subr.bf16.mxu0 0
        %3932 = vmatpush1.bf16.msra.mxu0 0
        %3933 = vmatprep.subr.bf16.mxu0 0
        %3934 = vmatpush1.bf16.msra.mxu0 0
        %3935 = vmatprep.subr.bf16.mxu0 0
        %3936 = vmatpush1.bf16.msra.mxu0 %v3919
        %3937 = vmatprep.subr.bf16.mxu0 0
        %3938 = vmatpush1.bf16.msra.mxu0 %v3918
        %3939 = vmatprep.subr.bf16.mxu0 0
        %3940 = vmatpush2.bf16.msra.mxu0 0
        %3941 = vmatprep.subr.bf16.mxu0 0
        %3942 = vmatpush2.bf16.msra.mxu0 0
        %3943 = vmatprep.subr.bf16.mxu0 0
        %3944 = vmatpush2.bf16.msra.mxu0 0
        %3945 = vmatprep.subr.bf16.mxu0 0
        %3946 = vmatpush2.bf16.msra.mxu0 0
        %3947 = vmatprep.subr.bf16.mxu0 0
        %3948 = vmatpush2.bf16.msra.mxu0 0
        %3949 = vmatprep.subr.bf16.mxu0 0
        %3950 = vmatpush2.bf16.msra.mxu0 0
        %3951 = vmatprep.subr.bf16.mxu0 0
        %3952 = vmatpush2.bf16.msra.mxu0 0
        %3953 = vmatprep.subr.bf16.mxu0 0
        %3954 = vmatpush2.bf16.msra.mxu0 0
        %3955 = vmatprep.mubr.bf16.mxu0 0
        %3956 = vmatmul.mubr.bf16.gmra.mxu0 %v3921
        %v3957 = vpop.f32.mrf.mxu0
        %v3958 = vadd.f32 0.0, %v3957
        %v3959 = vpop.f32.mrf.mxu0
        %v3960 = vpop.f32.mrf.mxu0
        %v3961 = vadd.f32 0.0, %v3960
        %v3962 = vpop.f32.mrf.mxu0
        %3963 = vdwg.mxu0
        %v3964 = vmul.f32 %v3958, 0.0625
        %v3965 = vmul.f32 %v3961, 0.0625
        %s3966 = scalar_lea.vmem %s13, 64
        %v3967 = vld [vmem:[%s3966] sm:$0xff]
        %v3968 = vld [vmem:[%s3966 + $0x8] sm:$0xff]
        %v3969 = vld [vmem:[%s3966 + $0x10] sm:$0xff]
        %v3970 = vld [vmem:[%s3966 + $0x18] sm:$0xff]
        %v3971 = vpack.c.bf16 %v3965, %v3964
        %v3972 = vpack.c.bf16 %v3968, %v3967
        %v3973 = vpack.c.bf16 %v3970, %v3969
        %s3974 = scalar_lea.vmem %s14, 2
        %v3975 = vld [vmem:[%s3974] sm:$0x1]
        %v3977 = vlaneseq
        %v3978 = vshrl.u32 %v3977, 7
        %v3979 = vsub.s32 0, %v3978
        %v3980 = vrot.slane %v3975, %v3979
        %v3983 = vsel %vm1070, %v3971, 0
        %3985 = vmatprep.subr.bf16.mxu0 0
        %3986 = vmatpush1.bf16.msra.mxu0 0
        %3987 = vmatprep.subr.bf16.mxu0 0
        %3988 = vmatpush1.bf16.msra.mxu0 0
        %3989 = vmatprep.subr.bf16.mxu0 0
        %3990 = vmatpush1.bf16.msra.mxu0 0
        %3991 = vmatprep.subr.bf16.mxu0 0
        %3992 = vmatpush1.bf16.msra.mxu0 0
        %3993 = vmatprep.subr.bf16.mxu0 0
        %3994 = vmatpush1.bf16.msra.mxu0 0
        %3995 = vmatprep.subr.bf16.mxu0 0
        %3996 = vmatpush1.bf16.msra.mxu0 0
        %3997 = vmatprep.subr.bf16.mxu0 0
        %3998 = vmatpush1.bf16.msra.mxu0 %v3973
        %3999 = vmatprep.subr.bf16.mxu0 0
        %4000 = vmatpush1.bf16.msra.mxu0 %v3972
        %4001 = vmatprep.subr.bf16.mxu0 0
        %4002 = vmatpush2.bf16.msra.mxu0 0
        %4003 = vmatprep.subr.bf16.mxu0 0
        %4004 = vmatpush2.bf16.msra.mxu0 0
        %4005 = vmatprep.subr.bf16.mxu0 0
        %4006 = vmatpush2.bf16.msra.mxu0 0
        %4007 = vmatprep.subr.bf16.mxu0 0
        %4008 = vmatpush2.bf16.msra.mxu0 0
        %4009 = vmatprep.subr.bf16.mxu0 0
        %4010 = vmatpush2.bf16.msra.mxu0 0
        %4011 = vmatprep.subr.bf16.mxu0 0
        %4012 = vmatpush2.bf16.msra.mxu0 0
        %4013 = vmatprep.subr.bf16.mxu0 0
        %4014 = vmatpush2.bf16.msra.mxu0 0
        %4015 = vmatprep.subr.bf16.mxu0 0
        %4016 = vmatpush2.bf16.msra.mxu0 0
        %4017 = vmatprep.mubr.bf16.mxu0 0
        %4018 = vmatmul.mubr.bf16.gmra.mxu0 %v3983
        %v4019 = vpop.f32.mrf.mxu0
        %v4020 = vadd.f32 %v3980, %v4019
        %v4021 = vpop.f32.mrf.mxu0
        %v4022 = vpop.f32.mrf.mxu0
        %v4023 = vadd.f32 %v3980, %v4022
        %v4024 = vpop.f32.mrf.mxu0
        %4025 = vdwg.mxu0
        %v4026 = vadd.f32 %v3364, %v4020
        %v4027 = vadd.f32 %v3365, %v4023
        %s4028 = scalar_lea.vmem [#allocation6], 2
        %v4029 = vld [vmem:[%s4028] sm:$0x1]
        %s4030 = scalar_lea.vmem [#allocation8], 2
        %v4031 = vld [vmem:[%s4030] sm:$0x1]
        %v4032 = vsel %vm1070, %v4026, 0.0
        %4033 = vadd.xlane.f32.xlu0 %v4032
        %v4034 = vpop.xlane.xlu0 %4033
        %v4035 = vsel %vm1070, %v4027, 0.0
        %4036 = vadd.xlane.f32.xlu0 %v4035
        %v4037 = vpop.xlane.xlu0 %4036
        %v4038 = vmul.f32 %v4034, %v1901
        %v4039 = vmul.f32 %v4037, %v1901
        %v4040 = vsub.f32 %v4026, %v4038
        %v4041 = vsub.f32 %v4027, %v4039
        %v4042 = vmul.f32 %v4040, %v4040
        %v4043 = vmul.f32 %v4041, %v4041
        %v4044 = vsel %vm1070, %v4042, 0.0
        %4045 = vadd.xlane.f32.xlu0 %v4044
        %v4046 = vpop.xlane.xlu0 %4045
        %v4047 = vsel %vm1070, %v4043, 0.0
        %4048 = vadd.xlane.f32.xlu0 %v4047
        %v4049 = vpop.xlane.xlu0 %4048
        %v4050 = vmul.f32 %v4046, %v1901
        %v4051 = vmul.f32 %v4049, %v1901
        %v4052 = vadd.f32 %v4050, 1e-05
        %v4053 = vadd.f32 %v4051, 1e-05
        %v4054 = vrsqrt.pop %v4052
        %v4055 = vrsqrt.pop %v4053
        %v4056 = vmul.f32 %v4040, %v4054
        %v4057 = vmul.f32 %v4041, %v4055
        %v4059 = vlaneseq
        %v4060 = vshrl.u32 %v4059, 7
        %v4061 = vsub.s32 0, %v4060
        %v4062 = vrot.slane %v4029, %v4061
        %v4064 = vmul.f32 %v4056, %v4062
        %v4065 = vmul.f32 %v4057, %v4062
        %v4067 = vlaneseq
        %v4068 = vshrl.u32 %v4067, 7
        %v4069 = vsub.s32 0, %v4068
        %v4070 = vrot.slane %v4031, %v4069
        %v4072 = vadd.f32 %v4064, %v4070
        %v4073 = vadd.f32 %v4065, %v4070
        %s4074 = scalar_lea.vmem [#allocation9], 64
        %v4075 = vld [vmem:[%s4074] sm:$0xff]
        %v4076 = vld [vmem:[%s4074 + $0x8] sm:$0xff]
        %v4077 = vld [vmem:[%s4074 + $0x10] sm:$0xff]
        %v4078 = vld [vmem:[%s4074 + $0x18] sm:$0xff]
        %v4079 = vpack.c.bf16 %v4073, %v4072
        %v4080 = vpack.c.bf16 %v4076, %v4075
        %v4081 = vpack.c.bf16 %v4078, %v4077
        %s4082 = scalar_lea.vmem [#allocation11], 2
        %v4083 = vld [vmem:[%s4082] sm:$0x1]
        %v4085 = vlaneseq
        %v4086 = vshrl.u32 %v4085, 7
        %v4087 = vsub.s32 0, %v4086
        %v4088 = vrot.slane %v4083, %v4087
        %v4091 = vsel %vm1070, %v4079, 0
        %4093 = vmatprep.subr.bf16.mxu0 0
        %4094 = vmatpush1.bf16.msra.mxu0 0
        %4095 = vmatprep.subr.bf16.mxu0 0
        %4096 = vmatpush1.bf16.msra.mxu0 0
        %4097 = vmatprep.subr.bf16.mxu0 0
        %4098 = vmatpush1.bf16.msra.mxu0 0
        %4099 = vmatprep.subr.bf16.mxu0 0
        %4100 = vmatpush1.bf16.msra.mxu0 0
        %4101 = vmatprep.subr.bf16.mxu0 0
        %4102 = vmatpush1.bf16.msra.mxu0 0
        %4103 = vmatprep.subr.bf16.mxu0 0
        %4104 = vmatpush1.bf16.msra.mxu0 0
        %4105 = vmatprep.subr.bf16.mxu0 0
        %4106 = vmatpush1.bf16.msra.mxu0 %v4081
        %4107 = vmatprep.subr.bf16.mxu0 0
        %4108 = vmatpush1.bf16.msra.mxu0 %v4080
        %4109 = vmatprep.subr.bf16.mxu0 0
        %4110 = vmatpush2.bf16.msra.mxu0 0
        %4111 = vmatprep.subr.bf16.mxu0 0
        %4112 = vmatpush2.bf16.msra.mxu0 0
        %4113 = vmatprep.subr.bf16.mxu0 0
        %4114 = vmatpush2.bf16.msra.mxu0 0
        %4115 = vmatprep.subr.bf16.mxu0 0
        %4116 = vmatpush2.bf16.msra.mxu0 0
        %4117 = vmatprep.subr.bf16.mxu0 0
        %4118 = vmatpush2.bf16.msra.mxu0 0
        %4119 = vmatprep.subr.bf16.mxu0 0
        %4120 = vmatpush2.bf16.msra.mxu0 0
        %4121 = vmatprep.subr.bf16.mxu0 0
        %4122 = vmatpush2.bf16.msra.mxu0 0
        %4123 = vmatprep.subr.bf16.mxu0 0
        %4124 = vmatpush2.bf16.msra.mxu0 0
        %4125 = vmatprep.mubr.bf16.mxu0 0
        %4126 = vmatmul.mubr.bf16.gmra.mxu0 %v4091
        %v4127 = vpop.f32.mrf.mxu0
        %v4128 = vadd.f32 %v4088, %v4127
        %v4129 = vpop.f32.mrf.mxu0
        %v4130 = vpop.f32.mrf.mxu0
        %v4131 = vadd.f32 %v4088, %v4130
        %v4132 = vpop.f32.mrf.mxu0
        %4133 = vdwg.mxu0
        %v4134 = vmax.f32 %v4128, 0.0
        %v4135 = vmax.f32 %v4131, 0.0
        %s4136 = scalar_lea.vmem [#allocation12], 64
        %v4137 = vld [vmem:[%s4136] sm:$0xff]
        %v4138 = vld [vmem:[%s4136 + $0x8] sm:$0xff]
        %v4139 = vld [vmem:[%s4136 + $0x10] sm:$0xff]
        %v4140 = vld [vmem:[%s4136 + $0x18] sm:$0xff]
        %v4141 = vpack.c.bf16 %v4135, %v4134
        %v4142 = vpack.c.bf16 %v4138, %v4137
        %v4143 = vpack.c.bf16 %v4140, %v4139
        %s4144 = scalar_lea.vmem [#allocation14], 2
        %v4145 = vld [vmem:[%s4144] sm:$0x1]
        %v4147 = vlaneseq
        %v4148 = vshrl.u32 %v4147, 7
        %v4149 = vsub.s32 0, %v4148
        %v4150 = vrot.slane %v4145, %v4149
        %v4153 = vsel %vm1070, %v4141, 0
        %4155 = vmatprep.subr.bf16.mxu0 0
        %4156 = vmatpush1.bf16.msra.mxu0 0
        %4157 = vmatprep.subr.bf16.mxu0 0
        %4158 = vmatpush1.bf16.msra.mxu0 0
        %4159 = vmatprep.subr.bf16.mxu0 0
        %4160 = vmatpush1.bf16.msra.mxu0 0
        %4161 = vmatprep.subr.bf16.mxu0 0
        %4162 = vmatpush1.bf16.msra.mxu0 0
        %4163 = vmatprep.subr.bf16.mxu0 0
        %4164 = vmatpush1.bf16.msra.mxu0 0
        %4165 = vmatprep.subr.bf16.mxu0 0
        %4166 = vmatpush1.bf16.msra.mxu0 0
        %4167 = vmatprep.subr.bf16.mxu0 0
        %4168 = vmatpush1.bf16.msra.mxu0 %v4143
        %4169 = vmatprep.subr.bf16.mxu0 0
        %4170 = vmatpush1.bf16.msra.mxu0 %v4142
        %4171 = vmatprep.subr.bf16.mxu0 0
        %4172 = vmatpush2.bf16.msra.mxu0 0
        %4173 = vmatprep.subr.bf16.mxu0 0
        %4174 = vmatpush2.bf16.msra.mxu0 0
        %4175 = vmatprep.subr.bf16.mxu0 0
        %4176 = vmatpush2.bf16.msra.mxu0 0
        %4177 = vmatprep.subr.bf16.mxu0 0
        %4178 = vmatpush2.bf16.msra.mxu0 0
        %4179 = vmatprep.subr.bf16.mxu0 0
        %4180 = vmatpush2.bf16.msra.mxu0 0
        %4181 = vmatprep.subr.bf16.mxu0 0
        %4182 = vmatpush2.bf16.msra.mxu0 0
        %4183 = vmatprep.subr.bf16.mxu0 0
        %4184 = vmatpush2.bf16.msra.mxu0 0
        %4185 = vmatprep.subr.bf16.mxu0 0
        %4186 = vmatpush2.bf16.msra.mxu0 0
        %4187 = vmatprep.mubr.bf16.mxu0 0
        %4188 = vmatmul.mubr.bf16.gmra.mxu0 %v4153
        %v4189 = vpop.f32.mrf.mxu0
        %v4190 = vadd.f32 %v4150, %v4189
        %v4191 = vpop.f32.mrf.mxu0
        %v4192 = vpop.f32.mrf.mxu0
        %v4193 = vadd.f32 %v4150, %v4192
        %v4194 = vpop.f32.mrf.mxu0
        %4195 = vdwg.mxu0
        %v4196 = vadd.f32 %v4072, %v4190
        %v4197 = vadd.f32 %v4073, %v4193
        %s4198 = scalar_lea.vmem [#allocation15], 2
        %v4199 = vld [vmem:[%s4198] sm:$0x1]
        %s4200 = scalar_lea.vmem [#allocation17], 2
        %v4201 = vld [vmem:[%s4200] sm:$0x1]
        %v4202 = vsel %vm1070, %v4196, 0.0
        %4203 = vadd.xlane.f32.xlu0 %v4202
        %v4204 = vpop.xlane.xlu0 %4203
        %v4205 = vsel %vm1070, %v4197, 0.0
        %4206 = vadd.xlane.f32.xlu0 %v4205
        %v4207 = vpop.xlane.xlu0 %4206
        %v4208 = vmul.f32 %v4204, %v1901
        %v4209 = vmul.f32 %v4207, %v1901
        %v4210 = vsub.f32 %v4196, %v4208
        %v4211 = vsub.f32 %v4197, %v4209
        %v4212 = vmul.f32 %v4210, %v4210
        %v4213 = vmul.f32 %v4211, %v4211
        %v4214 = vsel %vm1070, %v4212, 0.0
        %4215 = vadd.xlane.f32.xlu0 %v4214
        %v4216 = vpop.xlane.xlu0 %4215
        %v4217 = vsel %vm1070, %v4213, 0.0
        %4218 = vadd.xlane.f32.xlu0 %v4217
        %v4219 = vpop.xlane.xlu0 %4218
        %v4220 = vmul.f32 %v4216, %v1901
        %v4221 = vmul.f32 %v4219, %v1901
        %v4222 = vadd.f32 %v4220, 1e-05
        %v4223 = vadd.f32 %v4221, 1e-05
        %v4224 = vrsqrt.pop %v4222
        %v4225 = vrsqrt.pop %v4223
        %v4226 = vmul.f32 %v4210, %v4224
        %v4227 = vmul.f32 %v4211, %v4225
        %v4229 = vlaneseq
        %v4230 = vshrl.u32 %v4229, 7
        %v4231 = vsub.s32 0, %v4230
        %v4232 = vrot.slane %v4199, %v4231
        %v4234 = vmul.f32 %v4226, %v4232
        %v4235 = vmul.f32 %v4227, %v4232
        %v4237 = vlaneseq
        %v4238 = vshrl.u32 %v4237, 7
        %v4239 = vsub.s32 0, %v4238
        %v4240 = vrot.slane %v4201, %v4239
        %v4242 = vadd.f32 %v4234, %v4240
        %v4243 = vadd.f32 %v4235, %v4240
        %s4244 = scalar_lea.vmem [#allocation3], 288
        %v4245 = vld [vmem:[%s4244] sm:$0xff]
        %v4246 = vld [vmem:[%s4244 + $0x8] sm:$0xff]
        %v4247 = vld [vmem:[%s4244 + $0x10] sm:$0xff]
        %v4248 = vld [vmem:[%s4244 + $0x18] sm:$0xff]
        %v4249 = vld [vmem:[%s4244 + $0x20] sm:$0xff]
        %v4250 = vld [vmem:[%s4244 + $0x28] sm:$0xff]
        %v4251 = vld [vmem:[%s4244 + $0x30] sm:$0xff]
        %v4252 = vld [vmem:[%s4244 + $0x38] sm:$0xff]
        %v4253 = vld [vmem:[%s4244 + $0x40] sm:$0xff]
        %v4254 = vld [vmem:[%s4244 + $0x48] sm:$0xff]
        %v4255 = vld [vmem:[%s4244 + $0x50] sm:$0xff]
        %v4256 = vld [vmem:[%s4244 + $0x58] sm:$0xff]
        %v4259 = vrot.slane %v4242, 7
        %v4260 = vrot.slane %v4243, 7
        %v4261 = vsel %vm1057, %v4259, %v4260
        %v4265 = vsel %vm1057, 0.0, %v4259
        %v4266 = vsel %vm1057, %v4260, 0.0
        %s4267 = scalar_lea.vmem %s6, 3
        %v4268 = vld [vmem:[%s4267] sm:$0x1]
        %v4269 = vpack.c.bf16 %v4261, %v4265
        %v4270 = vpack.c.bf16 %v4246, %v4245
        %v4271 = vpack.c.bf16 %v4248, %v4247
        %v4273 = vsel %vm1070, %v4269, 0
        %4275 = vmatprep.subr.bf16.mxu0 0
        %4276 = vmatpush1.bf16.msra.mxu0 0
        %4277 = vmatprep.subr.bf16.mxu0 0
        %4278 = vmatpush1.bf16.msra.mxu0 0
        %4279 = vmatprep.subr.bf16.mxu0 0
        %4280 = vmatpush1.bf16.msra.mxu0 0
        %4281 = vmatprep.subr.bf16.mxu0 0
        %4282 = vmatpush1.bf16.msra.mxu0 0
        %4283 = vmatprep.subr.bf16.mxu0 0
        %4284 = vmatpush1.bf16.msra.mxu0 0
        %4285 = vmatprep.subr.bf16.mxu0 0
        %4286 = vmatpush1.bf16.msra.mxu0 0
        %4287 = vmatprep.subr.bf16.mxu0 0
        %4288 = vmatpush1.bf16.msra.mxu0 %v4271
        %4289 = vmatprep.subr.bf16.mxu0 0
        %4290 = vmatpush1.bf16.msra.mxu0 %v4270
        %4291 = vmatprep.subr.bf16.mxu0 0
        %4292 = vmatpush2.bf16.msra.mxu0 0
        %4293 = vmatprep.subr.bf16.mxu0 0
        %4294 = vmatpush2.bf16.msra.mxu0 0
        %4295 = vmatprep.subr.bf16.mxu0 0
        %4296 = vmatpush2.bf16.msra.mxu0 0
        %4297 = vmatprep.subr.bf16.mxu0 0
        %4298 = vmatpush2.bf16.msra.mxu0 0
        %4299 = vmatprep.subr.bf16.mxu0 0
        %4300 = vmatpush2.bf16.msra.mxu0 0
        %4301 = vmatprep.subr.bf16.mxu0 0
        %4302 = vmatpush2.bf16.msra.mxu0 0
        %4303 = vmatprep.subr.bf16.mxu0 0
        %4304 = vmatpush2.bf16.msra.mxu0 0
        %4305 = vmatprep.subr.bf16.mxu0 0
        %4306 = vmatpush2.bf16.msra.mxu0 0
        %4307 = vmatprep.mubr.bf16.mxu0 0
        %4308 = vmatmul.mubr.bf16.gmra.mxu0 %v4273
        %v4309 = vpop.f32.mrf.mxu0
        %v4310 = vadd.f32 0.0, %v4309
        %v4311 = vpop.f32.mrf.mxu0
        %v4312 = vpop.f32.mrf.mxu0
        %v4313 = vadd.f32 0.0, %v4312
        %v4314 = vpop.f32.mrf.mxu0
        %4315 = vdwg.mxu0
        %v4317 = vlaneseq
        %v4318 = vshrl.u32 %v4317, 7
        %v4319 = vsub.s32 0, %v4318
        %v4320 = vrot.slane %v4268, %v4319
        %v4322 = vadd.f32 %v4320, %v4310
        %v4323 = vadd.f32 %v4320, %v4313
        %v4324 = vpack.c.bf16 %v4266, %v4266
        %v4325 = vpack.c.bf16 %v4250, %v4249
        %v4326 = vpack.c.bf16 %v4252, %v4251
        %v4327 = vshrl.u32 %v4269, 16
        %v4329 = vshll.u32 %v4269, 16
        %v4331 = vrot.slane %v4329, 1
        %v4332 = vor.u32 %v4327, %v4331
        %v4334 = vshll.u32 %v4324, 16
        %v4336 = vrot.slane %v4334, 1
        %v4337 = vsel %vm1126, %v4332, %v4336
        %v4339 = vsel %vm1070, %v4337, 0
        %4341 = vmatprep.subr.bf16.mxu0 0
        %4342 = vmatpush1.bf16.msra.mxu0 0
        %4343 = vmatprep.subr.bf16.mxu0 0
        %4344 = vmatpush1.bf16.msra.mxu0 0
        %4345 = vmatprep.subr.bf16.mxu0 0
        %4346 = vmatpush1.bf16.msra.mxu0 0
        %4347 = vmatprep.subr.bf16.mxu0 0
        %4348 = vmatpush1.bf16.msra.mxu0 0
        %4349 = vmatprep.subr.bf16.mxu0 0
        %4350 = vmatpush1.bf16.msra.mxu0 0
        %4351 = vmatprep.subr.bf16.mxu0 0
        %4352 = vmatpush1.bf16.msra.mxu0 0
        %4353 = vmatprep.subr.bf16.mxu0 0
        %4354 = vmatpush1.bf16.msra.mxu0 %v4326
        %4355 = vmatprep.subr.bf16.mxu0 0
        %4356 = vmatpush1.bf16.msra.mxu0 %v4325
        %4357 = vmatprep.subr.bf16.mxu0 0
        %4358 = vmatpush2.bf16.msra.mxu0 0
        %4359 = vmatprep.subr.bf16.mxu0 0
        %4360 = vmatpush2.bf16.msra.mxu0 0
        %4361 = vmatprep.subr.bf16.mxu0 0
        %4362 = vmatpush2.bf16.msra.mxu0 0
        %4363 = vmatprep.subr.bf16.mxu0 0
        %4364 = vmatpush2.bf16.msra.mxu0 0
        %4365 = vmatprep.subr.bf16.mxu0 0
        %4366 = vmatpush2.bf16.msra.mxu0 0
        %4367 = vmatprep.subr.bf16.mxu0 0
        %4368 = vmatpush2.bf16.msra.mxu0 0
        %4369 = vmatprep.subr.bf16.mxu0 0
        %4370 = vmatpush2.bf16.msra.mxu0 0
        %4371 = vmatprep.subr.bf16.mxu0 0
        %4372 = vmatpush2.bf16.msra.mxu0 0
        %4373 = vmatprep.mubr.bf16.mxu0 0
        %4374 = vmatmul.mubr.bf16.gmra.mxu0 %v4339
        %v4375 = vpop.f32.mrf.mxu0
        %v4376 = vadd.f32 0.0, %v4375
        %v4377 = vpop.f32.mrf.mxu0
        %v4378 = vpop.f32.mrf.mxu0
        %v4379 = vadd.f32 0.0, %v4378
        %v4380 = vpop.f32.mrf.mxu0
        %4381 = vdwg.mxu0
        %v4382 = vadd.f32 %v4322, %v4376
        %v4383 = vadd.f32 %v4323, %v4379
        %v4384 = vpack.c.bf16 %v4254, %v4253
        %v4385 = vpack.c.bf16 %v4256, %v4255
        %v4388 = vrot.slane %v4269, 1
        %v4389 = vrot.slane %v4324, 1
        %v4390 = vsel %vm1188, %v4388, %v4389
        %v4392 = vsel %vm1070, %v4390, 0
        %4394 = vmatprep.subr.bf16.mxu0 0
        %4395 = vmatpush1.bf16.msra.mxu0 0
        %4396 = vmatprep.subr.bf16.mxu0 0
        %4397 = vmatpush1.bf16.msra.mxu0 0
        %4398 = vmatprep.subr.bf16.mxu0 0
        %4399 = vmatpush1.bf16.msra.mxu0 0
        %4400 = vmatprep.subr.bf16.mxu0 0
        %4401 = vmatpush1.bf16.msra.mxu0 0
        %4402 = vmatprep.subr.bf16.mxu0 0
        %4403 = vmatpush1.bf16.msra.mxu0 0
        %4404 = vmatprep.subr.bf16.mxu0 0
        %4405 = vmatpush1.bf16.msra.mxu0 0
        %4406 = vmatprep.subr.bf16.mxu0 0
        %4407 = vmatpush1.bf16.msra.mxu0 %v4385
        %4408 = vmatprep.subr.bf16.mxu0 0
        %4409 = vmatpush1.bf16.msra.mxu0 %v4384
        %4410 = vmatprep.subr.bf16.mxu0 0
        %4411 = vmatpush2.bf16.msra.mxu0 0
        %4412 = vmatprep.subr.bf16.mxu0 0
        %4413 = vmatpush2.bf16.msra.mxu0 0
        %4414 = vmatprep.subr.bf16.mxu0 0
        %4415 = vmatpush2.bf16.msra.mxu0 0
        %4416 = vmatprep.subr.bf16.mxu0 0
        %4417 = vmatpush2.bf16.msra.mxu0 0
        %4418 = vmatprep.subr.bf16.mxu0 0
        %4419 = vmatpush2.bf16.msra.mxu0 0
        %4420 = vmatprep.subr.bf16.mxu0 0
        %4421 = vmatpush2.bf16.msra.mxu0 0
        %4422 = vmatprep.subr.bf16.mxu0 0
        %4423 = vmatpush2.bf16.msra.mxu0 0
        %4424 = vmatprep.subr.bf16.mxu0 0
        %4425 = vmatpush2.bf16.msra.mxu0 0
        %4426 = vmatprep.mubr.bf16.mxu0 0
        %4427 = vmatmul.mubr.bf16.gmra.mxu0 %v4392
        %v4428 = vpop.f32.mrf.mxu0
        %v4429 = vadd.f32 0.0, %v4428
        %v4430 = vpop.f32.mrf.mxu0
        %v4431 = vpop.f32.mrf.mxu0
        %v4432 = vadd.f32 0.0, %v4431
        %v4433 = vpop.f32.mrf.mxu0
        %4434 = vdwg.mxu0
        %v4435 = vadd.f32 %v4382, %v4429
        %v4436 = vadd.f32 %v4383, %v4432
        %s4437 = scalar_lea.vmem %s7, 96
        %v4438 = vld [vmem:[%s4437] sm:$0xff]
        %v4439 = vld [vmem:[%s4437 + $0x8] sm:$0xff]
        %v4440 = vld [vmem:[%s4437 + $0x10] sm:$0xff]
        %v4441 = vld [vmem:[%s4437 + $0x18] sm:$0xff]
        %v4442 = vpack.c.bf16 %v4243, %v4242
        %v4443 = vpack.c.bf16 %v4439, %v4438
        %v4444 = vpack.c.bf16 %v4441, %v4440
        %s4445 = scalar_lea.vmem %s8, 3
        %v4446 = vld [vmem:[%s4445] sm:$0x1]
        %v4448 = vlaneseq
        %v4449 = vshrl.u32 %v4448, 7
        %v4450 = vsub.s32 0, %v4449
        %v4451 = vrot.slane %v4446, %v4450
        %v4454 = vsel %vm1070, %v4442, 0
        %4456 = vmatprep.subr.bf16.mxu0 0
        %4457 = vmatpush1.bf16.msra.mxu0 0
        %4458 = vmatprep.subr.bf16.mxu0 0
        %4459 = vmatpush1.bf16.msra.mxu0 0
        %4460 = vmatprep.subr.bf16.mxu0 0
        %4461 = vmatpush1.bf16.msra.mxu0 0
        %4462 = vmatprep.subr.bf16.mxu0 0
        %4463 = vmatpush1.bf16.msra.mxu0 0
        %4464 = vmatprep.subr.bf16.mxu0 0
        %4465 = vmatpush1.bf16.msra.mxu0 0
        %4466 = vmatprep.subr.bf16.mxu0 0
        %4467 = vmatpush1.bf16.msra.mxu0 0
        %4468 = vmatprep.subr.bf16.mxu0 0
        %4469 = vmatpush1.bf16.msra.mxu0 %v4444
        %4470 = vmatprep.subr.bf16.mxu0 0
        %4471 = vmatpush1.bf16.msra.mxu0 %v4443
        %4472 = vmatprep.subr.bf16.mxu0 0
        %4473 = vmatpush2.bf16.msra.mxu0 0
        %4474 = vmatprep.subr.bf16.mxu0 0
        %4475 = vmatpush2.bf16.msra.mxu0 0
        %4476 = vmatprep.subr.bf16.mxu0 0
        %4477 = vmatpush2.bf16.msra.mxu0 0
        %4478 = vmatprep.subr.bf16.mxu0 0
        %4479 = vmatpush2.bf16.msra.mxu0 0
        %4480 = vmatprep.subr.bf16.mxu0 0
        %4481 = vmatpush2.bf16.msra.mxu0 0
        %4482 = vmatprep.subr.bf16.mxu0 0
        %4483 = vmatpush2.bf16.msra.mxu0 0
        %4484 = vmatprep.subr.bf16.mxu0 0
        %4485 = vmatpush2.bf16.msra.mxu0 0
        %4486 = vmatprep.subr.bf16.mxu0 0
        %4487 = vmatpush2.bf16.msra.mxu0 0
        %4488 = vmatprep.mubr.bf16.mxu0 0
        %4489 = vmatmul.mubr.bf16.gmra.mxu0 %v4454
        %v4490 = vpop.f32.mrf.mxu0
        %v4491 = vadd.f32 %v4451, %v4490
        %v4492 = vpop.f32.mrf.mxu0
        %v4493 = vpop.f32.mrf.mxu0
        %v4494 = vadd.f32 %v4451, %v4493
        %v4495 = vpop.f32.mrf.mxu0
        %4496 = vdwg.mxu0
        %s4497 = scalar_lea.vmem %s9, 3
        %v4498 = vld [vmem:[%s4497] sm:$0x1]
        %s4499 = scalar_lea.vmem %s10, 3
        %v4500 = vld [vmem:[%s4499] sm:$0x1]
        %v4502 = vsel %vm1070, %v4491, 0
        %v4505 = vsel %vm1070, %v4494, 0
        %4507 = vmatprep.subr.mxu0 0.0
        %4508 = vmatpush1.msra.mxu0 0.0
        %4509 = vmatprep.subr.mxu0 0.0
        %4510 = vmatpush1.msra.mxu0 0.0
        %4511 = vmatprep.subr.mxu0 0.0
        %4512 = vmatpush1.msra.mxu0 0.0
        %4513 = vmatprep.subr.mxu0 0.0
        %4514 = vmatpush1.msra.mxu0 0.0
        %4515 = vmatprep.subr.mxu0 0.0
        %4516 = vmatpush1.msra.mxu0 0.0
        %4517 = vmatprep.subr.mxu0 0.0
        %4518 = vmatpush1.msra.mxu0 0.0
        %4519 = vmatprep.subr.mxu0 0.0
        %4520 = vmatpush1.msra.mxu0 0.0
        %4521 = vmatprep.subr.mxu0 0.0
        %4522 = vmatpush1.msra.mxu0 0.0
        %4523 = vmatprep.subr.mxu0 0.0
        %4524 = vmatpush1.msra.mxu0 0.0
        %4525 = vmatprep.subr.mxu0 0.0
        %4526 = vmatpush1.msra.mxu0 0.0
        %4527 = vmatprep.subr.mxu0 0.0
        %4528 = vmatpush1.msra.mxu0 0.0
        %4529 = vmatprep.subr.mxu0 0.0
        %4530 = vmatpush1.msra.mxu0 0.0
        %4531 = vmatprep.subr.mxu0 0.0
        %4532 = vmatpush1.msra.mxu0 %v1038
        %4533 = vmatprep.subr.mxu0 0.0
        %4534 = vmatpush1.msra.mxu0 %v1037
        %4535 = vmatprep.subr.mxu0 0.0
        %4536 = vmatpush1.msra.mxu0 %v1036
        %4537 = vmatprep.subr.mxu0 0.0
        %4538 = vmatpush1.msra.mxu0 %v1035
        %4539 = vmatprep.subr.mxu0 0.0
        %4540 = vmatpush2.msra.mxu0 0.0
        %4541 = vmatprep.subr.mxu0 0.0
        %4542 = vmatpush2.msra.mxu0 0.0
        %4543 = vmatprep.subr.mxu0 0.0
        %4544 = vmatpush2.msra.mxu0 0.0
        %4545 = vmatprep.subr.mxu0 0.0
        %4546 = vmatpush2.msra.mxu0 0.0
        %4547 = vmatprep.subr.mxu0 0.0
        %4548 = vmatpush2.msra.mxu0 0.0
        %4549 = vmatprep.subr.mxu0 0.0
        %4550 = vmatpush2.msra.mxu0 0.0
        %4551 = vmatprep.subr.mxu0 0.0
        %4552 = vmatpush2.msra.mxu0 0.0
        %4553 = vmatprep.subr.mxu0 0.0
        %4554 = vmatpush2.msra.mxu0 0.0
        %4555 = vmatprep.subr.mxu0 0.0
        %4556 = vmatpush2.msra.mxu0 0.0
        %4557 = vmatprep.subr.mxu0 0.0
        %4558 = vmatpush2.msra.mxu0 0.0
        %4559 = vmatprep.subr.mxu0 0.0
        %4560 = vmatpush2.msra.mxu0 0.0
        %4561 = vmatprep.subr.mxu0 0.0
        %4562 = vmatpush2.msra.mxu0 0.0
        %4563 = vmatprep.subr.mxu0 0.0
        %4564 = vmatpush2.msra.mxu0 0.0
        %4565 = vmatprep.subr.mxu0 0.0
        %4566 = vmatpush2.msra.mxu0 0.0
        %4567 = vmatprep.subr.mxu0 0.0
        %4568 = vmatpush2.msra.mxu0 0.0
        %4569 = vmatprep.subr.mxu0 0.0
        %4570 = vmatpush2.msra.mxu0 0.0
        %4571 = vmatprep.mubr.f32.mxu0 0.0
        %4572 = vmatmul.mubr.f32.gmra.mxu0 %v4502
        %v4573 = vpop.f32.mrf.mxu0
        %v4574 = vadd.f32 0.0, %v4573
        %v4575 = vpop.f32.mrf.mxu0
        %4576 = vmatprep.mubr.f32.mxu0 0.0
        %4577 = vmatmul.mubr.f32.gmra.mxu0 %v4505
        %v4578 = vpop.f32.mrf.mxu0
        %v4579 = vadd.f32 0.0, %v4578
        %v4580 = vpop.f32.mrf.mxu0
        %4581 = vdwg.mxu0
        %v4582 = vsub.f32 %v4491, %v4574
        %v4583 = vsub.f32 %v4494, %v4579
        %v4584 = vmul.f32 %v4582, %v4582
        %v4585 = vmul.f32 %v4583, %v4583
        %v4587 = vsel %vm1070, %v4584, 0
        %v4590 = vsel %vm1070, %v4585, 0
        %4592 = vmatprep.subr.mxu0 0.0
        %4593 = vmatpush1.msra.mxu0 0.0
        %4594 = vmatprep.subr.mxu0 0.0
        %4595 = vmatpush1.msra.mxu0 0.0
        %4596 = vmatprep.subr.mxu0 0.0
        %4597 = vmatpush1.msra.mxu0 0.0
        %4598 = vmatprep.subr.mxu0 0.0
        %4599 = vmatpush1.msra.mxu0 0.0
        %4600 = vmatprep.subr.mxu0 0.0
        %4601 = vmatpush1.msra.mxu0 0.0
        %4602 = vmatprep.subr.mxu0 0.0
        %4603 = vmatpush1.msra.mxu0 0.0
        %4604 = vmatprep.subr.mxu0 0.0
        %4605 = vmatpush1.msra.mxu0 0.0
        %4606 = vmatprep.subr.mxu0 0.0
        %4607 = vmatpush1.msra.mxu0 0.0
        %4608 = vmatprep.subr.mxu0 0.0
        %4609 = vmatpush1.msra.mxu0 0.0
        %4610 = vmatprep.subr.mxu0 0.0
        %4611 = vmatpush1.msra.mxu0 0.0
        %4612 = vmatprep.subr.mxu0 0.0
        %4613 = vmatpush1.msra.mxu0 0.0
        %4614 = vmatprep.subr.mxu0 0.0
        %4615 = vmatpush1.msra.mxu0 0.0
        %4616 = vmatprep.subr.mxu0 0.0
        %4617 = vmatpush1.msra.mxu0 %v1038
        %4618 = vmatprep.subr.mxu0 0.0
        %4619 = vmatpush1.msra.mxu0 %v1037
        %4620 = vmatprep.subr.mxu0 0.0
        %4621 = vmatpush1.msra.mxu0 %v1036
        %4622 = vmatprep.subr.mxu0 0.0
        %4623 = vmatpush1.msra.mxu0 %v1035
        %4624 = vmatprep.subr.mxu0 0.0
        %4625 = vmatpush2.msra.mxu0 0.0
        %4626 = vmatprep.subr.mxu0 0.0
        %4627 = vmatpush2.msra.mxu0 0.0
        %4628 = vmatprep.subr.mxu0 0.0
        %4629 = vmatpush2.msra.mxu0 0.0
        %4630 = vmatprep.subr.mxu0 0.0
        %4631 = vmatpush2.msra.mxu0 0.0
        %4632 = vmatprep.subr.mxu0 0.0
        %4633 = vmatpush2.msra.mxu0 0.0
        %4634 = vmatprep.subr.mxu0 0.0
        %4635 = vmatpush2.msra.mxu0 0.0
        %4636 = vmatprep.subr.mxu0 0.0
        %4637 = vmatpush2.msra.mxu0 0.0
        %4638 = vmatprep.subr.mxu0 0.0
        %4639 = vmatpush2.msra.mxu0 0.0
        %4640 = vmatprep.subr.mxu0 0.0
        %4641 = vmatpush2.msra.mxu0 0.0
        %4642 = vmatprep.subr.mxu0 0.0
        %4643 = vmatpush2.msra.mxu0 0.0
        %4644 = vmatprep.subr.mxu0 0.0
        %4645 = vmatpush2.msra.mxu0 0.0
        %4646 = vmatprep.subr.mxu0 0.0
        %4647 = vmatpush2.msra.mxu0 0.0
        %4648 = vmatprep.subr.mxu0 0.0
        %4649 = vmatpush2.msra.mxu0 0.0
        %4650 = vmatprep.subr.mxu0 0.0
        %4651 = vmatpush2.msra.mxu0 0.0
        %4652 = vmatprep.subr.mxu0 0.0
        %4653 = vmatpush2.msra.mxu0 0.0
        %4654 = vmatprep.subr.mxu0 0.0
        %4655 = vmatpush2.msra.mxu0 0.0
        %4656 = vmatprep.mubr.f32.mxu0 0.0
        %4657 = vmatmul.mubr.f32.gmra.mxu0 %v4587
        %v4658 = vpop.f32.mrf.mxu0
        %v4659 = vadd.f32 1e-05, %v4658
        %v4660 = vpop.f32.mrf.mxu0
        %4661 = vmatprep.mubr.f32.mxu0 0.0
        %4662 = vmatmul.mubr.f32.gmra.mxu0 %v4590
        %v4663 = vpop.f32.mrf.mxu0
        %v4664 = vadd.f32 1e-05, %v4663
        %v4665 = vpop.f32.mrf.mxu0
        %4666 = vdwg.mxu0
        %v4667 = vrsqrt.pop %v4659
        %v4668 = vrsqrt.pop %v4664
        %v4669 = vmul.f32 %v4582, %v4667
        %v4670 = vmul.f32 %v4583, %v4668
        %v4672 = vlaneseq
        %v4673 = vshrl.u32 %v4672, 7
        %v4674 = vsub.s32 0, %v4673
        %v4675 = vrot.slane %v4498, %v4674
        %v4677 = vmul.f32 %v4669, %v4675
        %v4678 = vmul.f32 %v4670, %v4675
        %v4680 = vlaneseq
        %v4681 = vshrl.u32 %v4680, 7
        %v4682 = vsub.s32 0, %v4681
        %v4683 = vrot.slane %v4500, %v4682
        %v4685 = vadd.f32 %v4677, %v4683
        %v4686 = vadd.f32 %v4678, %v4683
        %s4687 = scalar_lea.vmem %s11, 3
        %v4688 = vld [vmem:[%s4687] sm:$0x1]
        %s4689 = scalar_lea.vmem %s12, 3
        %v4690 = vld [vmem:[%s4689] sm:$0x1]
        %4691 = vrot.lane.b32.xlu0 %v4491, 96
        %v4692 = vpop.permute.xlu0 %4691
        %4693 = vrot.lane.b32.xlu0 %v4494, 96
        %v4694 = vpop.permute.xlu0 %4693
        %v4695 = vsel %vm1070, %v4692, 0
        %v4697 = vsel %vm1070, %v4694, 0
        %4699 = vmatprep.subr.mxu0 0.0
        %4700 = vmatpush1.msra.mxu0 0.0
        %4701 = vmatprep.subr.mxu0 0.0
        %4702 = vmatpush1.msra.mxu0 0.0
        %4703 = vmatprep.subr.mxu0 0.0
        %4704 = vmatpush1.msra.mxu0 0.0
        %4705 = vmatprep.subr.mxu0 0.0
        %4706 = vmatpush1.msra.mxu0 0.0
        %4707 = vmatprep.subr.mxu0 0.0
        %4708 = vmatpush1.msra.mxu0 0.0
        %4709 = vmatprep.subr.mxu0 0.0
        %4710 = vmatpush1.msra.mxu0 0.0
        %4711 = vmatprep.subr.mxu0 0.0
        %4712 = vmatpush1.msra.mxu0 0.0
        %4713 = vmatprep.subr.mxu0 0.0
        %4714 = vmatpush1.msra.mxu0 0.0
        %4715 = vmatprep.subr.mxu0 0.0
        %4716 = vmatpush1.msra.mxu0 0.0
        %4717 = vmatprep.subr.mxu0 0.0
        %4718 = vmatpush1.msra.mxu0 0.0
        %4719 = vmatprep.subr.mxu0 0.0
        %4720 = vmatpush1.msra.mxu0 0.0
        %4721 = vmatprep.subr.mxu0 0.0
        %4722 = vmatpush1.msra.mxu0 0.0
        %4723 = vmatprep.subr.mxu0 0.0
        %4724 = vmatpush1.msra.mxu0 %v1038
        %4725 = vmatprep.subr.mxu0 0.0
        %4726 = vmatpush1.msra.mxu0 %v1037
        %4727 = vmatprep.subr.mxu0 0.0
        %4728 = vmatpush1.msra.mxu0 %v1036
        %4729 = vmatprep.subr.mxu0 0.0
        %4730 = vmatpush1.msra.mxu0 %v1035
        %4731 = vmatprep.subr.mxu0 0.0
        %4732 = vmatpush2.msra.mxu0 0.0
        %4733 = vmatprep.subr.mxu0 0.0
        %4734 = vmatpush2.msra.mxu0 0.0
        %4735 = vmatprep.subr.mxu0 0.0
        %4736 = vmatpush2.msra.mxu0 0.0
        %4737 = vmatprep.subr.mxu0 0.0
        %4738 = vmatpush2.msra.mxu0 0.0
        %4739 = vmatprep.subr.mxu0 0.0
        %4740 = vmatpush2.msra.mxu0 0.0
        %4741 = vmatprep.subr.mxu0 0.0
        %4742 = vmatpush2.msra.mxu0 0.0
        %4743 = vmatprep.subr.mxu0 0.0
        %4744 = vmatpush2.msra.mxu0 0.0
        %4745 = vmatprep.subr.mxu0 0.0
        %4746 = vmatpush2.msra.mxu0 0.0
        %4747 = vmatprep.subr.mxu0 0.0
        %4748 = vmatpush2.msra.mxu0 0.0
        %4749 = vmatprep.subr.mxu0 0.0
        %4750 = vmatpush2.msra.mxu0 0.0
        %4751 = vmatprep.subr.mxu0 0.0
        %4752 = vmatpush2.msra.mxu0 0.0
        %4753 = vmatprep.subr.mxu0 0.0
        %4754 = vmatpush2.msra.mxu0 0.0
        %4755 = vmatprep.subr.mxu0 0.0
        %4756 = vmatpush2.msra.mxu0 0.0
        %4757 = vmatprep.subr.mxu0 0.0
        %4758 = vmatpush2.msra.mxu0 0.0
        %4759 = vmatprep.subr.mxu0 0.0
        %4760 = vmatpush2.msra.mxu0 0.0
        %4761 = vmatprep.subr.mxu0 0.0
        %4762 = vmatpush2.msra.mxu0 0.0
        %4763 = vmatprep.mubr.f32.mxu0 0.0
        %4764 = vmatmul.mubr.f32.gmra.mxu0 %v4695
        %v4765 = vpop.f32.mrf.mxu0
        %v4766 = vadd.f32 0.0, %v4765
        %v4767 = vpop.f32.mrf.mxu0
        %4768 = vmatprep.mubr.f32.mxu0 0.0
        %4769 = vmatmul.mubr.f32.gmra.mxu0 %v4697
        %v4770 = vpop.f32.mrf.mxu0
        %v4771 = vadd.f32 0.0, %v4770
        %v4772 = vpop.f32.mrf.mxu0
        %4773 = vdwg.mxu0
        %4776 = vrot.lane.b32.xlu0 %v4766, 32
        %v4777 = vpop.permute.xlu0 %4776
        %4778 = vrot.lane.b32.xlu0 %v4771, 32
        %v4779 = vpop.permute.xlu0 %4778
        %v4782 = vsub.f32 %v4491, %v4777
        %v4783 = vsub.f32 %v4494, %v4779
        %v4784 = vmul.f32 %v4782, %v4782
        %v4785 = vmul.f32 %v4783, %v4783
        %4788 = vrot.lane.b32.xlu0 %v4784, 96
        %v4789 = vpop.permute.xlu0 %4788
        %4790 = vrot.lane.b32.xlu0 %v4785, 96
        %v4791 = vpop.permute.xlu0 %4790
        %v4792 = vsel %vm1070, %v4789, 0
        %v4794 = vsel %vm1070, %v4791, 0
        %4796 = vmatprep.subr.mxu0 0.0
        %4797 = vmatpush1.msra.mxu0 0.0
        %4798 = vmatprep.subr.mxu0 0.0
        %4799 = vmatpush1.msra.mxu0 0.0
        %4800 = vmatprep.subr.mxu0 0.0
        %4801 = vmatpush1.msra.mxu0 0.0
        %4802 = vmatprep.subr.mxu0 0.0
        %4803 = vmatpush1.msra.mxu0 0.0
        %4804 = vmatprep.subr.mxu0 0.0
        %4805 = vmatpush1.msra.mxu0 0.0
        %4806 = vmatprep.subr.mxu0 0.0
        %4807 = vmatpush1.msra.mxu0 0.0
        %4808 = vmatprep.subr.mxu0 0.0
        %4809 = vmatpush1.msra.mxu0 0.0
        %4810 = vmatprep.subr.mxu0 0.0
        %4811 = vmatpush1.msra.mxu0 0.0
        %4812 = vmatprep.subr.mxu0 0.0
        %4813 = vmatpush1.msra.mxu0 0.0
        %4814 = vmatprep.subr.mxu0 0.0
        %4815 = vmatpush1.msra.mxu0 0.0
        %4816 = vmatprep.subr.mxu0 0.0
        %4817 = vmatpush1.msra.mxu0 0.0
        %4818 = vmatprep.subr.mxu0 0.0
        %4819 = vmatpush1.msra.mxu0 0.0
        %4820 = vmatprep.subr.mxu0 0.0
        %4821 = vmatpush1.msra.mxu0 %v1038
        %4822 = vmatprep.subr.mxu0 0.0
        %4823 = vmatpush1.msra.mxu0 %v1037
        %4824 = vmatprep.subr.mxu0 0.0
        %4825 = vmatpush1.msra.mxu0 %v1036
        %4826 = vmatprep.subr.mxu0 0.0
        %4827 = vmatpush1.msra.mxu0 %v1035
        %4828 = vmatprep.subr.mxu0 0.0
        %4829 = vmatpush2.msra.mxu0 0.0
        %4830 = vmatprep.subr.mxu0 0.0
        %4831 = vmatpush2.msra.mxu0 0.0
        %4832 = vmatprep.subr.mxu0 0.0
        %4833 = vmatpush2.msra.mxu0 0.0
        %4834 = vmatprep.subr.mxu0 0.0
        %4835 = vmatpush2.msra.mxu0 0.0
        %4836 = vmatprep.subr.mxu0 0.0
        %4837 = vmatpush2.msra.mxu0 0.0
        %4838 = vmatprep.subr.mxu0 0.0
        %4839 = vmatpush2.msra.mxu0 0.0
        %4840 = vmatprep.subr.mxu0 0.0
        %4841 = vmatpush2.msra.mxu0 0.0
        %4842 = vmatprep.subr.mxu0 0.0
        %4843 = vmatpush2.msra.mxu0 0.0
        %4844 = vmatprep.subr.mxu0 0.0
        %4845 = vmatpush2.msra.mxu0 0.0
        %4846 = vmatprep.subr.mxu0 0.0
        %4847 = vmatpush2.msra.mxu0 0.0
        %4848 = vmatprep.subr.mxu0 0.0
        %4849 = vmatpush2.msra.mxu0 0.0
        %4850 = vmatprep.subr.mxu0 0.0
        %4851 = vmatpush2.msra.mxu0 0.0
        %4852 = vmatprep.subr.mxu0 0.0
        %4853 = vmatpush2.msra.mxu0 0.0
        %4854 = vmatprep.subr.mxu0 0.0
        %4855 = vmatpush2.msra.mxu0 0.0
        %4856 = vmatprep.subr.mxu0 0.0
        %4857 = vmatpush2.msra.mxu0 0.0
        %4858 = vmatprep.subr.mxu0 0.0
        %4859 = vmatpush2.msra.mxu0 0.0
        %4860 = vmatprep.mubr.f32.mxu0 0.0
        %4861 = vmatmul.mubr.f32.gmra.mxu0 %v4792
        %v4862 = vpop.f32.mrf.mxu0
        %v4863 = vadd.f32 1e-05, %v4862
        %v4864 = vpop.f32.mrf.mxu0
        %4865 = vmatprep.mubr.f32.mxu0 0.0
        %4866 = vmatmul.mubr.f32.gmra.mxu0 %v4794
        %v4867 = vpop.f32.mrf.mxu0
        %v4868 = vadd.f32 1e-05, %v4867
        %v4869 = vpop.f32.mrf.mxu0
        %4870 = vdwg.mxu0
        %v4871 = vrsqrt.pop %v4863
        %v4872 = vrsqrt.pop %v4868
        %4875 = vrot.lane.b32.xlu0 %v4871, 32
        %v4876 = vpop.permute.xlu0 %4875
        %4877 = vrot.lane.b32.xlu0 %v4872, 32
        %v4878 = vpop.permute.xlu0 %4877
        %v4881 = vmul.f32 %v4782, %v4876
        %v4882 = vmul.f32 %v4783, %v4878
        %v4884 = vlaneseq
        %v4885 = vshrl.u32 %v4884, 7
        %v4886 = vsub.s32 0, %v4885
        %v4887 = vrot.slane %v4688, %v4886
        %4888 = vrot.lane.b32.xlu0 %v4887, 32
        %v4889 = vpop.permute.xlu0 %4888
        %v4891 = vmul.f32 %v4881, %v4889
        %v4892 = vmul.f32 %v4882, %v4889
        %v4894 = vlaneseq
        %v4895 = vshrl.u32 %v4894, 7
        %v4896 = vsub.s32 0, %v4895
        %v4897 = vrot.slane %v4690, %v4896
        %4898 = vrot.lane.b32.xlu0 %v4897, 32
        %v4899 = vpop.permute.xlu0 %4898
        %v4901 = vadd.f32 %v4891, %v4899
        %v4902 = vadd.f32 %v4892, %v4899
        %v4903 = vpack.c.bf16 %v4902, %v4901
        %v4904 = vpack.c.bf16 %v4494, %v4491
        %4906 = vrot.lane.b32.xlu0 %v4903, 96
        %v4907 = vpop.permute.xlu0 %4906
        %4909 = vxpose.xlu0.c.b16.start [1/8] %v4907, 128
        %4910 = vxpose.xlu0.c.b16.cont [2/8] 0, 128
        %4911 = vxpose.xlu0.c.b16.cont [3/8] 0, 128
        %4912 = vxpose.xlu0.c.b16.cont [4/8] 0, 128
        %4913 = vxpose.xlu0.c.b16.cont [5/8] 0, 128
        %4914 = vxpose.xlu0.c.b16.cont [6/8] 0, 128
        %4915 = vxpose.xlu0.c.b16.cont [7/8] 0, 128
        %4916 = vxpose.xlu0.c.b16.end [8/8] 0, 128
        %v4917 = vpop.trf.xlu0
        %v4918 = vpop.trf.xlu0
        %v4919 = vpop.trf.xlu0
        %v4920 = vpop.trf.xlu0
        %v4921 = vpop.trf.xlu0
        %v4922 = vpop.trf.xlu0
        %v4923 = vpop.trf.xlu0
        %v4924 = vpop.trf.xlu0
        %4926 = vrot.lane.b32.xlu0 %v4904, 64
        %v4927 = vpop.permute.xlu0 %4926
        %v4930 = vsel %vm1724, %v4917, 0
        %v4933 = vsel %vm1724, %v4918, 0
        %4935 = vmatprep.subr.bf16.mxu0 0
        %4936 = vmatpush1.bf16.msra.mxu0 0
        %4937 = vmatprep.subr.bf16.mxu0 0
        %4938 = vmatpush1.bf16.msra.mxu0 0
        %4939 = vmatprep.subr.bf16.mxu0 0
        %4940 = vmatpush1.bf16.msra.mxu0 0
        %4941 = vmatprep.subr.bf16.mxu0 0
        %4942 = vmatpush1.bf16.msra.mxu0 0
        %4943 = vmatprep.subr.bf16.mxu0 0
        %4944 = vmatpush1.bf16.msra.mxu0 0
        %4945 = vmatprep.subr.bf16.mxu0 0
        %4946 = vmatpush1.bf16.msra.mxu0 0
        %4947 = vmatprep.subr.bf16.mxu0 0
        %4948 = vmatpush1.bf16.msra.mxu0 0
        %4949 = vmatprep.subr.bf16.mxu0 0
        %4950 = vmatpush1.bf16.msra.mxu0 %v4927
        %4951 = vmatprep.subr.bf16.mxu0 0
        %4952 = vmatpush2.bf16.msra.mxu0 0
        %4953 = vmatprep.subr.bf16.mxu0 0
        %4954 = vmatpush2.bf16.msra.mxu0 0
        %4955 = vmatprep.subr.bf16.mxu0 0
        %4956 = vmatpush2.bf16.msra.mxu0 0
        %4957 = vmatprep.subr.bf16.mxu0 0
        %4958 = vmatpush2.bf16.msra.mxu0 0
        %4959 = vmatprep.subr.bf16.mxu0 0
        %4960 = vmatpush2.bf16.msra.mxu0 0
        %4961 = vmatprep.subr.bf16.mxu0 0
        %4962 = vmatpush2.bf16.msra.mxu0 0
        %4963 = vmatprep.subr.bf16.mxu0 0
        %4964 = vmatpush2.bf16.msra.mxu0 0
        %4965 = vmatprep.subr.bf16.mxu0 0
        %4966 = vmatpush2.bf16.msra.mxu0 0
        %4967 = vmatprep.mubr.bf16.mxu0 0
        %4968 = vmatmul.mubr.bf16.gmra.mxu0 %v4930
        %v4969 = vpop.f32.mrf.mxu0
        %v4970 = vadd.f32 0.0, %v4969
        %v4971 = vpop.f32.mrf.mxu0
        %v4972 = vpop.f32.mrf.mxu0
        %v4973 = vadd.f32 0.0, %v4972
        %v4974 = vpop.f32.mrf.mxu0
        %4975 = vmatprep.mubr.bf16.mxu0 0
        %4976 = vmatmul.mubr.bf16.gmra.mxu0 %v4933
        %v4977 = vpop.f32.mrf.mxu0
        %v4978 = vadd.f32 0.0, %v4977
        %v4979 = vpop.f32.mrf.mxu0
        %v4980 = vpop.f32.mrf.mxu0
        %v4981 = vadd.f32 0.0, %v4980
        %v4982 = vpop.f32.mrf.mxu0
        %4983 = vdwg.mxu0
        %v4984 = vmul.f32 %v4970, %v1039
        %v4985 = vmul.f32 %v4973, %v1040
        %v4986 = vmul.f32 %v4978, %v1041
        %v4987 = vmul.f32 %v4981, %v1042
        %v4988 = vpack.c.bf16 %v4686, %v4685
        %v4989 = vpack.c.bf16 %v4985, %v4984
        %v4990 = vpack.c.bf16 %v4987, %v4986
        %v4992 = vsel %vm1070, %v4988, 0
        %4994 = vmatprep.subr.bf16.mxu0 0
        %4995 = vmatpush1.bf16.msra.mxu0 0
        %4996 = vmatprep.subr.bf16.mxu0 0
        %4997 = vmatpush1.bf16.msra.mxu0 0
        %4998 = vmatprep.subr.bf16.mxu0 0
        %4999 = vmatpush1.bf16.msra.mxu0 0
        %5000 = vmatprep.subr.bf16.mxu0 0
        %5001 = vmatpush1.bf16.msra.mxu0 0
        %5002 = vmatprep.subr.bf16.mxu0 0
        %5003 = vmatpush1.bf16.msra.mxu0 0
        %5004 = vmatprep.subr.bf16.mxu0 0
        %5005 = vmatpush1.bf16.msra.mxu0 0
        %5006 = vmatprep.subr.bf16.mxu0 0
        %5007 = vmatpush1.bf16.msra.mxu0 %v4990
        %5008 = vmatprep.subr.bf16.mxu0 0
        %5009 = vmatpush1.bf16.msra.mxu0 %v4989
        %5010 = vmatprep.subr.bf16.mxu0 0
        %5011 = vmatpush2.bf16.msra.mxu0 0
        %5012 = vmatprep.subr.bf16.mxu0 0
        %5013 = vmatpush2.bf16.msra.mxu0 0
        %5014 = vmatprep.subr.bf16.mxu0 0
        %5015 = vmatpush2.bf16.msra.mxu0 0
        %5016 = vmatprep.subr.bf16.mxu0 0
        %5017 = vmatpush2.bf16.msra.mxu0 0
        %5018 = vmatprep.subr.bf16.mxu0 0
        %5019 = vmatpush2.bf16.msra.mxu0 0
        %5020 = vmatprep.subr.bf16.mxu0 0
        %5021 = vmatpush2.bf16.msra.mxu0 0
        %5022 = vmatprep.subr.bf16.mxu0 0
        %5023 = vmatpush2.bf16.msra.mxu0 0
        %5024 = vmatprep.subr.bf16.mxu0 0
        %5025 = vmatpush2.bf16.msra.mxu0 0
        %5026 = vmatprep.mubr.bf16.mxu0 0
        %5027 = vmatmul.mubr.bf16.gmra.mxu0 %v4992
        %v5028 = vpop.f32.mrf.mxu0
        %v5029 = vadd.f32 0.0, %v5028
        %v5030 = vpop.f32.mrf.mxu0
        %v5031 = vpop.f32.mrf.mxu0
        %v5032 = vadd.f32 0.0, %v5031
        %v5033 = vpop.f32.mrf.mxu0
        %5034 = vdwg.mxu0
        %v5035 = vmul.f32 %v5029, 0.0625
        %v5036 = vmul.f32 %v5032, 0.0625
        %s5037 = scalar_lea.vmem %s13, 96
        %v5038 = vld [vmem:[%s5037] sm:$0xff]
        %v5039 = vld [vmem:[%s5037 + $0x8] sm:$0xff]
        %v5040 = vld [vmem:[%s5037 + $0x10] sm:$0xff]
        %v5041 = vld [vmem:[%s5037 + $0x18] sm:$0xff]
        %v5042 = vpack.c.bf16 %v5036, %v5035
        %v5043 = vpack.c.bf16 %v5039, %v5038
        %v5044 = vpack.c.bf16 %v5041, %v5040
        %s5045 = scalar_lea.vmem %s14, 3
        %v5046 = vld [vmem:[%s5045] sm:$0x1]
        %v5048 = vlaneseq
        %v5049 = vshrl.u32 %v5048, 7
        %v5050 = vsub.s32 0, %v5049
        %v5051 = vrot.slane %v5046, %v5050
        %v5054 = vsel %vm1070, %v5042, 0
        %5056 = vmatprep.subr.bf16.mxu0 0
        %5057 = vmatpush1.bf16.msra.mxu0 0
        %5058 = vmatprep.subr.bf16.mxu0 0
        %5059 = vmatpush1.bf16.msra.mxu0 0
        %5060 = vmatprep.subr.bf16.mxu0 0
        %5061 = vmatpush1.bf16.msra.mxu0 0
        %5062 = vmatprep.subr.bf16.mxu0 0
        %5063 = vmatpush1.bf16.msra.mxu0 0
        %5064 = vmatprep.subr.bf16.mxu0 0
        %5065 = vmatpush1.bf16.msra.mxu0 0
        %5066 = vmatprep.subr.bf16.mxu0 0
        %5067 = vmatpush1.bf16.msra.mxu0 0
        %5068 = vmatprep.subr.bf16.mxu0 0
        %5069 = vmatpush1.bf16.msra.mxu0 %v5044
        %5070 = vmatprep.subr.bf16.mxu0 0
        %5071 = vmatpush1.bf16.msra.mxu0 %v5043
        %5072 = vmatprep.subr.bf16.mxu0 0
        %5073 = vmatpush2.bf16.msra.mxu0 0
        %5074 = vmatprep.subr.bf16.mxu0 0
        %5075 = vmatpush2.bf16.msra.mxu0 0
        %5076 = vmatprep.subr.bf16.mxu0 0
        %5077 = vmatpush2.bf16.msra.mxu0 0
        %5078 = vmatprep.subr.bf16.mxu0 0
        %5079 = vmatpush2.bf16.msra.mxu0 0
        %5080 = vmatprep.subr.bf16.mxu0 0
        %5081 = vmatpush2.bf16.msra.mxu0 0
        %5082 = vmatprep.subr.bf16.mxu0 0
        %5083 = vmatpush2.bf16.msra.mxu0 0
        %5084 = vmatprep.subr.bf16.mxu0 0
        %5085 = vmatpush2.bf16.msra.mxu0 0
        %5086 = vmatprep.subr.bf16.mxu0 0
        %5087 = vmatpush2.bf16.msra.mxu0 0
        %5088 = vmatprep.mubr.bf16.mxu0 0
        %5089 = vmatmul.mubr.bf16.gmra.mxu0 %v5054
        %v5090 = vpop.f32.mrf.mxu0
        %v5091 = vadd.f32 %v5051, %v5090
        %v5092 = vpop.f32.mrf.mxu0
        %v5093 = vpop.f32.mrf.mxu0
        %v5094 = vadd.f32 %v5051, %v5093
        %v5095 = vpop.f32.mrf.mxu0
        %5096 = vdwg.mxu0
        %v5097 = vadd.f32 %v4435, %v5091
        %v5098 = vadd.f32 %v4436, %v5094
        %s5099 = scalar_lea.vmem [#allocation6], 3
        %v5100 = vld [vmem:[%s5099] sm:$0x1]
        %s5101 = scalar_lea.vmem [#allocation8], 3
        %v5102 = vld [vmem:[%s5101] sm:$0x1]
        %v5103 = vsel %vm1070, %v5097, 0.0
        %5104 = vadd.xlane.f32.xlu0 %v5103
        %v5105 = vpop.xlane.xlu0 %5104
        %v5106 = vsel %vm1070, %v5098, 0.0
        %5107 = vadd.xlane.f32.xlu0 %v5106
        %v5108 = vpop.xlane.xlu0 %5107
        %v5109 = vmul.f32 %v5105, %v1901
        %v5110 = vmul.f32 %v5108, %v1901
        %v5111 = vsub.f32 %v5097, %v5109
        %v5112 = vsub.f32 %v5098, %v5110
        %v5113 = vmul.f32 %v5111, %v5111
        %v5114 = vmul.f32 %v5112, %v5112
        %v5115 = vsel %vm1070, %v5113, 0.0
        %5116 = vadd.xlane.f32.xlu0 %v5115
        %v5117 = vpop.xlane.xlu0 %5116
        %v5118 = vsel %vm1070, %v5114, 0.0
        %5119 = vadd.xlane.f32.xlu0 %v5118
        %v5120 = vpop.xlane.xlu0 %5119
        %v5121 = vmul.f32 %v5117, %v1901
        %v5122 = vmul.f32 %v5120, %v1901
        %v5123 = vadd.f32 %v5121, 1e-05
        %v5124 = vadd.f32 %v5122, 1e-05
        %v5125 = vrsqrt.pop %v5123
        %v5126 = vrsqrt.pop %v5124
        %v5127 = vmul.f32 %v5111, %v5125
        %v5128 = vmul.f32 %v5112, %v5126
        %v5130 = vlaneseq
        %v5131 = vshrl.u32 %v5130, 7
        %v5132 = vsub.s32 0, %v5131
        %v5133 = vrot.slane %v5100, %v5132
        %v5135 = vmul.f32 %v5127, %v5133
        %v5136 = vmul.f32 %v5128, %v5133
        %v5138 = vlaneseq
        %v5139 = vshrl.u32 %v5138, 7
        %v5140 = vsub.s32 0, %v5139
        %v5141 = vrot.slane %v5102, %v5140
        %v5143 = vadd.f32 %v5135, %v5141
        %v5144 = vadd.f32 %v5136, %v5141
        %s5145 = scalar_lea.vmem [#allocation9], 96
        %v5146 = vld [vmem:[%s5145] sm:$0xff]
        %v5147 = vld [vmem:[%s5145 + $0x8] sm:$0xff]
        %v5148 = vld [vmem:[%s5145 + $0x10] sm:$0xff]
        %v5149 = vld [vmem:[%s5145 + $0x18] sm:$0xff]
        %v5150 = vpack.c.bf16 %v5144, %v5143
        %v5151 = vpack.c.bf16 %v5147, %v5146
        %v5152 = vpack.c.bf16 %v5149, %v5148
        %s5153 = scalar_lea.vmem [#allocation11], 3
        %v5154 = vld [vmem:[%s5153] sm:$0x1]
        %v5156 = vlaneseq
        %v5157 = vshrl.u32 %v5156, 7
        %v5158 = vsub.s32 0, %v5157
        %v5159 = vrot.slane %v5154, %v5158
        %v5162 = vsel %vm1070, %v5150, 0
        %5164 = vmatprep.subr.bf16.mxu0 0
        %5165 = vmatpush1.bf16.msra.mxu0 0
        %5166 = vmatprep.subr.bf16.mxu0 0
        %5167 = vmatpush1.bf16.msra.mxu0 0
        %5168 = vmatprep.subr.bf16.mxu0 0
        %5169 = vmatpush1.bf16.msra.mxu0 0
        %5170 = vmatprep.subr.bf16.mxu0 0
        %5171 = vmatpush1.bf16.msra.mxu0 0
        %5172 = vmatprep.subr.bf16.mxu0 0
        %5173 = vmatpush1.bf16.msra.mxu0 0
        %5174 = vmatprep.subr.bf16.mxu0 0
        %5175 = vmatpush1.bf16.msra.mxu0 0
        %5176 = vmatprep.subr.bf16.mxu0 0
        %5177 = vmatpush1.bf16.msra.mxu0 %v5152
        %5178 = vmatprep.subr.bf16.mxu0 0
        %5179 = vmatpush1.bf16.msra.mxu0 %v5151
        %5180 = vmatprep.subr.bf16.mxu0 0
        %5181 = vmatpush2.bf16.msra.mxu0 0
        %5182 = vmatprep.subr.bf16.mxu0 0
        %5183 = vmatpush2.bf16.msra.mxu0 0
        %5184 = vmatprep.subr.bf16.mxu0 0
        %5185 = vmatpush2.bf16.msra.mxu0 0
        %5186 = vmatprep.subr.bf16.mxu0 0
        %5187 = vmatpush2.bf16.msra.mxu0 0
        %5188 = vmatprep.subr.bf16.mxu0 0
        %5189 = vmatpush2.bf16.msra.mxu0 0
        %5190 = vmatprep.subr.bf16.mxu0 0
        %5191 = vmatpush2.bf16.msra.mxu0 0
        %5192 = vmatprep.subr.bf16.mxu0 0
        %5193 = vmatpush2.bf16.msra.mxu0 0
        %5194 = vmatprep.subr.bf16.mxu0 0
        %5195 = vmatpush2.bf16.msra.mxu0 0
        %5196 = vmatprep.mubr.bf16.mxu0 0
        %5197 = vmatmul.mubr.bf16.gmra.mxu0 %v5162
        %v5198 = vpop.f32.mrf.mxu0
        %v5199 = vadd.f32 %v5159, %v5198
        %v5200 = vpop.f32.mrf.mxu0
        %v5201 = vpop.f32.mrf.mxu0
        %v5202 = vadd.f32 %v5159, %v5201
        %v5203 = vpop.f32.mrf.mxu0
        %5204 = vdwg.mxu0
        %v5205 = vmax.f32 %v5199, 0.0
        %v5206 = vmax.f32 %v5202, 0.0
        %s5207 = scalar_lea.vmem [#allocation12], 96
        %v5208 = vld [vmem:[%s5207] sm:$0xff]
        %v5209 = vld [vmem:[%s5207 + $0x8] sm:$0xff]
        %v5210 = vld [vmem:[%s5207 + $0x10] sm:$0xff]
        %v5211 = vld [vmem:[%s5207 + $0x18] sm:$0xff]
        %v5212 = vpack.c.bf16 %v5206, %v5205
        %v5213 = vpack.c.bf16 %v5209, %v5208
        %v5214 = vpack.c.bf16 %v5211, %v5210
        %s5215 = scalar_lea.vmem [#allocation14], 3
        %v5216 = vld [vmem:[%s5215] sm:$0x1]
        %v5218 = vlaneseq
        %v5219 = vshrl.u32 %v5218, 7
        %v5220 = vsub.s32 0, %v5219
        %v5221 = vrot.slane %v5216, %v5220
        %v5224 = vsel %vm1070, %v5212, 0
        %5226 = vmatprep.subr.bf16.mxu0 0
        %5227 = vmatpush1.bf16.msra.mxu0 0
        %5228 = vmatprep.subr.bf16.mxu0 0
        %5229 = vmatpush1.bf16.msra.mxu0 0
        %5230 = vmatprep.subr.bf16.mxu0 0
        %5231 = vmatpush1.bf16.msra.mxu0 0
        %5232 = vmatprep.subr.bf16.mxu0 0
        %5233 = vmatpush1.bf16.msra.mxu0 0
        %5234 = vmatprep.subr.bf16.mxu0 0
        %5235 = vmatpush1.bf16.msra.mxu0 0
        %5236 = vmatprep.subr.bf16.mxu0 0
        %5237 = vmatpush1.bf16.msra.mxu0 0
        %5238 = vmatprep.subr.bf16.mxu0 0
        %5239 = vmatpush1.bf16.msra.mxu0 %v5214
        %5240 = vmatprep.subr.bf16.mxu0 0
        %5241 = vmatpush1.bf16.msra.mxu0 %v5213
        %5242 = vmatprep.subr.bf16.mxu0 0
        %5243 = vmatpush2.bf16.msra.mxu0 0
        %5244 = vmatprep.subr.bf16.mxu0 0
        %5245 = vmatpush2.bf16.msra.mxu0 0
        %5246 = vmatprep.subr.bf16.mxu0 0
        %5247 = vmatpush2.bf16.msra.mxu0 0
        %5248 = vmatprep.subr.bf16.mxu0 0
        %5249 = vmatpush2.bf16.msra.mxu0 0
        %5250 = vmatprep.subr.bf16.mxu0 0
        %5251 = vmatpush2.bf16.msra.mxu0 0
        %5252 = vmatprep.subr.bf16.mxu0 0
        %5253 = vmatpush2.bf16.msra.mxu0 0
        %5254 = vmatprep.subr.bf16.mxu0 0
        %5255 = vmatpush2.bf16.msra.mxu0 0
        %5256 = vmatprep.subr.bf16.mxu0 0
        %5257 = vmatpush2.bf16.msra.mxu0 0
        %5258 = vmatprep.mubr.bf16.mxu0 0
        %5259 = vmatmul.mubr.bf16.gmra.mxu0 %v5224
        %v5260 = vpop.f32.mrf.mxu0
        %v5261 = vadd.f32 %v5221, %v5260
        %v5262 = vpop.f32.mrf.mxu0
        %v5263 = vpop.f32.mrf.mxu0
        %v5264 = vadd.f32 %v5221, %v5263
        %v5265 = vpop.f32.mrf.mxu0
        %5266 = vdwg.mxu0
        %v5267 = vadd.f32 %v5143, %v5261
        %v5268 = vadd.f32 %v5144, %v5264
        %s5269 = scalar_lea.vmem [#allocation15], 3
        %v5270 = vld [vmem:[%s5269] sm:$0x1]
        %s5271 = scalar_lea.vmem [#allocation17], 3
        %v5272 = vld [vmem:[%s5271] sm:$0x1]
        %v5273 = vsel %vm1070, %v5267, 0.0
        %5274 = vadd.xlane.f32.xlu0 %v5273
        %v5275 = vpop.xlane.xlu0 %5274
        %v5276 = vsel %vm1070, %v5268, 0.0
        %5277 = vadd.xlane.f32.xlu0 %v5276
        %v5278 = vpop.xlane.xlu0 %5277
        %v5279 = vmul.f32 %v5275, %v1901
        %v5280 = vmul.f32 %v5278, %v1901
        %v5281 = vsub.f32 %v5267, %v5279
        %v5282 = vsub.f32 %v5268, %v5280
        %v5283 = vmul.f32 %v5281, %v5281
        %v5284 = vmul.f32 %v5282, %v5282
        %v5285 = vsel %vm1070, %v5283, 0.0
        %5286 = vadd.xlane.f32.xlu0 %v5285
        %v5287 = vpop.xlane.xlu0 %5286
        %v5288 = vsel %vm1070, %v5284, 0.0
        %5289 = vadd.xlane.f32.xlu0 %v5288
        %v5290 = vpop.xlane.xlu0 %5289
        %v5291 = vmul.f32 %v5287, %v1901
        %v5292 = vmul.f32 %v5290, %v1901
        %v5293 = vadd.f32 %v5291, 1e-05
        %v5294 = vadd.f32 %v5292, 1e-05
        %v5295 = vrsqrt.pop %v5293
        %v5296 = vrsqrt.pop %v5294
        %v5297 = vmul.f32 %v5281, %v5295
        %v5298 = vmul.f32 %v5282, %v5296
        %v5300 = vlaneseq
        %v5301 = vshrl.u32 %v5300, 7
        %v5302 = vsub.s32 0, %v5301
        %v5303 = vrot.slane %v5270, %v5302
        %v5305 = vmul.f32 %v5297, %v5303
        %v5306 = vmul.f32 %v5298, %v5303
        %v5308 = vlaneseq
        %v5309 = vshrl.u32 %v5308, 7
        %v5310 = vsub.s32 0, %v5309
        %v5311 = vrot.slane %v5272, %v5310
        %v5313 = vadd.f32 %v5305, %v5311
        %v5314 = vadd.f32 %v5306, %v5311
        %v5315 = vld [vmem:[#allocation18] sm:$0xff]
        %v5316 = vld [vmem:[#allocation18 + $0x8] sm:$0xff]
        %v5317 = vld [vmem:[#allocation18 + $0x10] sm:$0xff]
        %v5318 = vld [vmem:[#allocation18 + $0x18] sm:$0xff]
        %v5319 = vpack.c.bf16 %v5314, %v5313
        %v5320 = vpack.c.bf16 %v5316, %v5315
        %v5321 = vpack.c.bf16 %v5318, %v5317
        %v5322 = vld [vmem:[#allocation20] sm:$0x1]
        %v5324 = vlaneseq
        %v5325 = vshrl.u32 %v5324, 7
        %v5326 = vsub.s32 0, %v5325
        %v5327 = vrot.slane %v5322, %v5326
        %v5330 = vsel %vm1070, %v5319, 0
        %5332 = vmatprep.subr.bf16.mxu0 0
        %5333 = vmatpush1.bf16.msra.mxu0 0
        %5334 = vmatprep.subr.bf16.mxu0 0
        %5335 = vmatpush1.bf16.msra.mxu0 0
        %5336 = vmatprep.subr.bf16.mxu0 0
        %5337 = vmatpush1.bf16.msra.mxu0 0
        %5338 = vmatprep.subr.bf16.mxu0 0
        %5339 = vmatpush1.bf16.msra.mxu0 0
        %5340 = vmatprep.subr.bf16.mxu0 0
        %5341 = vmatpush1.bf16.msra.mxu0 0
        %5342 = vmatprep.subr.bf16.mxu0 0
        %5343 = vmatpush1.bf16.msra.mxu0 0
        %5344 = vmatprep.subr.bf16.mxu0 0
        %5345 = vmatpush1.bf16.msra.mxu0 %v5321
        %5346 = vmatprep.subr.bf16.mxu0 0
        %5347 = vmatpush1.bf16.msra.mxu0 %v5320
        %5348 = vmatprep.subr.bf16.mxu0 0
        %5349 = vmatpush2.bf16.msra.mxu0 0
        %5350 = vmatprep.subr.bf16.mxu0 0
        %5351 = vmatpush2.bf16.msra.mxu0 0
        %5352 = vmatprep.subr.bf16.mxu0 0
        %5353 = vmatpush2.bf16.msra.mxu0 0
        %5354 = vmatprep.subr.bf16.mxu0 0
        %5355 = vmatpush2.bf16.msra.mxu0 0
        %5356 = vmatprep.subr.bf16.mxu0 0
        %5357 = vmatpush2.bf16.msra.mxu0 0
        %5358 = vmatprep.subr.bf16.mxu0 0
        %5359 = vmatpush2.bf16.msra.mxu0 0
        %5360 = vmatprep.subr.bf16.mxu0 0
        %5361 = vmatpush2.bf16.msra.mxu0 0
        %5362 = vmatprep.subr.bf16.mxu0 0
        %5363 = vmatpush2.bf16.msra.mxu0 0
        %5364 = vmatprep.mubr.bf16.mxu0 0
        %5365 = vmatmul.mubr.bf16.gmra.mxu0 %v5330
        %v5366 = vpop.f32.mrf.mxu0
        %v5367 = vadd.f32 %v5327, %v5366
        %v5368 = vpop.f32.mrf.mxu0
        %v5369 = vpop.f32.mrf.mxu0
        %v5370 = vadd.f32 %v5327, %v5369
        %v5371 = vpop.f32.mrf.mxu0
        %5372 = vdwg.mxu0
        %v5373 = vmax.f32 %v5367, 0.0
        %v5374 = vmax.f32 %v5370, 0.0
        %v5375 = vld [vmem:[#allocation21] sm:$0x1]
        %v5376 = vpack.c.bf16 %v5375, %v5375
        %v5377 = vpack.c.bf16 %v5374, %v5373
        %v5378 = vld [vmem:[#allocation2] sm:$0x1]
        %5380 = vset.pattern.permute.xlu0 0
        %5381 = vperm.xlu0 %5380, %v5378
        %v5382 = vpop.permute.xlu0 %5381
        %v5384 = vlaneseq
        %v5385 = vshrl.u32 %v5384, 7
        %v5386 = vsub.s32 0, %v5385
        %v5387 = vrot.slane %v5382, %v5386
        %vm5388 = vcmask 523264
        %v5390 = vsel %vm5388, %v5376, 0
        %v5393 = vsel %vm5388, %v5377, 0
        %5395 = vmatprep.subr.bf16.mxu0 0
        %5396 = vmatpush1.bf16.xpose.msra.mxu0 0
        %5397 = vmatprep.subr.bf16.mxu0 0
        %5398 = vmatpush1.bf16.xpose.msra.mxu0 0
        %5399 = vmatprep.subr.bf16.mxu0 0
        %5400 = vmatpush1.bf16.xpose.msra.mxu0 0
        %5401 = vmatprep.subr.bf16.mxu0 0
        %5402 = vmatpush1.bf16.xpose.msra.mxu0 0
        %5403 = vmatprep.subr.bf16.mxu0 0
        %5404 = vmatpush1.bf16.xpose.msra.mxu0 0
        %5405 = vmatprep.subr.bf16.mxu0 0
        %5406 = vmatpush1.bf16.xpose.msra.mxu0 0
        %5407 = vmatprep.subr.bf16.mxu0 0
        %5408 = vmatpush1.bf16.xpose.msra.mxu0 0
        %5409 = vmatprep.subr.bf16.mxu0 0
        %5410 = vmatpush1.bf16.xpose.msra.mxu0 %v5393
        %5411 = vmatprep.subr.bf16.mxu0 0
        %5412 = vmatpush2.bf16.xpose.msra.mxu0 0
        %5413 = vmatprep.subr.bf16.mxu0 0
        %5414 = vmatpush2.bf16.xpose.msra.mxu0 0
        %5415 = vmatprep.subr.bf16.mxu0 0
        %5416 = vmatpush2.bf16.xpose.msra.mxu0 0
        %5417 = vmatprep.subr.bf16.mxu0 0
        %5418 = vmatpush2.bf16.xpose.msra.mxu0 0
        %5419 = vmatprep.subr.bf16.mxu0 0
        %5420 = vmatpush2.bf16.xpose.msra.mxu0 0
        %5421 = vmatprep.subr.bf16.mxu0 0
        %5422 = vmatpush2.bf16.xpose.msra.mxu0 0
        %5423 = vmatprep.subr.bf16.mxu0 0
        %5424 = vmatpush2.bf16.xpose.msra.mxu0 0
        %5425 = vmatprep.subr.bf16.mxu0 0
        %5426 = vmatpush2.bf16.xpose.msra.mxu0 0
        %5427 = vmatprep.mubr.bf16.mxu0 0
        %5428 = vmatmul.mubr.bf16.gmra.mxu0 %v5390
        %v5429 = vpop.f32.mrf.mxu0
        %v5430 = vadd.f32 %v5387, %v5429
        %v5431 = vpop.f32.mrf.mxu0
        %v5432 = vpop.f32.mrf.mxu0
        %v5433 = vpop.f32.mrf.mxu0
        %5434 = vdwg.mxu0
        %vm5435 = vcmask 122880
        %5436 = vst.msk [vmem:[%s983] sm:$0x1] %vm5435, %v5430
        %s5437 = sand.u32 %s630, 1
        %s5438 = scalar_lea.sflag [#allocation5], %s5437
        %s5439 = sand.u32 %s630, 1
        %s5440 = scalar_lea.vmem [#allocation23], %s5439
        // Predicated region
        $region177: #{ft1d_forward.1} parent=127 // pred_check
          %p5441 = pneg %p640
        $region178: #{ft1d_forward.1} parent=127 // pred_check_branch
          %5443 = sbr.rel (%p5441) target = $region180
        $region179: #{ft1d_forward.1} parent=127 // pred_region
          %s5445 = ssub.s32 16, 16
          %5446 = vsyncadd %s5438, %s5445
          %s5447 = smul.addr %s50, 16
          %s5448 = scalar_lea.hbm %s27, %s5447
          %s5450 = sshll.u32 %s5440, 4
          %s5451 = int_to_ptr.vmem [resolvable:$true] %s5450
          %5453 = dma.vmem_to_hbm [thread:$0]  %s5451, 16, %s5448, %s5438
        $region180: #{ft1d_forward.1} parent=127 // pred_fallthru
          _
      $region128: #{ft1d_forward.1} parent=5 // pred_fallthru
        _
      %p5454 = scmp.le.s32.totalorder 2, %s45
      // Predicated region
      $region181: #{ft1d_forward.1} parent=5 // pred_check
        %p5455 = pneg %p5454
      $region182: #{ft1d_forward.1} parent=5 // pred_check_branch
        %5457 = sbr.rel (%p5455) target = $region184
      $region183: #{ft1d_forward.1} parent=5 // pred_region
        %s5458 = ssub.s32 %s45, 2
        // Predicated region
        $region185: #{ft1d_forward.1} parent=183 // pred_check
          %p5459 = pneg %p646
        $region186: #{ft1d_forward.1} parent=183 // pred_check_branch
          %5461 = sbr.rel (%p5459) target = $region188
        $region187: #{ft1d_forward.1} parent=183 // pred_region
          %s5462 = sand.u32 %s631, 1
          %s5463 = scalar_lea.sflag [#allocation5], %s5462
          %s5464 = sand.u32 %s631, 1
          %s5465 = scalar_lea.vmem [#allocation23], %s5464
          %5466 = dma.done %s5463, 16
        $region188: #{ft1d_forward.1} parent=183 // pred_fallthru
          _
      $region184: #{ft1d_forward.1} parent=5 // pred_fallthru
        _
    $region6: #{ft1d_forward.1} parent=1 // loop_footer
      %s49 = sadd.s32 1, %s45
    $region7: #{ft1d_forward.1} parent=1 // loop_footer_branch
      %44 = sbr.rel target = $region3
    $region8: #{ft1d_forward.1} parent=1 // loop_exit
      _
    %5467 = vsyncpa [#allocation4], 1
    %s5468 = scalar_lea.sflag [#allocation4], 1
    %5469 = vsyncpa %s5468, 1
    %5470 = vsyncpa [#allocation7], 1
    %5471 = vsyncpa [#allocation10], 1
    %5472 = vsyncpa [#allocation13], 1
    %5473 = vsyncpa [#allocation16], 1
    %5474 = vsyncpa [#allocation19], 1
    %5475 = vsyncpa [#allocation22], 1
    %5476 = vsyncpa [#allocation5], 1
    %s5477 = scalar_lea.sflag [#allocation5], 1
    %5478 = vsyncpa %s5477, 1

</llo_original>
